<compile_context>
chip_gen: v7x
topology: tpu7x:2x2x1
jax: 0.10.0
libtpu: 0.0.40
codegen_flags: <defaults>
</compile_context>

<pallas_src>
import functools

import jax
import jax.numpy as jnp
import numpy as np
from jax.experimental import pallas as pl
from jax.experimental.pallas import tpu as pltpu

_BN_EPS = 1e-5


# --------------------------------------------------------------------------
# Fused ResBlock kernel (Nb images per grid step, rows stacked into matmul M)
# --------------------------------------------------------------------------
def _resblock_kernel(x_ref, b1_ref, b2_ref, m1_ref, a1_ref, m2_ref, a2_ref,
                     alpha_ref, o_ref, pad_ref, *, H, WC, K, Nb):
    p = K // 2
    M = Nb * H

    # Zero only the per-image H halo rows (tiny), every step: "parallel" grid +
    # per-core scratch means a program_id==0-only init is not multi-core safe.
    zhalo = jnp.zeros((Nb, p, WC), jnp.float32)
    pad_ref[:, :p, :] = zhalo
    pad_ref[:, p + H:, :] = zhalo

    def conv(b_ref):
        # K deep-contraction MXU matmuls over sublane-shifted windows of the
        # H-padded slab; W taps + W zero-padding live inside the banded b_ref.
        acc = None
        for kh in range(K):                                  # unrolled, K == 3
            lhs = (pad_ref[:, kh:kh + H, :]
                   .reshape(M, WC)
                   .astype(jnp.bfloat16))
            d = jnp.dot(lhs, b_ref[kh], preferred_element_type=jnp.float32)
            acc = d if acc is None else acc + d              # init from tap 0
        return acc.reshape(Nb, H, WC)

    # ---- conv1: re-pad x along H into scratch interior, matmul, BN, PReLU ----
    pad_ref[:, p:p + H, :] = x_ref[...]
    y = conv(b1_ref) * m1_ref[...] + a1_ref[...]             # folded bias + BN
    alpha = alpha_ref[0]
    y = jnp.where(y >= 0.0, y, alpha * y)                    # PReLU (learned)

    # ---- conv2: reuse the same scratch (interior overwritten), BN, residual --
    pad_ref[:, p:p + H, :] = y
    out = conv(b2_ref) * m2_ref[...] + a2_ref[...]
    o_ref[...] = out + x_ref[...]                            # residual in f32


# --------------------------------------------------------------------------
# Weight / BN preparation
# --------------------------------------------------------------------------
def _build_banded(w_oihw, W_spatial):
    """(Cout,Cin,K,K) PyTorch conv weight -> (K, W*Cin, W*Cout) banded bf16 matrix.

    B[kh, w_in*Cin + ci, w_out*Cout + co] = w[co, ci, kh, kw],  kw = w_in - w_out + p
    (zero where the tap falls outside [0, W): this encodes the SAME padding
    along W, so only the H direction needs explicit zero rows).
    """
    Cout, Cin, K, _ = w_oihw.shape
    p = K // 2
    w = jnp.transpose(w_oihw, (2, 3, 1, 0))                  # (kh, kw, ci, co)
    place = np.zeros((K, W_spatial, W_spatial), np.float32)
    for kw in range(K):
        for w_out in range(W_spatial):
            w_in = w_out + kw - p
            if 0 <= w_in < W_spatial:
                place[kw, w_in, w_out] = 1.0
    B = jnp.einsum('kwv,hkio->hwivo', jnp.asarray(place), w)
    return B.reshape(K, W_spatial * Cin, W_spatial * Cout).astype(jnp.bfloat16)


def _fold_bn(bias, bn):
    """Fold conv bias + eval-mode BN into per-channel (mul, add)."""
    gamma, beta, mean, var = bn
    mul = gamma * jax.lax.rsqrt(var + _BN_EPS)
    add = (bias - mean) * mul + beta
    return mul, add


def _pick_nb(N, H):
    """Images per grid step: target M = Nb*H in [128, 256], keep >=2 grid steps."""
    nb = max(1, min(N, 256 // max(H, 1)))
    while N % nb != 0 or (nb > 1 and N // nb < 2):
        nb -= 1
    return nb


# --------------------------------------------------------------------------
# Forward wrapper (NCHW in / NCHW out, kernel runs lane-dense (Nb, H, W*C) rows)
# --------------------------------------------------------------------------
def resblock_forward(params, x_nchw):
    N, C, H, W = x_nchw.shape
    K = params['w1'].shape[-1]
    p = K // 2
    WC = W * C                                               # 16*32 = 512 lanes

    # Lane-dense / sublane-aligned layout guards (see correctness notes).
    assert WC % 128 == 0, f"W*C must be a multiple of 128, got {WC}"
    assert H % 8 == 0, f"H must be a multiple of 8, got {H}"

    Nb = _pick_nb(N, H)

    # NCHW -> (N, H, W*C); no wrapper-side H padding (halo handled in-kernel).
    x = jnp.transpose(x_nchw, (0, 2, 3, 1)).reshape(N, H, WC).astype(jnp.float32)

    # Banded bf16 conv weights + folded bias/BN pre-broadcast to (1, 1, W*C).
    B1 = _build_banded(params['w1'], W)
    B2 = _build_banded(params['w2'], W)
    mul1, add1 = _fold_bn(params['b1'], params['bn1'])
    mul2, add2 = _fold_bn(params['b2'], params['bn2'])
    m1 = jnp.tile(mul1, W).reshape(1, 1, WC)
    a1 = jnp.tile(add1, W).reshape(1, 1, WC)
    m2 = jnp.tile(mul2, W).reshape(1, 1, WC)
    a2 = jnp.tile(add2, W).reshape(1, 1, WC)
    alpha = params['alpha'].reshape(1).astype(jnp.float32)

    kern = functools.partial(_resblock_kernel, H=H, WC=WC, K=K, Nb=Nb)
    out = pl.pallas_call(
        kern,
        out_shape=jax.ShapeDtypeStruct((N, H, WC), jnp.float32),
        grid=(N // Nb,),
        in_specs=[
            pl.BlockSpec((Nb, H, WC), lambda g: (g, 0, 0)),     # x (unpadded)
            pl.BlockSpec((K, WC, WC), lambda g: (0, 0, 0)),     # banded W1 (bf16)
            pl.BlockSpec((K, WC, WC), lambda g: (0, 0, 0)),     # banded W2 (bf16)
            pl.BlockSpec((1, 1, WC), lambda g: (0, 0, 0)),      # mul1
            pl.BlockSpec((1, 1, WC), lambda g: (0, 0, 0)),      # add1
            pl.BlockSpec((1, 1, WC), lambda g: (0, 0, 0)),      # mul2
            pl.BlockSpec((1, 1, WC), lambda g: (0, 0, 0)),      # add2
            pl.BlockSpec(memory_space=pltpu.MemorySpace.SMEM),  # PReLU slope
        ],
        out_specs=pl.BlockSpec((Nb, H, WC), lambda g: (g, 0, 0)),
        scratch_shapes=[pltpu.VMEM((Nb, H + 2 * p, WC), jnp.float32)],
        compiler_params=pltpu.CompilerParams(
            dimension_semantics=("parallel",)),
    )(x, B1, B2, m1, a1, m2, a2, alpha)

    return jnp.transpose(out.reshape(N, H, W, C), (0, 3, 1, 2))


# --------------------------------------------------------------------------
# Deterministic synthetic parameters (PyTorch layout) + pure-JAX reference
# --------------------------------------------------------------------------
def init_resblock_params(key, *, n_c=32, ks=3):
    keys = iter(jax.random.split(key, 12))

    def conv_w():
        return 0.05 * jax.random.normal(next(keys), (n_c, n_c, ks, ks), jnp.float32)

    def bias():   # bias=~batch_norm in the reference code is truthy -> bias present
        return 0.02 * jax.random.normal(next(keys), (n_c,), jnp.float32)

    def bn():
        gamma = 1.0 + 0.1 * jax.random.normal(next(keys), (n_c,), jnp.float32)
        beta = 0.05 * jax.random.normal(next(keys), (n_c,), jnp.float32)
        mean = 0.05 * jax.random.normal(next(keys), (n_c,), jnp.float32)
        var = jax.random.uniform(next(keys), (n_c,), jnp.float32, 0.5, 1.5)
        return (gamma, beta, mean, var)

    return {
        'w1': conv_w(), 'b1': bias(), 'bn1': bn(),
        'w2': conv_w(), 'b2': bias(), 'bn2': bn(),
        'alpha': jnp.full((1,), 0.25, jnp.float32),   # nn.PReLU() default init
    }


def resblock_reference(params, x_nchw):
    """Pure-XLA f32 reference of the eval-mode ResBlock forward."""
    x = jnp.transpose(x_nchw, (0, 2, 3, 1))                  # NHWC

    def conv_bn(h, w_oihw, b, bn):
        w = jnp.transpose(w_oihw, (2, 3, 1, 0))              # HWIO
        y = jax.lax.conv_general_dilated(
            h, w, window_strides=(1, 1), padding='SAME',
            dimension_numbers=('NHWC', 'HWIO', 'NHWC')) + b
        gamma, beta, mean, var = bn
        return (y - mean) * (gamma * jax.lax.rsqrt(var + _BN_EPS)) + beta

    y = conv_bn(x, params['w1'], params['b1'], params['bn1'])
    y = jnp.where(y >= 0.0, y, params['alpha'][0] * y)       # PReLU
    y = conv_bn(y, params['w2'], params['b2'], params['bn2'])
    y = y + x
    return jnp.transpose(y, (0, 3, 1, 2))


if __name__ == "__main__":
    key = jax.random.PRNGKey(0)
    k_param, k_in = jax.random.split(key)

    n_c, ks = 32, 3                    # ResBlock(n_c=32, ks=3)
    N, H, W = 16, 16, 16               # W * n_c = 512 lanes; Nb=8 -> M=128, grid=(2,)
    params = init_resblock_params(k_param, n_c=n_c, ks=ks)
    x = jax.random.normal(k_in, (N, n_c, H, W), jnp.float32)   # NCHW

    fwd = jax.jit(resblock_forward)
    y = jax.block_until_ready(fwd(params, x))

    assert y.shape == (N, n_c, H, W), y.shape
    assert bool(jnp.all(jnp.isfinite(y)))

    # Correctness vs. f32 XLA reference (bf16 matmul operands -> loose tol).
    y_ref = resblock_reference(params, x)
    np.testing.assert_allclose(np.asarray(y), np.asarray(y_ref),
                               rtol=0.1, atol=0.1)
    print("KERNEL_OK")
</pallas_src>

<mosaic_0001>
module attributes {stable_mosaic.version = 11 : i64} {
  func.func @_resblock_kernel(%arg0: i32, %arg1: memref<8x16x512xf32, #tpu.memory_space<vmem>>, %arg2: memref<3x512x512xbf16, #tpu.memory_space<vmem>>, %arg3: memref<3x512x512xbf16, #tpu.memory_space<vmem>>, %arg4: memref<1x1x512xf32, #tpu.memory_space<vmem>>, %arg5: memref<1x1x512xf32, #tpu.memory_space<vmem>>, %arg6: memref<1x1x512xf32, #tpu.memory_space<vmem>>, %arg7: memref<1x1x512xf32, #tpu.memory_space<vmem>>, %arg8: memref<1xf32, #tpu.memory_space<smem>>, %arg9: memref<8x16x512xf32, #tpu.memory_space<vmem>>, %arg10: memref<8x18x512xf32, #tpu.memory_space<vmem>>) attributes {dimension_semantics = [#tpu.dimension_semantics<parallel>], iteration_bounds = array<i64: 2>, scalar_prefetch = 0 : i64, scratch_operands = 1 : i64, tpu.core_type = #tpu.core_type<tc>, window_params = [{transform_indices = @transform_0, window_bounds = array<i64: 8, 16, 512>}, {pipeline_mode = #tpu.pipeline_mode<synchronous>, transform_indices = @transform_1, window_bounds = array<i64: 3, 512, 512>}, {pipeline_mode = #tpu.pipeline_mode<synchronous>, transform_indices = @transform_2, window_bounds = array<i64: 3, 512, 512>}, {pipeline_mode = #tpu.pipeline_mode<synchronous>, transform_indices = @transform_3, window_bounds = array<i64: 1, 1, 512>}, {pipeline_mode = #tpu.pipeline_mode<synchronous>, transform_indices = @transform_4, window_bounds = array<i64: 1, 1, 512>}, {pipeline_mode = #tpu.pipeline_mode<synchronous>, transform_indices = @transform_5, window_bounds = array<i64: 1, 1, 512>}, {pipeline_mode = #tpu.pipeline_mode<synchronous>, transform_indices = @transform_6, window_bounds = array<i64: 1, 1, 512>}, {transform_indices = @transform_7, window_bounds = array<i64: 1>}, {transform_indices = @transform_8, window_bounds = array<i64: 8, 16, 512>}]} {
    %cst = arith.constant 0.000000e+00 : f32
    %0 = vector.broadcast %cst : f32 to vector<8x1x512xf32>
    %c0 = arith.constant 0 : index
    %c0_0 = arith.constant 0 : index
    %c0_1 = arith.constant 0 : index
    %1 = vector.load %arg10[%c0, %c0_0, %c0_1] : memref<8x18x512xf32, #tpu.memory_space<vmem>>, vector<8x1x512xf32>
    tpu.vector_store %arg10[%c0, %c0_0, %c0_1], %0 {strides = array<i32>} : memref<8x18x512xf32, #tpu.memory_space<vmem>>, vector<8x1x512xf32>,
    %c0_2 = arith.constant 0 : index
    %c17 = arith.constant 17 : index
    %c0_3 = arith.constant 0 : index
    %2 = vector.load %arg10[%c0_2, %c17, %c0_3] : memref<8x18x512xf32, #tpu.memory_space<vmem>>, vector<8x1x512xf32>
    tpu.vector_store %arg10[%c0_2, %c17, %c0_3], %0 {strides = array<i32>} : memref<8x18x512xf32, #tpu.memory_space<vmem>>, vector<8x1x512xf32>,
    %c0_4 = arith.constant 0 : index
    %c0_5 = arith.constant 0 : index
    %c0_6 = arith.constant 0 : index
    %3 = vector.load %arg1[%c0_4, %c0_5, %c0_6] : memref<8x16x512xf32, #tpu.memory_space<vmem>>, vector<8x16x512xf32>
    %c0_7 = arith.constant 0 : index
    %c1 = arith.constant 1 : index
    %c0_8 = arith.constant 0 : index
    %4 = vector.load %arg10[%c0_7, %c1, %c0_8] : memref<8x18x512xf32, #tpu.memory_space<vmem>>, vector<8x16x512xf32>
    tpu.vector_store %arg10[%c0_7, %c1, %c0_8], %3 {strides = array<i32>} : memref<8x18x512xf32, #tpu.memory_space<vmem>>, vector<8x16x512xf32>,
    %c0_9 = arith.constant 0 : index
    %c0_10 = arith.constant 0 : index
    %c0_11 = arith.constant 0 : index
    %5 = vector.load %arg10[%c0_9, %c0_10, %c0_11] : memref<8x18x512xf32, #tpu.memory_space<vmem>>, vector<8x16x512xf32>
    %6 = vector.shape_cast %5 : vector<8x16x512xf32> to vector<128x512xf32>
    %7 = arith.truncf %6 : vector<128x512xf32> to vector<128x512xbf16>
    %c0_12 = arith.constant 0 : index
    %c0_13 = arith.constant 0 : index
    %c0_14 = arith.constant 0 : index
    %8 = vector.load %arg2[%c0_12, %c0_13, %c0_14] : memref<3x512x512xbf16, #tpu.memory_space<vmem>>, vector<1x512x512xbf16>
    %9 = vector.shape_cast %8 : vector<1x512x512xbf16> to vector<512x512xbf16>
    %cst_15 = arith.constant dense<0.000000e+00> : vector<128x512xf32>
    %10 = tpu.matmul %7, %9, %cst_15 {dimension_numbers = #tpu.dot_dimension_numbers<[1], [0], [0], [1], [0, 0, 1, 1], [], []>} : vector<128x512xbf16>, vector<512x512xbf16>, vector<128x512xf32> -> vector<128x512xf32>
    %c0_16 = arith.constant 0 : index
    %c1_17 = arith.constant 1 : index
    %c0_18 = arith.constant 0 : index
    %11 = vector.load %arg10[%c0_16, %c1_17, %c0_18] : memref<8x18x512xf32, #tpu.memory_space<vmem>>, vector<8x16x512xf32>
    %12 = vector.shape_cast %11 : vector<8x16x512xf32> to vector<128x512xf32>
    %13 = arith.truncf %12 : vector<128x512xf32> to vector<128x512xbf16>
    %c1_19 = arith.constant 1 : index
    %c0_20 = arith.constant 0 : index
    %c0_21 = arith.constant 0 : index
    %14 = vector.load %arg2[%c1_19, %c0_20, %c0_21] : memref<3x512x512xbf16, #tpu.memory_space<vmem>>, vector<1x512x512xbf16>
    %15 = vector.shape_cast %14 : vector<1x512x512xbf16> to vector<512x512xbf16>
    %cst_22 = arith.constant dense<0.000000e+00> : vector<128x512xf32>
    %16 = tpu.matmul %13, %15, %cst_22 {dimension_numbers = #tpu.dot_dimension_numbers<[1], [0], [0], [1], [0, 0, 1, 1], [], []>} : vector<128x512xbf16>, vector<512x512xbf16>, vector<128x512xf32> -> vector<128x512xf32>
    %17 = arith.addf %10, %16 : vector<128x512xf32>
    %c0_23 = arith.constant 0 : index
    %c2 = arith.constant 2 : index
    %c0_24 = arith.constant 0 : index
    %18 = vector.load %arg10[%c0_23, %c2, %c0_24] : memref<8x18x512xf32, #tpu.memory_space<vmem>>, vector<8x16x512xf32>
    %19 = vector.shape_cast %18 : vector<8x16x512xf32> to vector<128x512xf32>
    %20 = arith.truncf %19 : vector<128x512xf32> to vector<128x512xbf16>
    %c2_25 = arith.constant 2 : index
    %c0_26 = arith.constant 0 : index
    %c0_27 = arith.constant 0 : index
    %21 = vector.load %arg2[%c2_25, %c0_26, %c0_27] : memref<3x512x512xbf16, #tpu.memory_space<vmem>>, vector<1x512x512xbf16>
    %22 = vector.shape_cast %21 : vector<1x512x512xbf16> to vector<512x512xbf16>
    %cst_28 = arith.constant dense<0.000000e+00> : vector<128x512xf32>
    %23 = tpu.matmul %20, %22, %cst_28 {dimension_numbers = #tpu.dot_dimension_numbers<[1], [0], [0], [1], [0, 0, 1, 1], [], []>} : vector<128x512xbf16>, vector<512x512xbf16>, vector<128x512xf32> -> vector<128x512xf32>
    %24 = arith.addf %17, %23 : vector<128x512xf32>
    %25 = vector.shape_cast %24 : vector<128x512xf32> to vector<8x16x512xf32>
    %c0_29 = arith.constant 0 : index
    %c0_30 = arith.constant 0 : index
    %c0_31 = arith.constant 0 : index
    %26 = vector.load %arg4[%c0_29, %c0_30, %c0_31] : memref<1x1x512xf32, #tpu.memory_space<vmem>>, vector<1x1x512xf32>
    %27 = vector.broadcast %26 : vector<1x1x512xf32> to vector<8x16x512xf32>
    %28 = arith.mulf %25, %27 : vector<8x16x512xf32>
    %c0_32 = arith.constant 0 : index
    %c0_33 = arith.constant 0 : index
    %c0_34 = arith.constant 0 : index
    %29 = vector.load %arg5[%c0_32, %c0_33, %c0_34] : memref<1x1x512xf32, #tpu.memory_space<vmem>>, vector<1x1x512xf32>
    %30 = vector.broadcast %29 : vector<1x1x512xf32> to vector<8x16x512xf32>
    %31 = arith.addf %28, %30 : vector<8x16x512xf32>
    %c0_35 = arith.constant 0 : index
    %32 = memref.load %arg8[%c0_35] : memref<1xf32, #tpu.memory_space<smem>>
    %cst_36 = arith.constant 0.000000e+00 : f32
    %33 = vector.broadcast %cst_36 : f32 to vector<8x16x512xf32>
    %34 = arith.cmpf oge, %31, %33 : vector<8x16x512xf32>
    %35 = vector.broadcast %32 : f32 to vector<8x16x512xf32>
    %36 = arith.mulf %35, %31 : vector<8x16x512xf32>
    %37 = arith.select %34, %31, %36 : vector<8x16x512xi1>, vector<8x16x512xf32>
    %c0_37 = arith.constant 0 : index
    %c1_38 = arith.constant 1 : index
    %c0_39 = arith.constant 0 : index
    %38 = vector.load %arg10[%c0_37, %c1_38, %c0_39] : memref<8x18x512xf32, #tpu.memory_space<vmem>>, vector<8x16x512xf32>
    tpu.vector_store %arg10[%c0_37, %c1_38, %c0_39], %37 {strides = array<i32>} : memref<8x18x512xf32, #tpu.memory_space<vmem>>, vector<8x16x512xf32>,
    %c0_40 = arith.constant 0 : index
    %c0_41 = arith.constant 0 : index
    %c0_42 = arith.constant 0 : index
    %39 = vector.load %arg10[%c0_40, %c0_41, %c0_42] : memref<8x18x512xf32, #tpu.memory_space<vmem>>, vector<8x16x512xf32>
    %40 = vector.shape_cast %39 : vector<8x16x512xf32> to vector<128x512xf32>
    %41 = arith.truncf %40 : vector<128x512xf32> to vector<128x512xbf16>
    %c0_43 = arith.constant 0 : index
    %c0_44 = arith.constant 0 : index
    %c0_45 = arith.constant 0 : index
    %42 = vector.load %arg3[%c0_43, %c0_44, %c0_45] : memref<3x512x512xbf16, #tpu.memory_space<vmem>>, vector<1x512x512xbf16>
    %43 = vector.shape_cast %42 : vector<1x512x512xbf16> to vector<512x512xbf16>
    %cst_46 = arith.constant dense<0.000000e+00> : vector<128x512xf32>
    %44 = tpu.matmul %41, %43, %cst_46 {dimension_numbers = #tpu.dot_dimension_numbers<[1], [0], [0], [1], [0, 0, 1, 1], [], []>} : vector<128x512xbf16>, vector<512x512xbf16>, vector<128x512xf32> -> vector<128x512xf32>
    %c0_47 = arith.constant 0 : index
    %c1_48 = arith.constant 1 : index
    %c0_49 = arith.constant 0 : index
    %45 = vector.load %arg10[%c0_47, %c1_48, %c0_49] : memref<8x18x512xf32, #tpu.memory_space<vmem>>, vector<8x16x512xf32>
    %46 = vector.shape_cast %45 : vector<8x16x512xf32> to vector<128x512xf32>
    %47 = arith.truncf %46 : vector<128x512xf32> to vector<128x512xbf16>
    %c1_50 = arith.constant 1 : index
    %c0_51 = arith.constant 0 : index
    %c0_52 = arith.constant 0 : index
    %48 = vector.load %arg3[%c1_50, %c0_51, %c0_52] : memref<3x512x512xbf16, #tpu.memory_space<vmem>>, vector<1x512x512xbf16>
    %49 = vector.shape_cast %48 : vector<1x512x512xbf16> to vector<512x512xbf16>
    %cst_53 = arith.constant dense<0.000000e+00> : vector<128x512xf32>
    %50 = tpu.matmul %47, %49, %cst_53 {dimension_numbers = #tpu.dot_dimension_numbers<[1], [0], [0], [1], [0, 0, 1, 1], [], []>} : vector<128x512xbf16>, vector<512x512xbf16>, vector<128x512xf32> -> vector<128x512xf32>
    %51 = arith.addf %44, %50 : vector<128x512xf32>
    %c0_54 = arith.constant 0 : index
    %c2_55 = arith.constant 2 : index
    %c0_56 = arith.constant 0 : index
    %52 = vector.load %arg10[%c0_54, %c2_55, %c0_56] : memref<8x18x512xf32, #tpu.memory_space<vmem>>, vector<8x16x512xf32>
    %53 = vector.shape_cast %52 : vector<8x16x512xf32> to vector<128x512xf32>
    %54 = arith.truncf %53 : vector<128x512xf32> to vector<128x512xbf16>
    %c2_57 = arith.constant 2 : index
    %c0_58 = arith.constant 0 : index
    %c0_59 = arith.constant 0 : index
    %55 = vector.load %arg3[%c2_57, %c0_58, %c0_59] : memref<3x512x512xbf16, #tpu.memory_space<vmem>>, vector<1x512x512xbf16>
    %56 = vector.shape_cast %55 : vector<1x512x512xbf16> to vector<512x512xbf16>
    %cst_60 = arith.constant dense<0.000000e+00> : vector<128x512xf32>
    %57 = tpu.matmul %54, %56, %cst_60 {dimension_numbers = #tpu.dot_dimension_numbers<[1], [0], [0], [1], [0, 0, 1, 1], [], []>} : vector<128x512xbf16>, vector<512x512xbf16>, vector<128x512xf32> -> vector<128x512xf32>
    %58 = arith.addf %51, %57 : vector<128x512xf32>
    %59 = vector.shape_cast %58 : vector<128x512xf32> to vector<8x16x512xf32>
    %c0_61 = arith.constant 0 : index
    %c0_62 = arith.constant 0 : index
    %c0_63 = arith.constant 0 : index
    %60 = vector.load %arg6[%c0_61, %c0_62, %c0_63] : memref<1x1x512xf32, #tpu.memory_space<vmem>>, vector<1x1x512xf32>
    %61 = vector.broadcast %60 : vector<1x1x512xf32> to vector<8x16x512xf32>
    %62 = arith.mulf %59, %61 : vector<8x16x512xf32>
    %c0_64 = arith.constant 0 : index
    %c0_65 = arith.constant 0 : index
    %c0_66 = arith.constant 0 : index
    %63 = vector.load %arg7[%c0_64, %c0_65, %c0_66] : memref<1x1x512xf32, #tpu.memory_space<vmem>>, vector<1x1x512xf32>
    %64 = vector.broadcast %63 : vector<1x1x512xf32> to vector<8x16x512xf32>
    %65 = arith.addf %62, %64 : vector<8x16x512xf32>
    %c0_67 = arith.constant 0 : index
    %c0_68 = arith.constant 0 : index
    %c0_69 = arith.constant 0 : index
    %66 = vector.load %arg1[%c0_67, %c0_68, %c0_69] : memref<8x16x512xf32, #tpu.memory_space<vmem>>, vector<8x16x512xf32>
    %67 = arith.addf %65, %66 : vector<8x16x512xf32>
    %c0_70 = arith.constant 0 : index
    %c0_71 = arith.constant 0 : index
    %c0_72 = arith.constant 0 : index
    %68 = vector.load %arg9[%c0_70, %c0_71, %c0_72] : memref<8x16x512xf32, #tpu.memory_space<vmem>>, vector<8x16x512xf32>
    tpu.vector_store %arg9[%c0_70, %c0_71, %c0_72], %67 {strides = array<i32>} : memref<8x16x512xf32, #tpu.memory_space<vmem>>, vector<8x16x512xf32>,
    return
  }
  func.func @transform_0(%arg0: i32) -> (i32, i32, i32) {
    %c0_i32 = arith.constant 0 : i32
    %c0_i32_0 = arith.constant 0 : i32
    %c0_i32_1 = arith.constant 0 : i32
    return %arg0, %c0_i32, %c0_i32_0 : i32, i32, i32
  }
  func.func @transform_1(%arg0: i32) -> (i32, i32, i32) {
    %c0_i32 = arith.constant 0 : i32
    %c0_i32_0 = arith.constant 0 : i32
    %c0_i32_1 = arith.constant 0 : i32
    %c0_i32_2 = arith.constant 0 : i32
    return %c0_i32, %c0_i32_0, %c0_i32_1 : i32, i32, i32
  }
  func.func @transform_2(%arg0: i32) -> (i32, i32, i32) {
    %c0_i32 = arith.constant 0 : i32
    %c0_i32_0 = arith.constant 0 : i32
    %c0_i32_1 = arith.constant 0 : i32
    %c0_i32_2 = arith.constant 0 : i32
    return %c0_i32, %c0_i32_0, %c0_i32_1 : i32, i32, i32
  }
  func.func @transform_3(%arg0: i32) -> (i32, i32, i32) {
    %c0_i32 = arith.constant 0 : i32
    %c0_i32_0 = arith.constant 0 : i32
    %c0_i32_1 = arith.constant 0 : i32
    %c0_i32_2 = arith.constant 0 : i32
    return %c0_i32, %c0_i32_0, %c0_i32_1 : i32, i32, i32
  }
  func.func @transform_4(%arg0: i32) -> (i32, i32, i32) {
    %c0_i32 = arith.constant 0 : i32
    %c0_i32_0 = arith.constant 0 : i32
    %c0_i32_1 = arith.constant 0 : i32
    %c0_i32_2 = arith.constant 0 : i32
    return %c0_i32, %c0_i32_0, %c0_i32_1 : i32, i32, i32
  }
  func.func @transform_5(%arg0: i32) -> (i32, i32, i32) {
    %c0_i32 = arith.constant 0 : i32
    %c0_i32_0 = arith.constant 0 : i32
    %c0_i32_1 = arith.constant 0 : i32
    %c0_i32_2 = arith.constant 0 : i32
    return %c0_i32, %c0_i32_0, %c0_i32_1 : i32, i32, i32
  }
  func.func @transform_6(%arg0: i32) -> (i32, i32, i32) {
    %c0_i32 = arith.constant 0 : i32
    %c0_i32_0 = arith.constant 0 : i32
    %c0_i32_1 = arith.constant 0 : i32
    %c0_i32_2 = arith.constant 0 : i32
    return %c0_i32, %c0_i32_0, %c0_i32_1 : i32, i32, i32
  }
  func.func @transform_7(%arg0: i32) -> i32 {
    %c0_i32 = arith.constant 0 : i32
    %c0_i32_0 = arith.constant 0 : i32
    return %c0_i32 : i32
  }
  func.func @transform_8(%arg0: i32) -> (i32, i32, i32) {
    %c0_i32 = arith.constant 0 : i32
    %c0_i32_0 = arith.constant 0 : i32
    %c0_i32_1 = arith.constant 0 : i32
    return %arg0, %c0_i32, %c0_i32_0 : i32, i32, i32
  }
}

</mosaic_0001>

<llo_original>
// kernel: tile.23
$region0: #{tile.23}
  #allocation0 [shape = 's32[1]{0}', space=sflag, size = 0x4, scoped, tag = 'scoped memory for tile.23']
  %s0 = inlined_call_operand.vmem [shape: f32[32], index: 0, kind: input, shape index: {}]
  %s1 = inlined_call_operand.vmem [shape: f32[16,32], index: 1, kind: output, shape index: {}]
  // Predicated region
  $region2: #{tile.23} parent=0 // pred_check
    _
  $region3: #{tile.23} parent=0 // pred_check_branch
    %3 = sbr.rel (0) target = $region5
  $region4: #{tile.23} parent=0 // pred_region
    _
  $region5: #{tile.23} parent=0 // pred_fallthru
    _
  %v4 = vld [vmem:[%s0] ss:$0 sm:$0xff]
  %5 = vst [vmem:[%s1] sm:$0xff] %v4
  %s6 = scalar_lea.vmem %s1, 8
  %7 = vst [vmem:[%s6] sm:$0xff] %v4

// kernel: tile.24
$region0: #{tile.24}
  %s0 = inlined_call_operand.vmem [shape: f32[16,32], index: 0, kind: input, shape index: {}]
  %s1 = inlined_call_operand.vmem [shape: f32[1,1,512], index: 1, kind: output, shape index: {}]
  $region1: #{tile.24} parent=0
    #allocation0 [shape = 'u8[16384]{0}', space=vmem, size = 0x4000, scoped, tag = 'scoped mem for output reshape']
    %v2 = vld [vmem:[%s0] ss:$4 sm:$0xf]
    %vm3 = vcmask 261120
    %4 = vst.msk [vmem:[#allocation0] ss:$8 sm:$0xf] %vm3, %v2
    %s5 = scalar_lea.vmem %s0, 3
    %v6 = vld [vmem:[%s5] ss:$4 sm:$0xf]
    %7 = vrot.lane.b32.xlu0 %v6, 96
    %v8 = vpop.permute.xlu0 %7
    %vm9 = vcmask 1048320
    %10 = vst.msk [vmem:[#allocation0] ss:$8 sm:$0xf] %vm9, %v8
    %s11 = scalar_lea.vmem %s0, 2
    %v12 = vld [vmem:[%s11] ss:$4 sm:$0xf]
    %13 = vrot.lane.b32.xlu0 %v12, 64
    %v14 = vpop.permute.xlu0 %13
    %vm15 = vcmask 785920
    %16 = vst.msk [vmem:[#allocation0] ss:$8 sm:$0xf] %vm15, %v14
    %s17 = scalar_lea.vmem %s0, 1
    %v18 = vld [vmem:[%s17] ss:$4 sm:$0xf]
    %19 = vrot.lane.b32.xlu0 %v18, 32
    %v20 = vpop.permute.xlu0 %19
    %vm21 = vcmask 523520
    %22 = vst.msk [vmem:[#allocation0] ss:$8 sm:$0xf] %vm21, %v20
    %s24 = sshllo.u32 0, 1
    %v26 = vld [vmem:[#allocation0] sm:%s24]
    %s27 = sshllo.u32 0, 1
    %28 = vst [vmem:[%s1] sm:%s27] %v26
    %s29 = scalar_lea.vmem [#allocation0], 8
    %v30 = vld [vmem:[%s29] sm:%s24]
    %s31 = sshllo.u32 0, 1
    %s32 = scalar_lea.vmem %s1, 1
    %33 = vst [vmem:[%s32] sm:%s31] %v30
    %s34 = scalar_lea.vmem [#allocation0], 16
    %v35 = vld [vmem:[%s34] sm:%s24]
    %s36 = sshllo.u32 0, 1
    %s37 = smul.addr 1, 2
    %s38 = scalar_lea.vmem %s1, %s37
    %39 = vst [vmem:[%s38] sm:%s36] %v35
    %s40 = scalar_lea.vmem [#allocation0], 24
    %v41 = vld [vmem:[%s40] sm:%s24]
    %s42 = sshllo.u32 0, 1
    %s43 = smul.addr 1, 3
    %s44 = scalar_lea.vmem %s1, %s43
    %45 = vst [vmem:[%s44] sm:%s42] %v41

// kernel: resblock_forward.1
$region0: #{resblock_forward.1}
  #allocation0 [shape = 'u32[]', space=smem, size = 0x4, offset = 0x4, fixed_abs, tag = 'smem constant byte address 0x4 - core index']
  #allocation1 [shape = 'u32[144,128]{1,0:T(1,128)}', space=vmem, size = 0x12000, scoped, tag = 'internal scratch']
  #allocation2 [shape = 'f32[8,18,512]{2,1,0:T(8,128)}', space=vmem, size = 0x60000, scoped, tag = 'scratch operand']
  #allocation3 [shape = 'f32[1]{0:T(128)S(6)}', space=smem, size = 0x200, scoped, tag = 'scoped memory for resblock_forward.1']
  %s0 = inlined_call_operand.vmem [shape: f32[16,16,512], index: 0, kind: input, shape index: {}]
  %s1 = inlined_call_operand.vmem [shape: bf16[3,512,512], index: 1, kind: input, shape index: {}]
  %s2 = inlined_call_operand.vmem [shape: bf16[3,512,512], index: 2, kind: input, shape index: {}]
  %s3 = inlined_call_operand.vmem [shape: f32[1,1,512], index: 3, kind: input, shape index: {}]
  %s4 = inlined_call_operand.vmem [shape: f32[1,1,512], index: 4, kind: input, shape index: {}]
  %s5 = inlined_call_operand.vmem [shape: f32[1,1,512], index: 5, kind: input, shape index: {}]
  %s6 = inlined_call_operand.vmem [shape: f32[1,1,512], index: 6, kind: input, shape index: {}]
  %s7 = inlined_call_operand.<no memory space> [shape: f32[1], index: 7, kind: input, shape index: {}]
  %s8 = inlined_call_operand.vmem [shape: f32[16,16,512], index: 8, kind: output, shape index: {}]
  %s9 = sld [smem:[#allocation0]]
  $region65: #{resblock_forward.1} parent=0
    _
  %s11 = ssub.s32 1, %s9
  %s12 = scalar_select 0, %s11, %s9
  %13 = sst [smem:[#allocation3]] %s7
  loop: start=0, step=1, limit=4
  $region2: #{resblock_forward.1} parent=0 // loop_pre_header
    _
  $region3: #{resblock_forward.1} parent=0 // loop_header
    %s15 = sphi 0, %s19
    %p16 = scmp.ge.s32.totalorder %s15, 4
    %s25 = sphi 0, %s27
    %s28 = sphi 0, %s25
    %s29 = sphi 0, %s28
    %s45 = sphi 0, %s29
    %s49 = sphi 0, %s49
    %s51 = sphi 0, %s49
    %s52 = sphi 0, %s51
    %s66 = sphi 0, %s52
    %s70 = sphi 0, %s70
    %s72 = sphi 0, %s70
    %s73 = sphi 0, %s72
    %s87 = sphi 0, %s73
    %s91 = sphi 0, %s91
    %s93 = sphi 0, %s91
    %s94 = sphi 0, %s93
    %s108 = sphi 0, %s94
    %s112 = sphi 0, %s112
    %s114 = sphi 0, %s112
    %s115 = sphi 0, %s114
    %s129 = sphi 0, %s115
    %s133 = sphi 0, %s133
    %s135 = sphi 0, %s133
    %s136 = sphi 0, %s135
    %s150 = sphi 0, %s136
    %s154 = sphi 0, %s154
    %s156 = sphi 0, %s154
    %s157 = sphi 0, %s156
    %s171 = sphi 0, %s157
    %s175 = sphi 0, %s175
    %s177 = sphi 0, %s175
    %s178 = sphi 0, %s177
    %s192 = sphi 0, %s178
    %s198 = sphi 0, %s200
    %s201 = sphi 0, %s198
    %s202 = sphi 0, %s201
    %s218 = sphi 0, %s202
  $region4: #{resblock_forward.1} parent=0 // loop_header_branch
    %18 = sbr.rel (%p16) target = $region8
  $region5: #{resblock_forward.1} parent=0 // loop_body
    %s20 = ssub.s32 %s15, 1
    %s21 = ssub.s32 %s15, 2
    %s22 = sadd.s32 %s15, 1
    %s23 = ssub.s32 %s15, %s22
    %p24 = scmp.eq.s32.totalorder %s23, 0
    %s26 = sadd.s32 %s25, 1
    %s27 = scalar_select %p24, %s25, %s26
    %p30 = pneg %p24
    %p31 = scmp.eq.s32.totalorder %s15, 1
    %p32 = por %p30, %p31
    %p33 = scmp.ne.s32.totalorder %s25, %s28
    %p34 = scmp.eq.s32.totalorder %s15, 0
    %p35 = por %p33, %p34
    %p36 = scmp.ne.s32.totalorder %s25, %s28
    %p37 = scmp.eq.s32.totalorder %s20, 1
    %p38 = por %p36, %p37
    %p39 = scmp.ne.s32.totalorder %s28, %s29
    %p40 = scmp.eq.s32.totalorder %s20, 0
    %p41 = por %p39, %p40
    %p42 = scmp.ne.s32.totalorder %s28, %s29
    %p43 = scmp.eq.s32.totalorder %s21, 1
    %p44 = por %p42, %p43
    %p46 = scmp.ne.s32.totalorder %s29, %s45
    %p47 = scmp.eq.s32.totalorder %s21, 0
    %p48 = por %p46, %p47
    %s50 = sadd.s32 %s49, 1
    %p53 = scmp.eq.s32.totalorder %s15, 1
    %p54 = scmp.ne.s32.totalorder %s49, %s51
    %p55 = scmp.eq.s32.totalorder %s15, 0
    %p56 = por %p54, %p55
    %p57 = scmp.ne.s32.totalorder %s49, %s51
    %p58 = scmp.eq.s32.totalorder %s20, 1
    %p59 = por %p57, %p58
    %p60 = scmp.ne.s32.totalorder %s51, %s52
    %p61 = scmp.eq.s32.totalorder %s20, 0
    %p62 = por %p60, %p61
    %p63 = scmp.ne.s32.totalorder %s51, %s52
    %p64 = scmp.eq.s32.totalorder %s21, 1
    %p65 = por %p63, %p64
    %p67 = scmp.ne.s32.totalorder %s52, %s66
    %p68 = scmp.eq.s32.totalorder %s21, 0
    %p69 = por %p67, %p68
    %s71 = sadd.s32 %s70, 1
    %p74 = scmp.eq.s32.totalorder %s15, 1
    %p75 = scmp.ne.s32.totalorder %s70, %s72
    %p76 = scmp.eq.s32.totalorder %s15, 0
    %p77 = por %p75, %p76
    %p78 = scmp.ne.s32.totalorder %s70, %s72
    %p79 = scmp.eq.s32.totalorder %s20, 1
    %p80 = por %p78, %p79
    %p81 = scmp.ne.s32.totalorder %s72, %s73
    %p82 = scmp.eq.s32.totalorder %s20, 0
    %p83 = por %p81, %p82
    %p84 = scmp.ne.s32.totalorder %s72, %s73
    %p85 = scmp.eq.s32.totalorder %s21, 1
    %p86 = por %p84, %p85
    %p88 = scmp.ne.s32.totalorder %s73, %s87
    %p89 = scmp.eq.s32.totalorder %s21, 0
    %p90 = por %p88, %p89
    %s92 = sadd.s32 %s91, 1
    %p95 = scmp.eq.s32.totalorder %s15, 1
    %p96 = scmp.ne.s32.totalorder %s91, %s93
    %p97 = scmp.eq.s32.totalorder %s15, 0
    %p98 = por %p96, %p97
    %p99 = scmp.ne.s32.totalorder %s91, %s93
    %p100 = scmp.eq.s32.totalorder %s20, 1
    %p101 = por %p99, %p100
    %p102 = scmp.ne.s32.totalorder %s93, %s94
    %p103 = scmp.eq.s32.totalorder %s20, 0
    %p104 = por %p102, %p103
    %p105 = scmp.ne.s32.totalorder %s93, %s94
    %p106 = scmp.eq.s32.totalorder %s21, 1
    %p107 = por %p105, %p106
    %p109 = scmp.ne.s32.totalorder %s94, %s108
    %p110 = scmp.eq.s32.totalorder %s21, 0
    %p111 = por %p109, %p110
    %s113 = sadd.s32 %s112, 1
    %p116 = scmp.eq.s32.totalorder %s15, 1
    %p117 = scmp.ne.s32.totalorder %s112, %s114
    %p118 = scmp.eq.s32.totalorder %s15, 0
    %p119 = por %p117, %p118
    %p120 = scmp.ne.s32.totalorder %s112, %s114
    %p121 = scmp.eq.s32.totalorder %s20, 1
    %p122 = por %p120, %p121
    %p123 = scmp.ne.s32.totalorder %s114, %s115
    %p124 = scmp.eq.s32.totalorder %s20, 0
    %p125 = por %p123, %p124
    %p126 = scmp.ne.s32.totalorder %s114, %s115
    %p127 = scmp.eq.s32.totalorder %s21, 1
    %p128 = por %p126, %p127
    %p130 = scmp.ne.s32.totalorder %s115, %s129
    %p131 = scmp.eq.s32.totalorder %s21, 0
    %p132 = por %p130, %p131
    %s134 = sadd.s32 %s133, 1
    %p137 = scmp.eq.s32.totalorder %s15, 1
    %p138 = scmp.ne.s32.totalorder %s133, %s135
    %p139 = scmp.eq.s32.totalorder %s15, 0
    %p140 = por %p138, %p139
    %p141 = scmp.ne.s32.totalorder %s133, %s135
    %p142 = scmp.eq.s32.totalorder %s20, 1
    %p143 = por %p141, %p142
    %p144 = scmp.ne.s32.totalorder %s135, %s136
    %p145 = scmp.eq.s32.totalorder %s20, 0
    %p146 = por %p144, %p145
    %p147 = scmp.ne.s32.totalorder %s135, %s136
    %p148 = scmp.eq.s32.totalorder %s21, 1
    %p149 = por %p147, %p148
    %p151 = scmp.ne.s32.totalorder %s136, %s150
    %p152 = scmp.eq.s32.totalorder %s21, 0
    %p153 = por %p151, %p152
    %s155 = sadd.s32 %s154, 1
    %p158 = scmp.eq.s32.totalorder %s15, 1
    %p159 = scmp.ne.s32.totalorder %s154, %s156
    %p160 = scmp.eq.s32.totalorder %s15, 0
    %p161 = por %p159, %p160
    %p162 = scmp.ne.s32.totalorder %s154, %s156
    %p163 = scmp.eq.s32.totalorder %s20, 1
    %p164 = por %p162, %p163
    %p165 = scmp.ne.s32.totalorder %s156, %s157
    %p166 = scmp.eq.s32.totalorder %s20, 0
    %p167 = por %p165, %p166
    %p168 = scmp.ne.s32.totalorder %s156, %s157
    %p169 = scmp.eq.s32.totalorder %s21, 1
    %p170 = por %p168, %p169
    %p172 = scmp.ne.s32.totalorder %s157, %s171
    %p173 = scmp.eq.s32.totalorder %s21, 0
    %p174 = por %p172, %p173
    %s176 = sadd.s32 %s175, 1
    %p179 = scmp.eq.s32.totalorder %s15, 1
    %p180 = scmp.ne.s32.totalorder %s175, %s177
    %p181 = scmp.eq.s32.totalorder %s15, 0
    %p182 = por %p180, %p181
    %p183 = scmp.ne.s32.totalorder %s175, %s177
    %p184 = scmp.eq.s32.totalorder %s20, 1
    %p185 = por %p183, %p184
    %p186 = scmp.ne.s32.totalorder %s177, %s178
    %p187 = scmp.eq.s32.totalorder %s20, 0
    %p188 = por %p186, %p187
    %p189 = scmp.ne.s32.totalorder %s177, %s178
    %p190 = scmp.eq.s32.totalorder %s21, 1
    %p191 = por %p189, %p190
    %p193 = scmp.ne.s32.totalorder %s178, %s192
    %p194 = scmp.eq.s32.totalorder %s21, 0
    %p195 = por %p193, %p194
    %s196 = ssub.s32 %s15, %s22
    %p197 = scmp.eq.s32.totalorder %s196, 0
    %s199 = sadd.s32 %s198, 1
    %s200 = scalar_select %p197, %s198, %s199
    %p203 = pneg %p197
    %p204 = scmp.eq.s32.totalorder %s15, 1
    %p205 = por %p203, %p204
    %p206 = scmp.ne.s32.totalorder %s198, %s201
    %p207 = scmp.eq.s32.totalorder %s15, 0
    %p208 = por %p206, %p207
    %p209 = scmp.ne.s32.totalorder %s198, %s201
    %p210 = scmp.eq.s32.totalorder %s20, 1
    %p211 = por %p209, %p210
    %p212 = scmp.ne.s32.totalorder %s201, %s202
    %p213 = scmp.eq.s32.totalorder %s20, 0
    %p214 = por %p212, %p213
    %p215 = scmp.ne.s32.totalorder %s201, %s202
    %p216 = scmp.eq.s32.totalorder %s21, 1
    %p217 = por %p215, %p216
    %p219 = scmp.ne.s32.totalorder %s202, %s218
    %p220 = scmp.eq.s32.totalorder %s21, 0
    %p221 = por %p219, %p220
    %p222 = scmp.le.s32.totalorder 1, %s15
    %p223 = scmp.lt.s32.totalorder %s15, 3
    %p224 = pnand %p222, %p223
    %p225 = pneg %p224
    // Predicated region
    $region9: #{resblock_forward.1} parent=5 // pred_check
      _
    $region10: #{resblock_forward.1} parent=5 // pred_check_branch
      %227 = sbr.rel (%p224) target = $region12
    $region11: #{resblock_forward.1} parent=5 // pred_region
      %s228 = ssub.s32 %s15, 1
      // Predicated region
      $region13: #{resblock_forward.1} parent=11 // pred_check
        %p229 = pneg %p62
      $region14: #{resblock_forward.1} parent=11 // pred_check_branch
        %231 = sbr.rel (%p229) target = $region16
      $region15: #{resblock_forward.1} parent=11 // pred_region
        _
      $region16: #{resblock_forward.1} parent=11 // pred_fallthru
        _
      // Predicated region
      $region17: #{resblock_forward.1} parent=11 // pred_check
        %p232 = pneg %p83
      $region18: #{resblock_forward.1} parent=11 // pred_check_branch
        %234 = sbr.rel (%p232) target = $region20
      $region19: #{resblock_forward.1} parent=11 // pred_region
        _
      $region20: #{resblock_forward.1} parent=11 // pred_fallthru
        _
      // Predicated region
      $region21: #{resblock_forward.1} parent=11 // pred_check
        %p235 = pneg %p104
      $region22: #{resblock_forward.1} parent=11 // pred_check_branch
        %237 = sbr.rel (%p235) target = $region24
      $region23: #{resblock_forward.1} parent=11 // pred_region
        _
      $region24: #{resblock_forward.1} parent=11 // pred_fallthru
        _
      // Predicated region
      $region25: #{resblock_forward.1} parent=11 // pred_check
        %p238 = pneg %p125
      $region26: #{resblock_forward.1} parent=11 // pred_check_branch
        %240 = sbr.rel (%p238) target = $region28
      $region27: #{resblock_forward.1} parent=11 // pred_region
        _
      $region28: #{resblock_forward.1} parent=11 // pred_fallthru
        _
      // Predicated region
      $region29: #{resblock_forward.1} parent=11 // pred_check
        %p241 = pneg %p146
      $region30: #{resblock_forward.1} parent=11 // pred_check_branch
        %243 = sbr.rel (%p241) target = $region32
      $region31: #{resblock_forward.1} parent=11 // pred_region
        _
      $region32: #{resblock_forward.1} parent=11 // pred_fallthru
        _
      // Predicated region
      $region33: #{resblock_forward.1} parent=11 // pred_check
        %p244 = pneg %p167
      $region34: #{resblock_forward.1} parent=11 // pred_check_branch
        %246 = sbr.rel (%p244) target = $region36
      $region35: #{resblock_forward.1} parent=11 // pred_region
        _
      $region36: #{resblock_forward.1} parent=11 // pred_fallthru
        _
      // Predicated region
      $region37: #{resblock_forward.1} parent=11 // pred_check
        %p247 = pneg %p188
      $region38: #{resblock_forward.1} parent=11 // pred_check_branch
        %249 = sbr.rel (%p247) target = $region40
      $region39: #{resblock_forward.1} parent=11 // pred_region
        _
      $region40: #{resblock_forward.1} parent=11 // pred_fallthru
        _
    $region12: #{resblock_forward.1} parent=5 // pred_fallthru
      _
    %p250 = scmp.lt.s32.totalorder %s15, 2
    // Predicated region
    $region41: #{resblock_forward.1} parent=5 // pred_check
      %p251 = pneg %p250
    $region42: #{resblock_forward.1} parent=5 // pred_check_branch
      %253 = sbr.rel (%p251) target = $region44
    $region43: #{resblock_forward.1} parent=5 // pred_region
      // Predicated region
      $region45: #{resblock_forward.1} parent=43 // pred_check
        %p254 = pneg %p35
      $region46: #{resblock_forward.1} parent=43 // pred_check_branch
        %256 = sbr.rel (%p254) target = $region48
      $region47: #{resblock_forward.1} parent=43 // pred_region
        %s257 = smul.u32 8, %s15
        %p258 = scmp.lt.s32.totalorder %s257, 15
        %s259 = scalar_select %p258, %s257, 15
        %s260 = smul.addr %s259, 8
        %s261 = smul.addr %s260, 8
        %s262 = scalar_lea.vmem %s0, %s261
        %s263 = smul.u32 8, %s15
      $region48: #{resblock_forward.1} parent=43 // pred_fallthru
        _
    $region44: #{resblock_forward.1} parent=5 // pred_fallthru
      _
    %p264 = scmp.le.s32.totalorder 1, %s15
    %p265 = scmp.lt.s32.totalorder %s15, 3
    %p266 = pnand %p264, %p265
    %p267 = pneg %p266
    // Predicated region
    $region49: #{resblock_forward.1} parent=5 // pred_check
      _
    $region50: #{resblock_forward.1} parent=5 // pred_check_branch
      %269 = sbr.rel (%p266) target = $region52
    $region51: #{resblock_forward.1} parent=5 // pred_region
      %s270 = ssub.s32 %s15, 1
      %s271 = smul.u32 8, %s20
      %p272 = scmp.lt.s32.totalorder %s271, 15
      %s273 = scalar_select %p272, %s271, 15
      %s274 = smul.addr %s273, 8
      %s275 = smul.addr %s274, 8
      %s276 = scalar_lea.vmem %s0, %s275
      %p277 = pneg %p41
      %p278 = pneg %p38
      %p279 = pneg %p62
      %p280 = pneg %p59
      %p281 = pneg %p83
      %p282 = pneg %p80
      %p283 = pneg %p104
      %p284 = pneg %p101
      %p285 = pneg %p125
      %p286 = pneg %p122
      %p287 = pneg %p146
      %p288 = pneg %p143
      %p289 = pneg %p167
      %p290 = pneg %p164
      %p291 = pneg %p188
      %p292 = pneg %p185
      %p293 = pneg %p214
      %p294 = pneg %p211
      %s295 = smul.u32 8, %s20
      %p296 = scmp.lt.s32.totalorder %s295, 15
      %s297 = scalar_select %p296, %s295, 15
      %s298 = smul.addr %s297, 8
      %s299 = smul.addr %s298, 8
      %s300 = scalar_lea.vmem %s8, %s299
      %s301 = smul.u32 8, %s20
      %p302 = scmp.lt.s32.totalorder %s301, 15
      %s303 = scalar_select %p302, %s301, 15
      %s304 = smul.addr %s303, 8
      %s305 = smul.addr %s304, 8
      %s306 = scalar_lea.vmem %s0, %s305
      %s307 = smul.u32 8, %s20
      %s308 = smul.u32 8, %s20
      %p309 = scmp.lt.s32.totalorder %s308, 15
      %s310 = scalar_select %p309, %s308, 15
      %s311 = smul.addr %s310, 8
      %s312 = smul.addr %s311, 8
      %s313 = scalar_lea.vmem %s8, %s312
      %s314 = smul.u32 8, %s20
      %v315 = vlaneseq
      %vm316 = vcmp.ge.s32.totalorder %v315, 0
      %vm317 = vcmp.lt.s32.totalorder %v315, 512
      %vm318 = vmand %vm316, %vm317
      %319 = vst.msk [vmem:[#allocation2] ss:$8 sm:$0xf] %vm318, 0.0
      %320 = vst.msk [vmem:[#allocation2] ss:$8 sm:$0x0] %vm318, 0.0
      %s321 = scalar_lea.vmem [#allocation2], 96
      %322 = vst.msk [vmem:[%s321] ss:$8 sm:$0xf] %vm318, 0.0
      %323 = vst.msk [vmem:[%s321] ss:$8 sm:$0x0] %vm318, 0.0
      %s324 = scalar_lea.vmem [#allocation2], 192
      %325 = vst.msk [vmem:[%s324] ss:$8 sm:$0xf] %vm318, 0.0
      %326 = vst.msk [vmem:[%s324] ss:$8 sm:$0x0] %vm318, 0.0
      %s327 = scalar_lea.vmem [#allocation2], 288
      %328 = vst.msk [vmem:[%s327] ss:$8 sm:$0xf] %vm318, 0.0
      %329 = vst.msk [vmem:[%s327] ss:$8 sm:$0x0] %vm318, 0.0
      %s330 = scalar_lea.vmem [#allocation2], 384
      %331 = vst.msk [vmem:[%s330] ss:$8 sm:$0xf] %vm318, 0.0
      %332 = vst.msk [vmem:[%s330] ss:$8 sm:$0x0] %vm318, 0.0
      %s333 = scalar_lea.vmem [#allocation2], 480
      %334 = vst.msk [vmem:[%s333] ss:$8 sm:$0xf] %vm318, 0.0
      %335 = vst.msk [vmem:[%s333] ss:$8 sm:$0x0] %vm318, 0.0
      %s336 = scalar_lea.vmem [#allocation2], 576
      %337 = vst.msk [vmem:[%s336] ss:$8 sm:$0xf] %vm318, 0.0
      %338 = vst.msk [vmem:[%s336] ss:$8 sm:$0x0] %vm318, 0.0
      %s339 = scalar_lea.vmem [#allocation2], 672
      %340 = vst.msk [vmem:[%s339] ss:$8 sm:$0xf] %vm318, 0.0
      %341 = vst.msk [vmem:[%s339] ss:$8 sm:$0x0] %vm318, 0.0
      %s342 = scalar_lea.vmem [#allocation2], 65
      %343 = vst.msk [vmem:[%s342] ss:$8 sm:$0xf] %vm318, 0.0
      %344 = vst.msk [vmem:[%s342] ss:$8 sm:$0x0] %vm318, 0.0
      %s345 = scalar_lea.vmem [#allocation2], 161
      %346 = vst.msk [vmem:[%s345] ss:$8 sm:$0xf] %vm318, 0.0
      %347 = vst.msk [vmem:[%s345] ss:$8 sm:$0x0] %vm318, 0.0
      %s348 = scalar_lea.vmem [#allocation2], 257
      %349 = vst.msk [vmem:[%s348] ss:$8 sm:$0xf] %vm318, 0.0
      %350 = vst.msk [vmem:[%s348] ss:$8 sm:$0x0] %vm318, 0.0
      %s351 = scalar_lea.vmem [#allocation2], 353
      %352 = vst.msk [vmem:[%s351] ss:$8 sm:$0xf] %vm318, 0.0
      %353 = vst.msk [vmem:[%s351] ss:$8 sm:$0x0] %vm318, 0.0
      %s354 = scalar_lea.vmem [#allocation2], 449
      %355 = vst.msk [vmem:[%s354] ss:$8 sm:$0xf] %vm318, 0.0
      %356 = vst.msk [vmem:[%s354] ss:$8 sm:$0x0] %vm318, 0.0
      %s357 = scalar_lea.vmem [#allocation2], 545
      %358 = vst.msk [vmem:[%s357] ss:$8 sm:$0xf] %vm318, 0.0
      %359 = vst.msk [vmem:[%s357] ss:$8 sm:$0x0] %vm318, 0.0
      %s360 = scalar_lea.vmem [#allocation2], 641
      %361 = vst.msk [vmem:[%s360] ss:$8 sm:$0xf] %vm318, 0.0
      %362 = vst.msk [vmem:[%s360] ss:$8 sm:$0x0] %vm318, 0.0
      %s363 = scalar_lea.vmem [#allocation2], 737
      %364 = vst.msk [vmem:[%s363] ss:$8 sm:$0xf] %vm318, 0.0
      %365 = vst.msk [vmem:[%s363] ss:$8 sm:$0x0] %vm318, 0.0
      %v366 = vld [vmem:[%s306] sm:$0xff]
      %v367 = vld [vmem:[%s306 + $0x8] sm:$0xff]
      %v368 = vld [vmem:[%s306 + $0x10] sm:$0xff]
      %v369 = vld [vmem:[%s306 + $0x18] sm:$0xff]
      %v370 = vld [vmem:[%s306 + $0x20] sm:$0xff]
      %v371 = vld [vmem:[%s306 + $0x28] sm:$0xff]
      %v372 = vld [vmem:[%s306 + $0x30] sm:$0xff]
      %v373 = vld [vmem:[%s306 + $0x38] sm:$0xff]
      %v374 = vld [vmem:[%s306 + $0x40] sm:$0xff]
      %v375 = vld [vmem:[%s306 + $0x48] sm:$0xff]
      %v376 = vld [vmem:[%s306 + $0x50] sm:$0xff]
      %v377 = vld [vmem:[%s306 + $0x58] sm:$0xff]
      %v378 = vld [vmem:[%s306 + $0x60] sm:$0xff]
      %v379 = vld [vmem:[%s306 + $0x68] sm:$0xff]
      %v380 = vld [vmem:[%s306 + $0x70] sm:$0xff]
      %v381 = vld [vmem:[%s306 + $0x78] sm:$0xff]
      %v382 = vld [vmem:[%s306 + $0x80] sm:$0xff]
      %v383 = vld [vmem:[%s306 + $0x88] sm:$0xff]
      %v384 = vld [vmem:[%s306 + $0x90] sm:$0xff]
      %v385 = vld [vmem:[%s306 + $0x98] sm:$0xff]
      %v386 = vld [vmem:[%s306 + $0xa0] sm:$0xff]
      %v387 = vld [vmem:[%s306 + $0xa8] sm:$0xff]
      %v388 = vld [vmem:[%s306 + $0xb0] sm:$0xff]
      %v389 = vld [vmem:[%s306 + $0xb8] sm:$0xff]
      %v390 = vld [vmem:[%s306 + $0xc0] sm:$0xff]
      %v391 = vld [vmem:[%s306 + $0xc8] sm:$0xff]
      %v392 = vld [vmem:[%s306 + $0xd0] sm:$0xff]
      %v393 = vld [vmem:[%s306 + $0xd8] sm:$0xff]
      %v394 = vld [vmem:[%s306 + $0xe0] sm:$0xff]
      %v395 = vld [vmem:[%s306 + $0xe8] sm:$0xff]
      %v396 = vld [vmem:[%s306 + $0xf0] sm:$0xff]
      %v397 = vld [vmem:[%s306 + $0xf8] sm:$0xff]
      %v398 = vld [vmem:[%s306 + $0x100] sm:$0xff]
      %v399 = vld [vmem:[%s306 + $0x108] sm:$0xff]
      %v400 = vld [vmem:[%s306 + $0x110] sm:$0xff]
      %v401 = vld [vmem:[%s306 + $0x118] sm:$0xff]
      %v402 = vld [vmem:[%s306 + $0x120] sm:$0xff]
      %v403 = vld [vmem:[%s306 + $0x128] sm:$0xff]
      %v404 = vld [vmem:[%s306 + $0x130] sm:$0xff]
      %v405 = vld [vmem:[%s306 + $0x138] sm:$0xff]
      %v406 = vld [vmem:[%s306 + $0x140] sm:$0xff]
      %v407 = vld [vmem:[%s306 + $0x148] sm:$0xff]
      %v408 = vld [vmem:[%s306 + $0x150] sm:$0xff]
      %v409 = vld [vmem:[%s306 + $0x158] sm:$0xff]
      %v410 = vld [vmem:[%s306 + $0x160] sm:$0xff]
      %v411 = vld [vmem:[%s306 + $0x168] sm:$0xff]
      %v412 = vld [vmem:[%s306 + $0x170] sm:$0xff]
      %v413 = vld [vmem:[%s306 + $0x178] sm:$0xff]
      %v414 = vld [vmem:[%s306 + $0x180] sm:$0xff]
      %v415 = vld [vmem:[%s306 + $0x188] sm:$0xff]
      %v416 = vld [vmem:[%s306 + $0x190] sm:$0xff]
      %v417 = vld [vmem:[%s306 + $0x198] sm:$0xff]
      %v418 = vld [vmem:[%s306 + $0x1a0] sm:$0xff]
      %v419 = vld [vmem:[%s306 + $0x1a8] sm:$0xff]
      %v420 = vld [vmem:[%s306 + $0x1b0] sm:$0xff]
      %v421 = vld [vmem:[%s306 + $0x1b8] sm:$0xff]
      %v422 = vld [vmem:[%s306 + $0x1c0] sm:$0xff]
      %v423 = vld [vmem:[%s306 + $0x1c8] sm:$0xff]
      %v424 = vld [vmem:[%s306 + $0x1d0] sm:$0xff]
      %v425 = vld [vmem:[%s306 + $0x1d8] sm:$0xff]
      %v426 = vld [vmem:[%s306 + $0x1e0] sm:$0xff]
      %v427 = vld [vmem:[%s306 + $0x1e8] sm:$0xff]
      %v428 = vld [vmem:[%s306 + $0x1f0] sm:$0xff]
      %v429 = vld [vmem:[%s306 + $0x1f8] sm:$0xff]
      %vm494 = vcmask 1040384
      %v495 = vrot.slane %v366, 7
      %v496 = vrot.slane %v367, 7
      %v497 = vrot.slane %v368, 7
      %v498 = vrot.slane %v369, 7
      %v499 = vrot.slane %v370, 7
      %v500 = vsel %vm494, %v495, %v499
      %v501 = vrot.slane %v371, 7
      %v502 = vsel %vm494, %v496, %v501
      %v503 = vrot.slane %v372, 7
      %v504 = vsel %vm494, %v497, %v503
      %v505 = vrot.slane %v373, 7
      %v506 = vsel %vm494, %v498, %v505
      %v507 = vrot.slane %v374, 7
      %v508 = vrot.slane %v375, 7
      %v509 = vrot.slane %v376, 7
      %v510 = vrot.slane %v377, 7
      %v511 = vrot.slane %v378, 7
      %v512 = vsel %vm494, %v507, %v511
      %v513 = vrot.slane %v379, 7
      %v514 = vsel %vm494, %v508, %v513
      %v515 = vrot.slane %v380, 7
      %v516 = vsel %vm494, %v509, %v515
      %v517 = vrot.slane %v381, 7
      %v518 = vsel %vm494, %v510, %v517
      %v519 = vrot.slane %v382, 7
      %v520 = vrot.slane %v383, 7
      %v521 = vrot.slane %v384, 7
      %v522 = vrot.slane %v385, 7
      %v523 = vrot.slane %v386, 7
      %v524 = vsel %vm494, %v519, %v523
      %v525 = vrot.slane %v387, 7
      %v526 = vsel %vm494, %v520, %v525
      %v527 = vrot.slane %v388, 7
      %v528 = vsel %vm494, %v521, %v527
      %v529 = vrot.slane %v389, 7
      %v530 = vsel %vm494, %v522, %v529
      %v531 = vrot.slane %v390, 7
      %v532 = vrot.slane %v391, 7
      %v533 = vrot.slane %v392, 7
      %v534 = vrot.slane %v393, 7
      %v535 = vrot.slane %v394, 7
      %v536 = vsel %vm494, %v531, %v535
      %v537 = vrot.slane %v395, 7
      %v538 = vsel %vm494, %v532, %v537
      %v539 = vrot.slane %v396, 7
      %v540 = vsel %vm494, %v533, %v539
      %v541 = vrot.slane %v397, 7
      %v542 = vsel %vm494, %v534, %v541
      %v543 = vrot.slane %v398, 7
      %v544 = vrot.slane %v399, 7
      %v545 = vrot.slane %v400, 7
      %v546 = vrot.slane %v401, 7
      %v547 = vrot.slane %v402, 7
      %v548 = vsel %vm494, %v543, %v547
      %v549 = vrot.slane %v403, 7
      %v550 = vsel %vm494, %v544, %v549
      %v551 = vrot.slane %v404, 7
      %v552 = vsel %vm494, %v545, %v551
      %v553 = vrot.slane %v405, 7
      %v554 = vsel %vm494, %v546, %v553
      %v555 = vrot.slane %v406, 7
      %v556 = vrot.slane %v407, 7
      %v557 = vrot.slane %v408, 7
      %v558 = vrot.slane %v409, 7
      %v559 = vrot.slane %v410, 7
      %v560 = vsel %vm494, %v555, %v559
      %v561 = vrot.slane %v411, 7
      %v562 = vsel %vm494, %v556, %v561
      %v563 = vrot.slane %v412, 7
      %v564 = vsel %vm494, %v557, %v563
      %v565 = vrot.slane %v413, 7
      %v566 = vsel %vm494, %v558, %v565
      %v567 = vrot.slane %v414, 7
      %v568 = vrot.slane %v415, 7
      %v569 = vrot.slane %v416, 7
      %v570 = vrot.slane %v417, 7
      %v571 = vrot.slane %v418, 7
      %v572 = vsel %vm494, %v567, %v571
      %v573 = vrot.slane %v419, 7
      %v574 = vsel %vm494, %v568, %v573
      %v575 = vrot.slane %v420, 7
      %v576 = vsel %vm494, %v569, %v575
      %v577 = vrot.slane %v421, 7
      %v578 = vsel %vm494, %v570, %v577
      %v579 = vrot.slane %v422, 7
      %v580 = vrot.slane %v423, 7
      %v581 = vrot.slane %v424, 7
      %v582 = vrot.slane %v425, 7
      %v583 = vrot.slane %v426, 7
      %v584 = vsel %vm494, %v579, %v583
      %v585 = vrot.slane %v427, 7
      %v586 = vsel %vm494, %v580, %v585
      %v587 = vrot.slane %v428, 7
      %v588 = vsel %vm494, %v581, %v587
      %v589 = vrot.slane %v429, 7
      %v590 = vsel %vm494, %v582, %v589
      %687 = vst [vmem:[#allocation2] sm:$0xfe] %v495
      %688 = vst [vmem:[#allocation2 + $0x8] sm:$0xfe] %v496
      %689 = vst [vmem:[#allocation2 + $0x10] sm:$0xfe] %v497
      %690 = vst [vmem:[#allocation2 + $0x18] sm:$0xfe] %v498
      %691 = vst [vmem:[#allocation2 + $0x20] sm:$0xff] %v500
      %692 = vst [vmem:[#allocation2 + $0x28] sm:$0xff] %v502
      %693 = vst [vmem:[#allocation2 + $0x30] sm:$0xff] %v504
      %694 = vst [vmem:[#allocation2 + $0x38] sm:$0xff] %v506
      %695 = vst [vmem:[#allocation2 + $0x40] sm:$0x1] %v499
      %696 = vst [vmem:[#allocation2 + $0x48] sm:$0x1] %v501
      %697 = vst [vmem:[#allocation2 + $0x50] sm:$0x1] %v503
      %698 = vst [vmem:[#allocation2 + $0x58] sm:$0x1] %v505
      %699 = vst [vmem:[#allocation2 + $0x60] sm:$0xfe] %v507
      %700 = vst [vmem:[#allocation2 + $0x68] sm:$0xfe] %v508
      %701 = vst [vmem:[#allocation2 + $0x70] sm:$0xfe] %v509
      %702 = vst [vmem:[#allocation2 + $0x78] sm:$0xfe] %v510
      %703 = vst [vmem:[#allocation2 + $0x80] sm:$0xff] %v512
      %704 = vst [vmem:[#allocation2 + $0x88] sm:$0xff] %v514
      %705 = vst [vmem:[#allocation2 + $0x90] sm:$0xff] %v516
      %706 = vst [vmem:[#allocation2 + $0x98] sm:$0xff] %v518
      %707 = vst [vmem:[#allocation2 + $0xa0] sm:$0x1] %v511
      %708 = vst [vmem:[#allocation2 + $0xa8] sm:$0x1] %v513
      %709 = vst [vmem:[#allocation2 + $0xb0] sm:$0x1] %v515
      %710 = vst [vmem:[#allocation2 + $0xb8] sm:$0x1] %v517
      %711 = vst [vmem:[#allocation2 + $0xc0] sm:$0xfe] %v519
      %712 = vst [vmem:[#allocation2 + $0xc8] sm:$0xfe] %v520
      %713 = vst [vmem:[#allocation2 + $0xd0] sm:$0xfe] %v521
      %714 = vst [vmem:[#allocation2 + $0xd8] sm:$0xfe] %v522
      %715 = vst [vmem:[#allocation2 + $0xe0] sm:$0xff] %v524
      %716 = vst [vmem:[#allocation2 + $0xe8] sm:$0xff] %v526
      %717 = vst [vmem:[#allocation2 + $0xf0] sm:$0xff] %v528
      %718 = vst [vmem:[#allocation2 + $0xf8] sm:$0xff] %v530
      %719 = vst [vmem:[#allocation2 + $0x100] sm:$0x1] %v523
      %720 = vst [vmem:[#allocation2 + $0x108] sm:$0x1] %v525
      %721 = vst [vmem:[#allocation2 + $0x110] sm:$0x1] %v527
      %722 = vst [vmem:[#allocation2 + $0x118] sm:$0x1] %v529
      %723 = vst [vmem:[#allocation2 + $0x120] sm:$0xfe] %v531
      %724 = vst [vmem:[#allocation2 + $0x128] sm:$0xfe] %v532
      %725 = vst [vmem:[#allocation2 + $0x130] sm:$0xfe] %v533
      %726 = vst [vmem:[#allocation2 + $0x138] sm:$0xfe] %v534
      %727 = vst [vmem:[#allocation2 + $0x140] sm:$0xff] %v536
      %728 = vst [vmem:[#allocation2 + $0x148] sm:$0xff] %v538
      %729 = vst [vmem:[#allocation2 + $0x150] sm:$0xff] %v540
      %730 = vst [vmem:[#allocation2 + $0x158] sm:$0xff] %v542
      %731 = vst [vmem:[#allocation2 + $0x160] sm:$0x1] %v535
      %732 = vst [vmem:[#allocation2 + $0x168] sm:$0x1] %v537
      %733 = vst [vmem:[#allocation2 + $0x170] sm:$0x1] %v539
      %734 = vst [vmem:[#allocation2 + $0x178] sm:$0x1] %v541
      %735 = vst [vmem:[#allocation2 + $0x180] sm:$0xfe] %v543
      %736 = vst [vmem:[#allocation2 + $0x188] sm:$0xfe] %v544
      %737 = vst [vmem:[#allocation2 + $0x190] sm:$0xfe] %v545
      %738 = vst [vmem:[#allocation2 + $0x198] sm:$0xfe] %v546
      %739 = vst [vmem:[#allocation2 + $0x1a0] sm:$0xff] %v548
      %740 = vst [vmem:[#allocation2 + $0x1a8] sm:$0xff] %v550
      %741 = vst [vmem:[#allocation2 + $0x1b0] sm:$0xff] %v552
      %742 = vst [vmem:[#allocation2 + $0x1b8] sm:$0xff] %v554
      %743 = vst [vmem:[#allocation2 + $0x1c0] sm:$0x1] %v547
      %744 = vst [vmem:[#allocation2 + $0x1c8] sm:$0x1] %v549
      %745 = vst [vmem:[#allocation2 + $0x1d0] sm:$0x1] %v551
      %746 = vst [vmem:[#allocation2 + $0x1d8] sm:$0x1] %v553
      %747 = vst [vmem:[#allocation2 + $0x1e0] sm:$0xfe] %v555
      %748 = vst [vmem:[#allocation2 + $0x1e8] sm:$0xfe] %v556
      %749 = vst [vmem:[#allocation2 + $0x1f0] sm:$0xfe] %v557
      %750 = vst [vmem:[#allocation2 + $0x1f8] sm:$0xfe] %v558
      %751 = vst [vmem:[#allocation2 + $0x200] sm:$0xff] %v560
      %752 = vst [vmem:[#allocation2 + $0x208] sm:$0xff] %v562
      %753 = vst [vmem:[#allocation2 + $0x210] sm:$0xff] %v564
      %754 = vst [vmem:[#allocation2 + $0x218] sm:$0xff] %v566
      %755 = vst [vmem:[#allocation2 + $0x220] sm:$0x1] %v559
      %756 = vst [vmem:[#allocation2 + $0x228] sm:$0x1] %v561
      %757 = vst [vmem:[#allocation2 + $0x230] sm:$0x1] %v563
      %758 = vst [vmem:[#allocation2 + $0x238] sm:$0x1] %v565
      %759 = vst [vmem:[#allocation2 + $0x240] sm:$0xfe] %v567
      %760 = vst [vmem:[#allocation2 + $0x248] sm:$0xfe] %v568
      %761 = vst [vmem:[#allocation2 + $0x250] sm:$0xfe] %v569
      %762 = vst [vmem:[#allocation2 + $0x258] sm:$0xfe] %v570
      %763 = vst [vmem:[#allocation2 + $0x260] sm:$0xff] %v572
      %764 = vst [vmem:[#allocation2 + $0x268] sm:$0xff] %v574
      %765 = vst [vmem:[#allocation2 + $0x270] sm:$0xff] %v576
      %766 = vst [vmem:[#allocation2 + $0x278] sm:$0xff] %v578
      %767 = vst [vmem:[#allocation2 + $0x280] sm:$0x1] %v571
      %768 = vst [vmem:[#allocation2 + $0x288] sm:$0x1] %v573
      %769 = vst [vmem:[#allocation2 + $0x290] sm:$0x1] %v575
      %770 = vst [vmem:[#allocation2 + $0x298] sm:$0x1] %v577
      %771 = vst [vmem:[#allocation2 + $0x2a0] sm:$0xfe] %v579
      %772 = vst [vmem:[#allocation2 + $0x2a8] sm:$0xfe] %v580
      %773 = vst [vmem:[#allocation2 + $0x2b0] sm:$0xfe] %v581
      %774 = vst [vmem:[#allocation2 + $0x2b8] sm:$0xfe] %v582
      %775 = vst [vmem:[#allocation2 + $0x2c0] sm:$0xff] %v584
      %776 = vst [vmem:[#allocation2 + $0x2c8] sm:$0xff] %v586
      %777 = vst [vmem:[#allocation2 + $0x2d0] sm:$0xff] %v588
      %778 = vst [vmem:[#allocation2 + $0x2d8] sm:$0xff] %v590
      %779 = vst [vmem:[#allocation2 + $0x2e0] sm:$0x1] %v583
      %780 = vst [vmem:[#allocation2 + $0x2e8] sm:$0x1] %v585
      %781 = vst [vmem:[#allocation2 + $0x2f0] sm:$0x1] %v587
      %782 = vst [vmem:[#allocation2 + $0x2f8] sm:$0x1] %v589
      %v783 = vld [vmem:[#allocation2] sm:$0xff]
      %v784 = vld [vmem:[#allocation2 + $0x8] sm:$0xff]
      %v785 = vld [vmem:[#allocation2 + $0x10] sm:$0xff]
      %v786 = vld [vmem:[#allocation2 + $0x18] sm:$0xff]
      %v787 = vld [vmem:[#allocation2 + $0x20] sm:$0xff]
      %v788 = vld [vmem:[#allocation2 + $0x28] sm:$0xff]
      %v789 = vld [vmem:[#allocation2 + $0x30] sm:$0xff]
      %v790 = vld [vmem:[#allocation2 + $0x38] sm:$0xff]
      %v791 = vld [vmem:[#allocation2 + $0x60] sm:$0xff]
      %v792 = vld [vmem:[#allocation2 + $0x68] sm:$0xff]
      %v793 = vld [vmem:[#allocation2 + $0x70] sm:$0xff]
      %v794 = vld [vmem:[#allocation2 + $0x78] sm:$0xff]
      %v795 = vld [vmem:[#allocation2 + $0x80] sm:$0xff]
      %v796 = vld [vmem:[#allocation2 + $0x88] sm:$0xff]
      %v797 = vld [vmem:[#allocation2 + $0x90] sm:$0xff]
      %v798 = vld [vmem:[#allocation2 + $0x98] sm:$0xff]
      %v799 = vld [vmem:[#allocation2 + $0xc0] sm:$0xff]
      %v800 = vld [vmem:[#allocation2 + $0xc8] sm:$0xff]
      %v801 = vld [vmem:[#allocation2 + $0xd0] sm:$0xff]
      %v802 = vld [vmem:[#allocation2 + $0xd8] sm:$0xff]
      %v803 = vld [vmem:[#allocation2 + $0xe0] sm:$0xff]
      %v804 = vld [vmem:[#allocation2 + $0xe8] sm:$0xff]
      %v805 = vld [vmem:[#allocation2 + $0xf0] sm:$0xff]
      %v806 = vld [vmem:[#allocation2 + $0xf8] sm:$0xff]
      %v807 = vld [vmem:[#allocation2 + $0x120] sm:$0xff]
      %v808 = vld [vmem:[#allocation2 + $0x128] sm:$0xff]
      %v809 = vld [vmem:[#allocation2 + $0x130] sm:$0xff]
      %v810 = vld [vmem:[#allocation2 + $0x138] sm:$0xff]
      %v811 = vld [vmem:[#allocation2 + $0x140] sm:$0xff]
      %v812 = vld [vmem:[#allocation2 + $0x148] sm:$0xff]
      %v813 = vld [vmem:[#allocation2 + $0x150] sm:$0xff]
      %v814 = vld [vmem:[#allocation2 + $0x158] sm:$0xff]
      %v815 = vld [vmem:[#allocation2 + $0x180] sm:$0xff]
      %v816 = vld [vmem:[#allocation2 + $0x188] sm:$0xff]
      %v817 = vld [vmem:[#allocation2 + $0x190] sm:$0xff]
      %v818 = vld [vmem:[#allocation2 + $0x198] sm:$0xff]
      %v819 = vld [vmem:[#allocation2 + $0x1a0] sm:$0xff]
      %v820 = vld [vmem:[#allocation2 + $0x1a8] sm:$0xff]
      %v821 = vld [vmem:[#allocation2 + $0x1b0] sm:$0xff]
      %v822 = vld [vmem:[#allocation2 + $0x1b8] sm:$0xff]
      %v823 = vld [vmem:[#allocation2 + $0x1e0] sm:$0xff]
      %v824 = vld [vmem:[#allocation2 + $0x1e8] sm:$0xff]
      %v825 = vld [vmem:[#allocation2 + $0x1f0] sm:$0xff]
      %v826 = vld [vmem:[#allocation2 + $0x1f8] sm:$0xff]
      %v827 = vld [vmem:[#allocation2 + $0x200] sm:$0xff]
      %v828 = vld [vmem:[#allocation2 + $0x208] sm:$0xff]
      %v829 = vld [vmem:[#allocation2 + $0x210] sm:$0xff]
      %v830 = vld [vmem:[#allocation2 + $0x218] sm:$0xff]
      %v831 = vld [vmem:[#allocation2 + $0x240] sm:$0xff]
      %v832 = vld [vmem:[#allocation2 + $0x248] sm:$0xff]
      %v833 = vld [vmem:[#allocation2 + $0x250] sm:$0xff]
      %v834 = vld [vmem:[#allocation2 + $0x258] sm:$0xff]
      %v835 = vld [vmem:[#allocation2 + $0x260] sm:$0xff]
      %v836 = vld [vmem:[#allocation2 + $0x268] sm:$0xff]
      %v837 = vld [vmem:[#allocation2 + $0x270] sm:$0xff]
      %v838 = vld [vmem:[#allocation2 + $0x278] sm:$0xff]
      %v839 = vld [vmem:[#allocation2 + $0x2a0] sm:$0xff]
      %v840 = vld [vmem:[#allocation2 + $0x2a8] sm:$0xff]
      %v841 = vld [vmem:[#allocation2 + $0x2b0] sm:$0xff]
      %v842 = vld [vmem:[#allocation2 + $0x2b8] sm:$0xff]
      %v843 = vld [vmem:[#allocation2 + $0x2c0] sm:$0xff]
      %v844 = vld [vmem:[#allocation2 + $0x2c8] sm:$0xff]
      %v845 = vld [vmem:[#allocation2 + $0x2d0] sm:$0xff]
      %v846 = vld [vmem:[#allocation2 + $0x2d8] sm:$0xff]
      %v847 = vpack.c.bf16 %v787, %v783
      %v848 = vpack.c.bf16 %v788, %v784
      %v849 = vpack.c.bf16 %v789, %v785
      %v850 = vpack.c.bf16 %v790, %v786
      %v851 = vpack.c.bf16 %v795, %v791
      %v852 = vpack.c.bf16 %v796, %v792
      %v853 = vpack.c.bf16 %v797, %v793
      %v854 = vpack.c.bf16 %v798, %v794
      %v855 = vpack.c.bf16 %v803, %v799
      %v856 = vpack.c.bf16 %v804, %v800
      %v857 = vpack.c.bf16 %v805, %v801
      %v858 = vpack.c.bf16 %v806, %v802
      %v859 = vpack.c.bf16 %v811, %v807
      %v860 = vpack.c.bf16 %v812, %v808
      %v861 = vpack.c.bf16 %v813, %v809
      %v862 = vpack.c.bf16 %v814, %v810
      %v863 = vpack.c.bf16 %v819, %v815
      %v864 = vpack.c.bf16 %v820, %v816
      %v865 = vpack.c.bf16 %v821, %v817
      %v866 = vpack.c.bf16 %v822, %v818
      %v867 = vpack.c.bf16 %v827, %v823
      %v868 = vpack.c.bf16 %v828, %v824
      %v869 = vpack.c.bf16 %v829, %v825
      %v870 = vpack.c.bf16 %v830, %v826
      %v871 = vpack.c.bf16 %v835, %v831
      %v872 = vpack.c.bf16 %v836, %v832
      %v873 = vpack.c.bf16 %v837, %v833
      %v874 = vpack.c.bf16 %v838, %v834
      %v875 = vpack.c.bf16 %v843, %v839
      %v876 = vpack.c.bf16 %v844, %v840
      %v877 = vpack.c.bf16 %v845, %v841
      %v878 = vpack.c.bf16 %v846, %v842
      %v879 = vld [vmem:[%s1] sm:$0xff]
      %v880 = vld [vmem:[%s1 + $0x8] sm:$0xff]
      %v881 = vld [vmem:[%s1 + $0x10] sm:$0xff]
      %v882 = vld [vmem:[%s1 + $0x18] sm:$0xff]
      %v883 = vld [vmem:[%s1 + $0x20] sm:$0xff]
      %v884 = vld [vmem:[%s1 + $0x28] sm:$0xff]
      %v885 = vld [vmem:[%s1 + $0x30] sm:$0xff]
      %v886 = vld [vmem:[%s1 + $0x38] sm:$0xff]
      %v887 = vld [vmem:[%s1 + $0x40] sm:$0xff]
      %v888 = vld [vmem:[%s1 + $0x48] sm:$0xff]
      %v889 = vld [vmem:[%s1 + $0x50] sm:$0xff]
      %v890 = vld [vmem:[%s1 + $0x58] sm:$0xff]
      %v891 = vld [vmem:[%s1 + $0x60] sm:$0xff]
      %v892 = vld [vmem:[%s1 + $0x68] sm:$0xff]
      %v893 = vld [vmem:[%s1 + $0x70] sm:$0xff]
      %v894 = vld [vmem:[%s1 + $0x78] sm:$0xff]
      %v895 = vld [vmem:[%s1 + $0x80] sm:$0xff]
      %v896 = vld [vmem:[%s1 + $0x88] sm:$0xff]
      %v897 = vld [vmem:[%s1 + $0x90] sm:$0xff]
      %v898 = vld [vmem:[%s1 + $0x98] sm:$0xff]
      %v899 = vld [vmem:[%s1 + $0xa0] sm:$0xff]
      %v900 = vld [vmem:[%s1 + $0xa8] sm:$0xff]
      %v901 = vld [vmem:[%s1 + $0xb0] sm:$0xff]
      %v902 = vld [vmem:[%s1 + $0xb8] sm:$0xff]
      %v903 = vld [vmem:[%s1 + $0xc0] sm:$0xff]
      %v904 = vld [vmem:[%s1 + $0xc8] sm:$0xff]
      %v905 = vld [vmem:[%s1 + $0xd0] sm:$0xff]
      %v906 = vld [vmem:[%s1 + $0xd8] sm:$0xff]
      %v907 = vld [vmem:[%s1 + $0xe0] sm:$0xff]
      %v908 = vld [vmem:[%s1 + $0xe8] sm:$0xff]
      %v909 = vld [vmem:[%s1 + $0xf0] sm:$0xff]
      %v910 = vld [vmem:[%s1 + $0xf8] sm:$0xff]
      %v911 = vld [vmem:[%s1 + $0x100] sm:$0xff]
      %v912 = vld [vmem:[%s1 + $0x108] sm:$0xff]
      %v913 = vld [vmem:[%s1 + $0x110] sm:$0xff]
      %v914 = vld [vmem:[%s1 + $0x118] sm:$0xff]
      %v915 = vld [vmem:[%s1 + $0x120] sm:$0xff]
      %v916 = vld [vmem:[%s1 + $0x128] sm:$0xff]
      %v917 = vld [vmem:[%s1 + $0x130] sm:$0xff]
      %v918 = vld [vmem:[%s1 + $0x138] sm:$0xff]
      %v919 = vld [vmem:[%s1 + $0x140] sm:$0xff]
      %v920 = vld [vmem:[%s1 + $0x148] sm:$0xff]
      %v921 = vld [vmem:[%s1 + $0x150] sm:$0xff]
      %v922 = vld [vmem:[%s1 + $0x158] sm:$0xff]
      %v923 = vld [vmem:[%s1 + $0x160] sm:$0xff]
      %v924 = vld [vmem:[%s1 + $0x168] sm:$0xff]
      %v925 = vld [vmem:[%s1 + $0x170] sm:$0xff]
      %v926 = vld [vmem:[%s1 + $0x178] sm:$0xff]
      %v927 = vld [vmem:[%s1 + $0x180] sm:$0xff]
      %v928 = vld [vmem:[%s1 + $0x188] sm:$0xff]
      %v929 = vld [vmem:[%s1 + $0x190] sm:$0xff]
      %v930 = vld [vmem:[%s1 + $0x198] sm:$0xff]
      %v931 = vld [vmem:[%s1 + $0x1a0] sm:$0xff]
      %v932 = vld [vmem:[%s1 + $0x1a8] sm:$0xff]
      %v933 = vld [vmem:[%s1 + $0x1b0] sm:$0xff]
      %v934 = vld [vmem:[%s1 + $0x1b8] sm:$0xff]
      %v935 = vld [vmem:[%s1 + $0x1c0] sm:$0xff]
      %v936 = vld [vmem:[%s1 + $0x1c8] sm:$0xff]
      %v937 = vld [vmem:[%s1 + $0x1d0] sm:$0xff]
      %v938 = vld [vmem:[%s1 + $0x1d8] sm:$0xff]
      %v939 = vld [vmem:[%s1 + $0x1e0] sm:$0xff]
      %v940 = vld [vmem:[%s1 + $0x1e8] sm:$0xff]
      %v941 = vld [vmem:[%s1 + $0x1f0] sm:$0xff]
      %v942 = vld [vmem:[%s1 + $0x1f8] sm:$0xff]
      %v943 = vld [vmem:[%s1 + $0x200] sm:$0xff]
      %v944 = vld [vmem:[%s1 + $0x208] sm:$0xff]
      %v945 = vld [vmem:[%s1 + $0x210] sm:$0xff]
      %v946 = vld [vmem:[%s1 + $0x218] sm:$0xff]
      %v947 = vld [vmem:[%s1 + $0x220] sm:$0xff]
      %v948 = vld [vmem:[%s1 + $0x228] sm:$0xff]
      %v949 = vld [vmem:[%s1 + $0x230] sm:$0xff]
      %v950 = vld [vmem:[%s1 + $0x238] sm:$0xff]
      %v951 = vld [vmem:[%s1 + $0x240] sm:$0xff]
      %v952 = vld [vmem:[%s1 + $0x248] sm:$0xff]
      %v953 = vld [vmem:[%s1 + $0x250] sm:$0xff]
      %v954 = vld [vmem:[%s1 + $0x258] sm:$0xff]
      %v955 = vld [vmem:[%s1 + $0x260] sm:$0xff]
      %v956 = vld [vmem:[%s1 + $0x268] sm:$0xff]
      %v957 = vld [vmem:[%s1 + $0x270] sm:$0xff]
      %v958 = vld [vmem:[%s1 + $0x278] sm:$0xff]
      %v959 = vld [vmem:[%s1 + $0x280] sm:$0xff]
      %v960 = vld [vmem:[%s1 + $0x288] sm:$0xff]
      %v961 = vld [vmem:[%s1 + $0x290] sm:$0xff]
      %v962 = vld [vmem:[%s1 + $0x298] sm:$0xff]
      %v963 = vld [vmem:[%s1 + $0x2a0] sm:$0xff]
      %v964 = vld [vmem:[%s1 + $0x2a8] sm:$0xff]
      %v965 = vld [vmem:[%s1 + $0x2b0] sm:$0xff]
      %v966 = vld [vmem:[%s1 + $0x2b8] sm:$0xff]
      %v967 = vld [vmem:[%s1 + $0x2c0] sm:$0xff]
      %v968 = vld [vmem:[%s1 + $0x2c8] sm:$0xff]
      %v969 = vld [vmem:[%s1 + $0x2d0] sm:$0xff]
      %v970 = vld [vmem:[%s1 + $0x2d8] sm:$0xff]
      %v971 = vld [vmem:[%s1 + $0x2e0] sm:$0xff]
      %v972 = vld [vmem:[%s1 + $0x2e8] sm:$0xff]
      %v973 = vld [vmem:[%s1 + $0x2f0] sm:$0xff]
      %v974 = vld [vmem:[%s1 + $0x2f8] sm:$0xff]
      %v975 = vld [vmem:[%s1 + $0x300] sm:$0xff]
      %v976 = vld [vmem:[%s1 + $0x308] sm:$0xff]
      %v977 = vld [vmem:[%s1 + $0x310] sm:$0xff]
      %v978 = vld [vmem:[%s1 + $0x318] sm:$0xff]
      %v979 = vld [vmem:[%s1 + $0x320] sm:$0xff]
      %v980 = vld [vmem:[%s1 + $0x328] sm:$0xff]
      %v981 = vld [vmem:[%s1 + $0x330] sm:$0xff]
      %v982 = vld [vmem:[%s1 + $0x338] sm:$0xff]
      %v983 = vld [vmem:[%s1 + $0x340] sm:$0xff]
      %v984 = vld [vmem:[%s1 + $0x348] sm:$0xff]
      %v985 = vld [vmem:[%s1 + $0x350] sm:$0xff]
      %v986 = vld [vmem:[%s1 + $0x358] sm:$0xff]
      %v987 = vld [vmem:[%s1 + $0x360] sm:$0xff]
      %v988 = vld [vmem:[%s1 + $0x368] sm:$0xff]
      %v989 = vld [vmem:[%s1 + $0x370] sm:$0xff]
      %v990 = vld [vmem:[%s1 + $0x378] sm:$0xff]
      %v991 = vld [vmem:[%s1 + $0x380] sm:$0xff]
      %v992 = vld [vmem:[%s1 + $0x388] sm:$0xff]
      %v993 = vld [vmem:[%s1 + $0x390] sm:$0xff]
      %v994 = vld [vmem:[%s1 + $0x398] sm:$0xff]
      %v995 = vld [vmem:[%s1 + $0x3a0] sm:$0xff]
      %v996 = vld [vmem:[%s1 + $0x3a8] sm:$0xff]
      %v997 = vld [vmem:[%s1 + $0x3b0] sm:$0xff]
      %v998 = vld [vmem:[%s1 + $0x3b8] sm:$0xff]
      %v999 = vld [vmem:[%s1 + $0x3c0] sm:$0xff]
      %v1000 = vld [vmem:[%s1 + $0x3c8] sm:$0xff]
      %v1001 = vld [vmem:[%s1 + $0x3d0] sm:$0xff]
      %v1002 = vld [vmem:[%s1 + $0x3d8] sm:$0xff]
      %v1003 = vld [vmem:[%s1 + $0x3e0] sm:$0xff]
      %v1004 = vld [vmem:[%s1 + $0x3e8] sm:$0xff]
      %v1005 = vld [vmem:[%s1 + $0x3f0] sm:$0xff]
      %v1006 = vld [vmem:[%s1 + $0x3f8] sm:$0xff]
      %v1007 = vld [vmem:[#allocation2] sm:$0xfe]
      %v1008 = vld [vmem:[#allocation2 + $0x8] sm:$0xfe]
      %v1009 = vld [vmem:[#allocation2 + $0x10] sm:$0xfe]
      %v1010 = vld [vmem:[#allocation2 + $0x18] sm:$0xfe]
      %v1011 = vld [vmem:[#allocation2 + $0x40] sm:$0x1]
      %v1012 = vld [vmem:[#allocation2 + $0x48] sm:$0x1]
      %v1013 = vld [vmem:[#allocation2 + $0x50] sm:$0x1]
      %v1014 = vld [vmem:[#allocation2 + $0x58] sm:$0x1]
      %v1015 = vld [vmem:[#allocation2 + $0x60] sm:$0xfe]
      %v1016 = vld [vmem:[#allocation2 + $0x68] sm:$0xfe]
      %v1017 = vld [vmem:[#allocation2 + $0x70] sm:$0xfe]
      %v1018 = vld [vmem:[#allocation2 + $0x78] sm:$0xfe]
      %v1019 = vld [vmem:[#allocation2 + $0xa0] sm:$0x1]
      %v1020 = vld [vmem:[#allocation2 + $0xa8] sm:$0x1]
      %v1021 = vld [vmem:[#allocation2 + $0xb0] sm:$0x1]
      %v1022 = vld [vmem:[#allocation2 + $0xb8] sm:$0x1]
      %v1023 = vld [vmem:[#allocation2 + $0xc0] sm:$0xfe]
      %v1024 = vld [vmem:[#allocation2 + $0xc8] sm:$0xfe]
      %v1025 = vld [vmem:[#allocation2 + $0xd0] sm:$0xfe]
      %v1026 = vld [vmem:[#allocation2 + $0xd8] sm:$0xfe]
      %v1027 = vld [vmem:[#allocation2 + $0x100] sm:$0x1]
      %v1028 = vld [vmem:[#allocation2 + $0x108] sm:$0x1]
      %v1029 = vld [vmem:[#allocation2 + $0x110] sm:$0x1]
      %v1030 = vld [vmem:[#allocation2 + $0x118] sm:$0x1]
      %v1031 = vld [vmem:[#allocation2 + $0x120] sm:$0xfe]
      %v1032 = vld [vmem:[#allocation2 + $0x128] sm:$0xfe]
      %v1033 = vld [vmem:[#allocation2 + $0x130] sm:$0xfe]
      %v1034 = vld [vmem:[#allocation2 + $0x138] sm:$0xfe]
      %v1035 = vld [vmem:[#allocation2 + $0x160] sm:$0x1]
      %v1036 = vld [vmem:[#allocation2 + $0x168] sm:$0x1]
      %v1037 = vld [vmem:[#allocation2 + $0x170] sm:$0x1]
      %v1038 = vld [vmem:[#allocation2 + $0x178] sm:$0x1]
      %v1039 = vld [vmem:[#allocation2 + $0x180] sm:$0xfe]
      %v1040 = vld [vmem:[#allocation2 + $0x188] sm:$0xfe]
      %v1041 = vld [vmem:[#allocation2 + $0x190] sm:$0xfe]
      %v1042 = vld [vmem:[#allocation2 + $0x198] sm:$0xfe]
      %v1043 = vld [vmem:[#allocation2 + $0x1c0] sm:$0x1]
      %v1044 = vld [vmem:[#allocation2 + $0x1c8] sm:$0x1]
      %v1045 = vld [vmem:[#allocation2 + $0x1d0] sm:$0x1]
      %v1046 = vld [vmem:[#allocation2 + $0x1d8] sm:$0x1]
      %v1047 = vld [vmem:[#allocation2 + $0x1e0] sm:$0xfe]
      %v1048 = vld [vmem:[#allocation2 + $0x1e8] sm:$0xfe]
      %v1049 = vld [vmem:[#allocation2 + $0x1f0] sm:$0xfe]
      %v1050 = vld [vmem:[#allocation2 + $0x1f8] sm:$0xfe]
      %v1051 = vld [vmem:[#allocation2 + $0x220] sm:$0x1]
      %v1052 = vld [vmem:[#allocation2 + $0x228] sm:$0x1]
      %v1053 = vld [vmem:[#allocation2 + $0x230] sm:$0x1]
      %v1054 = vld [vmem:[#allocation2 + $0x238] sm:$0x1]
      %v1055 = vld [vmem:[#allocation2 + $0x240] sm:$0xfe]
      %v1056 = vld [vmem:[#allocation2 + $0x248] sm:$0xfe]
      %v1057 = vld [vmem:[#allocation2 + $0x250] sm:$0xfe]
      %v1058 = vld [vmem:[#allocation2 + $0x258] sm:$0xfe]
      %v1059 = vld [vmem:[#allocation2 + $0x280] sm:$0x1]
      %v1060 = vld [vmem:[#allocation2 + $0x288] sm:$0x1]
      %v1061 = vld [vmem:[#allocation2 + $0x290] sm:$0x1]
      %v1062 = vld [vmem:[#allocation2 + $0x298] sm:$0x1]
      %v1063 = vld [vmem:[#allocation2 + $0x2a0] sm:$0xfe]
      %v1064 = vld [vmem:[#allocation2 + $0x2a8] sm:$0xfe]
      %v1065 = vld [vmem:[#allocation2 + $0x2b0] sm:$0xfe]
      %v1066 = vld [vmem:[#allocation2 + $0x2b8] sm:$0xfe]
      %v1067 = vld [vmem:[#allocation2 + $0x2e0] sm:$0x1]
      %v1068 = vld [vmem:[#allocation2 + $0x2e8] sm:$0x1]
      %v1069 = vld [vmem:[#allocation2 + $0x2f0] sm:$0x1]
      %v1070 = vld [vmem:[#allocation2 + $0x2f8] sm:$0x1]
      %vm1167 = vcmask 1046528
      %v1168 = vrot.slane %v1007, 1
      %v1169 = vrot.slane %v787, 1
      %v1170 = vsel %vm1167, %v1168, %v1169
      %v1171 = vrot.slane %v1008, 1
      %v1172 = vrot.slane %v788, 1
      %v1173 = vsel %vm1167, %v1171, %v1172
      %v1174 = vrot.slane %v1009, 1
      %v1175 = vrot.slane %v789, 1
      %v1176 = vsel %vm1167, %v1174, %v1175
      %v1177 = vrot.slane %v1010, 1
      %v1178 = vrot.slane %v790, 1
      %v1179 = vsel %vm1167, %v1177, %v1178
      %v1180 = vrot.slane %v1011, 1
      %v1181 = vsel %vm1167, %v1169, %v1180
      %v1182 = vrot.slane %v1012, 1
      %v1183 = vsel %vm1167, %v1172, %v1182
      %v1184 = vrot.slane %v1013, 1
      %v1185 = vsel %vm1167, %v1175, %v1184
      %v1186 = vrot.slane %v1014, 1
      %v1187 = vsel %vm1167, %v1178, %v1186
      %v1188 = vrot.slane %v1015, 1
      %v1189 = vrot.slane %v795, 1
      %v1190 = vsel %vm1167, %v1188, %v1189
      %v1191 = vrot.slane %v1016, 1
      %v1192 = vrot.slane %v796, 1
      %v1193 = vsel %vm1167, %v1191, %v1192
      %v1194 = vrot.slane %v1017, 1
      %v1195 = vrot.slane %v797, 1
      %v1196 = vsel %vm1167, %v1194, %v1195
      %v1197 = vrot.slane %v1018, 1
      %v1198 = vrot.slane %v798, 1
      %v1199 = vsel %vm1167, %v1197, %v1198
      %v1200 = vrot.slane %v1019, 1
      %v1201 = vsel %vm1167, %v1189, %v1200
      %v1202 = vrot.slane %v1020, 1
      %v1203 = vsel %vm1167, %v1192, %v1202
      %v1204 = vrot.slane %v1021, 1
      %v1205 = vsel %vm1167, %v1195, %v1204
      %v1206 = vrot.slane %v1022, 1
      %v1207 = vsel %vm1167, %v1198, %v1206
      %v1208 = vrot.slane %v1023, 1
      %v1209 = vrot.slane %v803, 1
      %v1210 = vsel %vm1167, %v1208, %v1209
      %v1211 = vrot.slane %v1024, 1
      %v1212 = vrot.slane %v804, 1
      %v1213 = vsel %vm1167, %v1211, %v1212
      %v1214 = vrot.slane %v1025, 1
      %v1215 = vrot.slane %v805, 1
      %v1216 = vsel %vm1167, %v1214, %v1215
      %v1217 = vrot.slane %v1026, 1
      %v1218 = vrot.slane %v806, 1
      %v1219 = vsel %vm1167, %v1217, %v1218
      %v1220 = vrot.slane %v1027, 1
      %v1221 = vsel %vm1167, %v1209, %v1220
      %v1222 = vrot.slane %v1028, 1
      %v1223 = vsel %vm1167, %v1212, %v1222
      %v1224 = vrot.slane %v1029, 1
      %v1225 = vsel %vm1167, %v1215, %v1224
      %v1226 = vrot.slane %v1030, 1
      %v1227 = vsel %vm1167, %v1218, %v1226
      %v1228 = vrot.slane %v1031, 1
      %v1229 = vrot.slane %v811, 1
      %v1230 = vsel %vm1167, %v1228, %v1229
      %v1231 = vrot.slane %v1032, 1
      %v1232 = vrot.slane %v812, 1
      %v1233 = vsel %vm1167, %v1231, %v1232
      %v1234 = vrot.slane %v1033, 1
      %v1235 = vrot.slane %v813, 1
      %v1236 = vsel %vm1167, %v1234, %v1235
      %v1237 = vrot.slane %v1034, 1
      %v1238 = vrot.slane %v814, 1
      %v1239 = vsel %vm1167, %v1237, %v1238
      %v1240 = vrot.slane %v1035, 1
      %v1241 = vsel %vm1167, %v1229, %v1240
      %v1242 = vrot.slane %v1036, 1
      %v1243 = vsel %vm1167, %v1232, %v1242
      %v1244 = vrot.slane %v1037, 1
      %v1245 = vsel %vm1167, %v1235, %v1244
      %v1246 = vrot.slane %v1038, 1
      %v1247 = vsel %vm1167, %v1238, %v1246
      %v1248 = vrot.slane %v1039, 1
      %v1249 = vrot.slane %v819, 1
      %v1250 = vsel %vm1167, %v1248, %v1249
      %v1251 = vrot.slane %v1040, 1
      %v1252 = vrot.slane %v820, 1
      %v1253 = vsel %vm1167, %v1251, %v1252
      %v1254 = vrot.slane %v1041, 1
      %v1255 = vrot.slane %v821, 1
      %v1256 = vsel %vm1167, %v1254, %v1255
      %v1257 = vrot.slane %v1042, 1
      %v1258 = vrot.slane %v822, 1
      %v1259 = vsel %vm1167, %v1257, %v1258
      %v1260 = vrot.slane %v1043, 1
      %v1261 = vsel %vm1167, %v1249, %v1260
      %v1262 = vrot.slane %v1044, 1
      %v1263 = vsel %vm1167, %v1252, %v1262
      %v1264 = vrot.slane %v1045, 1
      %v1265 = vsel %vm1167, %v1255, %v1264
      %v1266 = vrot.slane %v1046, 1
      %v1267 = vsel %vm1167, %v1258, %v1266
      %v1268 = vrot.slane %v1047, 1
      %v1269 = vrot.slane %v827, 1
      %v1270 = vsel %vm1167, %v1268, %v1269
      %v1271 = vrot.slane %v1048, 1
      %v1272 = vrot.slane %v828, 1
      %v1273 = vsel %vm1167, %v1271, %v1272
      %v1274 = vrot.slane %v1049, 1
      %v1275 = vrot.slane %v829, 1
      %v1276 = vsel %vm1167, %v1274, %v1275
      %v1277 = vrot.slane %v1050, 1
      %v1278 = vrot.slane %v830, 1
      %v1279 = vsel %vm1167, %v1277, %v1278
      %v1280 = vrot.slane %v1051, 1
      %v1281 = vsel %vm1167, %v1269, %v1280
      %v1282 = vrot.slane %v1052, 1
      %v1283 = vsel %vm1167, %v1272, %v1282
      %v1284 = vrot.slane %v1053, 1
      %v1285 = vsel %vm1167, %v1275, %v1284
      %v1286 = vrot.slane %v1054, 1
      %v1287 = vsel %vm1167, %v1278, %v1286
      %v1288 = vrot.slane %v1055, 1
      %v1289 = vrot.slane %v835, 1
      %v1290 = vsel %vm1167, %v1288, %v1289
      %v1291 = vrot.slane %v1056, 1
      %v1292 = vrot.slane %v836, 1
      %v1293 = vsel %vm1167, %v1291, %v1292
      %v1294 = vrot.slane %v1057, 1
      %v1295 = vrot.slane %v837, 1
      %v1296 = vsel %vm1167, %v1294, %v1295
      %v1297 = vrot.slane %v1058, 1
      %v1298 = vrot.slane %v838, 1
      %v1299 = vsel %vm1167, %v1297, %v1298
      %v1300 = vrot.slane %v1059, 1
      %v1301 = vsel %vm1167, %v1289, %v1300
      %v1302 = vrot.slane %v1060, 1
      %v1303 = vsel %vm1167, %v1292, %v1302
      %v1304 = vrot.slane %v1061, 1
      %v1305 = vsel %vm1167, %v1295, %v1304
      %v1306 = vrot.slane %v1062, 1
      %v1307 = vsel %vm1167, %v1298, %v1306
      %v1308 = vrot.slane %v1063, 1
      %v1309 = vrot.slane %v843, 1
      %v1310 = vsel %vm1167, %v1308, %v1309
      %v1311 = vrot.slane %v1064, 1
      %v1312 = vrot.slane %v844, 1
      %v1313 = vsel %vm1167, %v1311, %v1312
      %v1314 = vrot.slane %v1065, 1
      %v1315 = vrot.slane %v845, 1
      %v1316 = vsel %vm1167, %v1314, %v1315
      %v1317 = vrot.slane %v1066, 1
      %v1318 = vrot.slane %v846, 1
      %v1319 = vsel %vm1167, %v1317, %v1318
      %v1320 = vrot.slane %v1067, 1
      %v1321 = vsel %vm1167, %v1309, %v1320
      %v1322 = vrot.slane %v1068, 1
      %v1323 = vsel %vm1167, %v1312, %v1322
      %v1324 = vrot.slane %v1069, 1
      %v1325 = vsel %vm1167, %v1315, %v1324
      %v1326 = vrot.slane %v1070, 1
      %v1327 = vsel %vm1167, %v1318, %v1326
      %v1392 = vpack.c.bf16 %v1181, %v1170
      %v1393 = vpack.c.bf16 %v1183, %v1173
      %v1394 = vpack.c.bf16 %v1185, %v1176
      %v1395 = vpack.c.bf16 %v1187, %v1179
      %v1396 = vpack.c.bf16 %v1201, %v1190
      %v1397 = vpack.c.bf16 %v1203, %v1193
      %v1398 = vpack.c.bf16 %v1205, %v1196
      %v1399 = vpack.c.bf16 %v1207, %v1199
      %v1400 = vpack.c.bf16 %v1221, %v1210
      %v1401 = vpack.c.bf16 %v1223, %v1213
      %v1402 = vpack.c.bf16 %v1225, %v1216
      %v1403 = vpack.c.bf16 %v1227, %v1219
      %v1404 = vpack.c.bf16 %v1241, %v1230
      %v1405 = vpack.c.bf16 %v1243, %v1233
      %v1406 = vpack.c.bf16 %v1245, %v1236
      %v1407 = vpack.c.bf16 %v1247, %v1239
      %v1408 = vpack.c.bf16 %v1261, %v1250
      %v1409 = vpack.c.bf16 %v1263, %v1253
      %v1410 = vpack.c.bf16 %v1265, %v1256
      %v1411 = vpack.c.bf16 %v1267, %v1259
      %v1412 = vpack.c.bf16 %v1281, %v1270
      %v1413 = vpack.c.bf16 %v1283, %v1273
      %v1414 = vpack.c.bf16 %v1285, %v1276
      %v1415 = vpack.c.bf16 %v1287, %v1279
      %v1416 = vpack.c.bf16 %v1301, %v1290
      %v1417 = vpack.c.bf16 %v1303, %v1293
      %v1418 = vpack.c.bf16 %v1305, %v1296
      %v1419 = vpack.c.bf16 %v1307, %v1299
      %v1420 = vpack.c.bf16 %v1321, %v1310
      %v1421 = vpack.c.bf16 %v1323, %v1313
      %v1422 = vpack.c.bf16 %v1325, %v1316
      %v1423 = vpack.c.bf16 %v1327, %v1319
      %s1424 = scalar_lea.vmem %s1, 1024
      %v1425 = vld [vmem:[%s1424] sm:$0xff]
      %v1426 = vld [vmem:[%s1424 + $0x8] sm:$0xff]
      %v1427 = vld [vmem:[%s1424 + $0x10] sm:$0xff]
      %v1428 = vld [vmem:[%s1424 + $0x18] sm:$0xff]
      %v1429 = vld [vmem:[%s1424 + $0x20] sm:$0xff]
      %v1430 = vld [vmem:[%s1424 + $0x28] sm:$0xff]
      %v1431 = vld [vmem:[%s1424 + $0x30] sm:$0xff]
      %v1432 = vld [vmem:[%s1424 + $0x38] sm:$0xff]
      %v1433 = vld [vmem:[%s1424 + $0x40] sm:$0xff]
      %v1434 = vld [vmem:[%s1424 + $0x48] sm:$0xff]
      %v1435 = vld [vmem:[%s1424 + $0x50] sm:$0xff]
      %v1436 = vld [vmem:[%s1424 + $0x58] sm:$0xff]
      %v1437 = vld [vmem:[%s1424 + $0x60] sm:$0xff]
      %v1438 = vld [vmem:[%s1424 + $0x68] sm:$0xff]
      %v1439 = vld [vmem:[%s1424 + $0x70] sm:$0xff]
      %v1440 = vld [vmem:[%s1424 + $0x78] sm:$0xff]
      %v1441 = vld [vmem:[%s1424 + $0x80] sm:$0xff]
      %v1442 = vld [vmem:[%s1424 + $0x88] sm:$0xff]
      %v1443 = vld [vmem:[%s1424 + $0x90] sm:$0xff]
      %v1444 = vld [vmem:[%s1424 + $0x98] sm:$0xff]
      %v1445 = vld [vmem:[%s1424 + $0xa0] sm:$0xff]
      %v1446 = vld [vmem:[%s1424 + $0xa8] sm:$0xff]
      %v1447 = vld [vmem:[%s1424 + $0xb0] sm:$0xff]
      %v1448 = vld [vmem:[%s1424 + $0xb8] sm:$0xff]
      %v1449 = vld [vmem:[%s1424 + $0xc0] sm:$0xff]
      %v1450 = vld [vmem:[%s1424 + $0xc8] sm:$0xff]
      %v1451 = vld [vmem:[%s1424 + $0xd0] sm:$0xff]
      %v1452 = vld [vmem:[%s1424 + $0xd8] sm:$0xff]
      %v1453 = vld [vmem:[%s1424 + $0xe0] sm:$0xff]
      %v1454 = vld [vmem:[%s1424 + $0xe8] sm:$0xff]
      %v1455 = vld [vmem:[%s1424 + $0xf0] sm:$0xff]
      %v1456 = vld [vmem:[%s1424 + $0xf8] sm:$0xff]
      %v1457 = vld [vmem:[%s1424 + $0x100] sm:$0xff]
      %v1458 = vld [vmem:[%s1424 + $0x108] sm:$0xff]
      %v1459 = vld [vmem:[%s1424 + $0x110] sm:$0xff]
      %v1460 = vld [vmem:[%s1424 + $0x118] sm:$0xff]
      %v1461 = vld [vmem:[%s1424 + $0x120] sm:$0xff]
      %v1462 = vld [vmem:[%s1424 + $0x128] sm:$0xff]
      %v1463 = vld [vmem:[%s1424 + $0x130] sm:$0xff]
      %v1464 = vld [vmem:[%s1424 + $0x138] sm:$0xff]
      %v1465 = vld [vmem:[%s1424 + $0x140] sm:$0xff]
      %v1466 = vld [vmem:[%s1424 + $0x148] sm:$0xff]
      %v1467 = vld [vmem:[%s1424 + $0x150] sm:$0xff]
      %v1468 = vld [vmem:[%s1424 + $0x158] sm:$0xff]
      %v1469 = vld [vmem:[%s1424 + $0x160] sm:$0xff]
      %v1470 = vld [vmem:[%s1424 + $0x168] sm:$0xff]
      %v1471 = vld [vmem:[%s1424 + $0x170] sm:$0xff]
      %v1472 = vld [vmem:[%s1424 + $0x178] sm:$0xff]
      %v1473 = vld [vmem:[%s1424 + $0x180] sm:$0xff]
      %v1474 = vld [vmem:[%s1424 + $0x188] sm:$0xff]
      %v1475 = vld [vmem:[%s1424 + $0x190] sm:$0xff]
      %v1476 = vld [vmem:[%s1424 + $0x198] sm:$0xff]
      %v1477 = vld [vmem:[%s1424 + $0x1a0] sm:$0xff]
      %v1478 = vld [vmem:[%s1424 + $0x1a8] sm:$0xff]
      %v1479 = vld [vmem:[%s1424 + $0x1b0] sm:$0xff]
      %v1480 = vld [vmem:[%s1424 + $0x1b8] sm:$0xff]
      %v1481 = vld [vmem:[%s1424 + $0x1c0] sm:$0xff]
      %v1482 = vld [vmem:[%s1424 + $0x1c8] sm:$0xff]
      %v1483 = vld [vmem:[%s1424 + $0x1d0] sm:$0xff]
      %v1484 = vld [vmem:[%s1424 + $0x1d8] sm:$0xff]
      %v1485 = vld [vmem:[%s1424 + $0x1e0] sm:$0xff]
      %v1486 = vld [vmem:[%s1424 + $0x1e8] sm:$0xff]
      %v1487 = vld [vmem:[%s1424 + $0x1f0] sm:$0xff]
      %v1488 = vld [vmem:[%s1424 + $0x1f8] sm:$0xff]
      %v1489 = vld [vmem:[%s1424 + $0x200] sm:$0xff]
      %v1490 = vld [vmem:[%s1424 + $0x208] sm:$0xff]
      %v1491 = vld [vmem:[%s1424 + $0x210] sm:$0xff]
      %v1492 = vld [vmem:[%s1424 + $0x218] sm:$0xff]
      %v1493 = vld [vmem:[%s1424 + $0x220] sm:$0xff]
      %v1494 = vld [vmem:[%s1424 + $0x228] sm:$0xff]
      %v1495 = vld [vmem:[%s1424 + $0x230] sm:$0xff]
      %v1496 = vld [vmem:[%s1424 + $0x238] sm:$0xff]
      %v1497 = vld [vmem:[%s1424 + $0x240] sm:$0xff]
      %v1498 = vld [vmem:[%s1424 + $0x248] sm:$0xff]
      %v1499 = vld [vmem:[%s1424 + $0x250] sm:$0xff]
      %v1500 = vld [vmem:[%s1424 + $0x258] sm:$0xff]
      %v1501 = vld [vmem:[%s1424 + $0x260] sm:$0xff]
      %v1502 = vld [vmem:[%s1424 + $0x268] sm:$0xff]
      %v1503 = vld [vmem:[%s1424 + $0x270] sm:$0xff]
      %v1504 = vld [vmem:[%s1424 + $0x278] sm:$0xff]
      %v1505 = vld [vmem:[%s1424 + $0x280] sm:$0xff]
      %v1506 = vld [vmem:[%s1424 + $0x288] sm:$0xff]
      %v1507 = vld [vmem:[%s1424 + $0x290] sm:$0xff]
      %v1508 = vld [vmem:[%s1424 + $0x298] sm:$0xff]
      %v1509 = vld [vmem:[%s1424 + $0x2a0] sm:$0xff]
      %v1510 = vld [vmem:[%s1424 + $0x2a8] sm:$0xff]
      %v1511 = vld [vmem:[%s1424 + $0x2b0] sm:$0xff]
      %v1512 = vld [vmem:[%s1424 + $0x2b8] sm:$0xff]
      %v1513 = vld [vmem:[%s1424 + $0x2c0] sm:$0xff]
      %v1514 = vld [vmem:[%s1424 + $0x2c8] sm:$0xff]
      %v1515 = vld [vmem:[%s1424 + $0x2d0] sm:$0xff]
      %v1516 = vld [vmem:[%s1424 + $0x2d8] sm:$0xff]
      %v1517 = vld [vmem:[%s1424 + $0x2e0] sm:$0xff]
      %v1518 = vld [vmem:[%s1424 + $0x2e8] sm:$0xff]
      %v1519 = vld [vmem:[%s1424 + $0x2f0] sm:$0xff]
      %v1520 = vld [vmem:[%s1424 + $0x2f8] sm:$0xff]
      %v1521 = vld [vmem:[%s1424 + $0x300] sm:$0xff]
      %v1522 = vld [vmem:[%s1424 + $0x308] sm:$0xff]
      %v1523 = vld [vmem:[%s1424 + $0x310] sm:$0xff]
      %v1524 = vld [vmem:[%s1424 + $0x318] sm:$0xff]
      %v1525 = vld [vmem:[%s1424 + $0x320] sm:$0xff]
      %v1526 = vld [vmem:[%s1424 + $0x328] sm:$0xff]
      %v1527 = vld [vmem:[%s1424 + $0x330] sm:$0xff]
      %v1528 = vld [vmem:[%s1424 + $0x338] sm:$0xff]
      %v1529 = vld [vmem:[%s1424 + $0x340] sm:$0xff]
      %v1530 = vld [vmem:[%s1424 + $0x348] sm:$0xff]
      %v1531 = vld [vmem:[%s1424 + $0x350] sm:$0xff]
      %v1532 = vld [vmem:[%s1424 + $0x358] sm:$0xff]
      %v1533 = vld [vmem:[%s1424 + $0x360] sm:$0xff]
      %v1534 = vld [vmem:[%s1424 + $0x368] sm:$0xff]
      %v1535 = vld [vmem:[%s1424 + $0x370] sm:$0xff]
      %v1536 = vld [vmem:[%s1424 + $0x378] sm:$0xff]
      %v1537 = vld [vmem:[%s1424 + $0x380] sm:$0xff]
      %v1538 = vld [vmem:[%s1424 + $0x388] sm:$0xff]
      %v1539 = vld [vmem:[%s1424 + $0x390] sm:$0xff]
      %v1540 = vld [vmem:[%s1424 + $0x398] sm:$0xff]
      %v1541 = vld [vmem:[%s1424 + $0x3a0] sm:$0xff]
      %v1542 = vld [vmem:[%s1424 + $0x3a8] sm:$0xff]
      %v1543 = vld [vmem:[%s1424 + $0x3b0] sm:$0xff]
      %v1544 = vld [vmem:[%s1424 + $0x3b8] sm:$0xff]
      %v1545 = vld [vmem:[%s1424 + $0x3c0] sm:$0xff]
      %v1546 = vld [vmem:[%s1424 + $0x3c8] sm:$0xff]
      %v1547 = vld [vmem:[%s1424 + $0x3d0] sm:$0xff]
      %v1548 = vld [vmem:[%s1424 + $0x3d8] sm:$0xff]
      %v1549 = vld [vmem:[%s1424 + $0x3e0] sm:$0xff]
      %v1550 = vld [vmem:[%s1424 + $0x3e8] sm:$0xff]
      %v1551 = vld [vmem:[%s1424 + $0x3f0] sm:$0xff]
      %v1552 = vld [vmem:[%s1424 + $0x3f8] sm:$0xff]
      %v1681 = vunpack.c.l.b16 %v1425
      %v1682 = vunpack.c.h.b16 %v1425
      %v1683 = vunpack.c.l.b16 %v1426
      %v1684 = vunpack.c.h.b16 %v1426
      %v1685 = vunpack.c.l.b16 %v1427
      %v1686 = vunpack.c.h.b16 %v1427
      %v1687 = vunpack.c.l.b16 %v1428
      %v1688 = vunpack.c.h.b16 %v1428
      %v1689 = vunpack.c.l.b16 %v1429
      %v1690 = vunpack.c.h.b16 %v1429
      %v1691 = vunpack.c.l.b16 %v1430
      %v1692 = vunpack.c.h.b16 %v1430
      %v1693 = vunpack.c.l.b16 %v1431
      %v1694 = vunpack.c.h.b16 %v1431
      %v1695 = vunpack.c.l.b16 %v1432
      %v1696 = vunpack.c.h.b16 %v1432
      %v1697 = vunpack.c.l.b16 %v1433
      %v1698 = vunpack.c.h.b16 %v1433
      %v1699 = vunpack.c.l.b16 %v1434
      %v1700 = vunpack.c.h.b16 %v1434
      %v1701 = vunpack.c.l.b16 %v1435
      %v1702 = vunpack.c.h.b16 %v1435
      %v1703 = vunpack.c.l.b16 %v1436
      %v1704 = vunpack.c.h.b16 %v1436
      %v1705 = vunpack.c.l.b16 %v1437
      %v1706 = vunpack.c.h.b16 %v1437
      %v1707 = vunpack.c.l.b16 %v1438
      %v1708 = vunpack.c.h.b16 %v1438
      %v1709 = vunpack.c.l.b16 %v1439
      %v1710 = vunpack.c.h.b16 %v1439
      %v1711 = vunpack.c.l.b16 %v1440
      %v1712 = vunpack.c.h.b16 %v1440
      %v1713 = vunpack.c.l.b16 %v1441
      %v1714 = vunpack.c.h.b16 %v1441
      %v1715 = vunpack.c.l.b16 %v1442
      %v1716 = vunpack.c.h.b16 %v1442
      %v1717 = vunpack.c.l.b16 %v1443
      %v1718 = vunpack.c.h.b16 %v1443
      %v1719 = vunpack.c.l.b16 %v1444
      %v1720 = vunpack.c.h.b16 %v1444
      %v1721 = vunpack.c.l.b16 %v1445
      %v1722 = vunpack.c.h.b16 %v1445
      %v1723 = vunpack.c.l.b16 %v1446
      %v1724 = vunpack.c.h.b16 %v1446
      %v1725 = vunpack.c.l.b16 %v1447
      %v1726 = vunpack.c.h.b16 %v1447
      %v1727 = vunpack.c.l.b16 %v1448
      %v1728 = vunpack.c.h.b16 %v1448
      %v1729 = vunpack.c.l.b16 %v1449
      %v1730 = vunpack.c.h.b16 %v1449
      %v1731 = vunpack.c.l.b16 %v1450
      %v1732 = vunpack.c.h.b16 %v1450
      %v1733 = vunpack.c.l.b16 %v1451
      %v1734 = vunpack.c.h.b16 %v1451
      %v1735 = vunpack.c.l.b16 %v1452
      %v1736 = vunpack.c.h.b16 %v1452
      %v1737 = vunpack.c.l.b16 %v1453
      %v1738 = vunpack.c.h.b16 %v1453
      %v1739 = vunpack.c.l.b16 %v1454
      %v1740 = vunpack.c.h.b16 %v1454
      %v1741 = vunpack.c.l.b16 %v1455
      %v1742 = vunpack.c.h.b16 %v1455
      %v1743 = vunpack.c.l.b16 %v1456
      %v1744 = vunpack.c.h.b16 %v1456
      %v1745 = vunpack.c.l.b16 %v1457
      %v1746 = vunpack.c.h.b16 %v1457
      %v1747 = vunpack.c.l.b16 %v1458
      %v1748 = vunpack.c.h.b16 %v1458
      %v1749 = vunpack.c.l.b16 %v1459
      %v1750 = vunpack.c.h.b16 %v1459
      %v1751 = vunpack.c.l.b16 %v1460
      %v1752 = vunpack.c.h.b16 %v1460
      %v1753 = vunpack.c.l.b16 %v1461
      %v1754 = vunpack.c.h.b16 %v1461
      %v1755 = vunpack.c.l.b16 %v1462
      %v1756 = vunpack.c.h.b16 %v1462
      %v1757 = vunpack.c.l.b16 %v1463
      %v1758 = vunpack.c.h.b16 %v1463
      %v1759 = vunpack.c.l.b16 %v1464
      %v1760 = vunpack.c.h.b16 %v1464
      %v1761 = vunpack.c.l.b16 %v1465
      %v1762 = vunpack.c.h.b16 %v1465
      %v1763 = vunpack.c.l.b16 %v1466
      %v1764 = vunpack.c.h.b16 %v1466
      %v1765 = vunpack.c.l.b16 %v1467
      %v1766 = vunpack.c.h.b16 %v1467
      %v1767 = vunpack.c.l.b16 %v1468
      %v1768 = vunpack.c.h.b16 %v1468
      %v1769 = vunpack.c.l.b16 %v1469
      %v1770 = vunpack.c.h.b16 %v1469
      %v1771 = vunpack.c.l.b16 %v1470
      %v1772 = vunpack.c.h.b16 %v1470
      %v1773 = vunpack.c.l.b16 %v1471
      %v1774 = vunpack.c.h.b16 %v1471
      %v1775 = vunpack.c.l.b16 %v1472
      %v1776 = vunpack.c.h.b16 %v1472
      %v1777 = vunpack.c.l.b16 %v1473
      %v1778 = vunpack.c.h.b16 %v1473
      %v1779 = vunpack.c.l.b16 %v1474
      %v1780 = vunpack.c.h.b16 %v1474
      %v1781 = vunpack.c.l.b16 %v1475
      %v1782 = vunpack.c.h.b16 %v1475
      %v1783 = vunpack.c.l.b16 %v1476
      %v1784 = vunpack.c.h.b16 %v1476
      %v1785 = vunpack.c.l.b16 %v1477
      %v1786 = vunpack.c.h.b16 %v1477
      %v1787 = vunpack.c.l.b16 %v1478
      %v1788 = vunpack.c.h.b16 %v1478
      %v1789 = vunpack.c.l.b16 %v1479
      %v1790 = vunpack.c.h.b16 %v1479
      %v1791 = vunpack.c.l.b16 %v1480
      %v1792 = vunpack.c.h.b16 %v1480
      %v1793 = vunpack.c.l.b16 %v1481
      %v1794 = vunpack.c.h.b16 %v1481
      %v1795 = vunpack.c.l.b16 %v1482
      %v1796 = vunpack.c.h.b16 %v1482
      %v1797 = vunpack.c.l.b16 %v1483
      %v1798 = vunpack.c.h.b16 %v1483
      %v1799 = vunpack.c.l.b16 %v1484
      %v1800 = vunpack.c.h.b16 %v1484
      %v1801 = vunpack.c.l.b16 %v1485
      %v1802 = vunpack.c.h.b16 %v1485
      %v1803 = vunpack.c.l.b16 %v1486
      %v1804 = vunpack.c.h.b16 %v1486
      %v1805 = vunpack.c.l.b16 %v1487
      %v1806 = vunpack.c.h.b16 %v1487
      %v1807 = vunpack.c.l.b16 %v1488
      %v1808 = vunpack.c.h.b16 %v1488
      %v1809 = vunpack.c.l.b16 %v1489
      %v1810 = vunpack.c.h.b16 %v1489
      %v1811 = vunpack.c.l.b16 %v1490
      %v1812 = vunpack.c.h.b16 %v1490
      %v1813 = vunpack.c.l.b16 %v1491
      %v1814 = vunpack.c.h.b16 %v1491
      %v1815 = vunpack.c.l.b16 %v1492
      %v1816 = vunpack.c.h.b16 %v1492
      %v1817 = vunpack.c.l.b16 %v1493
      %v1818 = vunpack.c.h.b16 %v1493
      %v1819 = vunpack.c.l.b16 %v1494
      %v1820 = vunpack.c.h.b16 %v1494
      %v1821 = vunpack.c.l.b16 %v1495
      %v1822 = vunpack.c.h.b16 %v1495
      %v1823 = vunpack.c.l.b16 %v1496
      %v1824 = vunpack.c.h.b16 %v1496
      %v1825 = vunpack.c.l.b16 %v1497
      %v1826 = vunpack.c.h.b16 %v1497
      %v1827 = vunpack.c.l.b16 %v1498
      %v1828 = vunpack.c.h.b16 %v1498
      %v1829 = vunpack.c.l.b16 %v1499
      %v1830 = vunpack.c.h.b16 %v1499
      %v1831 = vunpack.c.l.b16 %v1500
      %v1832 = vunpack.c.h.b16 %v1500
      %v1833 = vunpack.c.l.b16 %v1501
      %v1834 = vunpack.c.h.b16 %v1501
      %v1835 = vunpack.c.l.b16 %v1502
      %v1836 = vunpack.c.h.b16 %v1502
      %v1837 = vunpack.c.l.b16 %v1503
      %v1838 = vunpack.c.h.b16 %v1503
      %v1839 = vunpack.c.l.b16 %v1504
      %v1840 = vunpack.c.h.b16 %v1504
      %v1841 = vunpack.c.l.b16 %v1505
      %v1842 = vunpack.c.h.b16 %v1505
      %v1843 = vunpack.c.l.b16 %v1506
      %v1844 = vunpack.c.h.b16 %v1506
      %v1845 = vunpack.c.l.b16 %v1507
      %v1846 = vunpack.c.h.b16 %v1507
      %v1847 = vunpack.c.l.b16 %v1508
      %v1848 = vunpack.c.h.b16 %v1508
      %v1849 = vunpack.c.l.b16 %v1509
      %v1850 = vunpack.c.h.b16 %v1509
      %v1851 = vunpack.c.l.b16 %v1510
      %v1852 = vunpack.c.h.b16 %v1510
      %v1853 = vunpack.c.l.b16 %v1511
      %v1854 = vunpack.c.h.b16 %v1511
      %v1855 = vunpack.c.l.b16 %v1512
      %v1856 = vunpack.c.h.b16 %v1512
      %v1857 = vunpack.c.l.b16 %v1513
      %v1858 = vunpack.c.h.b16 %v1513
      %v1859 = vunpack.c.l.b16 %v1514
      %v1860 = vunpack.c.h.b16 %v1514
      %v1861 = vunpack.c.l.b16 %v1515
      %v1862 = vunpack.c.h.b16 %v1515
      %v1863 = vunpack.c.l.b16 %v1516
      %v1864 = vunpack.c.h.b16 %v1516
      %v1865 = vunpack.c.l.b16 %v1517
      %v1866 = vunpack.c.h.b16 %v1517
      %v1867 = vunpack.c.l.b16 %v1518
      %v1868 = vunpack.c.h.b16 %v1518
      %v1869 = vunpack.c.l.b16 %v1519
      %v1870 = vunpack.c.h.b16 %v1519
      %v1871 = vunpack.c.l.b16 %v1520
      %v1872 = vunpack.c.h.b16 %v1520
      %v1873 = vunpack.c.l.b16 %v1521
      %v1874 = vunpack.c.h.b16 %v1521
      %v1875 = vunpack.c.l.b16 %v1522
      %v1876 = vunpack.c.h.b16 %v1522
      %v1877 = vunpack.c.l.b16 %v1523
      %v1878 = vunpack.c.h.b16 %v1523
      %v1879 = vunpack.c.l.b16 %v1524
      %v1880 = vunpack.c.h.b16 %v1524
      %v1881 = vunpack.c.l.b16 %v1525
      %v1882 = vunpack.c.h.b16 %v1525
      %v1883 = vunpack.c.l.b16 %v1526
      %v1884 = vunpack.c.h.b16 %v1526
      %v1885 = vunpack.c.l.b16 %v1527
      %v1886 = vunpack.c.h.b16 %v1527
      %v1887 = vunpack.c.l.b16 %v1528
      %v1888 = vunpack.c.h.b16 %v1528
      %v1889 = vunpack.c.l.b16 %v1529
      %v1890 = vunpack.c.h.b16 %v1529
      %v1891 = vunpack.c.l.b16 %v1530
      %v1892 = vunpack.c.h.b16 %v1530
      %v1893 = vunpack.c.l.b16 %v1531
      %v1894 = vunpack.c.h.b16 %v1531
      %v1895 = vunpack.c.l.b16 %v1532
      %v1896 = vunpack.c.h.b16 %v1532
      %v1897 = vunpack.c.l.b16 %v1533
      %v1898 = vunpack.c.h.b16 %v1533
      %v1899 = vunpack.c.l.b16 %v1534
      %v1900 = vunpack.c.h.b16 %v1534
      %v1901 = vunpack.c.l.b16 %v1535
      %v1902 = vunpack.c.h.b16 %v1535
      %v1903 = vunpack.c.l.b16 %v1536
      %v1904 = vunpack.c.h.b16 %v1536
      %v1905 = vunpack.c.l.b16 %v1537
      %v1906 = vunpack.c.h.b16 %v1537
      %v1907 = vunpack.c.l.b16 %v1538
      %v1908 = vunpack.c.h.b16 %v1538
      %v1909 = vunpack.c.l.b16 %v1539
      %v1910 = vunpack.c.h.b16 %v1539
      %v1911 = vunpack.c.l.b16 %v1540
      %v1912 = vunpack.c.h.b16 %v1540
      %v1913 = vunpack.c.l.b16 %v1541
      %v1914 = vunpack.c.h.b16 %v1541
      %v1915 = vunpack.c.l.b16 %v1542
      %v1916 = vunpack.c.h.b16 %v1542
      %v1917 = vunpack.c.l.b16 %v1543
      %v1918 = vunpack.c.h.b16 %v1543
      %v1919 = vunpack.c.l.b16 %v1544
      %v1920 = vunpack.c.h.b16 %v1544
      %v1921 = vunpack.c.l.b16 %v1545
      %v1922 = vunpack.c.h.b16 %v1545
      %v1923 = vunpack.c.l.b16 %v1546
      %v1924 = vunpack.c.h.b16 %v1546
      %v1925 = vunpack.c.l.b16 %v1547
      %v1926 = vunpack.c.h.b16 %v1547
      %v1927 = vunpack.c.l.b16 %v1548
      %v1928 = vunpack.c.h.b16 %v1548
      %v1929 = vunpack.c.l.b16 %v1549
      %v1930 = vunpack.c.h.b16 %v1549
      %v1931 = vunpack.c.l.b16 %v1550
      %v1932 = vunpack.c.h.b16 %v1550
      %v1933 = vunpack.c.l.b16 %v1551
      %v1934 = vunpack.c.h.b16 %v1551
      %v1935 = vunpack.c.l.b16 %v1552
      %v1936 = vunpack.c.h.b16 %v1552
      %v1937 = vpack.c.b16 %v1685, %v1681
      %v1938 = vpack.c.b16 %v1686, %v1682
      %v1939 = vpack.c.b16 %v1687, %v1683
      %v1940 = vpack.c.b16 %v1688, %v1684
      %v1941 = vpack.c.b16 %v1693, %v1689
      %v1942 = vpack.c.b16 %v1694, %v1690
      %v1943 = vpack.c.b16 %v1695, %v1691
      %v1944 = vpack.c.b16 %v1696, %v1692
      %v1945 = vpack.c.b16 %v1701, %v1697
      %v1946 = vpack.c.b16 %v1702, %v1698
      %v1947 = vpack.c.b16 %v1703, %v1699
      %v1948 = vpack.c.b16 %v1704, %v1700
      %v1949 = vpack.c.b16 %v1709, %v1705
      %v1950 = vpack.c.b16 %v1710, %v1706
      %v1951 = vpack.c.b16 %v1711, %v1707
      %v1952 = vpack.c.b16 %v1712, %v1708
      %v1953 = vpack.c.b16 %v1717, %v1713
      %v1954 = vpack.c.b16 %v1718, %v1714
      %v1955 = vpack.c.b16 %v1719, %v1715
      %v1956 = vpack.c.b16 %v1720, %v1716
      %v1957 = vpack.c.b16 %v1725, %v1721
      %v1958 = vpack.c.b16 %v1726, %v1722
      %v1959 = vpack.c.b16 %v1727, %v1723
      %v1960 = vpack.c.b16 %v1728, %v1724
      %v1961 = vpack.c.b16 %v1733, %v1729
      %v1962 = vpack.c.b16 %v1734, %v1730
      %v1963 = vpack.c.b16 %v1735, %v1731
      %v1964 = vpack.c.b16 %v1736, %v1732
      %v1965 = vpack.c.b16 %v1741, %v1737
      %v1966 = vpack.c.b16 %v1742, %v1738
      %v1967 = vpack.c.b16 %v1743, %v1739
      %v1968 = vpack.c.b16 %v1744, %v1740
      %v1969 = vpack.c.b16 %v1749, %v1745
      %v1970 = vpack.c.b16 %v1750, %v1746
      %v1971 = vpack.c.b16 %v1751, %v1747
      %v1972 = vpack.c.b16 %v1752, %v1748
      %v1973 = vpack.c.b16 %v1757, %v1753
      %v1974 = vpack.c.b16 %v1758, %v1754
      %v1975 = vpack.c.b16 %v1759, %v1755
      %v1976 = vpack.c.b16 %v1760, %v1756
      %v1977 = vpack.c.b16 %v1765, %v1761
      %v1978 = vpack.c.b16 %v1766, %v1762
      %v1979 = vpack.c.b16 %v1767, %v1763
      %v1980 = vpack.c.b16 %v1768, %v1764
      %v1981 = vpack.c.b16 %v1773, %v1769
      %v1982 = vpack.c.b16 %v1774, %v1770
      %v1983 = vpack.c.b16 %v1775, %v1771
      %v1984 = vpack.c.b16 %v1776, %v1772
      %v1985 = vpack.c.b16 %v1781, %v1777
      %v1986 = vpack.c.b16 %v1782, %v1778
      %v1987 = vpack.c.b16 %v1783, %v1779
      %v1988 = vpack.c.b16 %v1784, %v1780
      %v1989 = vpack.c.b16 %v1789, %v1785
      %v1990 = vpack.c.b16 %v1790, %v1786
      %v1991 = vpack.c.b16 %v1791, %v1787
      %v1992 = vpack.c.b16 %v1792, %v1788
      %v1993 = vpack.c.b16 %v1797, %v1793
      %v1994 = vpack.c.b16 %v1798, %v1794
      %v1995 = vpack.c.b16 %v1799, %v1795
      %v1996 = vpack.c.b16 %v1800, %v1796
      %v1997 = vpack.c.b16 %v1805, %v1801
      %v1998 = vpack.c.b16 %v1806, %v1802
      %v1999 = vpack.c.b16 %v1807, %v1803
      %v2000 = vpack.c.b16 %v1808, %v1804
      %v2001 = vpack.c.b16 %v1813, %v1809
      %v2002 = vpack.c.b16 %v1814, %v1810
      %v2003 = vpack.c.b16 %v1815, %v1811
      %v2004 = vpack.c.b16 %v1816, %v1812
      %v2005 = vpack.c.b16 %v1821, %v1817
      %v2006 = vpack.c.b16 %v1822, %v1818
      %v2007 = vpack.c.b16 %v1823, %v1819
      %v2008 = vpack.c.b16 %v1824, %v1820
      %v2009 = vpack.c.b16 %v1829, %v1825
      %v2010 = vpack.c.b16 %v1830, %v1826
      %v2011 = vpack.c.b16 %v1831, %v1827
      %v2012 = vpack.c.b16 %v1832, %v1828
      %v2013 = vpack.c.b16 %v1837, %v1833
      %v2014 = vpack.c.b16 %v1838, %v1834
      %v2015 = vpack.c.b16 %v1839, %v1835
      %v2016 = vpack.c.b16 %v1840, %v1836
      %v2017 = vpack.c.b16 %v1845, %v1841
      %v2018 = vpack.c.b16 %v1846, %v1842
      %v2019 = vpack.c.b16 %v1847, %v1843
      %v2020 = vpack.c.b16 %v1848, %v1844
      %v2021 = vpack.c.b16 %v1853, %v1849
      %v2022 = vpack.c.b16 %v1854, %v1850
      %v2023 = vpack.c.b16 %v1855, %v1851
      %v2024 = vpack.c.b16 %v1856, %v1852
      %v2025 = vpack.c.b16 %v1861, %v1857
      %v2026 = vpack.c.b16 %v1862, %v1858
      %v2027 = vpack.c.b16 %v1863, %v1859
      %v2028 = vpack.c.b16 %v1864, %v1860
      %v2029 = vpack.c.b16 %v1869, %v1865
      %v2030 = vpack.c.b16 %v1870, %v1866
      %v2031 = vpack.c.b16 %v1871, %v1867
      %v2032 = vpack.c.b16 %v1872, %v1868
      %v2033 = vpack.c.b16 %v1877, %v1873
      %v2034 = vpack.c.b16 %v1878, %v1874
      %v2035 = vpack.c.b16 %v1879, %v1875
      %v2036 = vpack.c.b16 %v1880, %v1876
      %v2037 = vpack.c.b16 %v1885, %v1881
      %v2038 = vpack.c.b16 %v1886, %v1882
      %v2039 = vpack.c.b16 %v1887, %v1883
      %v2040 = vpack.c.b16 %v1888, %v1884
      %v2041 = vpack.c.b16 %v1893, %v1889
      %v2042 = vpack.c.b16 %v1894, %v1890
      %v2043 = vpack.c.b16 %v1895, %v1891
      %v2044 = vpack.c.b16 %v1896, %v1892
      %v2045 = vpack.c.b16 %v1901, %v1897
      %v2046 = vpack.c.b16 %v1902, %v1898
      %v2047 = vpack.c.b16 %v1903, %v1899
      %v2048 = vpack.c.b16 %v1904, %v1900
      %v2049 = vpack.c.b16 %v1909, %v1905
      %v2050 = vpack.c.b16 %v1910, %v1906
      %v2051 = vpack.c.b16 %v1911, %v1907
      %v2052 = vpack.c.b16 %v1912, %v1908
      %v2053 = vpack.c.b16 %v1917, %v1913
      %v2054 = vpack.c.b16 %v1918, %v1914
      %v2055 = vpack.c.b16 %v1919, %v1915
      %v2056 = vpack.c.b16 %v1920, %v1916
      %v2057 = vpack.c.b16 %v1925, %v1921
      %v2058 = vpack.c.b16 %v1926, %v1922
      %v2059 = vpack.c.b16 %v1927, %v1923
      %v2060 = vpack.c.b16 %v1928, %v1924
      %v2061 = vpack.c.b16 %v1933, %v1929
      %v2062 = vpack.c.b16 %v1934, %v1930
      %v2063 = vpack.c.b16 %v1935, %v1931
      %v2064 = vpack.c.b16 %v1936, %v1932
      %2193 = vmatprep.subr.bf16.mxu0 %v1938
      %2194 = vmatpush1.bf16.msra.mxu0 %v1937
      %2195 = vmatprep.subr.bf16.mxu0 %v1942
      %2196 = vmatpush1.bf16.msra.mxu0 %v1941
      %2197 = vmatprep.subr.bf16.mxu0 %v1946
      %2198 = vmatpush1.bf16.msra.mxu0 %v1945
      %2199 = vmatprep.subr.bf16.mxu0 %v1950
      %2200 = vmatpush1.bf16.msra.mxu0 %v1949
      %2201 = vmatprep.subr.bf16.mxu0 %v1954
      %2202 = vmatpush1.bf16.msra.mxu0 %v1953
      %2203 = vmatprep.subr.bf16.mxu0 %v1958
      %2204 = vmatpush1.bf16.msra.mxu0 %v1957
      %2205 = vmatprep.subr.bf16.mxu0 %v1962
      %2206 = vmatpush1.bf16.msra.mxu0 %v1961
      %2207 = vmatprep.subr.bf16.mxu0 %v1966
      %2208 = vmatpush1.bf16.msra.mxu0 %v1965
      %2209 = vmatprep.subr.bf16.mxu0 %v1970
      %2210 = vmatpush1.bf16.msra.mxu0 %v1969
      %2211 = vmatprep.subr.bf16.mxu0 %v1974
      %2212 = vmatpush1.bf16.msra.mxu0 %v1973
      %2213 = vmatprep.subr.bf16.mxu0 %v1978
      %2214 = vmatpush1.bf16.msra.mxu0 %v1977
      %2215 = vmatprep.subr.bf16.mxu0 %v1982
      %2216 = vmatpush1.bf16.msra.mxu0 %v1981
      %2217 = vmatprep.subr.bf16.mxu0 %v1986
      %2218 = vmatpush1.bf16.msra.mxu0 %v1985
      %2219 = vmatprep.subr.bf16.mxu0 %v1990
      %2220 = vmatpush1.bf16.msra.mxu0 %v1989
      %2221 = vmatprep.subr.bf16.mxu0 %v1994
      %2222 = vmatpush1.bf16.msra.mxu0 %v1993
      %2223 = vmatprep.subr.bf16.mxu0 %v1998
      %2224 = vmatpush1.bf16.msra.mxu0 %v1997
      %2225 = vmatprep.mubr.bf16.mxu0 %v1393
      %2226 = vmatmul.mubr.bf16.gmra.mrb[0].mxu0 %v1392
      %v2227 = vpop.f32.mrb[0].mxu0
      %v2228 = vadd.f32 0.0, %v2227
      %v2229 = vpop.f32.mrb[0].mxu0
      %v2230 = vadd.f32 0.0, %v2229
      %v2231 = vpop.f32.mrb[0].mxu0
      %v2232 = vadd.f32 0.0, %v2231
      %v2233 = vpop.f32.mrb[0].mxu0
      %v2234 = vadd.f32 0.0, %v2233
      %2235 = vmatprep.mubr.bf16.mxu0 %v1397
      %2236 = vmatmul.mubr.bf16.gmra.mrb[0].mxu0 %v1396
      %v2237 = vpop.f32.mrb[0].mxu0
      %v2238 = vadd.f32 0.0, %v2237
      %v2239 = vpop.f32.mrb[0].mxu0
      %v2240 = vadd.f32 0.0, %v2239
      %v2241 = vpop.f32.mrb[0].mxu0
      %v2242 = vadd.f32 0.0, %v2241
      %v2243 = vpop.f32.mrb[0].mxu0
      %v2244 = vadd.f32 0.0, %v2243
      %2245 = vmatprep.mubr.bf16.mxu0 %v1401
      %2246 = vmatmul.mubr.bf16.gmra.mrb[0].mxu0 %v1400
      %v2247 = vpop.f32.mrb[0].mxu0
      %v2248 = vadd.f32 0.0, %v2247
      %v2249 = vpop.f32.mrb[0].mxu0
      %v2250 = vadd.f32 0.0, %v2249
      %v2251 = vpop.f32.mrb[0].mxu0
      %v2252 = vadd.f32 0.0, %v2251
      %v2253 = vpop.f32.mrb[0].mxu0
      %v2254 = vadd.f32 0.0, %v2253
      %2255 = vmatprep.mubr.bf16.mxu0 %v1405
      %2256 = vmatmul.mubr.bf16.gmra.mrb[0].mxu0 %v1404
      %v2257 = vpop.f32.mrb[0].mxu0
      %v2258 = vadd.f32 0.0, %v2257
      %v2259 = vpop.f32.mrb[0].mxu0
      %v2260 = vadd.f32 0.0, %v2259
      %v2261 = vpop.f32.mrb[0].mxu0
      %v2262 = vadd.f32 0.0, %v2261
      %v2263 = vpop.f32.mrb[0].mxu0
      %v2264 = vadd.f32 0.0, %v2263
      %2265 = vmatprep.mubr.bf16.mxu0 %v1409
      %2266 = vmatmul.mubr.bf16.gmra.mrb[0].mxu0 %v1408
      %v2267 = vpop.f32.mrb[0].mxu0
      %v2268 = vadd.f32 0.0, %v2267
      %v2269 = vpop.f32.mrb[0].mxu0
      %v2270 = vadd.f32 0.0, %v2269
      %v2271 = vpop.f32.mrb[0].mxu0
      %v2272 = vadd.f32 0.0, %v2271
      %v2273 = vpop.f32.mrb[0].mxu0
      %v2274 = vadd.f32 0.0, %v2273
      %2275 = vmatprep.mubr.bf16.mxu0 %v1413
      %2276 = vmatmul.mubr.bf16.gmra.mrb[0].mxu0 %v1412
      %v2277 = vpop.f32.mrb[0].mxu0
      %v2278 = vadd.f32 0.0, %v2277
      %v2279 = vpop.f32.mrb[0].mxu0
      %v2280 = vadd.f32 0.0, %v2279
      %v2281 = vpop.f32.mrb[0].mxu0
      %v2282 = vadd.f32 0.0, %v2281
      %v2283 = vpop.f32.mrb[0].mxu0
      %v2284 = vadd.f32 0.0, %v2283
      %2285 = vmatprep.mubr.bf16.mxu0 %v1417
      %2286 = vmatmul.mubr.bf16.gmra.mrb[0].mxu0 %v1416
      %v2287 = vpop.f32.mrb[0].mxu0
      %v2288 = vadd.f32 0.0, %v2287
      %v2289 = vpop.f32.mrb[0].mxu0
      %v2290 = vadd.f32 0.0, %v2289
      %v2291 = vpop.f32.mrb[0].mxu0
      %v2292 = vadd.f32 0.0, %v2291
      %v2293 = vpop.f32.mrb[0].mxu0
      %v2294 = vadd.f32 0.0, %v2293
      %2295 = vmatprep.mubr.bf16.mxu0 %v1421
      %2296 = vmatmul.mubr.bf16.gmra.mrb[0].mxu0 %v1420
      %v2297 = vpop.f32.mrb[0].mxu0
      %v2298 = vadd.f32 0.0, %v2297
      %v2299 = vpop.f32.mrb[0].mxu0
      %v2300 = vadd.f32 0.0, %v2299
      %v2301 = vpop.f32.mrb[0].mxu0
      %v2302 = vadd.f32 0.0, %v2301
      %v2303 = vpop.f32.mrb[0].mxu0
      %v2304 = vadd.f32 0.0, %v2303
      %2305 = vdwg.mxu0
      %2306 = vmatprep.subr.bf16.mxu0 %v2002
      %2307 = vmatpush1.bf16.msra.mxu0 %v2001
      %2308 = vmatprep.subr.bf16.mxu0 %v2006
      %2309 = vmatpush1.bf16.msra.mxu0 %v2005
      %2310 = vmatprep.subr.bf16.mxu0 %v2010
      %2311 = vmatpush1.bf16.msra.mxu0 %v2009
      %2312 = vmatprep.subr.bf16.mxu0 %v2014
      %2313 = vmatpush1.bf16.msra.mxu0 %v2013
      %2314 = vmatprep.subr.bf16.mxu0 %v2018
      %2315 = vmatpush1.bf16.msra.mxu0 %v2017
      %2316 = vmatprep.subr.bf16.mxu0 %v2022
      %2317 = vmatpush1.bf16.msra.mxu0 %v2021
      %2318 = vmatprep.subr.bf16.mxu0 %v2026
      %2319 = vmatpush1.bf16.msra.mxu0 %v2025
      %2320 = vmatprep.subr.bf16.mxu0 %v2030
      %2321 = vmatpush1.bf16.msra.mxu0 %v2029
      %2322 = vmatprep.subr.bf16.mxu0 %v2034
      %2323 = vmatpush1.bf16.msra.mxu0 %v2033
      %2324 = vmatprep.subr.bf16.mxu0 %v2038
      %2325 = vmatpush1.bf16.msra.mxu0 %v2037
      %2326 = vmatprep.subr.bf16.mxu0 %v2042
      %2327 = vmatpush1.bf16.msra.mxu0 %v2041
      %2328 = vmatprep.subr.bf16.mxu0 %v2046
      %2329 = vmatpush1.bf16.msra.mxu0 %v2045
      %2330 = vmatprep.subr.bf16.mxu0 %v2050
      %2331 = vmatpush1.bf16.msra.mxu0 %v2049
      %2332 = vmatprep.subr.bf16.mxu0 %v2054
      %2333 = vmatpush1.bf16.msra.mxu0 %v2053
      %2334 = vmatprep.subr.bf16.mxu0 %v2058
      %2335 = vmatpush1.bf16.msra.mxu0 %v2057
      %2336 = vmatprep.subr.bf16.mxu0 %v2062
      %2337 = vmatpush1.bf16.msra.mxu0 %v2061
      %2338 = vmatprep.mubr.bf16.mxu0 %v1395
      %2339 = vmatmul.mubr.bf16.gmra.mrb[0].mxu0 %v1394
      %v2340 = vpop.f32.mrb[0].mxu0
      %v2341 = vadd.f32 %v2228, %v2340
      %v2342 = vpop.f32.mrb[0].mxu0
      %v2343 = vadd.f32 %v2230, %v2342
      %v2344 = vpop.f32.mrb[0].mxu0
      %v2345 = vadd.f32 %v2232, %v2344
      %v2346 = vpop.f32.mrb[0].mxu0
      %v2347 = vadd.f32 %v2234, %v2346
      %2348 = vmatprep.mubr.bf16.mxu0 %v1399
      %2349 = vmatmul.mubr.bf16.gmra.mrb[0].mxu0 %v1398
      %v2350 = vpop.f32.mrb[0].mxu0
      %v2351 = vadd.f32 %v2238, %v2350
      %v2352 = vpop.f32.mrb[0].mxu0
      %v2353 = vadd.f32 %v2240, %v2352
      %v2354 = vpop.f32.mrb[0].mxu0
      %v2355 = vadd.f32 %v2242, %v2354
      %v2356 = vpop.f32.mrb[0].mxu0
      %v2357 = vadd.f32 %v2244, %v2356
      %2358 = vmatprep.mubr.bf16.mxu0 %v1403
      %2359 = vmatmul.mubr.bf16.gmra.mrb[0].mxu0 %v1402
      %v2360 = vpop.f32.mrb[0].mxu0
      %v2361 = vadd.f32 %v2248, %v2360
      %v2362 = vpop.f32.mrb[0].mxu0
      %v2363 = vadd.f32 %v2250, %v2362
      %v2364 = vpop.f32.mrb[0].mxu0
      %v2365 = vadd.f32 %v2252, %v2364
      %v2366 = vpop.f32.mrb[0].mxu0
      %v2367 = vadd.f32 %v2254, %v2366
      %2368 = vmatprep.mubr.bf16.mxu0 %v1407
      %2369 = vmatmul.mubr.bf16.gmra.mrb[0].mxu0 %v1406
      %v2370 = vpop.f32.mrb[0].mxu0
      %v2371 = vadd.f32 %v2258, %v2370
      %v2372 = vpop.f32.mrb[0].mxu0
      %v2373 = vadd.f32 %v2260, %v2372
      %v2374 = vpop.f32.mrb[0].mxu0
      %v2375 = vadd.f32 %v2262, %v2374
      %v2376 = vpop.f32.mrb[0].mxu0
      %v2377 = vadd.f32 %v2264, %v2376
      %2378 = vmatprep.mubr.bf16.mxu0 %v1411
      %2379 = vmatmul.mubr.bf16.gmra.mrb[0].mxu0 %v1410
      %v2380 = vpop.f32.mrb[0].mxu0
      %v2381 = vadd.f32 %v2268, %v2380
      %v2382 = vpop.f32.mrb[0].mxu0
      %v2383 = vadd.f32 %v2270, %v2382
      %v2384 = vpop.f32.mrb[0].mxu0
      %v2385 = vadd.f32 %v2272, %v2384
      %v2386 = vpop.f32.mrb[0].mxu0
      %v2387 = vadd.f32 %v2274, %v2386
      %2388 = vmatprep.mubr.bf16.mxu0 %v1415
      %2389 = vmatmul.mubr.bf16.gmra.mrb[0].mxu0 %v1414
      %v2390 = vpop.f32.mrb[0].mxu0
      %v2391 = vadd.f32 %v2278, %v2390
      %v2392 = vpop.f32.mrb[0].mxu0
      %v2393 = vadd.f32 %v2280, %v2392
      %v2394 = vpop.f32.mrb[0].mxu0
      %v2395 = vadd.f32 %v2282, %v2394
      %v2396 = vpop.f32.mrb[0].mxu0
      %v2397 = vadd.f32 %v2284, %v2396
      %2398 = vmatprep.mubr.bf16.mxu0 %v1419
      %2399 = vmatmul.mubr.bf16.gmra.mrb[0].mxu0 %v1418
      %v2400 = vpop.f32.mrb[0].mxu0
      %v2401 = vadd.f32 %v2288, %v2400
      %v2402 = vpop.f32.mrb[0].mxu0
      %v2403 = vadd.f32 %v2290, %v2402
      %v2404 = vpop.f32.mrb[0].mxu0
      %v2405 = vadd.f32 %v2292, %v2404
      %v2406 = vpop.f32.mrb[0].mxu0
      %v2407 = vadd.f32 %v2294, %v2406
      %2408 = vmatprep.mubr.bf16.mxu0 %v1423
      %2409 = vmatmul.mubr.bf16.gmra.mrb[0].mxu0 %v1422
      %v2410 = vpop.f32.mrb[0].mxu0
      %v2411 = vadd.f32 %v2298, %v2410
      %v2412 = vpop.f32.mrb[0].mxu0
      %v2413 = vadd.f32 %v2300, %v2412
      %v2414 = vpop.f32.mrb[0].mxu0
      %v2415 = vadd.f32 %v2302, %v2414
      %v2416 = vpop.f32.mrb[0].mxu0
      %v2417 = vadd.f32 %v2304, %v2416
      %2418 = vdwg.mxu0
      %2419 = vmatprep.subr.bf16.mxu0 %v1940
      %2420 = vmatpush1.bf16.msra.mxu0 %v1939
      %2421 = vmatprep.subr.bf16.mxu0 %v1944
      %2422 = vmatpush1.bf16.msra.mxu0 %v1943
      %2423 = vmatprep.subr.bf16.mxu0 %v1948
      %2424 = vmatpush1.bf16.msra.mxu0 %v1947
      %2425 = vmatprep.subr.bf16.mxu0 %v1952
      %2426 = vmatpush1.bf16.msra.mxu0 %v1951
      %2427 = vmatprep.subr.bf16.mxu0 %v1956
      %2428 = vmatpush1.bf16.msra.mxu0 %v1955
      %2429 = vmatprep.subr.bf16.mxu0 %v1960
      %2430 = vmatpush1.bf16.msra.mxu0 %v1959
      %2431 = vmatprep.subr.bf16.mxu0 %v1964
      %2432 = vmatpush1.bf16.msra.mxu0 %v1963
      %2433 = vmatprep.subr.bf16.mxu0 %v1968
      %2434 = vmatpush1.bf16.msra.mxu0 %v1967
      %2435 = vmatprep.subr.bf16.mxu0 %v1972
      %2436 = vmatpush1.bf16.msra.mxu0 %v1971
      %2437 = vmatprep.subr.bf16.mxu0 %v1976
      %2438 = vmatpush1.bf16.msra.mxu0 %v1975
      %2439 = vmatprep.subr.bf16.mxu0 %v1980
      %2440 = vmatpush1.bf16.msra.mxu0 %v1979
      %2441 = vmatprep.subr.bf16.mxu0 %v1984
      %2442 = vmatpush1.bf16.msra.mxu0 %v1983
      %2443 = vmatprep.subr.bf16.mxu0 %v1988
      %2444 = vmatpush1.bf16.msra.mxu0 %v1987
      %2445 = vmatprep.subr.bf16.mxu0 %v1992
      %2446 = vmatpush1.bf16.msra.mxu0 %v1991
      %2447 = vmatprep.subr.bf16.mxu0 %v1996
      %2448 = vmatpush1.bf16.msra.mxu0 %v1995
      %2449 = vmatprep.subr.bf16.mxu0 %v2000
      %2450 = vmatpush1.bf16.msra.mxu0 %v1999
      %2451 = vmatprep.mubr.bf16.mxu0 %v1393
      %2452 = vmatmul.mubr.bf16.gmra.mrb[0].mxu0 %v1392
      %v2453 = vpop.f32.mrb[0].mxu0
      %v2454 = vadd.f32 0.0, %v2453
      %v2455 = vpop.f32.mrb[0].mxu0
      %v2456 = vadd.f32 0.0, %v2455
      %v2457 = vpop.f32.mrb[0].mxu0
      %v2458 = vadd.f32 0.0, %v2457
      %v2459 = vpop.f32.mrb[0].mxu0
      %v2460 = vadd.f32 0.0, %v2459
      %2461 = vmatprep.mubr.bf16.mxu0 %v1397
      %2462 = vmatmul.mubr.bf16.gmra.mrb[0].mxu0 %v1396
      %v2463 = vpop.f32.mrb[0].mxu0
      %v2464 = vadd.f32 0.0, %v2463
      %v2465 = vpop.f32.mrb[0].mxu0
      %v2466 = vadd.f32 0.0, %v2465
      %v2467 = vpop.f32.mrb[0].mxu0
      %v2468 = vadd.f32 0.0, %v2467
      %v2469 = vpop.f32.mrb[0].mxu0
      %v2470 = vadd.f32 0.0, %v2469
      %2471 = vmatprep.mubr.bf16.mxu0 %v1401
      %2472 = vmatmul.mubr.bf16.gmra.mrb[0].mxu0 %v1400
      %v2473 = vpop.f32.mrb[0].mxu0
      %v2474 = vadd.f32 0.0, %v2473
      %v2475 = vpop.f32.mrb[0].mxu0
      %v2476 = vadd.f32 0.0, %v2475
      %v2477 = vpop.f32.mrb[0].mxu0
      %v2478 = vadd.f32 0.0, %v2477
      %v2479 = vpop.f32.mrb[0].mxu0
      %v2480 = vadd.f32 0.0, %v2479
      %2481 = vmatprep.mubr.bf16.mxu0 %v1405
      %2482 = vmatmul.mubr.bf16.gmra.mrb[0].mxu0 %v1404
      %v2483 = vpop.f32.mrb[0].mxu0
      %v2484 = vadd.f32 0.0, %v2483
      %v2485 = vpop.f32.mrb[0].mxu0
      %v2486 = vadd.f32 0.0, %v2485
      %v2487 = vpop.f32.mrb[0].mxu0
      %v2488 = vadd.f32 0.0, %v2487
      %v2489 = vpop.f32.mrb[0].mxu0
      %v2490 = vadd.f32 0.0, %v2489
      %2491 = vmatprep.mubr.bf16.mxu0 %v1409
      %2492 = vmatmul.mubr.bf16.gmra.mrb[0].mxu0 %v1408
      %v2493 = vpop.f32.mrb[0].mxu0
      %v2494 = vadd.f32 0.0, %v2493
      %v2495 = vpop.f32.mrb[0].mxu0
      %v2496 = vadd.f32 0.0, %v2495
      %v2497 = vpop.f32.mrb[0].mxu0
      %v2498 = vadd.f32 0.0, %v2497
      %v2499 = vpop.f32.mrb[0].mxu0
      %v2500 = vadd.f32 0.0, %v2499
      %2501 = vmatprep.mubr.bf16.mxu0 %v1413
      %2502 = vmatmul.mubr.bf16.gmra.mrb[0].mxu0 %v1412
      %v2503 = vpop.f32.mrb[0].mxu0
      %v2504 = vadd.f32 0.0, %v2503
      %v2505 = vpop.f32.mrb[0].mxu0
      %v2506 = vadd.f32 0.0, %v2505
      %v2507 = vpop.f32.mrb[0].mxu0
      %v2508 = vadd.f32 0.0, %v2507
      %v2509 = vpop.f32.mrb[0].mxu0
      %v2510 = vadd.f32 0.0, %v2509
      %2511 = vmatprep.mubr.bf16.mxu0 %v1417
      %2512 = vmatmul.mubr.bf16.gmra.mrb[0].mxu0 %v1416
      %v2513 = vpop.f32.mrb[0].mxu0
      %v2514 = vadd.f32 0.0, %v2513
      %v2515 = vpop.f32.mrb[0].mxu0
      %v2516 = vadd.f32 0.0, %v2515
      %v2517 = vpop.f32.mrb[0].mxu0
      %v2518 = vadd.f32 0.0, %v2517
      %v2519 = vpop.f32.mrb[0].mxu0
      %v2520 = vadd.f32 0.0, %v2519
      %2521 = vmatprep.mubr.bf16.mxu0 %v1421
      %2522 = vmatmul.mubr.bf16.gmra.mrb[0].mxu0 %v1420
      %v2523 = vpop.f32.mrb[0].mxu0
      %v2524 = vadd.f32 0.0, %v2523
      %v2525 = vpop.f32.mrb[0].mxu0
      %v2526 = vadd.f32 0.0, %v2525
      %v2527 = vpop.f32.mrb[0].mxu0
      %v2528 = vadd.f32 0.0, %v2527
      %v2529 = vpop.f32.mrb[0].mxu0
      %v2530 = vadd.f32 0.0, %v2529
      %2531 = vdwg.mxu0
      %2532 = vmatprep.subr.bf16.mxu0 %v2004
      %2533 = vmatpush1.bf16.msra.mxu0 %v2003
      %2534 = vmatprep.subr.bf16.mxu0 %v2008
      %2535 = vmatpush1.bf16.msra.mxu0 %v2007
      %2536 = vmatprep.subr.bf16.mxu0 %v2012
      %2537 = vmatpush1.bf16.msra.mxu0 %v2011
      %2538 = vmatprep.subr.bf16.mxu0 %v2016
      %2539 = vmatpush1.bf16.msra.mxu0 %v2015
      %2540 = vmatprep.subr.bf16.mxu0 %v2020
      %2541 = vmatpush1.bf16.msra.mxu0 %v2019
      %2542 = vmatprep.subr.bf16.mxu0 %v2024
      %2543 = vmatpush1.bf16.msra.mxu0 %v2023
      %2544 = vmatprep.subr.bf16.mxu0 %v2028
      %2545 = vmatpush1.bf16.msra.mxu0 %v2027
      %2546 = vmatprep.subr.bf16.mxu0 %v2032
      %2547 = vmatpush1.bf16.msra.mxu0 %v2031
      %2548 = vmatprep.subr.bf16.mxu0 %v2036
      %2549 = vmatpush1.bf16.msra.mxu0 %v2035
      %2550 = vmatprep.subr.bf16.mxu0 %v2040
      %2551 = vmatpush1.bf16.msra.mxu0 %v2039
      %2552 = vmatprep.subr.bf16.mxu0 %v2044
      %2553 = vmatpush1.bf16.msra.mxu0 %v2043
      %2554 = vmatprep.subr.bf16.mxu0 %v2048
      %2555 = vmatpush1.bf16.msra.mxu0 %v2047
      %2556 = vmatprep.subr.bf16.mxu0 %v2052
      %2557 = vmatpush1.bf16.msra.mxu0 %v2051
      %2558 = vmatprep.subr.bf16.mxu0 %v2056
      %2559 = vmatpush1.bf16.msra.mxu0 %v2055
      %2560 = vmatprep.subr.bf16.mxu0 %v2060
      %2561 = vmatpush1.bf16.msra.mxu0 %v2059
      %2562 = vmatprep.subr.bf16.mxu0 %v2064
      %2563 = vmatpush1.bf16.msra.mxu0 %v2063
      %2564 = vmatprep.mubr.bf16.mxu0 %v1395
      %2565 = vmatmul.mubr.bf16.gmra.mrb[0].mxu0 %v1394
      %v2566 = vpop.f32.mrb[0].mxu0
      %v2567 = vadd.f32 %v2454, %v2566
      %v2568 = vpop.f32.mrb[0].mxu0
      %v2569 = vadd.f32 %v2456, %v2568
      %v2570 = vpop.f32.mrb[0].mxu0
      %v2571 = vadd.f32 %v2458, %v2570
      %v2572 = vpop.f32.mrb[0].mxu0
      %v2573 = vadd.f32 %v2460, %v2572
      %2574 = vmatprep.mubr.bf16.mxu0 %v1399
      %2575 = vmatmul.mubr.bf16.gmra.mrb[0].mxu0 %v1398
      %v2576 = vpop.f32.mrb[0].mxu0
      %v2577 = vadd.f32 %v2464, %v2576
      %v2578 = vpop.f32.mrb[0].mxu0
      %v2579 = vadd.f32 %v2466, %v2578
      %v2580 = vpop.f32.mrb[0].mxu0
      %v2581 = vadd.f32 %v2468, %v2580
      %v2582 = vpop.f32.mrb[0].mxu0
      %v2583 = vadd.f32 %v2470, %v2582
      %2584 = vmatprep.mubr.bf16.mxu0 %v1403
      %2585 = vmatmul.mubr.bf16.gmra.mrb[0].mxu0 %v1402
      %v2586 = vpop.f32.mrb[0].mxu0
      %v2587 = vadd.f32 %v2474, %v2586
      %v2588 = vpop.f32.mrb[0].mxu0
      %v2589 = vadd.f32 %v2476, %v2588
      %v2590 = vpop.f32.mrb[0].mxu0
      %v2591 = vadd.f32 %v2478, %v2590
      %v2592 = vpop.f32.mrb[0].mxu0
      %v2593 = vadd.f32 %v2480, %v2592
      %2594 = vmatprep.mubr.bf16.mxu0 %v1407
      %2595 = vmatmul.mubr.bf16.gmra.mrb[0].mxu0 %v1406
      %v2596 = vpop.f32.mrb[0].mxu0
      %v2597 = vadd.f32 %v2484, %v2596
      %v2598 = vpop.f32.mrb[0].mxu0
      %v2599 = vadd.f32 %v2486, %v2598
      %v2600 = vpop.f32.mrb[0].mxu0
      %v2601 = vadd.f32 %v2488, %v2600
      %v2602 = vpop.f32.mrb[0].mxu0
      %v2603 = vadd.f32 %v2490, %v2602
      %2604 = vmatprep.mubr.bf16.mxu0 %v1411
      %2605 = vmatmul.mubr.bf16.gmra.mrb[0].mxu0 %v1410
      %v2606 = vpop.f32.mrb[0].mxu0
      %v2607 = vadd.f32 %v2494, %v2606
      %v2608 = vpop.f32.mrb[0].mxu0
      %v2609 = vadd.f32 %v2496, %v2608
      %v2610 = vpop.f32.mrb[0].mxu0
      %v2611 = vadd.f32 %v2498, %v2610
      %v2612 = vpop.f32.mrb[0].mxu0
      %v2613 = vadd.f32 %v2500, %v2612
      %2614 = vmatprep.mubr.bf16.mxu0 %v1415
      %2615 = vmatmul.mubr.bf16.gmra.mrb[0].mxu0 %v1414
      %v2616 = vpop.f32.mrb[0].mxu0
      %v2617 = vadd.f32 %v2504, %v2616
      %v2618 = vpop.f32.mrb[0].mxu0
      %v2619 = vadd.f32 %v2506, %v2618
      %v2620 = vpop.f32.mrb[0].mxu0
      %v2621 = vadd.f32 %v2508, %v2620
      %v2622 = vpop.f32.mrb[0].mxu0
      %v2623 = vadd.f32 %v2510, %v2622
      %2624 = vmatprep.mubr.bf16.mxu0 %v1419
      %2625 = vmatmul.mubr.bf16.gmra.mrb[0].mxu0 %v1418
      %v2626 = vpop.f32.mrb[0].mxu0
      %v2627 = vadd.f32 %v2514, %v2626
      %v2628 = vpop.f32.mrb[0].mxu0
      %v2629 = vadd.f32 %v2516, %v2628
      %v2630 = vpop.f32.mrb[0].mxu0
      %v2631 = vadd.f32 %v2518, %v2630
      %v2632 = vpop.f32.mrb[0].mxu0
      %v2633 = vadd.f32 %v2520, %v2632
      %2634 = vmatprep.mubr.bf16.mxu0 %v1423
      %2635 = vmatmul.mubr.bf16.gmra.mrb[0].mxu0 %v1422
      %v2636 = vpop.f32.mrb[0].mxu0
      %v2637 = vadd.f32 %v2524, %v2636
      %v2638 = vpop.f32.mrb[0].mxu0
      %v2639 = vadd.f32 %v2526, %v2638
      %v2640 = vpop.f32.mrb[0].mxu0
      %v2641 = vadd.f32 %v2528, %v2640
      %v2642 = vpop.f32.mrb[0].mxu0
      %v2643 = vadd.f32 %v2530, %v2642
      %2644 = vdwg.mxu0
      %v2773 = vunpack.c.l.b16 %v879
      %v2774 = vunpack.c.h.b16 %v879
      %v2775 = vunpack.c.l.b16 %v880
      %v2776 = vunpack.c.h.b16 %v880
      %v2777 = vunpack.c.l.b16 %v881
      %v2778 = vunpack.c.h.b16 %v881
      %v2779 = vunpack.c.l.b16 %v882
      %v2780 = vunpack.c.h.b16 %v882
      %v2781 = vunpack.c.l.b16 %v883
      %v2782 = vunpack.c.h.b16 %v883
      %v2783 = vunpack.c.l.b16 %v884
      %v2784 = vunpack.c.h.b16 %v884
      %v2785 = vunpack.c.l.b16 %v885
      %v2786 = vunpack.c.h.b16 %v885
      %v2787 = vunpack.c.l.b16 %v886
      %v2788 = vunpack.c.h.b16 %v886
      %v2789 = vunpack.c.l.b16 %v887
      %v2790 = vunpack.c.h.b16 %v887
      %v2791 = vunpack.c.l.b16 %v888
      %v2792 = vunpack.c.h.b16 %v888
      %v2793 = vunpack.c.l.b16 %v889
      %v2794 = vunpack.c.h.b16 %v889
      %v2795 = vunpack.c.l.b16 %v890
      %v2796 = vunpack.c.h.b16 %v890
      %v2797 = vunpack.c.l.b16 %v891
      %v2798 = vunpack.c.h.b16 %v891
      %v2799 = vunpack.c.l.b16 %v892
      %v2800 = vunpack.c.h.b16 %v892
      %v2801 = vunpack.c.l.b16 %v893
      %v2802 = vunpack.c.h.b16 %v893
      %v2803 = vunpack.c.l.b16 %v894
      %v2804 = vunpack.c.h.b16 %v894
      %v2805 = vunpack.c.l.b16 %v895
      %v2806 = vunpack.c.h.b16 %v895
      %v2807 = vunpack.c.l.b16 %v896
      %v2808 = vunpack.c.h.b16 %v896
      %v2809 = vunpack.c.l.b16 %v897
      %v2810 = vunpack.c.h.b16 %v897
      %v2811 = vunpack.c.l.b16 %v898
      %v2812 = vunpack.c.h.b16 %v898
      %v2813 = vunpack.c.l.b16 %v899
      %v2814 = vunpack.c.h.b16 %v899
      %v2815 = vunpack.c.l.b16 %v900
      %v2816 = vunpack.c.h.b16 %v900
      %v2817 = vunpack.c.l.b16 %v901
      %v2818 = vunpack.c.h.b16 %v901
      %v2819 = vunpack.c.l.b16 %v902
      %v2820 = vunpack.c.h.b16 %v902
      %v2821 = vunpack.c.l.b16 %v903
      %v2822 = vunpack.c.h.b16 %v903
      %v2823 = vunpack.c.l.b16 %v904
      %v2824 = vunpack.c.h.b16 %v904
      %v2825 = vunpack.c.l.b16 %v905
      %v2826 = vunpack.c.h.b16 %v905
      %v2827 = vunpack.c.l.b16 %v906
      %v2828 = vunpack.c.h.b16 %v906
      %v2829 = vunpack.c.l.b16 %v907
      %v2830 = vunpack.c.h.b16 %v907
      %v2831 = vunpack.c.l.b16 %v908
      %v2832 = vunpack.c.h.b16 %v908
      %v2833 = vunpack.c.l.b16 %v909
      %v2834 = vunpack.c.h.b16 %v909
      %v2835 = vunpack.c.l.b16 %v910
      %v2836 = vunpack.c.h.b16 %v910
      %v2837 = vunpack.c.l.b16 %v911
      %v2838 = vunpack.c.h.b16 %v911
      %v2839 = vunpack.c.l.b16 %v912
      %v2840 = vunpack.c.h.b16 %v912
      %v2841 = vunpack.c.l.b16 %v913
      %v2842 = vunpack.c.h.b16 %v913
      %v2843 = vunpack.c.l.b16 %v914
      %v2844 = vunpack.c.h.b16 %v914
      %v2845 = vunpack.c.l.b16 %v915
      %v2846 = vunpack.c.h.b16 %v915
      %v2847 = vunpack.c.l.b16 %v916
      %v2848 = vunpack.c.h.b16 %v916
      %v2849 = vunpack.c.l.b16 %v917
      %v2850 = vunpack.c.h.b16 %v917
      %v2851 = vunpack.c.l.b16 %v918
      %v2852 = vunpack.c.h.b16 %v918
      %v2853 = vunpack.c.l.b16 %v919
      %v2854 = vunpack.c.h.b16 %v919
      %v2855 = vunpack.c.l.b16 %v920
      %v2856 = vunpack.c.h.b16 %v920
      %v2857 = vunpack.c.l.b16 %v921
      %v2858 = vunpack.c.h.b16 %v921
      %v2859 = vunpack.c.l.b16 %v922
      %v2860 = vunpack.c.h.b16 %v922
      %v2861 = vunpack.c.l.b16 %v923
      %v2862 = vunpack.c.h.b16 %v923
      %v2863 = vunpack.c.l.b16 %v924
      %v2864 = vunpack.c.h.b16 %v924
      %v2865 = vunpack.c.l.b16 %v925
      %v2866 = vunpack.c.h.b16 %v925
      %v2867 = vunpack.c.l.b16 %v926
      %v2868 = vunpack.c.h.b16 %v926
      %v2869 = vunpack.c.l.b16 %v927
      %v2870 = vunpack.c.h.b16 %v927
      %v2871 = vunpack.c.l.b16 %v928
      %v2872 = vunpack.c.h.b16 %v928
      %v2873 = vunpack.c.l.b16 %v929
      %v2874 = vunpack.c.h.b16 %v929
      %v2875 = vunpack.c.l.b16 %v930
      %v2876 = vunpack.c.h.b16 %v930
      %v2877 = vunpack.c.l.b16 %v931
      %v2878 = vunpack.c.h.b16 %v931
      %v2879 = vunpack.c.l.b16 %v932
      %v2880 = vunpack.c.h.b16 %v932
      %v2881 = vunpack.c.l.b16 %v933
      %v2882 = vunpack.c.h.b16 %v933
      %v2883 = vunpack.c.l.b16 %v934
      %v2884 = vunpack.c.h.b16 %v934
      %v2885 = vunpack.c.l.b16 %v935
      %v2886 = vunpack.c.h.b16 %v935
      %v2887 = vunpack.c.l.b16 %v936
      %v2888 = vunpack.c.h.b16 %v936
      %v2889 = vunpack.c.l.b16 %v937
      %v2890 = vunpack.c.h.b16 %v937
      %v2891 = vunpack.c.l.b16 %v938
      %v2892 = vunpack.c.h.b16 %v938
      %v2893 = vunpack.c.l.b16 %v939
      %v2894 = vunpack.c.h.b16 %v939
      %v2895 = vunpack.c.l.b16 %v940
      %v2896 = vunpack.c.h.b16 %v940
      %v2897 = vunpack.c.l.b16 %v941
      %v2898 = vunpack.c.h.b16 %v941
      %v2899 = vunpack.c.l.b16 %v942
      %v2900 = vunpack.c.h.b16 %v942
      %v2901 = vunpack.c.l.b16 %v943
      %v2902 = vunpack.c.h.b16 %v943
      %v2903 = vunpack.c.l.b16 %v944
      %v2904 = vunpack.c.h.b16 %v944
      %v2905 = vunpack.c.l.b16 %v945
      %v2906 = vunpack.c.h.b16 %v945
      %v2907 = vunpack.c.l.b16 %v946
      %v2908 = vunpack.c.h.b16 %v946
      %v2909 = vunpack.c.l.b16 %v947
      %v2910 = vunpack.c.h.b16 %v947
      %v2911 = vunpack.c.l.b16 %v948
      %v2912 = vunpack.c.h.b16 %v948
      %v2913 = vunpack.c.l.b16 %v949
      %v2914 = vunpack.c.h.b16 %v949
      %v2915 = vunpack.c.l.b16 %v950
      %v2916 = vunpack.c.h.b16 %v950
      %v2917 = vunpack.c.l.b16 %v951
      %v2918 = vunpack.c.h.b16 %v951
      %v2919 = vunpack.c.l.b16 %v952
      %v2920 = vunpack.c.h.b16 %v952
      %v2921 = vunpack.c.l.b16 %v953
      %v2922 = vunpack.c.h.b16 %v953
      %v2923 = vunpack.c.l.b16 %v954
      %v2924 = vunpack.c.h.b16 %v954
      %v2925 = vunpack.c.l.b16 %v955
      %v2926 = vunpack.c.h.b16 %v955
      %v2927 = vunpack.c.l.b16 %v956
      %v2928 = vunpack.c.h.b16 %v956
      %v2929 = vunpack.c.l.b16 %v957
      %v2930 = vunpack.c.h.b16 %v957
      %v2931 = vunpack.c.l.b16 %v958
      %v2932 = vunpack.c.h.b16 %v958
      %v2933 = vunpack.c.l.b16 %v959
      %v2934 = vunpack.c.h.b16 %v959
      %v2935 = vunpack.c.l.b16 %v960
      %v2936 = vunpack.c.h.b16 %v960
      %v2937 = vunpack.c.l.b16 %v961
      %v2938 = vunpack.c.h.b16 %v961
      %v2939 = vunpack.c.l.b16 %v962
      %v2940 = vunpack.c.h.b16 %v962
      %v2941 = vunpack.c.l.b16 %v963
      %v2942 = vunpack.c.h.b16 %v963
      %v2943 = vunpack.c.l.b16 %v964
      %v2944 = vunpack.c.h.b16 %v964
      %v2945 = vunpack.c.l.b16 %v965
      %v2946 = vunpack.c.h.b16 %v965
      %v2947 = vunpack.c.l.b16 %v966
      %v2948 = vunpack.c.h.b16 %v966
      %v2949 = vunpack.c.l.b16 %v967
      %v2950 = vunpack.c.h.b16 %v967
      %v2951 = vunpack.c.l.b16 %v968
      %v2952 = vunpack.c.h.b16 %v968
      %v2953 = vunpack.c.l.b16 %v969
      %v2954 = vunpack.c.h.b16 %v969
      %v2955 = vunpack.c.l.b16 %v970
      %v2956 = vunpack.c.h.b16 %v970
      %v2957 = vunpack.c.l.b16 %v971
      %v2958 = vunpack.c.h.b16 %v971
      %v2959 = vunpack.c.l.b16 %v972
      %v2960 = vunpack.c.h.b16 %v972
      %v2961 = vunpack.c.l.b16 %v973
      %v2962 = vunpack.c.h.b16 %v973
      %v2963 = vunpack.c.l.b16 %v974
      %v2964 = vunpack.c.h.b16 %v974
      %v2965 = vunpack.c.l.b16 %v975
      %v2966 = vunpack.c.h.b16 %v975
      %v2967 = vunpack.c.l.b16 %v976
      %v2968 = vunpack.c.h.b16 %v976
      %v2969 = vunpack.c.l.b16 %v977
      %v2970 = vunpack.c.h.b16 %v977
      %v2971 = vunpack.c.l.b16 %v978
      %v2972 = vunpack.c.h.b16 %v978
      %v2973 = vunpack.c.l.b16 %v979
      %v2974 = vunpack.c.h.b16 %v979
      %v2975 = vunpack.c.l.b16 %v980
      %v2976 = vunpack.c.h.b16 %v980
      %v2977 = vunpack.c.l.b16 %v981
      %v2978 = vunpack.c.h.b16 %v981
      %v2979 = vunpack.c.l.b16 %v982
      %v2980 = vunpack.c.h.b16 %v982
      %v2981 = vunpack.c.l.b16 %v983
      %v2982 = vunpack.c.h.b16 %v983
      %v2983 = vunpack.c.l.b16 %v984
      %v2984 = vunpack.c.h.b16 %v984
      %v2985 = vunpack.c.l.b16 %v985
      %v2986 = vunpack.c.h.b16 %v985
      %v2987 = vunpack.c.l.b16 %v986
      %v2988 = vunpack.c.h.b16 %v986
      %v2989 = vunpack.c.l.b16 %v987
      %v2990 = vunpack.c.h.b16 %v987
      %v2991 = vunpack.c.l.b16 %v988
      %v2992 = vunpack.c.h.b16 %v988
      %v2993 = vunpack.c.l.b16 %v989
      %v2994 = vunpack.c.h.b16 %v989
      %v2995 = vunpack.c.l.b16 %v990
      %v2996 = vunpack.c.h.b16 %v990
      %v2997 = vunpack.c.l.b16 %v991
      %v2998 = vunpack.c.h.b16 %v991
      %v2999 = vunpack.c.l.b16 %v992
      %v3000 = vunpack.c.h.b16 %v992
      %v3001 = vunpack.c.l.b16 %v993
      %v3002 = vunpack.c.h.b16 %v993
      %v3003 = vunpack.c.l.b16 %v994
      %v3004 = vunpack.c.h.b16 %v994
      %v3005 = vunpack.c.l.b16 %v995
      %v3006 = vunpack.c.h.b16 %v995
      %v3007 = vunpack.c.l.b16 %v996
      %v3008 = vunpack.c.h.b16 %v996
      %v3009 = vunpack.c.l.b16 %v997
      %v3010 = vunpack.c.h.b16 %v997
      %v3011 = vunpack.c.l.b16 %v998
      %v3012 = vunpack.c.h.b16 %v998
      %v3013 = vunpack.c.l.b16 %v999
      %v3014 = vunpack.c.h.b16 %v999
      %v3015 = vunpack.c.l.b16 %v1000
      %v3016 = vunpack.c.h.b16 %v1000
      %v3017 = vunpack.c.l.b16 %v1001
      %v3018 = vunpack.c.h.b16 %v1001
      %v3019 = vunpack.c.l.b16 %v1002
      %v3020 = vunpack.c.h.b16 %v1002
      %v3021 = vunpack.c.l.b16 %v1003
      %v3022 = vunpack.c.h.b16 %v1003
      %v3023 = vunpack.c.l.b16 %v1004
      %v3024 = vunpack.c.h.b16 %v1004
      %v3025 = vunpack.c.l.b16 %v1005
      %v3026 = vunpack.c.h.b16 %v1005
      %v3027 = vunpack.c.l.b16 %v1006
      %v3028 = vunpack.c.h.b16 %v1006
      %v3029 = vpack.c.b16 %v2777, %v2773
      %v3030 = vpack.c.b16 %v2778, %v2774
      %v3031 = vpack.c.b16 %v2779, %v2775
      %v3032 = vpack.c.b16 %v2780, %v2776
      %v3033 = vpack.c.b16 %v2785, %v2781
      %v3034 = vpack.c.b16 %v2786, %v2782
      %v3035 = vpack.c.b16 %v2787, %v2783
      %v3036 = vpack.c.b16 %v2788, %v2784
      %v3037 = vpack.c.b16 %v2793, %v2789
      %v3038 = vpack.c.b16 %v2794, %v2790
      %v3039 = vpack.c.b16 %v2795, %v2791
      %v3040 = vpack.c.b16 %v2796, %v2792
      %v3041 = vpack.c.b16 %v2801, %v2797
      %v3042 = vpack.c.b16 %v2802, %v2798
      %v3043 = vpack.c.b16 %v2803, %v2799
      %v3044 = vpack.c.b16 %v2804, %v2800
      %v3045 = vpack.c.b16 %v2809, %v2805
      %v3046 = vpack.c.b16 %v2810, %v2806
      %v3047 = vpack.c.b16 %v2811, %v2807
      %v3048 = vpack.c.b16 %v2812, %v2808
      %v3049 = vpack.c.b16 %v2817, %v2813
      %v3050 = vpack.c.b16 %v2818, %v2814
      %v3051 = vpack.c.b16 %v2819, %v2815
      %v3052 = vpack.c.b16 %v2820, %v2816
      %v3053 = vpack.c.b16 %v2825, %v2821
      %v3054 = vpack.c.b16 %v2826, %v2822
      %v3055 = vpack.c.b16 %v2827, %v2823
      %v3056 = vpack.c.b16 %v2828, %v2824
      %v3057 = vpack.c.b16 %v2833, %v2829
      %v3058 = vpack.c.b16 %v2834, %v2830
      %v3059 = vpack.c.b16 %v2835, %v2831
      %v3060 = vpack.c.b16 %v2836, %v2832
      %v3061 = vpack.c.b16 %v2841, %v2837
      %v3062 = vpack.c.b16 %v2842, %v2838
      %v3063 = vpack.c.b16 %v2843, %v2839
      %v3064 = vpack.c.b16 %v2844, %v2840
      %v3065 = vpack.c.b16 %v2849, %v2845
      %v3066 = vpack.c.b16 %v2850, %v2846
      %v3067 = vpack.c.b16 %v2851, %v2847
      %v3068 = vpack.c.b16 %v2852, %v2848
      %v3069 = vpack.c.b16 %v2857, %v2853
      %v3070 = vpack.c.b16 %v2858, %v2854
      %v3071 = vpack.c.b16 %v2859, %v2855
      %v3072 = vpack.c.b16 %v2860, %v2856
      %v3073 = vpack.c.b16 %v2865, %v2861
      %v3074 = vpack.c.b16 %v2866, %v2862
      %v3075 = vpack.c.b16 %v2867, %v2863
      %v3076 = vpack.c.b16 %v2868, %v2864
      %v3077 = vpack.c.b16 %v2873, %v2869
      %v3078 = vpack.c.b16 %v2874, %v2870
      %v3079 = vpack.c.b16 %v2875, %v2871
      %v3080 = vpack.c.b16 %v2876, %v2872
      %v3081 = vpack.c.b16 %v2881, %v2877
      %v3082 = vpack.c.b16 %v2882, %v2878
      %v3083 = vpack.c.b16 %v2883, %v2879
      %v3084 = vpack.c.b16 %v2884, %v2880
      %v3085 = vpack.c.b16 %v2889, %v2885
      %v3086 = vpack.c.b16 %v2890, %v2886
      %v3087 = vpack.c.b16 %v2891, %v2887
      %v3088 = vpack.c.b16 %v2892, %v2888
      %v3089 = vpack.c.b16 %v2897, %v2893
      %v3090 = vpack.c.b16 %v2898, %v2894
      %v3091 = vpack.c.b16 %v2899, %v2895
      %v3092 = vpack.c.b16 %v2900, %v2896
      %v3093 = vpack.c.b16 %v2905, %v2901
      %v3094 = vpack.c.b16 %v2906, %v2902
      %v3095 = vpack.c.b16 %v2907, %v2903
      %v3096 = vpack.c.b16 %v2908, %v2904
      %v3097 = vpack.c.b16 %v2913, %v2909
      %v3098 = vpack.c.b16 %v2914, %v2910
      %v3099 = vpack.c.b16 %v2915, %v2911
      %v3100 = vpack.c.b16 %v2916, %v2912
      %v3101 = vpack.c.b16 %v2921, %v2917
      %v3102 = vpack.c.b16 %v2922, %v2918
      %v3103 = vpack.c.b16 %v2923, %v2919
      %v3104 = vpack.c.b16 %v2924, %v2920
      %v3105 = vpack.c.b16 %v2929, %v2925
      %v3106 = vpack.c.b16 %v2930, %v2926
      %v3107 = vpack.c.b16 %v2931, %v2927
      %v3108 = vpack.c.b16 %v2932, %v2928
      %v3109 = vpack.c.b16 %v2937, %v2933
      %v3110 = vpack.c.b16 %v2938, %v2934
      %v3111 = vpack.c.b16 %v2939, %v2935
      %v3112 = vpack.c.b16 %v2940, %v2936
      %v3113 = vpack.c.b16 %v2945, %v2941
      %v3114 = vpack.c.b16 %v2946, %v2942
      %v3115 = vpack.c.b16 %v2947, %v2943
      %v3116 = vpack.c.b16 %v2948, %v2944
      %v3117 = vpack.c.b16 %v2953, %v2949
      %v3118 = vpack.c.b16 %v2954, %v2950
      %v3119 = vpack.c.b16 %v2955, %v2951
      %v3120 = vpack.c.b16 %v2956, %v2952
      %v3121 = vpack.c.b16 %v2961, %v2957
      %v3122 = vpack.c.b16 %v2962, %v2958
      %v3123 = vpack.c.b16 %v2963, %v2959
      %v3124 = vpack.c.b16 %v2964, %v2960
      %v3125 = vpack.c.b16 %v2969, %v2965
      %v3126 = vpack.c.b16 %v2970, %v2966
      %v3127 = vpack.c.b16 %v2971, %v2967
      %v3128 = vpack.c.b16 %v2972, %v2968
      %v3129 = vpack.c.b16 %v2977, %v2973
      %v3130 = vpack.c.b16 %v2978, %v2974
      %v3131 = vpack.c.b16 %v2979, %v2975
      %v3132 = vpack.c.b16 %v2980, %v2976
      %v3133 = vpack.c.b16 %v2985, %v2981
      %v3134 = vpack.c.b16 %v2986, %v2982
      %v3135 = vpack.c.b16 %v2987, %v2983
      %v3136 = vpack.c.b16 %v2988, %v2984
      %v3137 = vpack.c.b16 %v2993, %v2989
      %v3138 = vpack.c.b16 %v2994, %v2990
      %v3139 = vpack.c.b16 %v2995, %v2991
      %v3140 = vpack.c.b16 %v2996, %v2992
      %v3141 = vpack.c.b16 %v3001, %v2997
      %v3142 = vpack.c.b16 %v3002, %v2998
      %v3143 = vpack.c.b16 %v3003, %v2999
      %v3144 = vpack.c.b16 %v3004, %v3000
      %v3145 = vpack.c.b16 %v3009, %v3005
      %v3146 = vpack.c.b16 %v3010, %v3006
      %v3147 = vpack.c.b16 %v3011, %v3007
      %v3148 = vpack.c.b16 %v3012, %v3008
      %v3149 = vpack.c.b16 %v3017, %v3013
      %v3150 = vpack.c.b16 %v3018, %v3014
      %v3151 = vpack.c.b16 %v3019, %v3015
      %v3152 = vpack.c.b16 %v3020, %v3016
      %v3153 = vpack.c.b16 %v3025, %v3021
      %v3154 = vpack.c.b16 %v3026, %v3022
      %v3155 = vpack.c.b16 %v3027, %v3023
      %v3156 = vpack.c.b16 %v3028, %v3024
      %3285 = vmatprep.subr.bf16.mxu0 %v3030
      %3286 = vmatpush1.bf16.msra.mxu0 %v3029
      %3287 = vmatprep.subr.bf16.mxu0 %v3034
      %3288 = vmatpush1.bf16.msra.mxu0 %v3033
      %3289 = vmatprep.subr.bf16.mxu0 %v3038
      %3290 = vmatpush1.bf16.msra.mxu0 %v3037
      %3291 = vmatprep.subr.bf16.mxu0 %v3042
      %3292 = vmatpush1.bf16.msra.mxu0 %v3041
      %3293 = vmatprep.subr.bf16.mxu0 %v3046
      %3294 = vmatpush1.bf16.msra.mxu0 %v3045
      %3295 = vmatprep.subr.bf16.mxu0 %v3050
      %3296 = vmatpush1.bf16.msra.mxu0 %v3049
      %3297 = vmatprep.subr.bf16.mxu0 %v3054
      %3298 = vmatpush1.bf16.msra.mxu0 %v3053
      %3299 = vmatprep.subr.bf16.mxu0 %v3058
      %3300 = vmatpush1.bf16.msra.mxu0 %v3057
      %3301 = vmatprep.subr.bf16.mxu0 %v3062
      %3302 = vmatpush1.bf16.msra.mxu0 %v3061
      %3303 = vmatprep.subr.bf16.mxu0 %v3066
      %3304 = vmatpush1.bf16.msra.mxu0 %v3065
      %3305 = vmatprep.subr.bf16.mxu0 %v3070
      %3306 = vmatpush1.bf16.msra.mxu0 %v3069
      %3307 = vmatprep.subr.bf16.mxu0 %v3074
      %3308 = vmatpush1.bf16.msra.mxu0 %v3073
      %3309 = vmatprep.subr.bf16.mxu0 %v3078
      %3310 = vmatpush1.bf16.msra.mxu0 %v3077
      %3311 = vmatprep.subr.bf16.mxu0 %v3082
      %3312 = vmatpush1.bf16.msra.mxu0 %v3081
      %3313 = vmatprep.subr.bf16.mxu0 %v3086
      %3314 = vmatpush1.bf16.msra.mxu0 %v3085
      %3315 = vmatprep.subr.bf16.mxu0 %v3090
      %3316 = vmatpush1.bf16.msra.mxu0 %v3089
      %3317 = vmatprep.mubr.bf16.mxu0 %v848
      %3318 = vmatmul.mubr.bf16.gmra.mrb[0].mxu0 %v847
      %v3319 = vpop.f32.mrb[0].mxu0
      %v3320 = vadd.f32 %v2341, %v3319
      %v3321 = vpop.f32.mrb[0].mxu0
      %v3322 = vadd.f32 %v2343, %v3321
      %v3323 = vpop.f32.mrb[0].mxu0
      %v3324 = vadd.f32 %v2345, %v3323
      %v3325 = vpop.f32.mrb[0].mxu0
      %v3326 = vadd.f32 %v2347, %v3325
      %3327 = vmatprep.mubr.bf16.mxu0 %v852
      %3328 = vmatmul.mubr.bf16.gmra.mrb[0].mxu0 %v851
      %v3329 = vpop.f32.mrb[0].mxu0
      %v3330 = vadd.f32 %v2351, %v3329
      %v3331 = vpop.f32.mrb[0].mxu0
      %v3332 = vadd.f32 %v2353, %v3331
      %v3333 = vpop.f32.mrb[0].mxu0
      %v3334 = vadd.f32 %v2355, %v3333
      %v3335 = vpop.f32.mrb[0].mxu0
      %v3336 = vadd.f32 %v2357, %v3335
      %3337 = vmatprep.mubr.bf16.mxu0 %v856
      %3338 = vmatmul.mubr.bf16.gmra.mrb[0].mxu0 %v855
      %v3339 = vpop.f32.mrb[0].mxu0
      %v3340 = vadd.f32 %v2361, %v3339
      %v3341 = vpop.f32.mrb[0].mxu0
      %v3342 = vadd.f32 %v2363, %v3341
      %v3343 = vpop.f32.mrb[0].mxu0
      %v3344 = vadd.f32 %v2365, %v3343
      %v3345 = vpop.f32.mrb[0].mxu0
      %v3346 = vadd.f32 %v2367, %v3345
      %3347 = vmatprep.mubr.bf16.mxu0 %v860
      %3348 = vmatmul.mubr.bf16.gmra.mrb[0].mxu0 %v859
      %v3349 = vpop.f32.mrb[0].mxu0
      %v3350 = vadd.f32 %v2371, %v3349
      %v3351 = vpop.f32.mrb[0].mxu0
      %v3352 = vadd.f32 %v2373, %v3351
      %v3353 = vpop.f32.mrb[0].mxu0
      %v3354 = vadd.f32 %v2375, %v3353
      %v3355 = vpop.f32.mrb[0].mxu0
      %v3356 = vadd.f32 %v2377, %v3355
      %3357 = vmatprep.mubr.bf16.mxu0 %v864
      %3358 = vmatmul.mubr.bf16.gmra.mrb[0].mxu0 %v863
      %v3359 = vpop.f32.mrb[0].mxu0
      %v3360 = vadd.f32 %v2381, %v3359
      %v3361 = vpop.f32.mrb[0].mxu0
      %v3362 = vadd.f32 %v2383, %v3361
      %v3363 = vpop.f32.mrb[0].mxu0
      %v3364 = vadd.f32 %v2385, %v3363
      %v3365 = vpop.f32.mrb[0].mxu0
      %v3366 = vadd.f32 %v2387, %v3365
      %3367 = vmatprep.mubr.bf16.mxu0 %v868
      %3368 = vmatmul.mubr.bf16.gmra.mrb[0].mxu0 %v867
      %v3369 = vpop.f32.mrb[0].mxu0
      %v3370 = vadd.f32 %v2391, %v3369
      %v3371 = vpop.f32.mrb[0].mxu0
      %v3372 = vadd.f32 %v2393, %v3371
      %v3373 = vpop.f32.mrb[0].mxu0
      %v3374 = vadd.f32 %v2395, %v3373
      %v3375 = vpop.f32.mrb[0].mxu0
      %v3376 = vadd.f32 %v2397, %v3375
      %3377 = vmatprep.mubr.bf16.mxu0 %v872
      %3378 = vmatmul.mubr.bf16.gmra.mrb[0].mxu0 %v871
      %v3379 = vpop.f32.mrb[0].mxu0
      %v3380 = vadd.f32 %v2401, %v3379
      %v3381 = vpop.f32.mrb[0].mxu0
      %v3382 = vadd.f32 %v2403, %v3381
      %v3383 = vpop.f32.mrb[0].mxu0
      %v3384 = vadd.f32 %v2405, %v3383
      %v3385 = vpop.f32.mrb[0].mxu0
      %v3386 = vadd.f32 %v2407, %v3385
      %3387 = vmatprep.mubr.bf16.mxu0 %v876
      %3388 = vmatmul.mubr.bf16.gmra.mrb[0].mxu0 %v875
      %v3389 = vpop.f32.mrb[0].mxu0
      %v3390 = vadd.f32 %v2411, %v3389
      %v3391 = vpop.f32.mrb[0].mxu0
      %v3392 = vadd.f32 %v2413, %v3391
      %v3393 = vpop.f32.mrb[0].mxu0
      %v3394 = vadd.f32 %v2415, %v3393
      %v3395 = vpop.f32.mrb[0].mxu0
      %v3396 = vadd.f32 %v2417, %v3395
      %3397 = vdwg.mxu0
      %3398 = vmatprep.subr.bf16.mxu0 %v3094
      %3399 = vmatpush1.bf16.msra.mxu0 %v3093
      %3400 = vmatprep.subr.bf16.mxu0 %v3098
      %3401 = vmatpush1.bf16.msra.mxu0 %v3097
      %3402 = vmatprep.subr.bf16.mxu0 %v3102
      %3403 = vmatpush1.bf16.msra.mxu0 %v3101
      %3404 = vmatprep.subr.bf16.mxu0 %v3106
      %3405 = vmatpush1.bf16.msra.mxu0 %v3105
      %3406 = vmatprep.subr.bf16.mxu0 %v3110
      %3407 = vmatpush1.bf16.msra.mxu0 %v3109
      %3408 = vmatprep.subr.bf16.mxu0 %v3114
      %3409 = vmatpush1.bf16.msra.mxu0 %v3113
      %3410 = vmatprep.subr.bf16.mxu0 %v3118
      %3411 = vmatpush1.bf16.msra.mxu0 %v3117
      %3412 = vmatprep.subr.bf16.mxu0 %v3122
      %3413 = vmatpush1.bf16.msra.mxu0 %v3121
      %3414 = vmatprep.subr.bf16.mxu0 %v3126
      %3415 = vmatpush1.bf16.msra.mxu0 %v3125
      %3416 = vmatprep.subr.bf16.mxu0 %v3130
      %3417 = vmatpush1.bf16.msra.mxu0 %v3129
      %3418 = vmatprep.subr.bf16.mxu0 %v3134
      %3419 = vmatpush1.bf16.msra.mxu0 %v3133
      %3420 = vmatprep.subr.bf16.mxu0 %v3138
      %3421 = vmatpush1.bf16.msra.mxu0 %v3137
      %3422 = vmatprep.subr.bf16.mxu0 %v3142
      %3423 = vmatpush1.bf16.msra.mxu0 %v3141
      %3424 = vmatprep.subr.bf16.mxu0 %v3146
      %3425 = vmatpush1.bf16.msra.mxu0 %v3145
      %3426 = vmatprep.subr.bf16.mxu0 %v3150
      %3427 = vmatpush1.bf16.msra.mxu0 %v3149
      %3428 = vmatprep.subr.bf16.mxu0 %v3154
      %3429 = vmatpush1.bf16.msra.mxu0 %v3153
      %3430 = vmatprep.mubr.bf16.mxu0 %v850
      %3431 = vmatmul.mubr.bf16.gmra.mrb[0].mxu0 %v849
      %v3432 = vpop.f32.mrb[0].mxu0
      %v3433 = vadd.f32 %v3320, %v3432
      %v3434 = vpop.f32.mrb[0].mxu0
      %v3435 = vadd.f32 %v3322, %v3434
      %v3436 = vpop.f32.mrb[0].mxu0
      %v3437 = vadd.f32 %v3324, %v3436
      %v3438 = vpop.f32.mrb[0].mxu0
      %v3439 = vadd.f32 %v3326, %v3438
      %3440 = vmatprep.mubr.bf16.mxu0 %v854
      %3441 = vmatmul.mubr.bf16.gmra.mrb[0].mxu0 %v853
      %v3442 = vpop.f32.mrb[0].mxu0
      %v3443 = vadd.f32 %v3330, %v3442
      %v3444 = vpop.f32.mrb[0].mxu0
      %v3445 = vadd.f32 %v3332, %v3444
      %v3446 = vpop.f32.mrb[0].mxu0
      %v3447 = vadd.f32 %v3334, %v3446
      %v3448 = vpop.f32.mrb[0].mxu0
      %v3449 = vadd.f32 %v3336, %v3448
      %3450 = vmatprep.mubr.bf16.mxu0 %v858
      %3451 = vmatmul.mubr.bf16.gmra.mrb[0].mxu0 %v857
      %v3452 = vpop.f32.mrb[0].mxu0
      %v3453 = vadd.f32 %v3340, %v3452
      %v3454 = vpop.f32.mrb[0].mxu0
      %v3455 = vadd.f32 %v3342, %v3454
      %v3456 = vpop.f32.mrb[0].mxu0
      %v3457 = vadd.f32 %v3344, %v3456
      %v3458 = vpop.f32.mrb[0].mxu0
      %v3459 = vadd.f32 %v3346, %v3458
      %3460 = vmatprep.mubr.bf16.mxu0 %v862
      %3461 = vmatmul.mubr.bf16.gmra.mrb[0].mxu0 %v861
      %v3462 = vpop.f32.mrb[0].mxu0
      %v3463 = vadd.f32 %v3350, %v3462
      %v3464 = vpop.f32.mrb[0].mxu0
      %v3465 = vadd.f32 %v3352, %v3464
      %v3466 = vpop.f32.mrb[0].mxu0
      %v3467 = vadd.f32 %v3354, %v3466
      %v3468 = vpop.f32.mrb[0].mxu0
      %v3469 = vadd.f32 %v3356, %v3468
      %3470 = vmatprep.mubr.bf16.mxu0 %v866
      %3471 = vmatmul.mubr.bf16.gmra.mrb[0].mxu0 %v865
      %v3472 = vpop.f32.mrb[0].mxu0
      %v3473 = vadd.f32 %v3360, %v3472
      %v3474 = vpop.f32.mrb[0].mxu0
      %v3475 = vadd.f32 %v3362, %v3474
      %v3476 = vpop.f32.mrb[0].mxu0
      %v3477 = vadd.f32 %v3364, %v3476
      %v3478 = vpop.f32.mrb[0].mxu0
      %v3479 = vadd.f32 %v3366, %v3478
      %3480 = vmatprep.mubr.bf16.mxu0 %v870
      %3481 = vmatmul.mubr.bf16.gmra.mrb[0].mxu0 %v869
      %v3482 = vpop.f32.mrb[0].mxu0
      %v3483 = vadd.f32 %v3370, %v3482
      %v3484 = vpop.f32.mrb[0].mxu0
      %v3485 = vadd.f32 %v3372, %v3484
      %v3486 = vpop.f32.mrb[0].mxu0
      %v3487 = vadd.f32 %v3374, %v3486
      %v3488 = vpop.f32.mrb[0].mxu0
      %v3489 = vadd.f32 %v3376, %v3488
      %3490 = vmatprep.mubr.bf16.mxu0 %v874
      %3491 = vmatmul.mubr.bf16.gmra.mrb[0].mxu0 %v873
      %v3492 = vpop.f32.mrb[0].mxu0
      %v3493 = vadd.f32 %v3380, %v3492
      %v3494 = vpop.f32.mrb[0].mxu0
      %v3495 = vadd.f32 %v3382, %v3494
      %v3496 = vpop.f32.mrb[0].mxu0
      %v3497 = vadd.f32 %v3384, %v3496
      %v3498 = vpop.f32.mrb[0].mxu0
      %v3499 = vadd.f32 %v3386, %v3498
      %3500 = vmatprep.mubr.bf16.mxu0 %v878
      %3501 = vmatmul.mubr.bf16.gmra.mrb[0].mxu0 %v877
      %v3502 = vpop.f32.mrb[0].mxu0
      %v3503 = vadd.f32 %v3390, %v3502
      %v3504 = vpop.f32.mrb[0].mxu0
      %v3505 = vadd.f32 %v3392, %v3504
      %v3506 = vpop.f32.mrb[0].mxu0
      %v3507 = vadd.f32 %v3394, %v3506
      %v3508 = vpop.f32.mrb[0].mxu0
      %v3509 = vadd.f32 %v3396, %v3508
      %3510 = vdwg.mxu0
      %3511 = vmatprep.subr.bf16.mxu0 %v3032
      %3512 = vmatpush1.bf16.msra.mxu0 %v3031
      %3513 = vmatprep.subr.bf16.mxu0 %v3036
      %3514 = vmatpush1.bf16.msra.mxu0 %v3035
      %3515 = vmatprep.subr.bf16.mxu0 %v3040
      %3516 = vmatpush1.bf16.msra.mxu0 %v3039
      %3517 = vmatprep.subr.bf16.mxu0 %v3044
      %3518 = vmatpush1.bf16.msra.mxu0 %v3043
      %3519 = vmatprep.subr.bf16.mxu0 %v3048
      %3520 = vmatpush1.bf16.msra.mxu0 %v3047
      %3521 = vmatprep.subr.bf16.mxu0 %v3052
      %3522 = vmatpush1.bf16.msra.mxu0 %v3051
      %3523 = vmatprep.subr.bf16.mxu0 %v3056
      %3524 = vmatpush1.bf16.msra.mxu0 %v3055
      %3525 = vmatprep.subr.bf16.mxu0 %v3060
      %3526 = vmatpush1.bf16.msra.mxu0 %v3059
      %3527 = vmatprep.subr.bf16.mxu0 %v3064
      %3528 = vmatpush1.bf16.msra.mxu0 %v3063
      %3529 = vmatprep.subr.bf16.mxu0 %v3068
      %3530 = vmatpush1.bf16.msra.mxu0 %v3067
      %3531 = vmatprep.subr.bf16.mxu0 %v3072
      %3532 = vmatpush1.bf16.msra.mxu0 %v3071
      %3533 = vmatprep.subr.bf16.mxu0 %v3076
      %3534 = vmatpush1.bf16.msra.mxu0 %v3075
      %3535 = vmatprep.subr.bf16.mxu0 %v3080
      %3536 = vmatpush1.bf16.msra.mxu0 %v3079
      %3537 = vmatprep.subr.bf16.mxu0 %v3084
      %3538 = vmatpush1.bf16.msra.mxu0 %v3083
      %3539 = vmatprep.subr.bf16.mxu0 %v3088
      %3540 = vmatpush1.bf16.msra.mxu0 %v3087
      %3541 = vmatprep.subr.bf16.mxu0 %v3092
      %3542 = vmatpush1.bf16.msra.mxu0 %v3091
      %3543 = vmatprep.mubr.bf16.mxu0 %v848
      %3544 = vmatmul.mubr.bf16.gmra.mrb[0].mxu0 %v847
      %v3545 = vpop.f32.mrb[0].mxu0
      %v3546 = vadd.f32 %v2567, %v3545
      %v3547 = vpop.f32.mrb[0].mxu0
      %v3548 = vadd.f32 %v2569, %v3547
      %v3549 = vpop.f32.mrb[0].mxu0
      %v3550 = vadd.f32 %v2571, %v3549
      %v3551 = vpop.f32.mrb[0].mxu0
      %v3552 = vadd.f32 %v2573, %v3551
      %3553 = vmatprep.mubr.bf16.mxu0 %v852
      %3554 = vmatmul.mubr.bf16.gmra.mrb[0].mxu0 %v851
      %v3555 = vpop.f32.mrb[0].mxu0
      %v3556 = vadd.f32 %v2577, %v3555
      %v3557 = vpop.f32.mrb[0].mxu0
      %v3558 = vadd.f32 %v2579, %v3557
      %v3559 = vpop.f32.mrb[0].mxu0
      %v3560 = vadd.f32 %v2581, %v3559
      %v3561 = vpop.f32.mrb[0].mxu0
      %v3562 = vadd.f32 %v2583, %v3561
      %3563 = vmatprep.mubr.bf16.mxu0 %v856
      %3564 = vmatmul.mubr.bf16.gmra.mrb[0].mxu0 %v855
      %v3565 = vpop.f32.mrb[0].mxu0
      %v3566 = vadd.f32 %v2587, %v3565
      %v3567 = vpop.f32.mrb[0].mxu0
      %v3568 = vadd.f32 %v2589, %v3567
      %v3569 = vpop.f32.mrb[0].mxu0
      %v3570 = vadd.f32 %v2591, %v3569
      %v3571 = vpop.f32.mrb[0].mxu0
      %v3572 = vadd.f32 %v2593, %v3571
      %3573 = vmatprep.mubr.bf16.mxu0 %v860
      %3574 = vmatmul.mubr.bf16.gmra.mrb[0].mxu0 %v859
      %v3575 = vpop.f32.mrb[0].mxu0
      %v3576 = vadd.f32 %v2597, %v3575
      %v3577 = vpop.f32.mrb[0].mxu0
      %v3578 = vadd.f32 %v2599, %v3577
      %v3579 = vpop.f32.mrb[0].mxu0
      %v3580 = vadd.f32 %v2601, %v3579
      %v3581 = vpop.f32.mrb[0].mxu0
      %v3582 = vadd.f32 %v2603, %v3581
      %3583 = vmatprep.mubr.bf16.mxu0 %v864
      %3584 = vmatmul.mubr.bf16.gmra.mrb[0].mxu0 %v863
      %v3585 = vpop.f32.mrb[0].mxu0
      %v3586 = vadd.f32 %v2607, %v3585
      %v3587 = vpop.f32.mrb[0].mxu0
      %v3588 = vadd.f32 %v2609, %v3587
      %v3589 = vpop.f32.mrb[0].mxu0
      %v3590 = vadd.f32 %v2611, %v3589
      %v3591 = vpop.f32.mrb[0].mxu0
      %v3592 = vadd.f32 %v2613, %v3591
      %3593 = vmatprep.mubr.bf16.mxu0 %v868
      %3594 = vmatmul.mubr.bf16.gmra.mrb[0].mxu0 %v867
      %v3595 = vpop.f32.mrb[0].mxu0
      %v3596 = vadd.f32 %v2617, %v3595
      %v3597 = vpop.f32.mrb[0].mxu0
      %v3598 = vadd.f32 %v2619, %v3597
      %v3599 = vpop.f32.mrb[0].mxu0
      %v3600 = vadd.f32 %v2621, %v3599
      %v3601 = vpop.f32.mrb[0].mxu0
      %v3602 = vadd.f32 %v2623, %v3601
      %3603 = vmatprep.mubr.bf16.mxu0 %v872
      %3604 = vmatmul.mubr.bf16.gmra.mrb[0].mxu0 %v871
      %v3605 = vpop.f32.mrb[0].mxu0
      %v3606 = vadd.f32 %v2627, %v3605
      %v3607 = vpop.f32.mrb[0].mxu0
      %v3608 = vadd.f32 %v2629, %v3607
      %v3609 = vpop.f32.mrb[0].mxu0
      %v3610 = vadd.f32 %v2631, %v3609
      %v3611 = vpop.f32.mrb[0].mxu0
      %v3612 = vadd.f32 %v2633, %v3611
      %3613 = vmatprep.mubr.bf16.mxu0 %v876
      %3614 = vmatmul.mubr.bf16.gmra.mrb[0].mxu0 %v875
      %v3615 = vpop.f32.mrb[0].mxu0
      %v3616 = vadd.f32 %v2637, %v3615
      %v3617 = vpop.f32.mrb[0].mxu0
      %v3618 = vadd.f32 %v2639, %v3617
      %v3619 = vpop.f32.mrb[0].mxu0
      %v3620 = vadd.f32 %v2641, %v3619
      %v3621 = vpop.f32.mrb[0].mxu0
      %v3622 = vadd.f32 %v2643, %v3621
      %3623 = vdwg.mxu0
      %3624 = vmatprep.subr.bf16.mxu0 %v3096
      %3625 = vmatpush1.bf16.msra.mxu0 %v3095
      %3626 = vmatprep.subr.bf16.mxu0 %v3100
      %3627 = vmatpush1.bf16.msra.mxu0 %v3099
      %3628 = vmatprep.subr.bf16.mxu0 %v3104
      %3629 = vmatpush1.bf16.msra.mxu0 %v3103
      %3630 = vmatprep.subr.bf16.mxu0 %v3108
      %3631 = vmatpush1.bf16.msra.mxu0 %v3107
      %3632 = vmatprep.subr.bf16.mxu0 %v3112
      %3633 = vmatpush1.bf16.msra.mxu0 %v3111
      %3634 = vmatprep.subr.bf16.mxu0 %v3116
      %3635 = vmatpush1.bf16.msra.mxu0 %v3115
      %3636 = vmatprep.subr.bf16.mxu0 %v3120
      %3637 = vmatpush1.bf16.msra.mxu0 %v3119
      %3638 = vmatprep.subr.bf16.mxu0 %v3124
      %3639 = vmatpush1.bf16.msra.mxu0 %v3123
      %3640 = vmatprep.subr.bf16.mxu0 %v3128
      %3641 = vmatpush1.bf16.msra.mxu0 %v3127
      %3642 = vmatprep.subr.bf16.mxu0 %v3132
      %3643 = vmatpush1.bf16.msra.mxu0 %v3131
      %3644 = vmatprep.subr.bf16.mxu0 %v3136
      %3645 = vmatpush1.bf16.msra.mxu0 %v3135
      %3646 = vmatprep.subr.bf16.mxu0 %v3140
      %3647 = vmatpush1.bf16.msra.mxu0 %v3139
      %3648 = vmatprep.subr.bf16.mxu0 %v3144
      %3649 = vmatpush1.bf16.msra.mxu0 %v3143
      %3650 = vmatprep.subr.bf16.mxu0 %v3148
      %3651 = vmatpush1.bf16.msra.mxu0 %v3147
      %3652 = vmatprep.subr.bf16.mxu0 %v3152
      %3653 = vmatpush1.bf16.msra.mxu0 %v3151
      %3654 = vmatprep.subr.bf16.mxu0 %v3156
      %3655 = vmatpush1.bf16.msra.mxu0 %v3155
      %3656 = vmatprep.mubr.bf16.mxu0 %v850
      %3657 = vmatmul.mubr.bf16.gmra.mrb[0].mxu0 %v849
      %v3658 = vpop.f32.mrb[0].mxu0
      %v3659 = vadd.f32 %v3546, %v3658
      %v3660 = vpop.f32.mrb[0].mxu0
      %v3661 = vadd.f32 %v3548, %v3660
      %v3662 = vpop.f32.mrb[0].mxu0
      %v3663 = vadd.f32 %v3550, %v3662
      %v3664 = vpop.f32.mrb[0].mxu0
      %v3665 = vadd.f32 %v3552, %v3664
      %3666 = vmatprep.mubr.bf16.mxu0 %v854
      %3667 = vmatmul.mubr.bf16.gmra.mrb[0].mxu0 %v853
      %v3668 = vpop.f32.mrb[0].mxu0
      %v3669 = vadd.f32 %v3556, %v3668
      %v3670 = vpop.f32.mrb[0].mxu0
      %v3671 = vadd.f32 %v3558, %v3670
      %v3672 = vpop.f32.mrb[0].mxu0
      %v3673 = vadd.f32 %v3560, %v3672
      %v3674 = vpop.f32.mrb[0].mxu0
      %v3675 = vadd.f32 %v3562, %v3674
      %3676 = vmatprep.mubr.bf16.mxu0 %v858
      %3677 = vmatmul.mubr.bf16.gmra.mrb[0].mxu0 %v857
      %v3678 = vpop.f32.mrb[0].mxu0
      %v3679 = vadd.f32 %v3566, %v3678
      %v3680 = vpop.f32.mrb[0].mxu0
      %v3681 = vadd.f32 %v3568, %v3680
      %v3682 = vpop.f32.mrb[0].mxu0
      %v3683 = vadd.f32 %v3570, %v3682
      %v3684 = vpop.f32.mrb[0].mxu0
      %v3685 = vadd.f32 %v3572, %v3684
      %3686 = vmatprep.mubr.bf16.mxu0 %v862
      %3687 = vmatmul.mubr.bf16.gmra.mrb[0].mxu0 %v861
      %v3688 = vpop.f32.mrb[0].mxu0
      %v3689 = vadd.f32 %v3576, %v3688
      %v3690 = vpop.f32.mrb[0].mxu0
      %v3691 = vadd.f32 %v3578, %v3690
      %v3692 = vpop.f32.mrb[0].mxu0
      %v3693 = vadd.f32 %v3580, %v3692
      %v3694 = vpop.f32.mrb[0].mxu0
      %v3695 = vadd.f32 %v3582, %v3694
      %3696 = vmatprep.mubr.bf16.mxu0 %v866
      %3697 = vmatmul.mubr.bf16.gmra.mrb[0].mxu0 %v865
      %v3698 = vpop.f32.mrb[0].mxu0
      %v3699 = vadd.f32 %v3586, %v3698
      %v3700 = vpop.f32.mrb[0].mxu0
      %v3701 = vadd.f32 %v3588, %v3700
      %v3702 = vpop.f32.mrb[0].mxu0
      %v3703 = vadd.f32 %v3590, %v3702
      %v3704 = vpop.f32.mrb[0].mxu0
      %v3705 = vadd.f32 %v3592, %v3704
      %3706 = vmatprep.mubr.bf16.mxu0 %v870
      %3707 = vmatmul.mubr.bf16.gmra.mrb[0].mxu0 %v869
      %v3708 = vpop.f32.mrb[0].mxu0
      %v3709 = vadd.f32 %v3596, %v3708
      %v3710 = vpop.f32.mrb[0].mxu0
      %v3711 = vadd.f32 %v3598, %v3710
      %v3712 = vpop.f32.mrb[0].mxu0
      %v3713 = vadd.f32 %v3600, %v3712
      %v3714 = vpop.f32.mrb[0].mxu0
      %v3715 = vadd.f32 %v3602, %v3714
      %3716 = vmatprep.mubr.bf16.mxu0 %v874
      %3717 = vmatmul.mubr.bf16.gmra.mrb[0].mxu0 %v873
      %v3718 = vpop.f32.mrb[0].mxu0
      %v3719 = vadd.f32 %v3606, %v3718
      %v3720 = vpop.f32.mrb[0].mxu0
      %v3721 = vadd.f32 %v3608, %v3720
      %v3722 = vpop.f32.mrb[0].mxu0
      %v3723 = vadd.f32 %v3610, %v3722
      %v3724 = vpop.f32.mrb[0].mxu0
      %v3725 = vadd.f32 %v3612, %v3724
      %3726 = vmatprep.mubr.bf16.mxu0 %v878
      %3727 = vmatmul.mubr.bf16.gmra.mrb[0].mxu0 %v877
      %v3728 = vpop.f32.mrb[0].mxu0
      %v3729 = vadd.f32 %v3616, %v3728
      %v3730 = vpop.f32.mrb[0].mxu0
      %v3731 = vadd.f32 %v3618, %v3730
      %v3732 = vpop.f32.mrb[0].mxu0
      %v3733 = vadd.f32 %v3620, %v3732
      %v3734 = vpop.f32.mrb[0].mxu0
      %v3735 = vadd.f32 %v3622, %v3734
      %3736 = vdwg.mxu0
      %v3737 = vld [vmem:[#allocation2] sm:$0xfc]
      %v3738 = vld [vmem:[#allocation2 + $0x8] sm:$0xfc]
      %v3739 = vld [vmem:[#allocation2 + $0x10] sm:$0xfc]
      %v3740 = vld [vmem:[#allocation2 + $0x18] sm:$0xfc]
      %v3741 = vld [vmem:[#allocation2 + $0x40] sm:$0x3]
      %v3742 = vld [vmem:[#allocation2 + $0x48] sm:$0x3]
      %v3743 = vld [vmem:[#allocation2 + $0x50] sm:$0x3]
      %v3744 = vld [vmem:[#allocation2 + $0x58] sm:$0x3]
      %v3745 = vld [vmem:[#allocation2 + $0x60] sm:$0xfc]
      %v3746 = vld [vmem:[#allocation2 + $0x68] sm:$0xfc]
      %v3747 = vld [vmem:[#allocation2 + $0x70] sm:$0xfc]
      %v3748 = vld [vmem:[#allocation2 + $0x78] sm:$0xfc]
      %v3749 = vld [vmem:[#allocation2 + $0xa0] sm:$0x3]
      %v3750 = vld [vmem:[#allocation2 + $0xa8] sm:$0x3]
      %v3751 = vld [vmem:[#allocation2 + $0xb0] sm:$0x3]
      %v3752 = vld [vmem:[#allocation2 + $0xb8] sm:$0x3]
      %v3753 = vld [vmem:[#allocation2 + $0xc0] sm:$0xfc]
      %v3754 = vld [vmem:[#allocation2 + $0xc8] sm:$0xfc]
      %v3755 = vld [vmem:[#allocation2 + $0xd0] sm:$0xfc]
      %v3756 = vld [vmem:[#allocation2 + $0xd8] sm:$0xfc]
      %v3757 = vld [vmem:[#allocation2 + $0x100] sm:$0x3]
      %v3758 = vld [vmem:[#allocation2 + $0x108] sm:$0x3]
      %v3759 = vld [vmem:[#allocation2 + $0x110] sm:$0x3]
      %v3760 = vld [vmem:[#allocation2 + $0x118] sm:$0x3]
      %v3761 = vld [vmem:[#allocation2 + $0x120] sm:$0xfc]
      %v3762 = vld [vmem:[#allocation2 + $0x128] sm:$0xfc]
      %v3763 = vld [vmem:[#allocation2 + $0x130] sm:$0xfc]
      %v3764 = vld [vmem:[#allocation2 + $0x138] sm:$0xfc]
      %v3765 = vld [vmem:[#allocation2 + $0x160] sm:$0x3]
      %v3766 = vld [vmem:[#allocation2 + $0x168] sm:$0x3]
      %v3767 = vld [vmem:[#allocation2 + $0x170] sm:$0x3]
      %v3768 = vld [vmem:[#allocation2 + $0x178] sm:$0x3]
      %v3769 = vld [vmem:[#allocation2 + $0x180] sm:$0xfc]
      %v3770 = vld [vmem:[#allocation2 + $0x188] sm:$0xfc]
      %v3771 = vld [vmem:[#allocation2 + $0x190] sm:$0xfc]
      %v3772 = vld [vmem:[#allocation2 + $0x198] sm:$0xfc]
      %v3773 = vld [vmem:[#allocation2 + $0x1c0] sm:$0x3]
      %v3774 = vld [vmem:[#allocation2 + $0x1c8] sm:$0x3]
      %v3775 = vld [vmem:[#allocation2 + $0x1d0] sm:$0x3]
      %v3776 = vld [vmem:[#allocation2 + $0x1d8] sm:$0x3]
      %v3777 = vld [vmem:[#allocation2 + $0x1e0] sm:$0xfc]
      %v3778 = vld [vmem:[#allocation2 + $0x1e8] sm:$0xfc]
      %v3779 = vld [vmem:[#allocation2 + $0x1f0] sm:$0xfc]
      %v3780 = vld [vmem:[#allocation2 + $0x1f8] sm:$0xfc]
      %v3781 = vld [vmem:[#allocation2 + $0x220] sm:$0x3]
      %v3782 = vld [vmem:[#allocation2 + $0x228] sm:$0x3]
      %v3783 = vld [vmem:[#allocation2 + $0x230] sm:$0x3]
      %v3784 = vld [vmem:[#allocation2 + $0x238] sm:$0x3]
      %v3785 = vld [vmem:[#allocation2 + $0x240] sm:$0xfc]
      %v3786 = vld [vmem:[#allocation2 + $0x248] sm:$0xfc]
      %v3787 = vld [vmem:[#allocation2 + $0x250] sm:$0xfc]
      %v3788 = vld [vmem:[#allocation2 + $0x258] sm:$0xfc]
      %v3789 = vld [vmem:[#allocation2 + $0x280] sm:$0x3]
      %v3790 = vld [vmem:[#allocation2 + $0x288] sm:$0x3]
      %v3791 = vld [vmem:[#allocation2 + $0x290] sm:$0x3]
      %v3792 = vld [vmem:[#allocation2 + $0x298] sm:$0x3]
      %v3793 = vld [vmem:[#allocation2 + $0x2a0] sm:$0xfc]
      %v3794 = vld [vmem:[#allocation2 + $0x2a8] sm:$0xfc]
      %v3795 = vld [vmem:[#allocation2 + $0x2b0] sm:$0xfc]
      %v3796 = vld [vmem:[#allocation2 + $0x2b8] sm:$0xfc]
      %v3797 = vld [vmem:[#allocation2 + $0x2e0] sm:$0x3]
      %v3798 = vld [vmem:[#allocation2 + $0x2e8] sm:$0x3]
      %v3799 = vld [vmem:[#allocation2 + $0x2f0] sm:$0x3]
      %v3800 = vld [vmem:[#allocation2 + $0x2f8] sm:$0x3]
      %vm3865 = vcmask 1045504
      %v3866 = vrot.slane %v3737, 2
      %v3867 = vrot.slane %v787, 2
      %v3868 = vsel %vm3865, %v3866, %v3867
      %v3869 = vrot.slane %v3738, 2
      %v3870 = vrot.slane %v788, 2
      %v3871 = vsel %vm3865, %v3869, %v3870
      %v3872 = vrot.slane %v3739, 2
      %v3873 = vrot.slane %v789, 2
      %v3874 = vsel %vm3865, %v3872, %v3873
      %v3875 = vrot.slane %v3740, 2
      %v3876 = vrot.slane %v790, 2
      %v3877 = vsel %vm3865, %v3875, %v3876
      %v3878 = vrot.slane %v3741, 2
      %v3879 = vsel %vm3865, %v3867, %v3878
      %v3880 = vrot.slane %v3742, 2
      %v3881 = vsel %vm3865, %v3870, %v3880
      %v3882 = vrot.slane %v3743, 2
      %v3883 = vsel %vm3865, %v3873, %v3882
      %v3884 = vrot.slane %v3744, 2
      %v3885 = vsel %vm3865, %v3876, %v3884
      %v3886 = vrot.slane %v3745, 2
      %v3887 = vrot.slane %v795, 2
      %v3888 = vsel %vm3865, %v3886, %v3887
      %v3889 = vrot.slane %v3746, 2
      %v3890 = vrot.slane %v796, 2
      %v3891 = vsel %vm3865, %v3889, %v3890
      %v3892 = vrot.slane %v3747, 2
      %v3893 = vrot.slane %v797, 2
      %v3894 = vsel %vm3865, %v3892, %v3893
      %v3895 = vrot.slane %v3748, 2
      %v3896 = vrot.slane %v798, 2
      %v3897 = vsel %vm3865, %v3895, %v3896
      %v3898 = vrot.slane %v3749, 2
      %v3899 = vsel %vm3865, %v3887, %v3898
      %v3900 = vrot.slane %v3750, 2
      %v3901 = vsel %vm3865, %v3890, %v3900
      %v3902 = vrot.slane %v3751, 2
      %v3903 = vsel %vm3865, %v3893, %v3902
      %v3904 = vrot.slane %v3752, 2
      %v3905 = vsel %vm3865, %v3896, %v3904
      %v3906 = vrot.slane %v3753, 2
      %v3907 = vrot.slane %v803, 2
      %v3908 = vsel %vm3865, %v3906, %v3907
      %v3909 = vrot.slane %v3754, 2
      %v3910 = vrot.slane %v804, 2
      %v3911 = vsel %vm3865, %v3909, %v3910
      %v3912 = vrot.slane %v3755, 2
      %v3913 = vrot.slane %v805, 2
      %v3914 = vsel %vm3865, %v3912, %v3913
      %v3915 = vrot.slane %v3756, 2
      %v3916 = vrot.slane %v806, 2
      %v3917 = vsel %vm3865, %v3915, %v3916
      %v3918 = vrot.slane %v3757, 2
      %v3919 = vsel %vm3865, %v3907, %v3918
      %v3920 = vrot.slane %v3758, 2
      %v3921 = vsel %vm3865, %v3910, %v3920
      %v3922 = vrot.slane %v3759, 2
      %v3923 = vsel %vm3865, %v3913, %v3922
      %v3924 = vrot.slane %v3760, 2
      %v3925 = vsel %vm3865, %v3916, %v3924
      %v3926 = vrot.slane %v3761, 2
      %v3927 = vrot.slane %v811, 2
      %v3928 = vsel %vm3865, %v3926, %v3927
      %v3929 = vrot.slane %v3762, 2
      %v3930 = vrot.slane %v812, 2
      %v3931 = vsel %vm3865, %v3929, %v3930
      %v3932 = vrot.slane %v3763, 2
      %v3933 = vrot.slane %v813, 2
      %v3934 = vsel %vm3865, %v3932, %v3933
      %v3935 = vrot.slane %v3764, 2
      %v3936 = vrot.slane %v814, 2
      %v3937 = vsel %vm3865, %v3935, %v3936
      %v3938 = vrot.slane %v3765, 2
      %v3939 = vsel %vm3865, %v3927, %v3938
      %v3940 = vrot.slane %v3766, 2
      %v3941 = vsel %vm3865, %v3930, %v3940
      %v3942 = vrot.slane %v3767, 2
      %v3943 = vsel %vm3865, %v3933, %v3942
      %v3944 = vrot.slane %v3768, 2
      %v3945 = vsel %vm3865, %v3936, %v3944
      %v3946 = vrot.slane %v3769, 2
      %v3947 = vrot.slane %v819, 2
      %v3948 = vsel %vm3865, %v3946, %v3947
      %v3949 = vrot.slane %v3770, 2
      %v3950 = vrot.slane %v820, 2
      %v3951 = vsel %vm3865, %v3949, %v3950
      %v3952 = vrot.slane %v3771, 2
      %v3953 = vrot.slane %v821, 2
      %v3954 = vsel %vm3865, %v3952, %v3953
      %v3955 = vrot.slane %v3772, 2
      %v3956 = vrot.slane %v822, 2
      %v3957 = vsel %vm3865, %v3955, %v3956
      %v3958 = vrot.slane %v3773, 2
      %v3959 = vsel %vm3865, %v3947, %v3958
      %v3960 = vrot.slane %v3774, 2
      %v3961 = vsel %vm3865, %v3950, %v3960
      %v3962 = vrot.slane %v3775, 2
      %v3963 = vsel %vm3865, %v3953, %v3962
      %v3964 = vrot.slane %v3776, 2
      %v3965 = vsel %vm3865, %v3956, %v3964
      %v3966 = vrot.slane %v3777, 2
      %v3967 = vrot.slane %v827, 2
      %v3968 = vsel %vm3865, %v3966, %v3967
      %v3969 = vrot.slane %v3778, 2
      %v3970 = vrot.slane %v828, 2
      %v3971 = vsel %vm3865, %v3969, %v3970
      %v3972 = vrot.slane %v3779, 2
      %v3973 = vrot.slane %v829, 2
      %v3974 = vsel %vm3865, %v3972, %v3973
      %v3975 = vrot.slane %v3780, 2
      %v3976 = vrot.slane %v830, 2
      %v3977 = vsel %vm3865, %v3975, %v3976
      %v3978 = vrot.slane %v3781, 2
      %v3979 = vsel %vm3865, %v3967, %v3978
      %v3980 = vrot.slane %v3782, 2
      %v3981 = vsel %vm3865, %v3970, %v3980
      %v3982 = vrot.slane %v3783, 2
      %v3983 = vsel %vm3865, %v3973, %v3982
      %v3984 = vrot.slane %v3784, 2
      %v3985 = vsel %vm3865, %v3976, %v3984
      %v3986 = vrot.slane %v3785, 2
      %v3987 = vrot.slane %v835, 2
      %v3988 = vsel %vm3865, %v3986, %v3987
      %v3989 = vrot.slane %v3786, 2
      %v3990 = vrot.slane %v836, 2
      %v3991 = vsel %vm3865, %v3989, %v3990
      %v3992 = vrot.slane %v3787, 2
      %v3993 = vrot.slane %v837, 2
      %v3994 = vsel %vm3865, %v3992, %v3993
      %v3995 = vrot.slane %v3788, 2
      %v3996 = vrot.slane %v838, 2
      %v3997 = vsel %vm3865, %v3995, %v3996
      %v3998 = vrot.slane %v3789, 2
      %v3999 = vsel %vm3865, %v3987, %v3998
      %v4000 = vrot.slane %v3790, 2
      %v4001 = vsel %vm3865, %v3990, %v4000
      %v4002 = vrot.slane %v3791, 2
      %v4003 = vsel %vm3865, %v3993, %v4002
      %v4004 = vrot.slane %v3792, 2
      %v4005 = vsel %vm3865, %v3996, %v4004
      %v4006 = vrot.slane %v3793, 2
      %v4007 = vrot.slane %v843, 2
      %v4008 = vsel %vm3865, %v4006, %v4007
      %v4009 = vrot.slane %v3794, 2
      %v4010 = vrot.slane %v844, 2
      %v4011 = vsel %vm3865, %v4009, %v4010
      %v4012 = vrot.slane %v3795, 2
      %v4013 = vrot.slane %v845, 2
      %v4014 = vsel %vm3865, %v4012, %v4013
      %v4015 = vrot.slane %v3796, 2
      %v4016 = vrot.slane %v846, 2
      %v4017 = vsel %vm3865, %v4015, %v4016
      %v4018 = vrot.slane %v3797, 2
      %v4019 = vsel %vm3865, %v4007, %v4018
      %v4020 = vrot.slane %v3798, 2
      %v4021 = vsel %vm3865, %v4010, %v4020
      %v4022 = vrot.slane %v3799, 2
      %v4023 = vsel %vm3865, %v4013, %v4022
      %v4024 = vrot.slane %v3800, 2
      %v4025 = vsel %vm3865, %v4016, %v4024
      %v4090 = vpack.c.bf16 %v3879, %v3868
      %v4091 = vpack.c.bf16 %v3881, %v3871
      %v4092 = vpack.c.bf16 %v3883, %v3874
      %v4093 = vpack.c.bf16 %v3885, %v3877
      %v4094 = vpack.c.bf16 %v3899, %v3888
      %v4095 = vpack.c.bf16 %v3901, %v3891
      %v4096 = vpack.c.bf16 %v3903, %v3894
      %v4097 = vpack.c.bf16 %v3905, %v3897
      %v4098 = vpack.c.bf16 %v3919, %v3908
      %v4099 = vpack.c.bf16 %v3921, %v3911
      %v4100 = vpack.c.bf16 %v3923, %v3914
      %v4101 = vpack.c.bf16 %v3925, %v3917
      %v4102 = vpack.c.bf16 %v3939, %v3928
      %v4103 = vpack.c.bf16 %v3941, %v3931
      %v4104 = vpack.c.bf16 %v3943, %v3934
      %v4105 = vpack.c.bf16 %v3945, %v3937
      %v4106 = vpack.c.bf16 %v3959, %v3948
      %v4107 = vpack.c.bf16 %v3961, %v3951
      %v4108 = vpack.c.bf16 %v3963, %v3954
      %v4109 = vpack.c.bf16 %v3965, %v3957
      %v4110 = vpack.c.bf16 %v3979, %v3968
      %v4111 = vpack.c.bf16 %v3981, %v3971
      %v4112 = vpack.c.bf16 %v3983, %v3974
      %v4113 = vpack.c.bf16 %v3985, %v3977
      %v4114 = vpack.c.bf16 %v3999, %v3988
      %v4115 = vpack.c.bf16 %v4001, %v3991
      %v4116 = vpack.c.bf16 %v4003, %v3994
      %v4117 = vpack.c.bf16 %v4005, %v3997
      %v4118 = vpack.c.bf16 %v4019, %v4008
      %v4119 = vpack.c.bf16 %v4021, %v4011
      %v4120 = vpack.c.bf16 %v4023, %v4014
      %v4121 = vpack.c.bf16 %v4025, %v4017
      %s4122 = scalar_lea.vmem %s1, 2048
      %v4123 = vld [vmem:[%s4122] sm:$0xff]
      %v4124 = vld [vmem:[%s4122 + $0x8] sm:$0xff]
      %v4125 = vld [vmem:[%s4122 + $0x10] sm:$0xff]
      %v4126 = vld [vmem:[%s4122 + $0x18] sm:$0xff]
      %v4127 = vld [vmem:[%s4122 + $0x20] sm:$0xff]
      %v4128 = vld [vmem:[%s4122 + $0x28] sm:$0xff]
      %v4129 = vld [vmem:[%s4122 + $0x30] sm:$0xff]
      %v4130 = vld [vmem:[%s4122 + $0x38] sm:$0xff]
      %v4131 = vld [vmem:[%s4122 + $0x40] sm:$0xff]
      %v4132 = vld [vmem:[%s4122 + $0x48] sm:$0xff]
      %v4133 = vld [vmem:[%s4122 + $0x50] sm:$0xff]
      %v4134 = vld [vmem:[%s4122 + $0x58] sm:$0xff]
      %v4135 = vld [vmem:[%s4122 + $0x60] sm:$0xff]
      %v4136 = vld [vmem:[%s4122 + $0x68] sm:$0xff]
      %v4137 = vld [vmem:[%s4122 + $0x70] sm:$0xff]
      %v4138 = vld [vmem:[%s4122 + $0x78] sm:$0xff]
      %v4139 = vld [vmem:[%s4122 + $0x80] sm:$0xff]
      %v4140 = vld [vmem:[%s4122 + $0x88] sm:$0xff]
      %v4141 = vld [vmem:[%s4122 + $0x90] sm:$0xff]
      %v4142 = vld [vmem:[%s4122 + $0x98] sm:$0xff]
      %v4143 = vld [vmem:[%s4122 + $0xa0] sm:$0xff]
      %v4144 = vld [vmem:[%s4122 + $0xa8] sm:$0xff]
      %v4145 = vld [vmem:[%s4122 + $0xb0] sm:$0xff]
      %v4146 = vld [vmem:[%s4122 + $0xb8] sm:$0xff]
      %v4147 = vld [vmem:[%s4122 + $0xc0] sm:$0xff]
      %v4148 = vld [vmem:[%s4122 + $0xc8] sm:$0xff]
      %v4149 = vld [vmem:[%s4122 + $0xd0] sm:$0xff]
      %v4150 = vld [vmem:[%s4122 + $0xd8] sm:$0xff]
      %v4151 = vld [vmem:[%s4122 + $0xe0] sm:$0xff]
      %v4152 = vld [vmem:[%s4122 + $0xe8] sm:$0xff]
      %v4153 = vld [vmem:[%s4122 + $0xf0] sm:$0xff]
      %v4154 = vld [vmem:[%s4122 + $0xf8] sm:$0xff]
      %v4155 = vld [vmem:[%s4122 + $0x100] sm:$0xff]
      %v4156 = vld [vmem:[%s4122 + $0x108] sm:$0xff]
      %v4157 = vld [vmem:[%s4122 + $0x110] sm:$0xff]
      %v4158 = vld [vmem:[%s4122 + $0x118] sm:$0xff]
      %v4159 = vld [vmem:[%s4122 + $0x120] sm:$0xff]
      %v4160 = vld [vmem:[%s4122 + $0x128] sm:$0xff]
      %v4161 = vld [vmem:[%s4122 + $0x130] sm:$0xff]
      %v4162 = vld [vmem:[%s4122 + $0x138] sm:$0xff]
      %v4163 = vld [vmem:[%s4122 + $0x140] sm:$0xff]
      %v4164 = vld [vmem:[%s4122 + $0x148] sm:$0xff]
      %v4165 = vld [vmem:[%s4122 + $0x150] sm:$0xff]
      %v4166 = vld [vmem:[%s4122 + $0x158] sm:$0xff]
      %v4167 = vld [vmem:[%s4122 + $0x160] sm:$0xff]
      %v4168 = vld [vmem:[%s4122 + $0x168] sm:$0xff]
      %v4169 = vld [vmem:[%s4122 + $0x170] sm:$0xff]
      %v4170 = vld [vmem:[%s4122 + $0x178] sm:$0xff]
      %v4171 = vld [vmem:[%s4122 + $0x180] sm:$0xff]
      %v4172 = vld [vmem:[%s4122 + $0x188] sm:$0xff]
      %v4173 = vld [vmem:[%s4122 + $0x190] sm:$0xff]
      %v4174 = vld [vmem:[%s4122 + $0x198] sm:$0xff]
      %v4175 = vld [vmem:[%s4122 + $0x1a0] sm:$0xff]
      %v4176 = vld [vmem:[%s4122 + $0x1a8] sm:$0xff]
      %v4177 = vld [vmem:[%s4122 + $0x1b0] sm:$0xff]
      %v4178 = vld [vmem:[%s4122 + $0x1b8] sm:$0xff]
      %v4179 = vld [vmem:[%s4122 + $0x1c0] sm:$0xff]
      %v4180 = vld [vmem:[%s4122 + $0x1c8] sm:$0xff]
      %v4181 = vld [vmem:[%s4122 + $0x1d0] sm:$0xff]
      %v4182 = vld [vmem:[%s4122 + $0x1d8] sm:$0xff]
      %v4183 = vld [vmem:[%s4122 + $0x1e0] sm:$0xff]
      %v4184 = vld [vmem:[%s4122 + $0x1e8] sm:$0xff]
      %v4185 = vld [vmem:[%s4122 + $0x1f0] sm:$0xff]
      %v4186 = vld [vmem:[%s4122 + $0x1f8] sm:$0xff]
      %v4187 = vld [vmem:[%s4122 + $0x200] sm:$0xff]
      %v4188 = vld [vmem:[%s4122 + $0x208] sm:$0xff]
      %v4189 = vld [vmem:[%s4122 + $0x210] sm:$0xff]
      %v4190 = vld [vmem:[%s4122 + $0x218] sm:$0xff]
      %v4191 = vld [vmem:[%s4122 + $0x220] sm:$0xff]
      %v4192 = vld [vmem:[%s4122 + $0x228] sm:$0xff]
      %v4193 = vld [vmem:[%s4122 + $0x230] sm:$0xff]
      %v4194 = vld [vmem:[%s4122 + $0x238] sm:$0xff]
      %v4195 = vld [vmem:[%s4122 + $0x240] sm:$0xff]
      %v4196 = vld [vmem:[%s4122 + $0x248] sm:$0xff]
      %v4197 = vld [vmem:[%s4122 + $0x250] sm:$0xff]
      %v4198 = vld [vmem:[%s4122 + $0x258] sm:$0xff]
      %v4199 = vld [vmem:[%s4122 + $0x260] sm:$0xff]
      %v4200 = vld [vmem:[%s4122 + $0x268] sm:$0xff]
      %v4201 = vld [vmem:[%s4122 + $0x270] sm:$0xff]
      %v4202 = vld [vmem:[%s4122 + $0x278] sm:$0xff]
      %v4203 = vld [vmem:[%s4122 + $0x280] sm:$0xff]
      %v4204 = vld [vmem:[%s4122 + $0x288] sm:$0xff]
      %v4205 = vld [vmem:[%s4122 + $0x290] sm:$0xff]
      %v4206 = vld [vmem:[%s4122 + $0x298] sm:$0xff]
      %v4207 = vld [vmem:[%s4122 + $0x2a0] sm:$0xff]
      %v4208 = vld [vmem:[%s4122 + $0x2a8] sm:$0xff]
      %v4209 = vld [vmem:[%s4122 + $0x2b0] sm:$0xff]
      %v4210 = vld [vmem:[%s4122 + $0x2b8] sm:$0xff]
      %v4211 = vld [vmem:[%s4122 + $0x2c0] sm:$0xff]
      %v4212 = vld [vmem:[%s4122 + $0x2c8] sm:$0xff]
      %v4213 = vld [vmem:[%s4122 + $0x2d0] sm:$0xff]
      %v4214 = vld [vmem:[%s4122 + $0x2d8] sm:$0xff]
      %v4215 = vld [vmem:[%s4122 + $0x2e0] sm:$0xff]
      %v4216 = vld [vmem:[%s4122 + $0x2e8] sm:$0xff]
      %v4217 = vld [vmem:[%s4122 + $0x2f0] sm:$0xff]
      %v4218 = vld [vmem:[%s4122 + $0x2f8] sm:$0xff]
      %v4219 = vld [vmem:[%s4122 + $0x300] sm:$0xff]
      %v4220 = vld [vmem:[%s4122 + $0x308] sm:$0xff]
      %v4221 = vld [vmem:[%s4122 + $0x310] sm:$0xff]
      %v4222 = vld [vmem:[%s4122 + $0x318] sm:$0xff]
      %v4223 = vld [vmem:[%s4122 + $0x320] sm:$0xff]
      %v4224 = vld [vmem:[%s4122 + $0x328] sm:$0xff]
      %v4225 = vld [vmem:[%s4122 + $0x330] sm:$0xff]
      %v4226 = vld [vmem:[%s4122 + $0x338] sm:$0xff]
      %v4227 = vld [vmem:[%s4122 + $0x340] sm:$0xff]
      %v4228 = vld [vmem:[%s4122 + $0x348] sm:$0xff]
      %v4229 = vld [vmem:[%s4122 + $0x350] sm:$0xff]
      %v4230 = vld [vmem:[%s4122 + $0x358] sm:$0xff]
      %v4231 = vld [vmem:[%s4122 + $0x360] sm:$0xff]
      %v4232 = vld [vmem:[%s4122 + $0x368] sm:$0xff]
      %v4233 = vld [vmem:[%s4122 + $0x370] sm:$0xff]
      %v4234 = vld [vmem:[%s4122 + $0x378] sm:$0xff]
      %v4235 = vld [vmem:[%s4122 + $0x380] sm:$0xff]
      %v4236 = vld [vmem:[%s4122 + $0x388] sm:$0xff]
      %v4237 = vld [vmem:[%s4122 + $0x390] sm:$0xff]
      %v4238 = vld [vmem:[%s4122 + $0x398] sm:$0xff]
      %v4239 = vld [vmem:[%s4122 + $0x3a0] sm:$0xff]
      %v4240 = vld [vmem:[%s4122 + $0x3a8] sm:$0xff]
      %v4241 = vld [vmem:[%s4122 + $0x3b0] sm:$0xff]
      %v4242 = vld [vmem:[%s4122 + $0x3b8] sm:$0xff]
      %v4243 = vld [vmem:[%s4122 + $0x3c0] sm:$0xff]
      %v4244 = vld [vmem:[%s4122 + $0x3c8] sm:$0xff]
      %v4245 = vld [vmem:[%s4122 + $0x3d0] sm:$0xff]
      %v4246 = vld [vmem:[%s4122 + $0x3d8] sm:$0xff]
      %v4247 = vld [vmem:[%s4122 + $0x3e0] sm:$0xff]
      %v4248 = vld [vmem:[%s4122 + $0x3e8] sm:$0xff]
      %v4249 = vld [vmem:[%s4122 + $0x3f0] sm:$0xff]
      %v4250 = vld [vmem:[%s4122 + $0x3f8] sm:$0xff]
      %v4379 = vunpack.c.l.b16 %v4123
      %v4380 = vunpack.c.h.b16 %v4123
      %v4381 = vunpack.c.l.b16 %v4124
      %v4382 = vunpack.c.h.b16 %v4124
      %v4383 = vunpack.c.l.b16 %v4125
      %v4384 = vunpack.c.h.b16 %v4125
      %v4385 = vunpack.c.l.b16 %v4126
      %v4386 = vunpack.c.h.b16 %v4126
      %v4387 = vunpack.c.l.b16 %v4127
      %v4388 = vunpack.c.h.b16 %v4127
      %v4389 = vunpack.c.l.b16 %v4128
      %v4390 = vunpack.c.h.b16 %v4128
      %v4391 = vunpack.c.l.b16 %v4129
      %v4392 = vunpack.c.h.b16 %v4129
      %v4393 = vunpack.c.l.b16 %v4130
      %v4394 = vunpack.c.h.b16 %v4130
      %v4395 = vunpack.c.l.b16 %v4131
      %v4396 = vunpack.c.h.b16 %v4131
      %v4397 = vunpack.c.l.b16 %v4132
      %v4398 = vunpack.c.h.b16 %v4132
      %v4399 = vunpack.c.l.b16 %v4133
      %v4400 = vunpack.c.h.b16 %v4133
      %v4401 = vunpack.c.l.b16 %v4134
      %v4402 = vunpack.c.h.b16 %v4134
      %v4403 = vunpack.c.l.b16 %v4135
      %v4404 = vunpack.c.h.b16 %v4135
      %v4405 = vunpack.c.l.b16 %v4136
      %v4406 = vunpack.c.h.b16 %v4136
      %v4407 = vunpack.c.l.b16 %v4137
      %v4408 = vunpack.c.h.b16 %v4137
      %v4409 = vunpack.c.l.b16 %v4138
      %v4410 = vunpack.c.h.b16 %v4138
      %v4411 = vunpack.c.l.b16 %v4139
      %v4412 = vunpack.c.h.b16 %v4139
      %v4413 = vunpack.c.l.b16 %v4140
      %v4414 = vunpack.c.h.b16 %v4140
      %v4415 = vunpack.c.l.b16 %v4141
      %v4416 = vunpack.c.h.b16 %v4141
      %v4417 = vunpack.c.l.b16 %v4142
      %v4418 = vunpack.c.h.b16 %v4142
      %v4419 = vunpack.c.l.b16 %v4143
      %v4420 = vunpack.c.h.b16 %v4143
      %v4421 = vunpack.c.l.b16 %v4144
      %v4422 = vunpack.c.h.b16 %v4144
      %v4423 = vunpack.c.l.b16 %v4145
      %v4424 = vunpack.c.h.b16 %v4145
      %v4425 = vunpack.c.l.b16 %v4146
      %v4426 = vunpack.c.h.b16 %v4146
      %v4427 = vunpack.c.l.b16 %v4147
      %v4428 = vunpack.c.h.b16 %v4147
      %v4429 = vunpack.c.l.b16 %v4148
      %v4430 = vunpack.c.h.b16 %v4148
      %v4431 = vunpack.c.l.b16 %v4149
      %v4432 = vunpack.c.h.b16 %v4149
      %v4433 = vunpack.c.l.b16 %v4150
      %v4434 = vunpack.c.h.b16 %v4150
      %v4435 = vunpack.c.l.b16 %v4151
      %v4436 = vunpack.c.h.b16 %v4151
      %v4437 = vunpack.c.l.b16 %v4152
      %v4438 = vunpack.c.h.b16 %v4152
      %v4439 = vunpack.c.l.b16 %v4153
      %v4440 = vunpack.c.h.b16 %v4153
      %v4441 = vunpack.c.l.b16 %v4154
      %v4442 = vunpack.c.h.b16 %v4154
      %v4443 = vunpack.c.l.b16 %v4155
      %v4444 = vunpack.c.h.b16 %v4155
      %v4445 = vunpack.c.l.b16 %v4156
      %v4446 = vunpack.c.h.b16 %v4156
      %v4447 = vunpack.c.l.b16 %v4157
      %v4448 = vunpack.c.h.b16 %v4157
      %v4449 = vunpack.c.l.b16 %v4158
      %v4450 = vunpack.c.h.b16 %v4158
      %v4451 = vunpack.c.l.b16 %v4159
      %v4452 = vunpack.c.h.b16 %v4159
      %v4453 = vunpack.c.l.b16 %v4160
      %v4454 = vunpack.c.h.b16 %v4160
      %v4455 = vunpack.c.l.b16 %v4161
      %v4456 = vunpack.c.h.b16 %v4161
      %v4457 = vunpack.c.l.b16 %v4162
      %v4458 = vunpack.c.h.b16 %v4162
      %v4459 = vunpack.c.l.b16 %v4163
      %v4460 = vunpack.c.h.b16 %v4163
      %v4461 = vunpack.c.l.b16 %v4164
      %v4462 = vunpack.c.h.b16 %v4164
      %v4463 = vunpack.c.l.b16 %v4165
      %v4464 = vunpack.c.h.b16 %v4165
      %v4465 = vunpack.c.l.b16 %v4166
      %v4466 = vunpack.c.h.b16 %v4166
      %v4467 = vunpack.c.l.b16 %v4167
      %v4468 = vunpack.c.h.b16 %v4167
      %v4469 = vunpack.c.l.b16 %v4168
      %v4470 = vunpack.c.h.b16 %v4168
      %v4471 = vunpack.c.l.b16 %v4169
      %v4472 = vunpack.c.h.b16 %v4169
      %v4473 = vunpack.c.l.b16 %v4170
      %v4474 = vunpack.c.h.b16 %v4170
      %v4475 = vunpack.c.l.b16 %v4171
      %v4476 = vunpack.c.h.b16 %v4171
      %v4477 = vunpack.c.l.b16 %v4172
      %v4478 = vunpack.c.h.b16 %v4172
      %v4479 = vunpack.c.l.b16 %v4173
      %v4480 = vunpack.c.h.b16 %v4173
      %v4481 = vunpack.c.l.b16 %v4174
      %v4482 = vunpack.c.h.b16 %v4174
      %v4483 = vunpack.c.l.b16 %v4175
      %v4484 = vunpack.c.h.b16 %v4175
      %v4485 = vunpack.c.l.b16 %v4176
      %v4486 = vunpack.c.h.b16 %v4176
      %v4487 = vunpack.c.l.b16 %v4177
      %v4488 = vunpack.c.h.b16 %v4177
      %v4489 = vunpack.c.l.b16 %v4178
      %v4490 = vunpack.c.h.b16 %v4178
      %v4491 = vunpack.c.l.b16 %v4179
      %v4492 = vunpack.c.h.b16 %v4179
      %v4493 = vunpack.c.l.b16 %v4180
      %v4494 = vunpack.c.h.b16 %v4180
      %v4495 = vunpack.c.l.b16 %v4181
      %v4496 = vunpack.c.h.b16 %v4181
      %v4497 = vunpack.c.l.b16 %v4182
      %v4498 = vunpack.c.h.b16 %v4182
      %v4499 = vunpack.c.l.b16 %v4183
      %v4500 = vunpack.c.h.b16 %v4183
      %v4501 = vunpack.c.l.b16 %v4184
      %v4502 = vunpack.c.h.b16 %v4184
      %v4503 = vunpack.c.l.b16 %v4185
      %v4504 = vunpack.c.h.b16 %v4185
      %v4505 = vunpack.c.l.b16 %v4186
      %v4506 = vunpack.c.h.b16 %v4186
      %v4507 = vunpack.c.l.b16 %v4187
      %v4508 = vunpack.c.h.b16 %v4187
      %v4509 = vunpack.c.l.b16 %v4188
      %v4510 = vunpack.c.h.b16 %v4188
      %v4511 = vunpack.c.l.b16 %v4189
      %v4512 = vunpack.c.h.b16 %v4189
      %v4513 = vunpack.c.l.b16 %v4190
      %v4514 = vunpack.c.h.b16 %v4190
      %v4515 = vunpack.c.l.b16 %v4191
      %v4516 = vunpack.c.h.b16 %v4191
      %v4517 = vunpack.c.l.b16 %v4192
      %v4518 = vunpack.c.h.b16 %v4192
      %v4519 = vunpack.c.l.b16 %v4193
      %v4520 = vunpack.c.h.b16 %v4193
      %v4521 = vunpack.c.l.b16 %v4194
      %v4522 = vunpack.c.h.b16 %v4194
      %v4523 = vunpack.c.l.b16 %v4195
      %v4524 = vunpack.c.h.b16 %v4195
      %v4525 = vunpack.c.l.b16 %v4196
      %v4526 = vunpack.c.h.b16 %v4196
      %v4527 = vunpack.c.l.b16 %v4197
      %v4528 = vunpack.c.h.b16 %v4197
      %v4529 = vunpack.c.l.b16 %v4198
      %v4530 = vunpack.c.h.b16 %v4198
      %v4531 = vunpack.c.l.b16 %v4199
      %v4532 = vunpack.c.h.b16 %v4199
      %v4533 = vunpack.c.l.b16 %v4200
      %v4534 = vunpack.c.h.b16 %v4200
      %v4535 = vunpack.c.l.b16 %v4201
      %v4536 = vunpack.c.h.b16 %v4201
      %v4537 = vunpack.c.l.b16 %v4202
      %v4538 = vunpack.c.h.b16 %v4202
      %v4539 = vunpack.c.l.b16 %v4203
      %v4540 = vunpack.c.h.b16 %v4203
      %v4541 = vunpack.c.l.b16 %v4204
      %v4542 = vunpack.c.h.b16 %v4204
      %v4543 = vunpack.c.l.b16 %v4205
      %v4544 = vunpack.c.h.b16 %v4205
      %v4545 = vunpack.c.l.b16 %v4206
      %v4546 = vunpack.c.h.b16 %v4206
      %v4547 = vunpack.c.l.b16 %v4207
      %v4548 = vunpack.c.h.b16 %v4207
      %v4549 = vunpack.c.l.b16 %v4208
      %v4550 = vunpack.c.h.b16 %v4208
      %v4551 = vunpack.c.l.b16 %v4209
      %v4552 = vunpack.c.h.b16 %v4209
      %v4553 = vunpack.c.l.b16 %v4210
      %v4554 = vunpack.c.h.b16 %v4210
      %v4555 = vunpack.c.l.b16 %v4211
      %v4556 = vunpack.c.h.b16 %v4211
      %v4557 = vunpack.c.l.b16 %v4212
      %v4558 = vunpack.c.h.b16 %v4212
      %v4559 = vunpack.c.l.b16 %v4213
      %v4560 = vunpack.c.h.b16 %v4213
      %v4561 = vunpack.c.l.b16 %v4214
      %v4562 = vunpack.c.h.b16 %v4214
      %v4563 = vunpack.c.l.b16 %v4215
      %v4564 = vunpack.c.h.b16 %v4215
      %v4565 = vunpack.c.l.b16 %v4216
      %v4566 = vunpack.c.h.b16 %v4216
      %v4567 = vunpack.c.l.b16 %v4217
      %v4568 = vunpack.c.h.b16 %v4217
      %v4569 = vunpack.c.l.b16 %v4218
      %v4570 = vunpack.c.h.b16 %v4218
      %v4571 = vunpack.c.l.b16 %v4219
      %v4572 = vunpack.c.h.b16 %v4219
      %v4573 = vunpack.c.l.b16 %v4220
      %v4574 = vunpack.c.h.b16 %v4220
      %v4575 = vunpack.c.l.b16 %v4221
      %v4576 = vunpack.c.h.b16 %v4221
      %v4577 = vunpack.c.l.b16 %v4222
      %v4578 = vunpack.c.h.b16 %v4222
      %v4579 = vunpack.c.l.b16 %v4223
      %v4580 = vunpack.c.h.b16 %v4223
      %v4581 = vunpack.c.l.b16 %v4224
      %v4582 = vunpack.c.h.b16 %v4224
      %v4583 = vunpack.c.l.b16 %v4225
      %v4584 = vunpack.c.h.b16 %v4225
      %v4585 = vunpack.c.l.b16 %v4226
      %v4586 = vunpack.c.h.b16 %v4226
      %v4587 = vunpack.c.l.b16 %v4227
      %v4588 = vunpack.c.h.b16 %v4227
      %v4589 = vunpack.c.l.b16 %v4228
      %v4590 = vunpack.c.h.b16 %v4228
      %v4591 = vunpack.c.l.b16 %v4229
      %v4592 = vunpack.c.h.b16 %v4229
      %v4593 = vunpack.c.l.b16 %v4230
      %v4594 = vunpack.c.h.b16 %v4230
      %v4595 = vunpack.c.l.b16 %v4231
      %v4596 = vunpack.c.h.b16 %v4231
      %v4597 = vunpack.c.l.b16 %v4232
      %v4598 = vunpack.c.h.b16 %v4232
      %v4599 = vunpack.c.l.b16 %v4233
      %v4600 = vunpack.c.h.b16 %v4233
      %v4601 = vunpack.c.l.b16 %v4234
      %v4602 = vunpack.c.h.b16 %v4234
      %v4603 = vunpack.c.l.b16 %v4235
      %v4604 = vunpack.c.h.b16 %v4235
      %v4605 = vunpack.c.l.b16 %v4236
      %v4606 = vunpack.c.h.b16 %v4236
      %v4607 = vunpack.c.l.b16 %v4237
      %v4608 = vunpack.c.h.b16 %v4237
      %v4609 = vunpack.c.l.b16 %v4238
      %v4610 = vunpack.c.h.b16 %v4238
      %v4611 = vunpack.c.l.b16 %v4239
      %v4612 = vunpack.c.h.b16 %v4239
      %v4613 = vunpack.c.l.b16 %v4240
      %v4614 = vunpack.c.h.b16 %v4240
      %v4615 = vunpack.c.l.b16 %v4241
      %v4616 = vunpack.c.h.b16 %v4241
      %v4617 = vunpack.c.l.b16 %v4242
      %v4618 = vunpack.c.h.b16 %v4242
      %v4619 = vunpack.c.l.b16 %v4243
      %v4620 = vunpack.c.h.b16 %v4243
      %v4621 = vunpack.c.l.b16 %v4244
      %v4622 = vunpack.c.h.b16 %v4244
      %v4623 = vunpack.c.l.b16 %v4245
      %v4624 = vunpack.c.h.b16 %v4245
      %v4625 = vunpack.c.l.b16 %v4246
      %v4626 = vunpack.c.h.b16 %v4246
      %v4627 = vunpack.c.l.b16 %v4247
      %v4628 = vunpack.c.h.b16 %v4247
      %v4629 = vunpack.c.l.b16 %v4248
      %v4630 = vunpack.c.h.b16 %v4248
      %v4631 = vunpack.c.l.b16 %v4249
      %v4632 = vunpack.c.h.b16 %v4249
      %v4633 = vunpack.c.l.b16 %v4250
      %v4634 = vunpack.c.h.b16 %v4250
      %v4635 = vpack.c.b16 %v4383, %v4379
      %v4636 = vpack.c.b16 %v4384, %v4380
      %v4637 = vpack.c.b16 %v4385, %v4381
      %v4638 = vpack.c.b16 %v4386, %v4382
      %v4639 = vpack.c.b16 %v4391, %v4387
      %v4640 = vpack.c.b16 %v4392, %v4388
      %v4641 = vpack.c.b16 %v4393, %v4389
      %v4642 = vpack.c.b16 %v4394, %v4390
      %v4643 = vpack.c.b16 %v4399, %v4395
      %v4644 = vpack.c.b16 %v4400, %v4396
      %v4645 = vpack.c.b16 %v4401, %v4397
      %v4646 = vpack.c.b16 %v4402, %v4398
      %v4647 = vpack.c.b16 %v4407, %v4403
      %v4648 = vpack.c.b16 %v4408, %v4404
      %v4649 = vpack.c.b16 %v4409, %v4405
      %v4650 = vpack.c.b16 %v4410, %v4406
      %v4651 = vpack.c.b16 %v4415, %v4411
      %v4652 = vpack.c.b16 %v4416, %v4412
      %v4653 = vpack.c.b16 %v4417, %v4413
      %v4654 = vpack.c.b16 %v4418, %v4414
      %v4655 = vpack.c.b16 %v4423, %v4419
      %v4656 = vpack.c.b16 %v4424, %v4420
      %v4657 = vpack.c.b16 %v4425, %v4421
      %v4658 = vpack.c.b16 %v4426, %v4422
      %v4659 = vpack.c.b16 %v4431, %v4427
      %v4660 = vpack.c.b16 %v4432, %v4428
      %v4661 = vpack.c.b16 %v4433, %v4429
      %v4662 = vpack.c.b16 %v4434, %v4430
      %v4663 = vpack.c.b16 %v4439, %v4435
      %v4664 = vpack.c.b16 %v4440, %v4436
      %v4665 = vpack.c.b16 %v4441, %v4437
      %v4666 = vpack.c.b16 %v4442, %v4438
      %v4667 = vpack.c.b16 %v4447, %v4443
      %v4668 = vpack.c.b16 %v4448, %v4444
      %v4669 = vpack.c.b16 %v4449, %v4445
      %v4670 = vpack.c.b16 %v4450, %v4446
      %v4671 = vpack.c.b16 %v4455, %v4451
      %v4672 = vpack.c.b16 %v4456, %v4452
      %v4673 = vpack.c.b16 %v4457, %v4453
      %v4674 = vpack.c.b16 %v4458, %v4454
      %v4675 = vpack.c.b16 %v4463, %v4459
      %v4676 = vpack.c.b16 %v4464, %v4460
      %v4677 = vpack.c.b16 %v4465, %v4461
      %v4678 = vpack.c.b16 %v4466, %v4462
      %v4679 = vpack.c.b16 %v4471, %v4467
      %v4680 = vpack.c.b16 %v4472, %v4468
      %v4681 = vpack.c.b16 %v4473, %v4469
      %v4682 = vpack.c.b16 %v4474, %v4470
      %v4683 = vpack.c.b16 %v4479, %v4475
      %v4684 = vpack.c.b16 %v4480, %v4476
      %v4685 = vpack.c.b16 %v4481, %v4477
      %v4686 = vpack.c.b16 %v4482, %v4478
      %v4687 = vpack.c.b16 %v4487, %v4483
      %v4688 = vpack.c.b16 %v4488, %v4484
      %v4689 = vpack.c.b16 %v4489, %v4485
      %v4690 = vpack.c.b16 %v4490, %v4486
      %v4691 = vpack.c.b16 %v4495, %v4491
      %v4692 = vpack.c.b16 %v4496, %v4492
      %v4693 = vpack.c.b16 %v4497, %v4493
      %v4694 = vpack.c.b16 %v4498, %v4494
      %v4695 = vpack.c.b16 %v4503, %v4499
      %v4696 = vpack.c.b16 %v4504, %v4500
      %v4697 = vpack.c.b16 %v4505, %v4501
      %v4698 = vpack.c.b16 %v4506, %v4502
      %v4699 = vpack.c.b16 %v4511, %v4507
      %v4700 = vpack.c.b16 %v4512, %v4508
      %v4701 = vpack.c.b16 %v4513, %v4509
      %v4702 = vpack.c.b16 %v4514, %v4510
      %v4703 = vpack.c.b16 %v4519, %v4515
      %v4704 = vpack.c.b16 %v4520, %v4516
      %v4705 = vpack.c.b16 %v4521, %v4517
      %v4706 = vpack.c.b16 %v4522, %v4518
      %v4707 = vpack.c.b16 %v4527, %v4523
      %v4708 = vpack.c.b16 %v4528, %v4524
      %v4709 = vpack.c.b16 %v4529, %v4525
      %v4710 = vpack.c.b16 %v4530, %v4526
      %v4711 = vpack.c.b16 %v4535, %v4531
      %v4712 = vpack.c.b16 %v4536, %v4532
      %v4713 = vpack.c.b16 %v4537, %v4533
      %v4714 = vpack.c.b16 %v4538, %v4534
      %v4715 = vpack.c.b16 %v4543, %v4539
      %v4716 = vpack.c.b16 %v4544, %v4540
      %v4717 = vpack.c.b16 %v4545, %v4541
      %v4718 = vpack.c.b16 %v4546, %v4542
      %v4719 = vpack.c.b16 %v4551, %v4547
      %v4720 = vpack.c.b16 %v4552, %v4548
      %v4721 = vpack.c.b16 %v4553, %v4549
      %v4722 = vpack.c.b16 %v4554, %v4550
      %v4723 = vpack.c.b16 %v4559, %v4555
      %v4724 = vpack.c.b16 %v4560, %v4556
      %v4725 = vpack.c.b16 %v4561, %v4557
      %v4726 = vpack.c.b16 %v4562, %v4558
      %v4727 = vpack.c.b16 %v4567, %v4563
      %v4728 = vpack.c.b16 %v4568, %v4564
      %v4729 = vpack.c.b16 %v4569, %v4565
      %v4730 = vpack.c.b16 %v4570, %v4566
      %v4731 = vpack.c.b16 %v4575, %v4571
      %v4732 = vpack.c.b16 %v4576, %v4572
      %v4733 = vpack.c.b16 %v4577, %v4573
      %v4734 = vpack.c.b16 %v4578, %v4574
      %v4735 = vpack.c.b16 %v4583, %v4579
      %v4736 = vpack.c.b16 %v4584, %v4580
      %v4737 = vpack.c.b16 %v4585, %v4581
      %v4738 = vpack.c.b16 %v4586, %v4582
      %v4739 = vpack.c.b16 %v4591, %v4587
      %v4740 = vpack.c.b16 %v4592, %v4588
      %v4741 = vpack.c.b16 %v4593, %v4589
      %v4742 = vpack.c.b16 %v4594, %v4590
      %v4743 = vpack.c.b16 %v4599, %v4595
      %v4744 = vpack.c.b16 %v4600, %v4596
      %v4745 = vpack.c.b16 %v4601, %v4597
      %v4746 = vpack.c.b16 %v4602, %v4598
      %v4747 = vpack.c.b16 %v4607, %v4603
      %v4748 = vpack.c.b16 %v4608, %v4604
      %v4749 = vpack.c.b16 %v4609, %v4605
      %v4750 = vpack.c.b16 %v4610, %v4606
      %v4751 = vpack.c.b16 %v4615, %v4611
      %v4752 = vpack.c.b16 %v4616, %v4612
      %v4753 = vpack.c.b16 %v4617, %v4613
      %v4754 = vpack.c.b16 %v4618, %v4614
      %v4755 = vpack.c.b16 %v4623, %v4619
      %v4756 = vpack.c.b16 %v4624, %v4620
      %v4757 = vpack.c.b16 %v4625, %v4621
      %v4758 = vpack.c.b16 %v4626, %v4622
      %v4759 = vpack.c.b16 %v4631, %v4627
      %v4760 = vpack.c.b16 %v4632, %v4628
      %v4761 = vpack.c.b16 %v4633, %v4629
      %v4762 = vpack.c.b16 %v4634, %v4630
      %4891 = vmatprep.subr.bf16.mxu0 %v4636
      %4892 = vmatpush1.bf16.msra.mxu0 %v4635
      %4893 = vmatprep.subr.bf16.mxu0 %v4640
      %4894 = vmatpush1.bf16.msra.mxu0 %v4639
      %4895 = vmatprep.subr.bf16.mxu0 %v4644
      %4896 = vmatpush1.bf16.msra.mxu0 %v4643
      %4897 = vmatprep.subr.bf16.mxu0 %v4648
      %4898 = vmatpush1.bf16.msra.mxu0 %v4647
      %4899 = vmatprep.subr.bf16.mxu0 %v4652
      %4900 = vmatpush1.bf16.msra.mxu0 %v4651
      %4901 = vmatprep.subr.bf16.mxu0 %v4656
      %4902 = vmatpush1.bf16.msra.mxu0 %v4655
      %4903 = vmatprep.subr.bf16.mxu0 %v4660
      %4904 = vmatpush1.bf16.msra.mxu0 %v4659
      %4905 = vmatprep.subr.bf16.mxu0 %v4664
      %4906 = vmatpush1.bf16.msra.mxu0 %v4663
      %4907 = vmatprep.subr.bf16.mxu0 %v4668
      %4908 = vmatpush1.bf16.msra.mxu0 %v4667
      %4909 = vmatprep.subr.bf16.mxu0 %v4672
      %4910 = vmatpush1.bf16.msra.mxu0 %v4671
      %4911 = vmatprep.subr.bf16.mxu0 %v4676
      %4912 = vmatpush1.bf16.msra.mxu0 %v4675
      %4913 = vmatprep.subr.bf16.mxu0 %v4680
      %4914 = vmatpush1.bf16.msra.mxu0 %v4679
      %4915 = vmatprep.subr.bf16.mxu0 %v4684
      %4916 = vmatpush1.bf16.msra.mxu0 %v4683
      %4917 = vmatprep.subr.bf16.mxu0 %v4688
      %4918 = vmatpush1.bf16.msra.mxu0 %v4687
      %4919 = vmatprep.subr.bf16.mxu0 %v4692
      %4920 = vmatpush1.bf16.msra.mxu0 %v4691
      %4921 = vmatprep.subr.bf16.mxu0 %v4696
      %4922 = vmatpush1.bf16.msra.mxu0 %v4695
      %4923 = vmatprep.mubr.bf16.mxu0 %v4091
      %4924 = vmatmul.mubr.bf16.gmra.mrb[0].mxu0 %v4090
      %v4925 = vpop.f32.mrb[0].mxu0
      %v4926 = vadd.f32 0.0, %v4925
      %v4927 = vpop.f32.mrb[0].mxu0
      %v4928 = vadd.f32 0.0, %v4927
      %v4929 = vpop.f32.mrb[0].mxu0
      %v4930 = vadd.f32 0.0, %v4929
      %v4931 = vpop.f32.mrb[0].mxu0
      %v4932 = vadd.f32 0.0, %v4931
      %4933 = vmatprep.mubr.bf16.mxu0 %v4095
      %4934 = vmatmul.mubr.bf16.gmra.mrb[0].mxu0 %v4094
      %v4935 = vpop.f32.mrb[0].mxu0
      %v4936 = vadd.f32 0.0, %v4935
      %v4937 = vpop.f32.mrb[0].mxu0
      %v4938 = vadd.f32 0.0, %v4937
      %v4939 = vpop.f32.mrb[0].mxu0
      %v4940 = vadd.f32 0.0, %v4939
      %v4941 = vpop.f32.mrb[0].mxu0
      %v4942 = vadd.f32 0.0, %v4941
      %4943 = vmatprep.mubr.bf16.mxu0 %v4099
      %4944 = vmatmul.mubr.bf16.gmra.mrb[0].mxu0 %v4098
      %v4945 = vpop.f32.mrb[0].mxu0
      %v4946 = vadd.f32 0.0, %v4945
      %v4947 = vpop.f32.mrb[0].mxu0
      %v4948 = vadd.f32 0.0, %v4947
      %v4949 = vpop.f32.mrb[0].mxu0
      %v4950 = vadd.f32 0.0, %v4949
      %v4951 = vpop.f32.mrb[0].mxu0
      %v4952 = vadd.f32 0.0, %v4951
      %4953 = vmatprep.mubr.bf16.mxu0 %v4103
      %4954 = vmatmul.mubr.bf16.gmra.mrb[0].mxu0 %v4102
      %v4955 = vpop.f32.mrb[0].mxu0
      %v4956 = vadd.f32 0.0, %v4955
      %v4957 = vpop.f32.mrb[0].mxu0
      %v4958 = vadd.f32 0.0, %v4957
      %v4959 = vpop.f32.mrb[0].mxu0
      %v4960 = vadd.f32 0.0, %v4959
      %v4961 = vpop.f32.mrb[0].mxu0
      %v4962 = vadd.f32 0.0, %v4961
      %4963 = vmatprep.mubr.bf16.mxu0 %v4107
      %4964 = vmatmul.mubr.bf16.gmra.mrb[0].mxu0 %v4106
      %v4965 = vpop.f32.mrb[0].mxu0
      %v4966 = vadd.f32 0.0, %v4965
      %v4967 = vpop.f32.mrb[0].mxu0
      %v4968 = vadd.f32 0.0, %v4967
      %v4969 = vpop.f32.mrb[0].mxu0
      %v4970 = vadd.f32 0.0, %v4969
      %v4971 = vpop.f32.mrb[0].mxu0
      %v4972 = vadd.f32 0.0, %v4971
      %4973 = vmatprep.mubr.bf16.mxu0 %v4111
      %4974 = vmatmul.mubr.bf16.gmra.mrb[0].mxu0 %v4110
      %v4975 = vpop.f32.mrb[0].mxu0
      %v4976 = vadd.f32 0.0, %v4975
      %v4977 = vpop.f32.mrb[0].mxu0
      %v4978 = vadd.f32 0.0, %v4977
      %v4979 = vpop.f32.mrb[0].mxu0
      %v4980 = vadd.f32 0.0, %v4979
      %v4981 = vpop.f32.mrb[0].mxu0
      %v4982 = vadd.f32 0.0, %v4981
      %4983 = vmatprep.mubr.bf16.mxu0 %v4115
      %4984 = vmatmul.mubr.bf16.gmra.mrb[0].mxu0 %v4114
      %v4985 = vpop.f32.mrb[0].mxu0
      %v4986 = vadd.f32 0.0, %v4985
      %v4987 = vpop.f32.mrb[0].mxu0
      %v4988 = vadd.f32 0.0, %v4987
      %v4989 = vpop.f32.mrb[0].mxu0
      %v4990 = vadd.f32 0.0, %v4989
      %v4991 = vpop.f32.mrb[0].mxu0
      %v4992 = vadd.f32 0.0, %v4991
      %4993 = vmatprep.mubr.bf16.mxu0 %v4119
      %4994 = vmatmul.mubr.bf16.gmra.mrb[0].mxu0 %v4118
      %v4995 = vpop.f32.mrb[0].mxu0
      %v4996 = vadd.f32 0.0, %v4995
      %v4997 = vpop.f32.mrb[0].mxu0
      %v4998 = vadd.f32 0.0, %v4997
      %v4999 = vpop.f32.mrb[0].mxu0
      %v5000 = vadd.f32 0.0, %v4999
      %v5001 = vpop.f32.mrb[0].mxu0
      %v5002 = vadd.f32 0.0, %v5001
      %5003 = vdwg.mxu0
      %5004 = vmatprep.subr.bf16.mxu0 %v4700
      %5005 = vmatpush1.bf16.msra.mxu0 %v4699
      %5006 = vmatprep.subr.bf16.mxu0 %v4704
      %5007 = vmatpush1.bf16.msra.mxu0 %v4703
      %5008 = vmatprep.subr.bf16.mxu0 %v4708
      %5009 = vmatpush1.bf16.msra.mxu0 %v4707
      %5010 = vmatprep.subr.bf16.mxu0 %v4712
      %5011 = vmatpush1.bf16.msra.mxu0 %v4711
      %5012 = vmatprep.subr.bf16.mxu0 %v4716
      %5013 = vmatpush1.bf16.msra.mxu0 %v4715
      %5014 = vmatprep.subr.bf16.mxu0 %v4720
      %5015 = vmatpush1.bf16.msra.mxu0 %v4719
      %5016 = vmatprep.subr.bf16.mxu0 %v4724
      %5017 = vmatpush1.bf16.msra.mxu0 %v4723
      %5018 = vmatprep.subr.bf16.mxu0 %v4728
      %5019 = vmatpush1.bf16.msra.mxu0 %v4727
      %5020 = vmatprep.subr.bf16.mxu0 %v4732
      %5021 = vmatpush1.bf16.msra.mxu0 %v4731
      %5022 = vmatprep.subr.bf16.mxu0 %v4736
      %5023 = vmatpush1.bf16.msra.mxu0 %v4735
      %5024 = vmatprep.subr.bf16.mxu0 %v4740
      %5025 = vmatpush1.bf16.msra.mxu0 %v4739
      %5026 = vmatprep.subr.bf16.mxu0 %v4744
      %5027 = vmatpush1.bf16.msra.mxu0 %v4743
      %5028 = vmatprep.subr.bf16.mxu0 %v4748
      %5029 = vmatpush1.bf16.msra.mxu0 %v4747
      %5030 = vmatprep.subr.bf16.mxu0 %v4752
      %5031 = vmatpush1.bf16.msra.mxu0 %v4751
      %5032 = vmatprep.subr.bf16.mxu0 %v4756
      %5033 = vmatpush1.bf16.msra.mxu0 %v4755
      %5034 = vmatprep.subr.bf16.mxu0 %v4760
      %5035 = vmatpush1.bf16.msra.mxu0 %v4759
      %5036 = vmatprep.mubr.bf16.mxu0 %v4093
      %5037 = vmatmul.mubr.bf16.gmra.mrb[0].mxu0 %v4092
      %v5038 = vpop.f32.mrb[0].mxu0
      %v5039 = vadd.f32 %v4926, %v5038
      %v5040 = vpop.f32.mrb[0].mxu0
      %v5041 = vadd.f32 %v4928, %v5040
      %v5042 = vpop.f32.mrb[0].mxu0
      %v5043 = vadd.f32 %v4930, %v5042
      %v5044 = vpop.f32.mrb[0].mxu0
      %v5045 = vadd.f32 %v4932, %v5044
      %5046 = vmatprep.mubr.bf16.mxu0 %v4097
      %5047 = vmatmul.mubr.bf16.gmra.mrb[0].mxu0 %v4096
      %v5048 = vpop.f32.mrb[0].mxu0
      %v5049 = vadd.f32 %v4936, %v5048
      %v5050 = vpop.f32.mrb[0].mxu0
      %v5051 = vadd.f32 %v4938, %v5050
      %v5052 = vpop.f32.mrb[0].mxu0
      %v5053 = vadd.f32 %v4940, %v5052
      %v5054 = vpop.f32.mrb[0].mxu0
      %v5055 = vadd.f32 %v4942, %v5054
      %5056 = vmatprep.mubr.bf16.mxu0 %v4101
      %5057 = vmatmul.mubr.bf16.gmra.mrb[0].mxu0 %v4100
      %v5058 = vpop.f32.mrb[0].mxu0
      %v5059 = vadd.f32 %v4946, %v5058
      %v5060 = vpop.f32.mrb[0].mxu0
      %v5061 = vadd.f32 %v4948, %v5060
      %v5062 = vpop.f32.mrb[0].mxu0
      %v5063 = vadd.f32 %v4950, %v5062
      %v5064 = vpop.f32.mrb[0].mxu0
      %v5065 = vadd.f32 %v4952, %v5064
      %5066 = vmatprep.mubr.bf16.mxu0 %v4105
      %5067 = vmatmul.mubr.bf16.gmra.mrb[0].mxu0 %v4104
      %v5068 = vpop.f32.mrb[0].mxu0
      %v5069 = vadd.f32 %v4956, %v5068
      %v5070 = vpop.f32.mrb[0].mxu0
      %v5071 = vadd.f32 %v4958, %v5070
      %v5072 = vpop.f32.mrb[0].mxu0
      %v5073 = vadd.f32 %v4960, %v5072
      %v5074 = vpop.f32.mrb[0].mxu0
      %v5075 = vadd.f32 %v4962, %v5074
      %5076 = vmatprep.mubr.bf16.mxu0 %v4109
      %5077 = vmatmul.mubr.bf16.gmra.mrb[0].mxu0 %v4108
      %v5078 = vpop.f32.mrb[0].mxu0
      %v5079 = vadd.f32 %v4966, %v5078
      %v5080 = vpop.f32.mrb[0].mxu0
      %v5081 = vadd.f32 %v4968, %v5080
      %v5082 = vpop.f32.mrb[0].mxu0
      %v5083 = vadd.f32 %v4970, %v5082
      %v5084 = vpop.f32.mrb[0].mxu0
      %v5085 = vadd.f32 %v4972, %v5084
      %5086 = vmatprep.mubr.bf16.mxu0 %v4113
      %5087 = vmatmul.mubr.bf16.gmra.mrb[0].mxu0 %v4112
      %v5088 = vpop.f32.mrb[0].mxu0
      %v5089 = vadd.f32 %v4976, %v5088
      %v5090 = vpop.f32.mrb[0].mxu0
      %v5091 = vadd.f32 %v4978, %v5090
      %v5092 = vpop.f32.mrb[0].mxu0
      %v5093 = vadd.f32 %v4980, %v5092
      %v5094 = vpop.f32.mrb[0].mxu0
      %v5095 = vadd.f32 %v4982, %v5094
      %5096 = vmatprep.mubr.bf16.mxu0 %v4117
      %5097 = vmatmul.mubr.bf16.gmra.mrb[0].mxu0 %v4116
      %v5098 = vpop.f32.mrb[0].mxu0
      %v5099 = vadd.f32 %v4986, %v5098
      %v5100 = vpop.f32.mrb[0].mxu0
      %v5101 = vadd.f32 %v4988, %v5100
      %v5102 = vpop.f32.mrb[0].mxu0
      %v5103 = vadd.f32 %v4990, %v5102
      %v5104 = vpop.f32.mrb[0].mxu0
      %v5105 = vadd.f32 %v4992, %v5104
      %5106 = vmatprep.mubr.bf16.mxu0 %v4121
      %5107 = vmatmul.mubr.bf16.gmra.mrb[0].mxu0 %v4120
      %v5108 = vpop.f32.mrb[0].mxu0
      %v5109 = vadd.f32 %v4996, %v5108
      %v5110 = vpop.f32.mrb[0].mxu0
      %v5111 = vadd.f32 %v4998, %v5110
      %v5112 = vpop.f32.mrb[0].mxu0
      %v5113 = vadd.f32 %v5000, %v5112
      %v5114 = vpop.f32.mrb[0].mxu0
      %v5115 = vadd.f32 %v5002, %v5114
      %5116 = vdwg.mxu0
      %5117 = vmatprep.subr.bf16.mxu0 %v4638
      %5118 = vmatpush1.bf16.msra.mxu0 %v4637
      %5119 = vmatprep.subr.bf16.mxu0 %v4642
      %5120 = vmatpush1.bf16.msra.mxu0 %v4641
      %5121 = vmatprep.subr.bf16.mxu0 %v4646
      %5122 = vmatpush1.bf16.msra.mxu0 %v4645
      %5123 = vmatprep.subr.bf16.mxu0 %v4650
      %5124 = vmatpush1.bf16.msra.mxu0 %v4649
      %5125 = vmatprep.subr.bf16.mxu0 %v4654
      %5126 = vmatpush1.bf16.msra.mxu0 %v4653
      %5127 = vmatprep.subr.bf16.mxu0 %v4658
      %5128 = vmatpush1.bf16.msra.mxu0 %v4657
      %5129 = vmatprep.subr.bf16.mxu0 %v4662
      %5130 = vmatpush1.bf16.msra.mxu0 %v4661
      %5131 = vmatprep.subr.bf16.mxu0 %v4666
      %5132 = vmatpush1.bf16.msra.mxu0 %v4665
      %5133 = vmatprep.subr.bf16.mxu0 %v4670
      %5134 = vmatpush1.bf16.msra.mxu0 %v4669
      %5135 = vmatprep.subr.bf16.mxu0 %v4674
      %5136 = vmatpush1.bf16.msra.mxu0 %v4673
      %5137 = vmatprep.subr.bf16.mxu0 %v4678
      %5138 = vmatpush1.bf16.msra.mxu0 %v4677
      %5139 = vmatprep.subr.bf16.mxu0 %v4682
      %5140 = vmatpush1.bf16.msra.mxu0 %v4681
      %5141 = vmatprep.subr.bf16.mxu0 %v4686
      %5142 = vmatpush1.bf16.msra.mxu0 %v4685
      %5143 = vmatprep.subr.bf16.mxu0 %v4690
      %5144 = vmatpush1.bf16.msra.mxu0 %v4689
      %5145 = vmatprep.subr.bf16.mxu0 %v4694
      %5146 = vmatpush1.bf16.msra.mxu0 %v4693
      %5147 = vmatprep.subr.bf16.mxu0 %v4698
      %5148 = vmatpush1.bf16.msra.mxu0 %v4697
      %5149 = vmatprep.mubr.bf16.mxu0 %v4091
      %5150 = vmatmul.mubr.bf16.gmra.mrb[0].mxu0 %v4090
      %v5151 = vpop.f32.mrb[0].mxu0
      %v5152 = vadd.f32 0.0, %v5151
      %v5153 = vpop.f32.mrb[0].mxu0
      %v5154 = vadd.f32 0.0, %v5153
      %v5155 = vpop.f32.mrb[0].mxu0
      %v5156 = vadd.f32 0.0, %v5155
      %v5157 = vpop.f32.mrb[0].mxu0
      %v5158 = vadd.f32 0.0, %v5157
      %5159 = vmatprep.mubr.bf16.mxu0 %v4095
      %5160 = vmatmul.mubr.bf16.gmra.mrb[0].mxu0 %v4094
      %v5161 = vpop.f32.mrb[0].mxu0
      %v5162 = vadd.f32 0.0, %v5161
      %v5163 = vpop.f32.mrb[0].mxu0
      %v5164 = vadd.f32 0.0, %v5163
      %v5165 = vpop.f32.mrb[0].mxu0
      %v5166 = vadd.f32 0.0, %v5165
      %v5167 = vpop.f32.mrb[0].mxu0
      %v5168 = vadd.f32 0.0, %v5167
      %5169 = vmatprep.mubr.bf16.mxu0 %v4099
      %5170 = vmatmul.mubr.bf16.gmra.mrb[0].mxu0 %v4098
      %v5171 = vpop.f32.mrb[0].mxu0
      %v5172 = vadd.f32 0.0, %v5171
      %v5173 = vpop.f32.mrb[0].mxu0
      %v5174 = vadd.f32 0.0, %v5173
      %v5175 = vpop.f32.mrb[0].mxu0
      %v5176 = vadd.f32 0.0, %v5175
      %v5177 = vpop.f32.mrb[0].mxu0
      %v5178 = vadd.f32 0.0, %v5177
      %5179 = vmatprep.mubr.bf16.mxu0 %v4103
      %5180 = vmatmul.mubr.bf16.gmra.mrb[0].mxu0 %v4102
      %v5181 = vpop.f32.mrb[0].mxu0
      %v5182 = vadd.f32 0.0, %v5181
      %v5183 = vpop.f32.mrb[0].mxu0
      %v5184 = vadd.f32 0.0, %v5183
      %v5185 = vpop.f32.mrb[0].mxu0
      %v5186 = vadd.f32 0.0, %v5185
      %v5187 = vpop.f32.mrb[0].mxu0
      %v5188 = vadd.f32 0.0, %v5187
      %5189 = vmatprep.mubr.bf16.mxu0 %v4107
      %5190 = vmatmul.mubr.bf16.gmra.mrb[0].mxu0 %v4106
      %v5191 = vpop.f32.mrb[0].mxu0
      %v5192 = vadd.f32 0.0, %v5191
      %v5193 = vpop.f32.mrb[0].mxu0
      %v5194 = vadd.f32 0.0, %v5193
      %v5195 = vpop.f32.mrb[0].mxu0
      %v5196 = vadd.f32 0.0, %v5195
      %v5197 = vpop.f32.mrb[0].mxu0
      %v5198 = vadd.f32 0.0, %v5197
      %5199 = vmatprep.mubr.bf16.mxu0 %v4111
      %5200 = vmatmul.mubr.bf16.gmra.mrb[0].mxu0 %v4110
      %v5201 = vpop.f32.mrb[0].mxu0
      %v5202 = vadd.f32 0.0, %v5201
      %v5203 = vpop.f32.mrb[0].mxu0
      %v5204 = vadd.f32 0.0, %v5203
      %v5205 = vpop.f32.mrb[0].mxu0
      %v5206 = vadd.f32 0.0, %v5205
      %v5207 = vpop.f32.mrb[0].mxu0
      %v5208 = vadd.f32 0.0, %v5207
      %5209 = vmatprep.mubr.bf16.mxu0 %v4115
      %5210 = vmatmul.mubr.bf16.gmra.mrb[0].mxu0 %v4114
      %v5211 = vpop.f32.mrb[0].mxu0
      %v5212 = vadd.f32 0.0, %v5211
      %v5213 = vpop.f32.mrb[0].mxu0
      %v5214 = vadd.f32 0.0, %v5213
      %v5215 = vpop.f32.mrb[0].mxu0
      %v5216 = vadd.f32 0.0, %v5215
      %v5217 = vpop.f32.mrb[0].mxu0
      %v5218 = vadd.f32 0.0, %v5217
      %5219 = vmatprep.mubr.bf16.mxu0 %v4119
      %5220 = vmatmul.mubr.bf16.gmra.mrb[0].mxu0 %v4118
      %v5221 = vpop.f32.mrb[0].mxu0
      %v5222 = vadd.f32 0.0, %v5221
      %v5223 = vpop.f32.mrb[0].mxu0
      %v5224 = vadd.f32 0.0, %v5223
      %v5225 = vpop.f32.mrb[0].mxu0
      %v5226 = vadd.f32 0.0, %v5225
      %v5227 = vpop.f32.mrb[0].mxu0
      %v5228 = vadd.f32 0.0, %v5227
      %5229 = vdwg.mxu0
      %5230 = vmatprep.subr.bf16.mxu0 %v4702
      %5231 = vmatpush1.bf16.msra.mxu0 %v4701
      %5232 = vmatprep.subr.bf16.mxu0 %v4706
      %5233 = vmatpush1.bf16.msra.mxu0 %v4705
      %5234 = vmatprep.subr.bf16.mxu0 %v4710
      %5235 = vmatpush1.bf16.msra.mxu0 %v4709
      %5236 = vmatprep.subr.bf16.mxu0 %v4714
      %5237 = vmatpush1.bf16.msra.mxu0 %v4713
      %5238 = vmatprep.subr.bf16.mxu0 %v4718
      %5239 = vmatpush1.bf16.msra.mxu0 %v4717
      %5240 = vmatprep.subr.bf16.mxu0 %v4722
      %5241 = vmatpush1.bf16.msra.mxu0 %v4721
      %5242 = vmatprep.subr.bf16.mxu0 %v4726
      %5243 = vmatpush1.bf16.msra.mxu0 %v4725
      %5244 = vmatprep.subr.bf16.mxu0 %v4730
      %5245 = vmatpush1.bf16.msra.mxu0 %v4729
      %5246 = vmatprep.subr.bf16.mxu0 %v4734
      %5247 = vmatpush1.bf16.msra.mxu0 %v4733
      %5248 = vmatprep.subr.bf16.mxu0 %v4738
      %5249 = vmatpush1.bf16.msra.mxu0 %v4737
      %5250 = vmatprep.subr.bf16.mxu0 %v4742
      %5251 = vmatpush1.bf16.msra.mxu0 %v4741
      %5252 = vmatprep.subr.bf16.mxu0 %v4746
      %5253 = vmatpush1.bf16.msra.mxu0 %v4745
      %5254 = vmatprep.subr.bf16.mxu0 %v4750
      %5255 = vmatpush1.bf16.msra.mxu0 %v4749
      %5256 = vmatprep.subr.bf16.mxu0 %v4754
      %5257 = vmatpush1.bf16.msra.mxu0 %v4753
      %5258 = vmatprep.subr.bf16.mxu0 %v4758
      %5259 = vmatpush1.bf16.msra.mxu0 %v4757
      %5260 = vmatprep.subr.bf16.mxu0 %v4762
      %5261 = vmatpush1.bf16.msra.mxu0 %v4761
      %5262 = vmatprep.mubr.bf16.mxu0 %v4093
      %5263 = vmatmul.mubr.bf16.gmra.mrb[0].mxu0 %v4092
      %v5264 = vpop.f32.mrb[0].mxu0
      %v5265 = vadd.f32 %v5152, %v5264
      %v5266 = vpop.f32.mrb[0].mxu0
      %v5267 = vadd.f32 %v5154, %v5266
      %v5268 = vpop.f32.mrb[0].mxu0
      %v5269 = vadd.f32 %v5156, %v5268
      %v5270 = vpop.f32.mrb[0].mxu0
      %v5271 = vadd.f32 %v5158, %v5270
      %5272 = vmatprep.mubr.bf16.mxu0 %v4097
      %5273 = vmatmul.mubr.bf16.gmra.mrb[0].mxu0 %v4096
      %v5274 = vpop.f32.mrb[0].mxu0
      %v5275 = vadd.f32 %v5162, %v5274
      %v5276 = vpop.f32.mrb[0].mxu0
      %v5277 = vadd.f32 %v5164, %v5276
      %v5278 = vpop.f32.mrb[0].mxu0
      %v5279 = vadd.f32 %v5166, %v5278
      %v5280 = vpop.f32.mrb[0].mxu0
      %v5281 = vadd.f32 %v5168, %v5280
      %5282 = vmatprep.mubr.bf16.mxu0 %v4101
      %5283 = vmatmul.mubr.bf16.gmra.mrb[0].mxu0 %v4100
      %v5284 = vpop.f32.mrb[0].mxu0
      %v5285 = vadd.f32 %v5172, %v5284
      %v5286 = vpop.f32.mrb[0].mxu0
      %v5287 = vadd.f32 %v5174, %v5286
      %v5288 = vpop.f32.mrb[0].mxu0
      %v5289 = vadd.f32 %v5176, %v5288
      %v5290 = vpop.f32.mrb[0].mxu0
      %v5291 = vadd.f32 %v5178, %v5290
      %5292 = vmatprep.mubr.bf16.mxu0 %v4105
      %5293 = vmatmul.mubr.bf16.gmra.mrb[0].mxu0 %v4104
      %v5294 = vpop.f32.mrb[0].mxu0
      %v5295 = vadd.f32 %v5182, %v5294
      %v5296 = vpop.f32.mrb[0].mxu0
      %v5297 = vadd.f32 %v5184, %v5296
      %v5298 = vpop.f32.mrb[0].mxu0
      %v5299 = vadd.f32 %v5186, %v5298
      %v5300 = vpop.f32.mrb[0].mxu0
      %v5301 = vadd.f32 %v5188, %v5300
      %5302 = vmatprep.mubr.bf16.mxu0 %v4109
      %5303 = vmatmul.mubr.bf16.gmra.mrb[0].mxu0 %v4108
      %v5304 = vpop.f32.mrb[0].mxu0
      %v5305 = vadd.f32 %v5192, %v5304
      %v5306 = vpop.f32.mrb[0].mxu0
      %v5307 = vadd.f32 %v5194, %v5306
      %v5308 = vpop.f32.mrb[0].mxu0
      %v5309 = vadd.f32 %v5196, %v5308
      %v5310 = vpop.f32.mrb[0].mxu0
      %v5311 = vadd.f32 %v5198, %v5310
      %5312 = vmatprep.mubr.bf16.mxu0 %v4113
      %5313 = vmatmul.mubr.bf16.gmra.mrb[0].mxu0 %v4112
      %v5314 = vpop.f32.mrb[0].mxu0
      %v5315 = vadd.f32 %v5202, %v5314
      %v5316 = vpop.f32.mrb[0].mxu0
      %v5317 = vadd.f32 %v5204, %v5316
      %v5318 = vpop.f32.mrb[0].mxu0
      %v5319 = vadd.f32 %v5206, %v5318
      %v5320 = vpop.f32.mrb[0].mxu0
      %v5321 = vadd.f32 %v5208, %v5320
      %5322 = vmatprep.mubr.bf16.mxu0 %v4117
      %5323 = vmatmul.mubr.bf16.gmra.mrb[0].mxu0 %v4116
      %v5324 = vpop.f32.mrb[0].mxu0
      %v5325 = vadd.f32 %v5212, %v5324
      %v5326 = vpop.f32.mrb[0].mxu0
      %v5327 = vadd.f32 %v5214, %v5326
      %v5328 = vpop.f32.mrb[0].mxu0
      %v5329 = vadd.f32 %v5216, %v5328
      %v5330 = vpop.f32.mrb[0].mxu0
      %v5331 = vadd.f32 %v5218, %v5330
      %5332 = vmatprep.mubr.bf16.mxu0 %v4121
      %5333 = vmatmul.mubr.bf16.gmra.mrb[0].mxu0 %v4120
      %v5334 = vpop.f32.mrb[0].mxu0
      %v5335 = vadd.f32 %v5222, %v5334
      %v5336 = vpop.f32.mrb[0].mxu0
      %v5337 = vadd.f32 %v5224, %v5336
      %v5338 = vpop.f32.mrb[0].mxu0
      %v5339 = vadd.f32 %v5226, %v5338
      %v5340 = vpop.f32.mrb[0].mxu0
      %v5341 = vadd.f32 %v5228, %v5340
      %5342 = vdwg.mxu0
      %v5343 = vadd.f32 %v3433, %v5039
      %v5344 = vadd.f32 %v3435, %v5041
      %v5345 = vadd.f32 %v3659, %v5265
      %v5346 = vadd.f32 %v3661, %v5267
      %v5347 = vadd.f32 %v3437, %v5043
      %v5348 = vadd.f32 %v3439, %v5045
      %v5349 = vadd.f32 %v3663, %v5269
      %v5350 = vadd.f32 %v3665, %v5271
      %v5351 = vadd.f32 %v3443, %v5049
      %v5352 = vadd.f32 %v3445, %v5051
      %v5353 = vadd.f32 %v3669, %v5275
      %v5354 = vadd.f32 %v3671, %v5277
      %v5355 = vadd.f32 %v3447, %v5053
      %v5356 = vadd.f32 %v3449, %v5055
      %v5357 = vadd.f32 %v3673, %v5279
      %v5358 = vadd.f32 %v3675, %v5281
      %v5359 = vadd.f32 %v3453, %v5059
      %v5360 = vadd.f32 %v3455, %v5061
      %v5361 = vadd.f32 %v3679, %v5285
      %v5362 = vadd.f32 %v3681, %v5287
      %v5363 = vadd.f32 %v3457, %v5063
      %v5364 = vadd.f32 %v3459, %v5065
      %v5365 = vadd.f32 %v3683, %v5289
      %v5366 = vadd.f32 %v3685, %v5291
      %v5367 = vadd.f32 %v3463, %v5069
      %v5368 = vadd.f32 %v3465, %v5071
      %v5369 = vadd.f32 %v3689, %v5295
      %v5370 = vadd.f32 %v3691, %v5297
      %v5371 = vadd.f32 %v3467, %v5073
      %v5372 = vadd.f32 %v3469, %v5075
      %v5373 = vadd.f32 %v3693, %v5299
      %v5374 = vadd.f32 %v3695, %v5301
      %v5375 = vadd.f32 %v3473, %v5079
      %v5376 = vadd.f32 %v3475, %v5081
      %v5377 = vadd.f32 %v3699, %v5305
      %v5378 = vadd.f32 %v3701, %v5307
      %v5379 = vadd.f32 %v3477, %v5083
      %v5380 = vadd.f32 %v3479, %v5085
      %v5381 = vadd.f32 %v3703, %v5309
      %v5382 = vadd.f32 %v3705, %v5311
      %v5383 = vadd.f32 %v3483, %v5089
      %v5384 = vadd.f32 %v3485, %v5091
      %v5385 = vadd.f32 %v3709, %v5315
      %v5386 = vadd.f32 %v3711, %v5317
      %v5387 = vadd.f32 %v3487, %v5093
      %v5388 = vadd.f32 %v3489, %v5095
      %v5389 = vadd.f32 %v3713, %v5319
      %v5390 = vadd.f32 %v3715, %v5321
      %v5391 = vadd.f32 %v3493, %v5099
      %v5392 = vadd.f32 %v3495, %v5101
      %v5393 = vadd.f32 %v3719, %v5325
      %v5394 = vadd.f32 %v3721, %v5327
      %v5395 = vadd.f32 %v3497, %v5103
      %v5396 = vadd.f32 %v3499, %v5105
      %v5397 = vadd.f32 %v3723, %v5329
      %v5398 = vadd.f32 %v3725, %v5331
      %v5399 = vadd.f32 %v3503, %v5109
      %v5400 = vadd.f32 %v3505, %v5111
      %v5401 = vadd.f32 %v3729, %v5335
      %v5402 = vadd.f32 %v3731, %v5337
      %v5403 = vadd.f32 %v3507, %v5113
      %v5404 = vadd.f32 %v3509, %v5115
      %v5405 = vadd.f32 %v3733, %v5339
      %v5406 = vadd.f32 %v3735, %v5341
      %v5407 = vld [vmem:[%s3] sm:$0xf]
      %v5409 = vlaneseq
      %v5410 = vshrl.u32 %v5409, 7
      %v5411 = vsub.s32 0, %v5410
      %v5412 = vrot.slane %v5407, %v5411
      %v5413 = vlaneseq
      %v5414 = vshrl.u32 %v5413, 7
      %v5415 = vsub.s32 1, %v5414
      %v5416 = vrot.slane %v5407, %v5415
      %v5417 = vlaneseq
      %v5418 = vshrl.u32 %v5417, 7
      %v5419 = vsub.s32 2, %v5418
      %v5420 = vrot.slane %v5407, %v5419
      %v5421 = vlaneseq
      %v5422 = vshrl.u32 %v5421, 7
      %v5423 = vsub.s32 3, %v5422
      %v5424 = vrot.slane %v5407, %v5423
      %v5429 = vmul.f32 %v5343, %v5412
      %v5430 = vmul.f32 %v5344, %v5416
      %v5431 = vmul.f32 %v5345, %v5420
      %v5432 = vmul.f32 %v5346, %v5424
      %v5433 = vmul.f32 %v5347, %v5412
      %v5434 = vmul.f32 %v5348, %v5416
      %v5435 = vmul.f32 %v5349, %v5420
      %v5436 = vmul.f32 %v5350, %v5424
      %v5437 = vmul.f32 %v5351, %v5412
      %v5438 = vmul.f32 %v5352, %v5416
      %v5439 = vmul.f32 %v5353, %v5420
      %v5440 = vmul.f32 %v5354, %v5424
      %v5441 = vmul.f32 %v5355, %v5412
      %v5442 = vmul.f32 %v5356, %v5416
      %v5443 = vmul.f32 %v5357, %v5420
      %v5444 = vmul.f32 %v5358, %v5424
      %v5445 = vmul.f32 %v5359, %v5412
      %v5446 = vmul.f32 %v5360, %v5416
      %v5447 = vmul.f32 %v5361, %v5420
      %v5448 = vmul.f32 %v5362, %v5424
      %v5449 = vmul.f32 %v5363, %v5412
      %v5450 = vmul.f32 %v5364, %v5416
      %v5451 = vmul.f32 %v5365, %v5420
      %v5452 = vmul.f32 %v5366, %v5424
      %v5453 = vmul.f32 %v5367, %v5412
      %v5454 = vmul.f32 %v5368, %v5416
      %v5455 = vmul.f32 %v5369, %v5420
      %v5456 = vmul.f32 %v5370, %v5424
      %v5457 = vmul.f32 %v5371, %v5412
      %v5458 = vmul.f32 %v5372, %v5416
      %v5459 = vmul.f32 %v5373, %v5420
      %v5460 = vmul.f32 %v5374, %v5424
      %v5461 = vmul.f32 %v5375, %v5412
      %v5462 = vmul.f32 %v5376, %v5416
      %v5463 = vmul.f32 %v5377, %v5420
      %v5464 = vmul.f32 %v5378, %v5424
      %v5465 = vmul.f32 %v5379, %v5412
      %v5466 = vmul.f32 %v5380, %v5416
      %v5467 = vmul.f32 %v5381, %v5420
      %v5468 = vmul.f32 %v5382, %v5424
      %v5469 = vmul.f32 %v5383, %v5412
      %v5470 = vmul.f32 %v5384, %v5416
      %v5471 = vmul.f32 %v5385, %v5420
      %v5472 = vmul.f32 %v5386, %v5424
      %v5473 = vmul.f32 %v5387, %v5412
      %v5474 = vmul.f32 %v5388, %v5416
      %v5475 = vmul.f32 %v5389, %v5420
      %v5476 = vmul.f32 %v5390, %v5424
      %v5477 = vmul.f32 %v5391, %v5412
      %v5478 = vmul.f32 %v5392, %v5416
      %v5479 = vmul.f32 %v5393, %v5420
      %v5480 = vmul.f32 %v5394, %v5424
      %v5481 = vmul.f32 %v5395, %v5412
      %v5482 = vmul.f32 %v5396, %v5416
      %v5483 = vmul.f32 %v5397, %v5420
      %v5484 = vmul.f32 %v5398, %v5424
      %v5485 = vmul.f32 %v5399, %v5412
      %v5486 = vmul.f32 %v5400, %v5416
      %v5487 = vmul.f32 %v5401, %v5420
      %v5488 = vmul.f32 %v5402, %v5424
      %v5489 = vmul.f32 %v5403, %v5412
      %v5490 = vmul.f32 %v5404, %v5416
      %v5491 = vmul.f32 %v5405, %v5420
      %v5492 = vmul.f32 %v5406, %v5424
      %v5493 = vld [vmem:[%s4] sm:$0xf]
      %v5495 = vlaneseq
      %v5496 = vshrl.u32 %v5495, 7
      %v5497 = vsub.s32 0, %v5496
      %v5498 = vrot.slane %v5493, %v5497
      %v5499 = vlaneseq
      %v5500 = vshrl.u32 %v5499, 7
      %v5501 = vsub.s32 1, %v5500
      %v5502 = vrot.slane %v5493, %v5501
      %v5503 = vlaneseq
      %v5504 = vshrl.u32 %v5503, 7
      %v5505 = vsub.s32 2, %v5504
      %v5506 = vrot.slane %v5493, %v5505
      %v5507 = vlaneseq
      %v5508 = vshrl.u32 %v5507, 7
      %v5509 = vsub.s32 3, %v5508
      %v5510 = vrot.slane %v5493, %v5509
      %v5515 = vadd.f32 %v5429, %v5498
      %v5516 = vadd.f32 %v5430, %v5502
      %v5517 = vadd.f32 %v5431, %v5506
      %v5518 = vadd.f32 %v5432, %v5510
      %v5519 = vadd.f32 %v5433, %v5498
      %v5520 = vadd.f32 %v5434, %v5502
      %v5521 = vadd.f32 %v5435, %v5506
      %v5522 = vadd.f32 %v5436, %v5510
      %v5523 = vadd.f32 %v5437, %v5498
      %v5524 = vadd.f32 %v5438, %v5502
      %v5525 = vadd.f32 %v5439, %v5506
      %v5526 = vadd.f32 %v5440, %v5510
      %v5527 = vadd.f32 %v5441, %v5498
      %v5528 = vadd.f32 %v5442, %v5502
      %v5529 = vadd.f32 %v5443, %v5506
      %v5530 = vadd.f32 %v5444, %v5510
      %v5531 = vadd.f32 %v5445, %v5498
      %v5532 = vadd.f32 %v5446, %v5502
      %v5533 = vadd.f32 %v5447, %v5506
      %v5534 = vadd.f32 %v5448, %v5510
      %v5535 = vadd.f32 %v5449, %v5498
      %v5536 = vadd.f32 %v5450, %v5502
      %v5537 = vadd.f32 %v5451, %v5506
      %v5538 = vadd.f32 %v5452, %v5510
      %v5539 = vadd.f32 %v5453, %v5498
      %v5540 = vadd.f32 %v5454, %v5502
      %v5541 = vadd.f32 %v5455, %v5506
      %v5542 = vadd.f32 %v5456, %v5510
      %v5543 = vadd.f32 %v5457, %v5498
      %v5544 = vadd.f32 %v5458, %v5502
      %v5545 = vadd.f32 %v5459, %v5506
      %v5546 = vadd.f32 %v5460, %v5510
      %v5547 = vadd.f32 %v5461, %v5498
      %v5548 = vadd.f32 %v5462, %v5502
      %v5549 = vadd.f32 %v5463, %v5506
      %v5550 = vadd.f32 %v5464, %v5510
      %v5551 = vadd.f32 %v5465, %v5498
      %v5552 = vadd.f32 %v5466, %v5502
      %v5553 = vadd.f32 %v5467, %v5506
      %v5554 = vadd.f32 %v5468, %v5510
      %v5555 = vadd.f32 %v5469, %v5498
      %v5556 = vadd.f32 %v5470, %v5502
      %v5557 = vadd.f32 %v5471, %v5506
      %v5558 = vadd.f32 %v5472, %v5510
      %v5559 = vadd.f32 %v5473, %v5498
      %v5560 = vadd.f32 %v5474, %v5502
      %v5561 = vadd.f32 %v5475, %v5506
      %v5562 = vadd.f32 %v5476, %v5510
      %v5563 = vadd.f32 %v5477, %v5498
      %v5564 = vadd.f32 %v5478, %v5502
      %v5565 = vadd.f32 %v5479, %v5506
      %v5566 = vadd.f32 %v5480, %v5510
      %v5567 = vadd.f32 %v5481, %v5498
      %v5568 = vadd.f32 %v5482, %v5502
      %v5569 = vadd.f32 %v5483, %v5506
      %v5570 = vadd.f32 %v5484, %v5510
      %v5571 = vadd.f32 %v5485, %v5498
      %v5572 = vadd.f32 %v5486, %v5502
      %v5573 = vadd.f32 %v5487, %v5506
      %v5574 = vadd.f32 %v5488, %v5510
      %v5575 = vadd.f32 %v5489, %v5498
      %v5576 = vadd.f32 %v5490, %v5502
      %v5577 = vadd.f32 %v5491, %v5506
      %v5578 = vadd.f32 %v5492, %v5510
      %s5579 = sld [smem:[#allocation3]]
      %vm5580 = vcmp.ge.f32.partialorder %v5515, 0.0
      %vm5581 = vcmp.ge.f32.partialorder %v5516, 0.0
      %vm5582 = vcmp.ge.f32.partialorder %v5517, 0.0
      %vm5583 = vcmp.ge.f32.partialorder %v5518, 0.0
      %vm5584 = vcmp.ge.f32.partialorder %v5519, 0.0
      %vm5585 = vcmp.ge.f32.partialorder %v5520, 0.0
      %vm5586 = vcmp.ge.f32.partialorder %v5521, 0.0
      %vm5587 = vcmp.ge.f32.partialorder %v5522, 0.0
      %vm5588 = vcmp.ge.f32.partialorder %v5523, 0.0
      %vm5589 = vcmp.ge.f32.partialorder %v5524, 0.0
      %vm5590 = vcmp.ge.f32.partialorder %v5525, 0.0
      %vm5591 = vcmp.ge.f32.partialorder %v5526, 0.0
      %vm5592 = vcmp.ge.f32.partialorder %v5527, 0.0
      %vm5593 = vcmp.ge.f32.partialorder %v5528, 0.0
      %vm5594 = vcmp.ge.f32.partialorder %v5529, 0.0
      %vm5595 = vcmp.ge.f32.partialorder %v5530, 0.0
      %vm5596 = vcmp.ge.f32.partialorder %v5531, 0.0
      %vm5597 = vcmp.ge.f32.partialorder %v5532, 0.0
      %vm5598 = vcmp.ge.f32.partialorder %v5533, 0.0
      %vm5599 = vcmp.ge.f32.partialorder %v5534, 0.0
      %vm5600 = vcmp.ge.f32.partialorder %v5535, 0.0
      %vm5601 = vcmp.ge.f32.partialorder %v5536, 0.0
      %vm5602 = vcmp.ge.f32.partialorder %v5537, 0.0
      %vm5603 = vcmp.ge.f32.partialorder %v5538, 0.0
      %vm5604 = vcmp.ge.f32.partialorder %v5539, 0.0
      %vm5605 = vcmp.ge.f32.partialorder %v5540, 0.0
      %vm5606 = vcmp.ge.f32.partialorder %v5541, 0.0
      %vm5607 = vcmp.ge.f32.partialorder %v5542, 0.0
      %vm5608 = vcmp.ge.f32.partialorder %v5543, 0.0
      %vm5609 = vcmp.ge.f32.partialorder %v5544, 0.0
      %vm5610 = vcmp.ge.f32.partialorder %v5545, 0.0
      %vm5611 = vcmp.ge.f32.partialorder %v5546, 0.0
      %vm5612 = vcmp.ge.f32.partialorder %v5547, 0.0
      %vm5613 = vcmp.ge.f32.partialorder %v5548, 0.0
      %vm5614 = vcmp.ge.f32.partialorder %v5549, 0.0
      %vm5615 = vcmp.ge.f32.partialorder %v5550, 0.0
      %vm5616 = vcmp.ge.f32.partialorder %v5551, 0.0
      %vm5617 = vcmp.ge.f32.partialorder %v5552, 0.0
      %vm5618 = vcmp.ge.f32.partialorder %v5553, 0.0
      %vm5619 = vcmp.ge.f32.partialorder %v5554, 0.0
      %vm5620 = vcmp.ge.f32.partialorder %v5555, 0.0
      %vm5621 = vcmp.ge.f32.partialorder %v5556, 0.0
      %vm5622 = vcmp.ge.f32.partialorder %v5557, 0.0
      %vm5623 = vcmp.ge.f32.partialorder %v5558, 0.0
      %vm5624 = vcmp.ge.f32.partialorder %v5559, 0.0
      %vm5625 = vcmp.ge.f32.partialorder %v5560, 0.0
      %vm5626 = vcmp.ge.f32.partialorder %v5561, 0.0
      %vm5627 = vcmp.ge.f32.partialorder %v5562, 0.0
      %vm5628 = vcmp.ge.f32.partialorder %v5563, 0.0
      %vm5629 = vcmp.ge.f32.partialorder %v5564, 0.0
      %vm5630 = vcmp.ge.f32.partialorder %v5565, 0.0
      %vm5631 = vcmp.ge.f32.partialorder %v5566, 0.0
      %vm5632 = vcmp.ge.f32.partialorder %v5567, 0.0
      %vm5633 = vcmp.ge.f32.partialorder %v5568, 0.0
      %vm5634 = vcmp.ge.f32.partialorder %v5569, 0.0
      %vm5635 = vcmp.ge.f32.partialorder %v5570, 0.0
      %vm5636 = vcmp.ge.f32.partialorder %v5571, 0.0
      %vm5637 = vcmp.ge.f32.partialorder %v5572, 0.0
      %vm5638 = vcmp.ge.f32.partialorder %v5573, 0.0
      %vm5639 = vcmp.ge.f32.partialorder %v5574, 0.0
      %vm5640 = vcmp.ge.f32.partialorder %v5575, 0.0
      %vm5641 = vcmp.ge.f32.partialorder %v5576, 0.0
      %vm5642 = vcmp.ge.f32.partialorder %v5577, 0.0
      %vm5643 = vcmp.ge.f32.partialorder %v5578, 0.0
      %v5644 = vstv %s5579
      %v5645 = vmul.f32 %v5644, %v5515
      %v5646 = vmul.f32 %v5644, %v5516
      %v5647 = vmul.f32 %v5644, %v5517
      %v5648 = vmul.f32 %v5644, %v5518
      %v5649 = vmul.f32 %v5644, %v5519
      %v5650 = vmul.f32 %v5644, %v5520
      %v5651 = vmul.f32 %v5644, %v5521
      %v5652 = vmul.f32 %v5644, %v5522
      %v5653 = vmul.f32 %v5644, %v5523
      %v5654 = vmul.f32 %v5644, %v5524
      %v5655 = vmul.f32 %v5644, %v5525
      %v5656 = vmul.f32 %v5644, %v5526
      %v5657 = vmul.f32 %v5644, %v5527
      %v5658 = vmul.f32 %v5644, %v5528
      %v5659 = vmul.f32 %v5644, %v5529
      %v5660 = vmul.f32 %v5644, %v5530
      %v5661 = vmul.f32 %v5644, %v5531
      %v5662 = vmul.f32 %v5644, %v5532
      %v5663 = vmul.f32 %v5644, %v5533
      %v5664 = vmul.f32 %v5644, %v5534
      %v5665 = vmul.f32 %v5644, %v5535
      %v5666 = vmul.f32 %v5644, %v5536
      %v5667 = vmul.f32 %v5644, %v5537
      %v5668 = vmul.f32 %v5644, %v5538
      %v5669 = vmul.f32 %v5644, %v5539
      %v5670 = vmul.f32 %v5644, %v5540
      %v5671 = vmul.f32 %v5644, %v5541
      %v5672 = vmul.f32 %v5644, %v5542
      %v5673 = vmul.f32 %v5644, %v5543
      %v5674 = vmul.f32 %v5644, %v5544
      %v5675 = vmul.f32 %v5644, %v5545
      %v5676 = vmul.f32 %v5644, %v5546
      %v5677 = vmul.f32 %v5644, %v5547
      %v5678 = vmul.f32 %v5644, %v5548
      %v5679 = vmul.f32 %v5644, %v5549
      %v5680 = vmul.f32 %v5644, %v5550
      %v5681 = vmul.f32 %v5644, %v5551
      %v5682 = vmul.f32 %v5644, %v5552
      %v5683 = vmul.f32 %v5644, %v5553
      %v5684 = vmul.f32 %v5644, %v5554
      %v5685 = vmul.f32 %v5644, %v5555
      %v5686 = vmul.f32 %v5644, %v5556
      %v5687 = vmul.f32 %v5644, %v5557
      %v5688 = vmul.f32 %v5644, %v5558
      %v5689 = vmul.f32 %v5644, %v5559
      %v5690 = vmul.f32 %v5644, %v5560
      %v5691 = vmul.f32 %v5644, %v5561
      %v5692 = vmul.f32 %v5644, %v5562
      %v5693 = vmul.f32 %v5644, %v5563
      %v5694 = vmul.f32 %v5644, %v5564
      %v5695 = vmul.f32 %v5644, %v5565
      %v5696 = vmul.f32 %v5644, %v5566
      %v5697 = vmul.f32 %v5644, %v5567
      %v5698 = vmul.f32 %v5644, %v5568
      %v5699 = vmul.f32 %v5644, %v5569
      %v5700 = vmul.f32 %v5644, %v5570
      %v5701 = vmul.f32 %v5644, %v5571
      %v5702 = vmul.f32 %v5644, %v5572
      %v5703 = vmul.f32 %v5644, %v5573
      %v5704 = vmul.f32 %v5644, %v5574
      %v5705 = vmul.f32 %v5644, %v5575
      %v5706 = vmul.f32 %v5644, %v5576
      %v5707 = vmul.f32 %v5644, %v5577
      %v5708 = vmul.f32 %v5644, %v5578
      %v5709 = vsel %vm5580, %v5515, %v5645
      %v5710 = vsel %vm5581, %v5516, %v5646
      %v5711 = vsel %vm5582, %v5517, %v5647
      %v5712 = vsel %vm5583, %v5518, %v5648
      %v5713 = vsel %vm5584, %v5519, %v5649
      %v5714 = vsel %vm5585, %v5520, %v5650
      %v5715 = vsel %vm5586, %v5521, %v5651
      %v5716 = vsel %vm5587, %v5522, %v5652
      %v5717 = vsel %vm5588, %v5523, %v5653
      %v5718 = vsel %vm5589, %v5524, %v5654
      %v5719 = vsel %vm5590, %v5525, %v5655
      %v5720 = vsel %vm5591, %v5526, %v5656
      %v5721 = vsel %vm5592, %v5527, %v5657
      %v5722 = vsel %vm5593, %v5528, %v5658
      %v5723 = vsel %vm5594, %v5529, %v5659
      %v5724 = vsel %vm5595, %v5530, %v5660
      %v5725 = vsel %vm5596, %v5531, %v5661
      %v5726 = vsel %vm5597, %v5532, %v5662
      %v5727 = vsel %vm5598, %v5533, %v5663
      %v5728 = vsel %vm5599, %v5534, %v5664
      %v5729 = vsel %vm5600, %v5535, %v5665
      %v5730 = vsel %vm5601, %v5536, %v5666
      %v5731 = vsel %vm5602, %v5537, %v5667
      %v5732 = vsel %vm5603, %v5538, %v5668
      %v5733 = vsel %vm5604, %v5539, %v5669
      %v5734 = vsel %vm5605, %v5540, %v5670
      %v5735 = vsel %vm5606, %v5541, %v5671
      %v5736 = vsel %vm5607, %v5542, %v5672
      %v5737 = vsel %vm5608, %v5543, %v5673
      %v5738 = vsel %vm5609, %v5544, %v5674
      %v5739 = vsel %vm5610, %v5545, %v5675
      %v5740 = vsel %vm5611, %v5546, %v5676
      %v5741 = vsel %vm5612, %v5547, %v5677
      %v5742 = vsel %vm5613, %v5548, %v5678
      %v5743 = vsel %vm5614, %v5549, %v5679
      %v5744 = vsel %vm5615, %v5550, %v5680
      %v5745 = vsel %vm5616, %v5551, %v5681
      %v5746 = vsel %vm5617, %v5552, %v5682
      %v5747 = vsel %vm5618, %v5553, %v5683
      %v5748 = vsel %vm5619, %v5554, %v5684
      %v5749 = vsel %vm5620, %v5555, %v5685
      %v5750 = vsel %vm5621, %v5556, %v5686
      %v5751 = vsel %vm5622, %v5557, %v5687
      %v5752 = vsel %vm5623, %v5558, %v5688
      %v5753 = vsel %vm5624, %v5559, %v5689
      %v5754 = vsel %vm5625, %v5560, %v5690
      %v5755 = vsel %vm5626, %v5561, %v5691
      %v5756 = vsel %vm5627, %v5562, %v5692
      %v5757 = vsel %vm5628, %v5563, %v5693
      %v5758 = vsel %vm5629, %v5564, %v5694
      %v5759 = vsel %vm5630, %v5565, %v5695
      %v5760 = vsel %vm5631, %v5566, %v5696
      %v5761 = vsel %vm5632, %v5567, %v5697
      %v5762 = vsel %vm5633, %v5568, %v5698
      %v5763 = vsel %vm5634, %v5569, %v5699
      %v5764 = vsel %vm5635, %v5570, %v5700
      %v5765 = vsel %vm5636, %v5571, %v5701
      %v5766 = vsel %vm5637, %v5572, %v5702
      %v5767 = vsel %vm5638, %v5573, %v5703
      %v5768 = vsel %vm5639, %v5574, %v5704
      %v5769 = vsel %vm5640, %v5575, %v5705
      %v5770 = vsel %vm5641, %v5576, %v5706
      %v5771 = vsel %vm5642, %v5577, %v5707
      %v5772 = vsel %vm5643, %v5578, %v5708
      %v5837 = vrot.slane %v5709, 7
      %v5838 = vrot.slane %v5710, 7
      %v5839 = vrot.slane %v5711, 7
      %v5840 = vrot.slane %v5712, 7
      %v5841 = vrot.slane %v5713, 7
      %v5842 = vsel %vm494, %v5837, %v5841
      %v5843 = vrot.slane %v5714, 7
      %v5844 = vsel %vm494, %v5838, %v5843
      %v5845 = vrot.slane %v5715, 7
      %v5846 = vsel %vm494, %v5839, %v5845
      %v5847 = vrot.slane %v5716, 7
      %v5848 = vsel %vm494, %v5840, %v5847
      %v5849 = vrot.slane %v5717, 7
      %v5850 = vrot.slane %v5718, 7
      %v5851 = vrot.slane %v5719, 7
      %v5852 = vrot.slane %v5720, 7
      %v5853 = vrot.slane %v5721, 7
      %v5854 = vsel %vm494, %v5849, %v5853
      %v5855 = vrot.slane %v5722, 7
      %v5856 = vsel %vm494, %v5850, %v5855
      %v5857 = vrot.slane %v5723, 7
      %v5858 = vsel %vm494, %v5851, %v5857
      %v5859 = vrot.slane %v5724, 7
      %v5860 = vsel %vm494, %v5852, %v5859
      %v5861 = vrot.slane %v5725, 7
      %v5862 = vrot.slane %v5726, 7
      %v5863 = vrot.slane %v5727, 7
      %v5864 = vrot.slane %v5728, 7
      %v5865 = vrot.slane %v5729, 7
      %v5866 = vsel %vm494, %v5861, %v5865
      %v5867 = vrot.slane %v5730, 7
      %v5868 = vsel %vm494, %v5862, %v5867
      %v5869 = vrot.slane %v5731, 7
      %v5870 = vsel %vm494, %v5863, %v5869
      %v5871 = vrot.slane %v5732, 7
      %v5872 = vsel %vm494, %v5864, %v5871
      %v5873 = vrot.slane %v5733, 7
      %v5874 = vrot.slane %v5734, 7
      %v5875 = vrot.slane %v5735, 7
      %v5876 = vrot.slane %v5736, 7
      %v5877 = vrot.slane %v5737, 7
      %v5878 = vsel %vm494, %v5873, %v5877
      %v5879 = vrot.slane %v5738, 7
      %v5880 = vsel %vm494, %v5874, %v5879
      %v5881 = vrot.slane %v5739, 7
      %v5882 = vsel %vm494, %v5875, %v5881
      %v5883 = vrot.slane %v5740, 7
      %v5884 = vsel %vm494, %v5876, %v5883
      %v5885 = vrot.slane %v5741, 7
      %v5886 = vrot.slane %v5742, 7
      %v5887 = vrot.slane %v5743, 7
      %v5888 = vrot.slane %v5744, 7
      %v5889 = vrot.slane %v5745, 7
      %v5890 = vsel %vm494, %v5885, %v5889
      %v5891 = vrot.slane %v5746, 7
      %v5892 = vsel %vm494, %v5886, %v5891
      %v5893 = vrot.slane %v5747, 7
      %v5894 = vsel %vm494, %v5887, %v5893
      %v5895 = vrot.slane %v5748, 7
      %v5896 = vsel %vm494, %v5888, %v5895
      %v5897 = vrot.slane %v5749, 7
      %v5898 = vrot.slane %v5750, 7
      %v5899 = vrot.slane %v5751, 7
      %v5900 = vrot.slane %v5752, 7
      %v5901 = vrot.slane %v5753, 7
      %v5902 = vsel %vm494, %v5897, %v5901
      %v5903 = vrot.slane %v5754, 7
      %v5904 = vsel %vm494, %v5898, %v5903
      %v5905 = vrot.slane %v5755, 7
      %v5906 = vsel %vm494, %v5899, %v5905
      %v5907 = vrot.slane %v5756, 7
      %v5908 = vsel %vm494, %v5900, %v5907
      %v5909 = vrot.slane %v5757, 7
      %v5910 = vrot.slane %v5758, 7
      %v5911 = vrot.slane %v5759, 7
      %v5912 = vrot.slane %v5760, 7
      %v5913 = vrot.slane %v5761, 7
      %v5914 = vsel %vm494, %v5909, %v5913
      %v5915 = vrot.slane %v5762, 7
      %v5916 = vsel %vm494, %v5910, %v5915
      %v5917 = vrot.slane %v5763, 7
      %v5918 = vsel %vm494, %v5911, %v5917
      %v5919 = vrot.slane %v5764, 7
      %v5920 = vsel %vm494, %v5912, %v5919
      %v5921 = vrot.slane %v5765, 7
      %v5922 = vrot.slane %v5766, 7
      %v5923 = vrot.slane %v5767, 7
      %v5924 = vrot.slane %v5768, 7
      %v5925 = vrot.slane %v5769, 7
      %v5926 = vsel %vm494, %v5921, %v5925
      %v5927 = vrot.slane %v5770, 7
      %v5928 = vsel %vm494, %v5922, %v5927
      %v5929 = vrot.slane %v5771, 7
      %v5930 = vsel %vm494, %v5923, %v5929
      %v5931 = vrot.slane %v5772, 7
      %v5932 = vsel %vm494, %v5924, %v5931
      %6029 = vst [vmem:[#allocation2] sm:$0xfe] %v5837
      %6030 = vst [vmem:[#allocation2 + $0x8] sm:$0xfe] %v5838
      %6031 = vst [vmem:[#allocation2 + $0x10] sm:$0xfe] %v5839
      %6032 = vst [vmem:[#allocation2 + $0x18] sm:$0xfe] %v5840
      %6033 = vst [vmem:[#allocation2 + $0x20] sm:$0xff] %v5842
      %6034 = vst [vmem:[#allocation2 + $0x28] sm:$0xff] %v5844
      %6035 = vst [vmem:[#allocation2 + $0x30] sm:$0xff] %v5846
      %6036 = vst [vmem:[#allocation2 + $0x38] sm:$0xff] %v5848
      %6037 = vst [vmem:[#allocation2 + $0x40] sm:$0x1] %v5841
      %6038 = vst [vmem:[#allocation2 + $0x48] sm:$0x1] %v5843
      %6039 = vst [vmem:[#allocation2 + $0x50] sm:$0x1] %v5845
      %6040 = vst [vmem:[#allocation2 + $0x58] sm:$0x1] %v5847
      %6041 = vst [vmem:[#allocation2 + $0x60] sm:$0xfe] %v5849
      %6042 = vst [vmem:[#allocation2 + $0x68] sm:$0xfe] %v5850
      %6043 = vst [vmem:[#allocation2 + $0x70] sm:$0xfe] %v5851
      %6044 = vst [vmem:[#allocation2 + $0x78] sm:$0xfe] %v5852
      %6045 = vst [vmem:[#allocation2 + $0x80] sm:$0xff] %v5854
      %6046 = vst [vmem:[#allocation2 + $0x88] sm:$0xff] %v5856
      %6047 = vst [vmem:[#allocation2 + $0x90] sm:$0xff] %v5858
      %6048 = vst [vmem:[#allocation2 + $0x98] sm:$0xff] %v5860
      %6049 = vst [vmem:[#allocation2 + $0xa0] sm:$0x1] %v5853
      %6050 = vst [vmem:[#allocation2 + $0xa8] sm:$0x1] %v5855
      %6051 = vst [vmem:[#allocation2 + $0xb0] sm:$0x1] %v5857
      %6052 = vst [vmem:[#allocation2 + $0xb8] sm:$0x1] %v5859
      %6053 = vst [vmem:[#allocation2 + $0xc0] sm:$0xfe] %v5861
      %6054 = vst [vmem:[#allocation2 + $0xc8] sm:$0xfe] %v5862
      %6055 = vst [vmem:[#allocation2 + $0xd0] sm:$0xfe] %v5863
      %6056 = vst [vmem:[#allocation2 + $0xd8] sm:$0xfe] %v5864
      %6057 = vst [vmem:[#allocation2 + $0xe0] sm:$0xff] %v5866
      %6058 = vst [vmem:[#allocation2 + $0xe8] sm:$0xff] %v5868
      %6059 = vst [vmem:[#allocation2 + $0xf0] sm:$0xff] %v5870
      %6060 = vst [vmem:[#allocation2 + $0xf8] sm:$0xff] %v5872
      %6061 = vst [vmem:[#allocation2 + $0x100] sm:$0x1] %v5865
      %6062 = vst [vmem:[#allocation2 + $0x108] sm:$0x1] %v5867
      %6063 = vst [vmem:[#allocation2 + $0x110] sm:$0x1] %v5869
      %6064 = vst [vmem:[#allocation2 + $0x118] sm:$0x1] %v5871
      %6065 = vst [vmem:[#allocation2 + $0x120] sm:$0xfe] %v5873
      %6066 = vst [vmem:[#allocation2 + $0x128] sm:$0xfe] %v5874
      %6067 = vst [vmem:[#allocation2 + $0x130] sm:$0xfe] %v5875
      %6068 = vst [vmem:[#allocation2 + $0x138] sm:$0xfe] %v5876
      %6069 = vst [vmem:[#allocation2 + $0x140] sm:$0xff] %v5878
      %6070 = vst [vmem:[#allocation2 + $0x148] sm:$0xff] %v5880
      %6071 = vst [vmem:[#allocation2 + $0x150] sm:$0xff] %v5882
      %6072 = vst [vmem:[#allocation2 + $0x158] sm:$0xff] %v5884
      %6073 = vst [vmem:[#allocation2 + $0x160] sm:$0x1] %v5877
      %6074 = vst [vmem:[#allocation2 + $0x168] sm:$0x1] %v5879
      %6075 = vst [vmem:[#allocation2 + $0x170] sm:$0x1] %v5881
      %6076 = vst [vmem:[#allocation2 + $0x178] sm:$0x1] %v5883
      %6077 = vst [vmem:[#allocation2 + $0x180] sm:$0xfe] %v5885
      %6078 = vst [vmem:[#allocation2 + $0x188] sm:$0xfe] %v5886
      %6079 = vst [vmem:[#allocation2 + $0x190] sm:$0xfe] %v5887
      %6080 = vst [vmem:[#allocation2 + $0x198] sm:$0xfe] %v5888
      %6081 = vst [vmem:[#allocation2 + $0x1a0] sm:$0xff] %v5890
      %6082 = vst [vmem:[#allocation2 + $0x1a8] sm:$0xff] %v5892
      %6083 = vst [vmem:[#allocation2 + $0x1b0] sm:$0xff] %v5894
      %6084 = vst [vmem:[#allocation2 + $0x1b8] sm:$0xff] %v5896
      %6085 = vst [vmem:[#allocation2 + $0x1c0] sm:$0x1] %v5889
      %6086 = vst [vmem:[#allocation2 + $0x1c8] sm:$0x1] %v5891
      %6087 = vst [vmem:[#allocation2 + $0x1d0] sm:$0x1] %v5893
      %6088 = vst [vmem:[#allocation2 + $0x1d8] sm:$0x1] %v5895
      %6089 = vst [vmem:[#allocation2 + $0x1e0] sm:$0xfe] %v5897
      %6090 = vst [vmem:[#allocation2 + $0x1e8] sm:$0xfe] %v5898
      %6091 = vst [vmem:[#allocation2 + $0x1f0] sm:$0xfe] %v5899
      %6092 = vst [vmem:[#allocation2 + $0x1f8] sm:$0xfe] %v5900
      %6093 = vst [vmem:[#allocation2 + $0x200] sm:$0xff] %v5902
      %6094 = vst [vmem:[#allocation2 + $0x208] sm:$0xff] %v5904
      %6095 = vst [vmem:[#allocation2 + $0x210] sm:$0xff] %v5906
      %6096 = vst [vmem:[#allocation2 + $0x218] sm:$0xff] %v5908
      %6097 = vst [vmem:[#allocation2 + $0x220] sm:$0x1] %v5901
      %6098 = vst [vmem:[#allocation2 + $0x228] sm:$0x1] %v5903
      %6099 = vst [vmem:[#allocation2 + $0x230] sm:$0x1] %v5905
      %6100 = vst [vmem:[#allocation2 + $0x238] sm:$0x1] %v5907
      %6101 = vst [vmem:[#allocation2 + $0x240] sm:$0xfe] %v5909
      %6102 = vst [vmem:[#allocation2 + $0x248] sm:$0xfe] %v5910
      %6103 = vst [vmem:[#allocation2 + $0x250] sm:$0xfe] %v5911
      %6104 = vst [vmem:[#allocation2 + $0x258] sm:$0xfe] %v5912
      %6105 = vst [vmem:[#allocation2 + $0x260] sm:$0xff] %v5914
      %6106 = vst [vmem:[#allocation2 + $0x268] sm:$0xff] %v5916
      %6107 = vst [vmem:[#allocation2 + $0x270] sm:$0xff] %v5918
      %6108 = vst [vmem:[#allocation2 + $0x278] sm:$0xff] %v5920
      %6109 = vst [vmem:[#allocation2 + $0x280] sm:$0x1] %v5913
      %6110 = vst [vmem:[#allocation2 + $0x288] sm:$0x1] %v5915
      %6111 = vst [vmem:[#allocation2 + $0x290] sm:$0x1] %v5917
      %6112 = vst [vmem:[#allocation2 + $0x298] sm:$0x1] %v5919
      %6113 = vst [vmem:[#allocation2 + $0x2a0] sm:$0xfe] %v5921
      %6114 = vst [vmem:[#allocation2 + $0x2a8] sm:$0xfe] %v5922
      %6115 = vst [vmem:[#allocation2 + $0x2b0] sm:$0xfe] %v5923
      %6116 = vst [vmem:[#allocation2 + $0x2b8] sm:$0xfe] %v5924
      %6117 = vst [vmem:[#allocation2 + $0x2c0] sm:$0xff] %v5926
      %6118 = vst [vmem:[#allocation2 + $0x2c8] sm:$0xff] %v5928
      %6119 = vst [vmem:[#allocation2 + $0x2d0] sm:$0xff] %v5930
      %6120 = vst [vmem:[#allocation2 + $0x2d8] sm:$0xff] %v5932
      %6121 = vst [vmem:[#allocation2 + $0x2e0] sm:$0x1] %v5925
      %6122 = vst [vmem:[#allocation2 + $0x2e8] sm:$0x1] %v5927
      %6123 = vst [vmem:[#allocation2 + $0x2f0] sm:$0x1] %v5929
      %6124 = vst [vmem:[#allocation2 + $0x2f8] sm:$0x1] %v5931
      %v6125 = vld [vmem:[#allocation2] sm:$0xff]
      %v6126 = vld [vmem:[#allocation2 + $0x8] sm:$0xff]
      %v6127 = vld [vmem:[#allocation2 + $0x10] sm:$0xff]
      %v6128 = vld [vmem:[#allocation2 + $0x18] sm:$0xff]
      %v6129 = vld [vmem:[#allocation2 + $0x20] sm:$0xff]
      %v6130 = vld [vmem:[#allocation2 + $0x28] sm:$0xff]
      %v6131 = vld [vmem:[#allocation2 + $0x30] sm:$0xff]
      %v6132 = vld [vmem:[#allocation2 + $0x38] sm:$0xff]
      %v6133 = vld [vmem:[#allocation2 + $0x60] sm:$0xff]
      %v6134 = vld [vmem:[#allocation2 + $0x68] sm:$0xff]
      %v6135 = vld [vmem:[#allocation2 + $0x70] sm:$0xff]
      %v6136 = vld [vmem:[#allocation2 + $0x78] sm:$0xff]
      %v6137 = vld [vmem:[#allocation2 + $0x80] sm:$0xff]
      %v6138 = vld [vmem:[#allocation2 + $0x88] sm:$0xff]
      %v6139 = vld [vmem:[#allocation2 + $0x90] sm:$0xff]
      %v6140 = vld [vmem:[#allocation2 + $0x98] sm:$0xff]
      %v6141 = vld [vmem:[#allocation2 + $0xc0] sm:$0xff]
      %v6142 = vld [vmem:[#allocation2 + $0xc8] sm:$0xff]
      %v6143 = vld [vmem:[#allocation2 + $0xd0] sm:$0xff]
      %v6144 = vld [vmem:[#allocation2 + $0xd8] sm:$0xff]
      %v6145 = vld [vmem:[#allocation2 + $0xe0] sm:$0xff]
      %v6146 = vld [vmem:[#allocation2 + $0xe8] sm:$0xff]
      %v6147 = vld [vmem:[#allocation2 + $0xf0] sm:$0xff]
      %v6148 = vld [vmem:[#allocation2 + $0xf8] sm:$0xff]
      %v6149 = vld [vmem:[#allocation2 + $0x120] sm:$0xff]
      %v6150 = vld [vmem:[#allocation2 + $0x128] sm:$0xff]
      %v6151 = vld [vmem:[#allocation2 + $0x130] sm:$0xff]
      %v6152 = vld [vmem:[#allocation2 + $0x138] sm:$0xff]
      %v6153 = vld [vmem:[#allocation2 + $0x140] sm:$0xff]
      %v6154 = vld [vmem:[#allocation2 + $0x148] sm:$0xff]
      %v6155 = vld [vmem:[#allocation2 + $0x150] sm:$0xff]
      %v6156 = vld [vmem:[#allocation2 + $0x158] sm:$0xff]
      %v6157 = vld [vmem:[#allocation2 + $0x180] sm:$0xff]
      %v6158 = vld [vmem:[#allocation2 + $0x188] sm:$0xff]
      %v6159 = vld [vmem:[#allocation2 + $0x190] sm:$0xff]
      %v6160 = vld [vmem:[#allocation2 + $0x198] sm:$0xff]
      %v6161 = vld [vmem:[#allocation2 + $0x1a0] sm:$0xff]
      %v6162 = vld [vmem:[#allocation2 + $0x1a8] sm:$0xff]
      %v6163 = vld [vmem:[#allocation2 + $0x1b0] sm:$0xff]
      %v6164 = vld [vmem:[#allocation2 + $0x1b8] sm:$0xff]
      %v6165 = vld [vmem:[#allocation2 + $0x1e0] sm:$0xff]
      %v6166 = vld [vmem:[#allocation2 + $0x1e8] sm:$0xff]
      %v6167 = vld [vmem:[#allocation2 + $0x1f0] sm:$0xff]
      %v6168 = vld [vmem:[#allocation2 + $0x1f8] sm:$0xff]
      %v6169 = vld [vmem:[#allocation2 + $0x200] sm:$0xff]
      %v6170 = vld [vmem:[#allocation2 + $0x208] sm:$0xff]
      %v6171 = vld [vmem:[#allocation2 + $0x210] sm:$0xff]
      %v6172 = vld [vmem:[#allocation2 + $0x218] sm:$0xff]
      %v6173 = vld [vmem:[#allocation2 + $0x240] sm:$0xff]
      %v6174 = vld [vmem:[#allocation2 + $0x248] sm:$0xff]
      %v6175 = vld [vmem:[#allocation2 + $0x250] sm:$0xff]
      %v6176 = vld [vmem:[#allocation2 + $0x258] sm:$0xff]
      %v6177 = vld [vmem:[#allocation2 + $0x260] sm:$0xff]
      %v6178 = vld [vmem:[#allocation2 + $0x268] sm:$0xff]
      %v6179 = vld [vmem:[#allocation2 + $0x270] sm:$0xff]
      %v6180 = vld [vmem:[#allocation2 + $0x278] sm:$0xff]
      %v6181 = vld [vmem:[#allocation2 + $0x2a0] sm:$0xff]
      %v6182 = vld [vmem:[#allocation2 + $0x2a8] sm:$0xff]
      %v6183 = vld [vmem:[#allocation2 + $0x2b0] sm:$0xff]
      %v6184 = vld [vmem:[#allocation2 + $0x2b8] sm:$0xff]
      %v6185 = vld [vmem:[#allocation2 + $0x2c0] sm:$0xff]
      %v6186 = vld [vmem:[#allocation2 + $0x2c8] sm:$0xff]
      %v6187 = vld [vmem:[#allocation2 + $0x2d0] sm:$0xff]
      %v6188 = vld [vmem:[#allocation2 + $0x2d8] sm:$0xff]
      %v6189 = vpack.c.bf16 %v6129, %v6125
      %v6190 = vpack.c.bf16 %v6130, %v6126
      %v6191 = vpack.c.bf16 %v6131, %v6127
      %v6192 = vpack.c.bf16 %v6132, %v6128
      %v6193 = vpack.c.bf16 %v6137, %v6133
      %v6194 = vpack.c.bf16 %v6138, %v6134
      %v6195 = vpack.c.bf16 %v6139, %v6135
      %v6196 = vpack.c.bf16 %v6140, %v6136
      %v6197 = vpack.c.bf16 %v6145, %v6141
      %v6198 = vpack.c.bf16 %v6146, %v6142
      %v6199 = vpack.c.bf16 %v6147, %v6143
      %v6200 = vpack.c.bf16 %v6148, %v6144
      %v6201 = vpack.c.bf16 %v6153, %v6149
      %v6202 = vpack.c.bf16 %v6154, %v6150
      %v6203 = vpack.c.bf16 %v6155, %v6151
      %v6204 = vpack.c.bf16 %v6156, %v6152
      %v6205 = vpack.c.bf16 %v6161, %v6157
      %v6206 = vpack.c.bf16 %v6162, %v6158
      %v6207 = vpack.c.bf16 %v6163, %v6159
      %v6208 = vpack.c.bf16 %v6164, %v6160
      %v6209 = vpack.c.bf16 %v6169, %v6165
      %v6210 = vpack.c.bf16 %v6170, %v6166
      %v6211 = vpack.c.bf16 %v6171, %v6167
      %v6212 = vpack.c.bf16 %v6172, %v6168
      %v6213 = vpack.c.bf16 %v6177, %v6173
      %v6214 = vpack.c.bf16 %v6178, %v6174
      %v6215 = vpack.c.bf16 %v6179, %v6175
      %v6216 = vpack.c.bf16 %v6180, %v6176
      %v6217 = vpack.c.bf16 %v6185, %v6181
      %v6218 = vpack.c.bf16 %v6186, %v6182
      %v6219 = vpack.c.bf16 %v6187, %v6183
      %v6220 = vpack.c.bf16 %v6188, %v6184
      %v6221 = vld [vmem:[%s2] sm:$0xff]
      %v6222 = vld [vmem:[%s2 + $0x8] sm:$0xff]
      %v6223 = vld [vmem:[%s2 + $0x10] sm:$0xff]
      %v6224 = vld [vmem:[%s2 + $0x18] sm:$0xff]
      %v6225 = vld [vmem:[%s2 + $0x20] sm:$0xff]
      %v6226 = vld [vmem:[%s2 + $0x28] sm:$0xff]
      %v6227 = vld [vmem:[%s2 + $0x30] sm:$0xff]
      %v6228 = vld [vmem:[%s2 + $0x38] sm:$0xff]
      %v6229 = vld [vmem:[%s2 + $0x40] sm:$0xff]
      %v6230 = vld [vmem:[%s2 + $0x48] sm:$0xff]
      %v6231 = vld [vmem:[%s2 + $0x50] sm:$0xff]
      %v6232 = vld [vmem:[%s2 + $0x58] sm:$0xff]
      %v6233 = vld [vmem:[%s2 + $0x60] sm:$0xff]
      %v6234 = vld [vmem:[%s2 + $0x68] sm:$0xff]
      %v6235 = vld [vmem:[%s2 + $0x70] sm:$0xff]
      %v6236 = vld [vmem:[%s2 + $0x78] sm:$0xff]
      %v6237 = vld [vmem:[%s2 + $0x80] sm:$0xff]
      %v6238 = vld [vmem:[%s2 + $0x88] sm:$0xff]
      %v6239 = vld [vmem:[%s2 + $0x90] sm:$0xff]
      %v6240 = vld [vmem:[%s2 + $0x98] sm:$0xff]
      %v6241 = vld [vmem:[%s2 + $0xa0] sm:$0xff]
      %v6242 = vld [vmem:[%s2 + $0xa8] sm:$0xff]
      %v6243 = vld [vmem:[%s2 + $0xb0] sm:$0xff]
      %v6244 = vld [vmem:[%s2 + $0xb8] sm:$0xff]
      %v6245 = vld [vmem:[%s2 + $0xc0] sm:$0xff]
      %v6246 = vld [vmem:[%s2 + $0xc8] sm:$0xff]
      %v6247 = vld [vmem:[%s2 + $0xd0] sm:$0xff]
      %v6248 = vld [vmem:[%s2 + $0xd8] sm:$0xff]
      %v6249 = vld [vmem:[%s2 + $0xe0] sm:$0xff]
      %v6250 = vld [vmem:[%s2 + $0xe8] sm:$0xff]
      %v6251 = vld [vmem:[%s2 + $0xf0] sm:$0xff]
      %v6252 = vld [vmem:[%s2 + $0xf8] sm:$0xff]
      %v6253 = vld [vmem:[%s2 + $0x100] sm:$0xff]
      %v6254 = vld [vmem:[%s2 + $0x108] sm:$0xff]
      %v6255 = vld [vmem:[%s2 + $0x110] sm:$0xff]
      %v6256 = vld [vmem:[%s2 + $0x118] sm:$0xff]
      %v6257 = vld [vmem:[%s2 + $0x120] sm:$0xff]
      %v6258 = vld [vmem:[%s2 + $0x128] sm:$0xff]
      %v6259 = vld [vmem:[%s2 + $0x130] sm:$0xff]
      %v6260 = vld [vmem:[%s2 + $0x138] sm:$0xff]
      %v6261 = vld [vmem:[%s2 + $0x140] sm:$0xff]
      %v6262 = vld [vmem:[%s2 + $0x148] sm:$0xff]
      %v6263 = vld [vmem:[%s2 + $0x150] sm:$0xff]
      %v6264 = vld [vmem:[%s2 + $0x158] sm:$0xff]
      %v6265 = vld [vmem:[%s2 + $0x160] sm:$0xff]
      %v6266 = vld [vmem:[%s2 + $0x168] sm:$0xff]
      %v6267 = vld [vmem:[%s2 + $0x170] sm:$0xff]
      %v6268 = vld [vmem:[%s2 + $0x178] sm:$0xff]
      %v6269 = vld [vmem:[%s2 + $0x180] sm:$0xff]
      %v6270 = vld [vmem:[%s2 + $0x188] sm:$0xff]
      %v6271 = vld [vmem:[%s2 + $0x190] sm:$0xff]
      %v6272 = vld [vmem:[%s2 + $0x198] sm:$0xff]
      %v6273 = vld [vmem:[%s2 + $0x1a0] sm:$0xff]
      %v6274 = vld [vmem:[%s2 + $0x1a8] sm:$0xff]
      %v6275 = vld [vmem:[%s2 + $0x1b0] sm:$0xff]
      %v6276 = vld [vmem:[%s2 + $0x1b8] sm:$0xff]
      %v6277 = vld [vmem:[%s2 + $0x1c0] sm:$0xff]
      %v6278 = vld [vmem:[%s2 + $0x1c8] sm:$0xff]
      %v6279 = vld [vmem:[%s2 + $0x1d0] sm:$0xff]
      %v6280 = vld [vmem:[%s2 + $0x1d8] sm:$0xff]
      %v6281 = vld [vmem:[%s2 + $0x1e0] sm:$0xff]
      %v6282 = vld [vmem:[%s2 + $0x1e8] sm:$0xff]
      %v6283 = vld [vmem:[%s2 + $0x1f0] sm:$0xff]
      %v6284 = vld [vmem:[%s2 + $0x1f8] sm:$0xff]
      %v6285 = vld [vmem:[%s2 + $0x200] sm:$0xff]
      %v6286 = vld [vmem:[%s2 + $0x208] sm:$0xff]
      %v6287 = vld [vmem:[%s2 + $0x210] sm:$0xff]
      %v6288 = vld [vmem:[%s2 + $0x218] sm:$0xff]
      %v6289 = vld [vmem:[%s2 + $0x220] sm:$0xff]
      %v6290 = vld [vmem:[%s2 + $0x228] sm:$0xff]
      %v6291 = vld [vmem:[%s2 + $0x230] sm:$0xff]
      %v6292 = vld [vmem:[%s2 + $0x238] sm:$0xff]
      %v6293 = vld [vmem:[%s2 + $0x240] sm:$0xff]
      %v6294 = vld [vmem:[%s2 + $0x248] sm:$0xff]
      %v6295 = vld [vmem:[%s2 + $0x250] sm:$0xff]
      %v6296 = vld [vmem:[%s2 + $0x258] sm:$0xff]
      %v6297 = vld [vmem:[%s2 + $0x260] sm:$0xff]
      %v6298 = vld [vmem:[%s2 + $0x268] sm:$0xff]
      %v6299 = vld [vmem:[%s2 + $0x270] sm:$0xff]
      %v6300 = vld [vmem:[%s2 + $0x278] sm:$0xff]
      %v6301 = vld [vmem:[%s2 + $0x280] sm:$0xff]
      %v6302 = vld [vmem:[%s2 + $0x288] sm:$0xff]
      %v6303 = vld [vmem:[%s2 + $0x290] sm:$0xff]
      %v6304 = vld [vmem:[%s2 + $0x298] sm:$0xff]
      %v6305 = vld [vmem:[%s2 + $0x2a0] sm:$0xff]
      %v6306 = vld [vmem:[%s2 + $0x2a8] sm:$0xff]
      %v6307 = vld [vmem:[%s2 + $0x2b0] sm:$0xff]
      %v6308 = vld [vmem:[%s2 + $0x2b8] sm:$0xff]
      %v6309 = vld [vmem:[%s2 + $0x2c0] sm:$0xff]
      %v6310 = vld [vmem:[%s2 + $0x2c8] sm:$0xff]
      %v6311 = vld [vmem:[%s2 + $0x2d0] sm:$0xff]
      %v6312 = vld [vmem:[%s2 + $0x2d8] sm:$0xff]
      %v6313 = vld [vmem:[%s2 + $0x2e0] sm:$0xff]
      %v6314 = vld [vmem:[%s2 + $0x2e8] sm:$0xff]
      %v6315 = vld [vmem:[%s2 + $0x2f0] sm:$0xff]
      %v6316 = vld [vmem:[%s2 + $0x2f8] sm:$0xff]
      %v6317 = vld [vmem:[%s2 + $0x300] sm:$0xff]
      %v6318 = vld [vmem:[%s2 + $0x308] sm:$0xff]
      %v6319 = vld [vmem:[%s2 + $0x310] sm:$0xff]
      %v6320 = vld [vmem:[%s2 + $0x318] sm:$0xff]
      %v6321 = vld [vmem:[%s2 + $0x320] sm:$0xff]
      %v6322 = vld [vmem:[%s2 + $0x328] sm:$0xff]
      %v6323 = vld [vmem:[%s2 + $0x330] sm:$0xff]
      %v6324 = vld [vmem:[%s2 + $0x338] sm:$0xff]
      %v6325 = vld [vmem:[%s2 + $0x340] sm:$0xff]
      %v6326 = vld [vmem:[%s2 + $0x348] sm:$0xff]
      %v6327 = vld [vmem:[%s2 + $0x350] sm:$0xff]
      %v6328 = vld [vmem:[%s2 + $0x358] sm:$0xff]
      %v6329 = vld [vmem:[%s2 + $0x360] sm:$0xff]
      %v6330 = vld [vmem:[%s2 + $0x368] sm:$0xff]
      %v6331 = vld [vmem:[%s2 + $0x370] sm:$0xff]
      %v6332 = vld [vmem:[%s2 + $0x378] sm:$0xff]
      %v6333 = vld [vmem:[%s2 + $0x380] sm:$0xff]
      %v6334 = vld [vmem:[%s2 + $0x388] sm:$0xff]
      %v6335 = vld [vmem:[%s2 + $0x390] sm:$0xff]
      %v6336 = vld [vmem:[%s2 + $0x398] sm:$0xff]
      %v6337 = vld [vmem:[%s2 + $0x3a0] sm:$0xff]
      %v6338 = vld [vmem:[%s2 + $0x3a8] sm:$0xff]
      %v6339 = vld [vmem:[%s2 + $0x3b0] sm:$0xff]
      %v6340 = vld [vmem:[%s2 + $0x3b8] sm:$0xff]
      %v6341 = vld [vmem:[%s2 + $0x3c0] sm:$0xff]
      %v6342 = vld [vmem:[%s2 + $0x3c8] sm:$0xff]
      %v6343 = vld [vmem:[%s2 + $0x3d0] sm:$0xff]
      %v6344 = vld [vmem:[%s2 + $0x3d8] sm:$0xff]
      %v6345 = vld [vmem:[%s2 + $0x3e0] sm:$0xff]
      %v6346 = vld [vmem:[%s2 + $0x3e8] sm:$0xff]
      %v6347 = vld [vmem:[%s2 + $0x3f0] sm:$0xff]
      %v6348 = vld [vmem:[%s2 + $0x3f8] sm:$0xff]
      %v6349 = vld [vmem:[#allocation2] sm:$0xfe]
      %v6350 = vld [vmem:[#allocation2 + $0x8] sm:$0xfe]
      %v6351 = vld [vmem:[#allocation2 + $0x10] sm:$0xfe]
      %v6352 = vld [vmem:[#allocation2 + $0x18] sm:$0xfe]
      %v6353 = vld [vmem:[#allocation2 + $0x40] sm:$0x1]
      %v6354 = vld [vmem:[#allocation2 + $0x48] sm:$0x1]
      %v6355 = vld [vmem:[#allocation2 + $0x50] sm:$0x1]
      %v6356 = vld [vmem:[#allocation2 + $0x58] sm:$0x1]
      %v6357 = vld [vmem:[#allocation2 + $0x60] sm:$0xfe]
      %v6358 = vld [vmem:[#allocation2 + $0x68] sm:$0xfe]
      %v6359 = vld [vmem:[#allocation2 + $0x70] sm:$0xfe]
      %v6360 = vld [vmem:[#allocation2 + $0x78] sm:$0xfe]
      %v6361 = vld [vmem:[#allocation2 + $0xa0] sm:$0x1]
      %v6362 = vld [vmem:[#allocation2 + $0xa8] sm:$0x1]
      %v6363 = vld [vmem:[#allocation2 + $0xb0] sm:$0x1]
      %v6364 = vld [vmem:[#allocation2 + $0xb8] sm:$0x1]
      %v6365 = vld [vmem:[#allocation2 + $0xc0] sm:$0xfe]
      %v6366 = vld [vmem:[#allocation2 + $0xc8] sm:$0xfe]
      %v6367 = vld [vmem:[#allocation2 + $0xd0] sm:$0xfe]
      %v6368 = vld [vmem:[#allocation2 + $0xd8] sm:$0xfe]
      %v6369 = vld [vmem:[#allocation2 + $0x100] sm:$0x1]
      %v6370 = vld [vmem:[#allocation2 + $0x108] sm:$0x1]
      %v6371 = vld [vmem:[#allocation2 + $0x110] sm:$0x1]
      %v6372 = vld [vmem:[#allocation2 + $0x118] sm:$0x1]
      %v6373 = vld [vmem:[#allocation2 + $0x120] sm:$0xfe]
      %v6374 = vld [vmem:[#allocation2 + $0x128] sm:$0xfe]
      %v6375 = vld [vmem:[#allocation2 + $0x130] sm:$0xfe]
      %v6376 = vld [vmem:[#allocation2 + $0x138] sm:$0xfe]
      %v6377 = vld [vmem:[#allocation2 + $0x160] sm:$0x1]
      %v6378 = vld [vmem:[#allocation2 + $0x168] sm:$0x1]
      %v6379 = vld [vmem:[#allocation2 + $0x170] sm:$0x1]
      %v6380 = vld [vmem:[#allocation2 + $0x178] sm:$0x1]
      %v6381 = vld [vmem:[#allocation2 + $0x180] sm:$0xfe]
      %v6382 = vld [vmem:[#allocation2 + $0x188] sm:$0xfe]
      %v6383 = vld [vmem:[#allocation2 + $0x190] sm:$0xfe]
      %v6384 = vld [vmem:[#allocation2 + $0x198] sm:$0xfe]
      %v6385 = vld [vmem:[#allocation2 + $0x1c0] sm:$0x1]
      %v6386 = vld [vmem:[#allocation2 + $0x1c8] sm:$0x1]
      %v6387 = vld [vmem:[#allocation2 + $0x1d0] sm:$0x1]
      %v6388 = vld [vmem:[#allocation2 + $0x1d8] sm:$0x1]
      %v6389 = vld [vmem:[#allocation2 + $0x1e0] sm:$0xfe]
      %v6390 = vld [vmem:[#allocation2 + $0x1e8] sm:$0xfe]
      %v6391 = vld [vmem:[#allocation2 + $0x1f0] sm:$0xfe]
      %v6392 = vld [vmem:[#allocation2 + $0x1f8] sm:$0xfe]
      %v6393 = vld [vmem:[#allocation2 + $0x220] sm:$0x1]
      %v6394 = vld [vmem:[#allocation2 + $0x228] sm:$0x1]
      %v6395 = vld [vmem:[#allocation2 + $0x230] sm:$0x1]
      %v6396 = vld [vmem:[#allocation2 + $0x238] sm:$0x1]
      %v6397 = vld [vmem:[#allocation2 + $0x240] sm:$0xfe]
      %v6398 = vld [vmem:[#allocation2 + $0x248] sm:$0xfe]
      %v6399 = vld [vmem:[#allocation2 + $0x250] sm:$0xfe]
      %v6400 = vld [vmem:[#allocation2 + $0x258] sm:$0xfe]
      %v6401 = vld [vmem:[#allocation2 + $0x280] sm:$0x1]
      %v6402 = vld [vmem:[#allocation2 + $0x288] sm:$0x1]
      %v6403 = vld [vmem:[#allocation2 + $0x290] sm:$0x1]
      %v6404 = vld [vmem:[#allocation2 + $0x298] sm:$0x1]
      %v6405 = vld [vmem:[#allocation2 + $0x2a0] sm:$0xfe]
      %v6406 = vld [vmem:[#allocation2 + $0x2a8] sm:$0xfe]
      %v6407 = vld [vmem:[#allocation2 + $0x2b0] sm:$0xfe]
      %v6408 = vld [vmem:[#allocation2 + $0x2b8] sm:$0xfe]
      %v6409 = vld [vmem:[#allocation2 + $0x2e0] sm:$0x1]
      %v6410 = vld [vmem:[#allocation2 + $0x2e8] sm:$0x1]
      %v6411 = vld [vmem:[#allocation2 + $0x2f0] sm:$0x1]
      %v6412 = vld [vmem:[#allocation2 + $0x2f8] sm:$0x1]
      %v6509 = vrot.slane %v6349, 1
      %v6510 = vrot.slane %v6129, 1
      %v6511 = vsel %vm1167, %v6509, %v6510
      %v6512 = vrot.slane %v6350, 1
      %v6513 = vrot.slane %v6130, 1
      %v6514 = vsel %vm1167, %v6512, %v6513
      %v6515 = vrot.slane %v6351, 1
      %v6516 = vrot.slane %v6131, 1
      %v6517 = vsel %vm1167, %v6515, %v6516
      %v6518 = vrot.slane %v6352, 1
      %v6519 = vrot.slane %v6132, 1
      %v6520 = vsel %vm1167, %v6518, %v6519
      %v6521 = vrot.slane %v6353, 1
      %v6522 = vsel %vm1167, %v6510, %v6521
      %v6523 = vrot.slane %v6354, 1
      %v6524 = vsel %vm1167, %v6513, %v6523
      %v6525 = vrot.slane %v6355, 1
      %v6526 = vsel %vm1167, %v6516, %v6525
      %v6527 = vrot.slane %v6356, 1
      %v6528 = vsel %vm1167, %v6519, %v6527
      %v6529 = vrot.slane %v6357, 1
      %v6530 = vrot.slane %v6137, 1
      %v6531 = vsel %vm1167, %v6529, %v6530
      %v6532 = vrot.slane %v6358, 1
      %v6533 = vrot.slane %v6138, 1
      %v6534 = vsel %vm1167, %v6532, %v6533
      %v6535 = vrot.slane %v6359, 1
      %v6536 = vrot.slane %v6139, 1
      %v6537 = vsel %vm1167, %v6535, %v6536
      %v6538 = vrot.slane %v6360, 1
      %v6539 = vrot.slane %v6140, 1
      %v6540 = vsel %vm1167, %v6538, %v6539
      %v6541 = vrot.slane %v6361, 1
      %v6542 = vsel %vm1167, %v6530, %v6541
      %v6543 = vrot.slane %v6362, 1
      %v6544 = vsel %vm1167, %v6533, %v6543
      %v6545 = vrot.slane %v6363, 1
      %v6546 = vsel %vm1167, %v6536, %v6545
      %v6547 = vrot.slane %v6364, 1
      %v6548 = vsel %vm1167, %v6539, %v6547
      %v6549 = vrot.slane %v6365, 1
      %v6550 = vrot.slane %v6145, 1
      %v6551 = vsel %vm1167, %v6549, %v6550
      %v6552 = vrot.slane %v6366, 1
      %v6553 = vrot.slane %v6146, 1
      %v6554 = vsel %vm1167, %v6552, %v6553
      %v6555 = vrot.slane %v6367, 1
      %v6556 = vrot.slane %v6147, 1
      %v6557 = vsel %vm1167, %v6555, %v6556
      %v6558 = vrot.slane %v6368, 1
      %v6559 = vrot.slane %v6148, 1
      %v6560 = vsel %vm1167, %v6558, %v6559
      %v6561 = vrot.slane %v6369, 1
      %v6562 = vsel %vm1167, %v6550, %v6561
      %v6563 = vrot.slane %v6370, 1
      %v6564 = vsel %vm1167, %v6553, %v6563
      %v6565 = vrot.slane %v6371, 1
      %v6566 = vsel %vm1167, %v6556, %v6565
      %v6567 = vrot.slane %v6372, 1
      %v6568 = vsel %vm1167, %v6559, %v6567
      %v6569 = vrot.slane %v6373, 1
      %v6570 = vrot.slane %v6153, 1
      %v6571 = vsel %vm1167, %v6569, %v6570
      %v6572 = vrot.slane %v6374, 1
      %v6573 = vrot.slane %v6154, 1
      %v6574 = vsel %vm1167, %v6572, %v6573
      %v6575 = vrot.slane %v6375, 1
      %v6576 = vrot.slane %v6155, 1
      %v6577 = vsel %vm1167, %v6575, %v6576
      %v6578 = vrot.slane %v6376, 1
      %v6579 = vrot.slane %v6156, 1
      %v6580 = vsel %vm1167, %v6578, %v6579
      %v6581 = vrot.slane %v6377, 1
      %v6582 = vsel %vm1167, %v6570, %v6581
      %v6583 = vrot.slane %v6378, 1
      %v6584 = vsel %vm1167, %v6573, %v6583
      %v6585 = vrot.slane %v6379, 1
      %v6586 = vsel %vm1167, %v6576, %v6585
      %v6587 = vrot.slane %v6380, 1
      %v6588 = vsel %vm1167, %v6579, %v6587
      %v6589 = vrot.slane %v6381, 1
      %v6590 = vrot.slane %v6161, 1
      %v6591 = vsel %vm1167, %v6589, %v6590
      %v6592 = vrot.slane %v6382, 1
      %v6593 = vrot.slane %v6162, 1
      %v6594 = vsel %vm1167, %v6592, %v6593
      %v6595 = vrot.slane %v6383, 1
      %v6596 = vrot.slane %v6163, 1
      %v6597 = vsel %vm1167, %v6595, %v6596
      %v6598 = vrot.slane %v6384, 1
      %v6599 = vrot.slane %v6164, 1
      %v6600 = vsel %vm1167, %v6598, %v6599
      %v6601 = vrot.slane %v6385, 1
      %v6602 = vsel %vm1167, %v6590, %v6601
      %v6603 = vrot.slane %v6386, 1
      %v6604 = vsel %vm1167, %v6593, %v6603
      %v6605 = vrot.slane %v6387, 1
      %v6606 = vsel %vm1167, %v6596, %v6605
      %v6607 = vrot.slane %v6388, 1
      %v6608 = vsel %vm1167, %v6599, %v6607
      %v6609 = vrot.slane %v6389, 1
      %v6610 = vrot.slane %v6169, 1
      %v6611 = vsel %vm1167, %v6609, %v6610
      %v6612 = vrot.slane %v6390, 1
      %v6613 = vrot.slane %v6170, 1
      %v6614 = vsel %vm1167, %v6612, %v6613
      %v6615 = vrot.slane %v6391, 1
      %v6616 = vrot.slane %v6171, 1
      %v6617 = vsel %vm1167, %v6615, %v6616
      %v6618 = vrot.slane %v6392, 1
      %v6619 = vrot.slane %v6172, 1
      %v6620 = vsel %vm1167, %v6618, %v6619
      %v6621 = vrot.slane %v6393, 1
      %v6622 = vsel %vm1167, %v6610, %v6621
      %v6623 = vrot.slane %v6394, 1
      %v6624 = vsel %vm1167, %v6613, %v6623
      %v6625 = vrot.slane %v6395, 1
      %v6626 = vsel %vm1167, %v6616, %v6625
      %v6627 = vrot.slane %v6396, 1
      %v6628 = vsel %vm1167, %v6619, %v6627
      %v6629 = vrot.slane %v6397, 1
      %v6630 = vrot.slane %v6177, 1
      %v6631 = vsel %vm1167, %v6629, %v6630
      %v6632 = vrot.slane %v6398, 1
      %v6633 = vrot.slane %v6178, 1
      %v6634 = vsel %vm1167, %v6632, %v6633
      %v6635 = vrot.slane %v6399, 1
      %v6636 = vrot.slane %v6179, 1
      %v6637 = vsel %vm1167, %v6635, %v6636
      %v6638 = vrot.slane %v6400, 1
      %v6639 = vrot.slane %v6180, 1
      %v6640 = vsel %vm1167, %v6638, %v6639
      %v6641 = vrot.slane %v6401, 1
      %v6642 = vsel %vm1167, %v6630, %v6641
      %v6643 = vrot.slane %v6402, 1
      %v6644 = vsel %vm1167, %v6633, %v6643
      %v6645 = vrot.slane %v6403, 1
      %v6646 = vsel %vm1167, %v6636, %v6645
      %v6647 = vrot.slane %v6404, 1
      %v6648 = vsel %vm1167, %v6639, %v6647
      %v6649 = vrot.slane %v6405, 1
      %v6650 = vrot.slane %v6185, 1
      %v6651 = vsel %vm1167, %v6649, %v6650
      %v6652 = vrot.slane %v6406, 1
      %v6653 = vrot.slane %v6186, 1
      %v6654 = vsel %vm1167, %v6652, %v6653
      %v6655 = vrot.slane %v6407, 1
      %v6656 = vrot.slane %v6187, 1
      %v6657 = vsel %vm1167, %v6655, %v6656
      %v6658 = vrot.slane %v6408, 1
      %v6659 = vrot.slane %v6188, 1
      %v6660 = vsel %vm1167, %v6658, %v6659
      %v6661 = vrot.slane %v6409, 1
      %v6662 = vsel %vm1167, %v6650, %v6661
      %v6663 = vrot.slane %v6410, 1
      %v6664 = vsel %vm1167, %v6653, %v6663
      %v6665 = vrot.slane %v6411, 1
      %v6666 = vsel %vm1167, %v6656, %v6665
      %v6667 = vrot.slane %v6412, 1
      %v6668 = vsel %vm1167, %v6659, %v6667
      %v6733 = vpack.c.bf16 %v6522, %v6511
      %v6734 = vpack.c.bf16 %v6524, %v6514
      %v6735 = vpack.c.bf16 %v6526, %v6517
      %v6736 = vpack.c.bf16 %v6528, %v6520
      %v6737 = vpack.c.bf16 %v6542, %v6531
      %v6738 = vpack.c.bf16 %v6544, %v6534
      %v6739 = vpack.c.bf16 %v6546, %v6537
      %v6740 = vpack.c.bf16 %v6548, %v6540
      %v6741 = vpack.c.bf16 %v6562, %v6551
      %v6742 = vpack.c.bf16 %v6564, %v6554
      %v6743 = vpack.c.bf16 %v6566, %v6557
      %v6744 = vpack.c.bf16 %v6568, %v6560
      %v6745 = vpack.c.bf16 %v6582, %v6571
      %v6746 = vpack.c.bf16 %v6584, %v6574
      %v6747 = vpack.c.bf16 %v6586, %v6577
      %v6748 = vpack.c.bf16 %v6588, %v6580
      %v6749 = vpack.c.bf16 %v6602, %v6591
      %v6750 = vpack.c.bf16 %v6604, %v6594
      %v6751 = vpack.c.bf16 %v6606, %v6597
      %v6752 = vpack.c.bf16 %v6608, %v6600
      %v6753 = vpack.c.bf16 %v6622, %v6611
      %v6754 = vpack.c.bf16 %v6624, %v6614
      %v6755 = vpack.c.bf16 %v6626, %v6617
      %v6756 = vpack.c.bf16 %v6628, %v6620
      %v6757 = vpack.c.bf16 %v6642, %v6631
      %v6758 = vpack.c.bf16 %v6644, %v6634
      %v6759 = vpack.c.bf16 %v6646, %v6637
      %v6760 = vpack.c.bf16 %v6648, %v6640
      %v6761 = vpack.c.bf16 %v6662, %v6651
      %v6762 = vpack.c.bf16 %v6664, %v6654
      %v6763 = vpack.c.bf16 %v6666, %v6657
      %v6764 = vpack.c.bf16 %v6668, %v6660
      %s6765 = scalar_lea.vmem %s2, 1024
      %v6766 = vld [vmem:[%s6765] sm:$0xff]
      %v6767 = vld [vmem:[%s6765 + $0x8] sm:$0xff]
      %v6768 = vld [vmem:[%s6765 + $0x10] sm:$0xff]
      %v6769 = vld [vmem:[%s6765 + $0x18] sm:$0xff]
      %v6770 = vld [vmem:[%s6765 + $0x20] sm:$0xff]
      %v6771 = vld [vmem:[%s6765 + $0x28] sm:$0xff]
      %v6772 = vld [vmem:[%s6765 + $0x30] sm:$0xff]
      %v6773 = vld [vmem:[%s6765 + $0x38] sm:$0xff]
      %v6774 = vld [vmem:[%s6765 + $0x40] sm:$0xff]
      %v6775 = vld [vmem:[%s6765 + $0x48] sm:$0xff]
      %v6776 = vld [vmem:[%s6765 + $0x50] sm:$0xff]
      %v6777 = vld [vmem:[%s6765 + $0x58] sm:$0xff]
      %v6778 = vld [vmem:[%s6765 + $0x60] sm:$0xff]
      %v6779 = vld [vmem:[%s6765 + $0x68] sm:$0xff]
      %v6780 = vld [vmem:[%s6765 + $0x70] sm:$0xff]
      %v6781 = vld [vmem:[%s6765 + $0x78] sm:$0xff]
      %v6782 = vld [vmem:[%s6765 + $0x80] sm:$0xff]
      %v6783 = vld [vmem:[%s6765 + $0x88] sm:$0xff]
      %v6784 = vld [vmem:[%s6765 + $0x90] sm:$0xff]
      %v6785 = vld [vmem:[%s6765 + $0x98] sm:$0xff]
      %v6786 = vld [vmem:[%s6765 + $0xa0] sm:$0xff]
      %v6787 = vld [vmem:[%s6765 + $0xa8] sm:$0xff]
      %v6788 = vld [vmem:[%s6765 + $0xb0] sm:$0xff]
      %v6789 = vld [vmem:[%s6765 + $0xb8] sm:$0xff]
      %v6790 = vld [vmem:[%s6765 + $0xc0] sm:$0xff]
      %v6791 = vld [vmem:[%s6765 + $0xc8] sm:$0xff]
      %v6792 = vld [vmem:[%s6765 + $0xd0] sm:$0xff]
      %v6793 = vld [vmem:[%s6765 + $0xd8] sm:$0xff]
      %v6794 = vld [vmem:[%s6765 + $0xe0] sm:$0xff]
      %v6795 = vld [vmem:[%s6765 + $0xe8] sm:$0xff]
      %v6796 = vld [vmem:[%s6765 + $0xf0] sm:$0xff]
      %v6797 = vld [vmem:[%s6765 + $0xf8] sm:$0xff]
      %v6798 = vld [vmem:[%s6765 + $0x100] sm:$0xff]
      %v6799 = vld [vmem:[%s6765 + $0x108] sm:$0xff]
      %v6800 = vld [vmem:[%s6765 + $0x110] sm:$0xff]
      %v6801 = vld [vmem:[%s6765 + $0x118] sm:$0xff]
      %v6802 = vld [vmem:[%s6765 + $0x120] sm:$0xff]
      %v6803 = vld [vmem:[%s6765 + $0x128] sm:$0xff]
      %v6804 = vld [vmem:[%s6765 + $0x130] sm:$0xff]
      %v6805 = vld [vmem:[%s6765 + $0x138] sm:$0xff]
      %v6806 = vld [vmem:[%s6765 + $0x140] sm:$0xff]
      %v6807 = vld [vmem:[%s6765 + $0x148] sm:$0xff]
      %v6808 = vld [vmem:[%s6765 + $0x150] sm:$0xff]
      %v6809 = vld [vmem:[%s6765 + $0x158] sm:$0xff]
      %v6810 = vld [vmem:[%s6765 + $0x160] sm:$0xff]
      %v6811 = vld [vmem:[%s6765 + $0x168] sm:$0xff]
      %v6812 = vld [vmem:[%s6765 + $0x170] sm:$0xff]
      %v6813 = vld [vmem:[%s6765 + $0x178] sm:$0xff]
      %v6814 = vld [vmem:[%s6765 + $0x180] sm:$0xff]
      %v6815 = vld [vmem:[%s6765 + $0x188] sm:$0xff]
      %v6816 = vld [vmem:[%s6765 + $0x190] sm:$0xff]
      %v6817 = vld [vmem:[%s6765 + $0x198] sm:$0xff]
      %v6818 = vld [vmem:[%s6765 + $0x1a0] sm:$0xff]
      %v6819 = vld [vmem:[%s6765 + $0x1a8] sm:$0xff]
      %v6820 = vld [vmem:[%s6765 + $0x1b0] sm:$0xff]
      %v6821 = vld [vmem:[%s6765 + $0x1b8] sm:$0xff]
      %v6822 = vld [vmem:[%s6765 + $0x1c0] sm:$0xff]
      %v6823 = vld [vmem:[%s6765 + $0x1c8] sm:$0xff]
      %v6824 = vld [vmem:[%s6765 + $0x1d0] sm:$0xff]
      %v6825 = vld [vmem:[%s6765 + $0x1d8] sm:$0xff]
      %v6826 = vld [vmem:[%s6765 + $0x1e0] sm:$0xff]
      %v6827 = vld [vmem:[%s6765 + $0x1e8] sm:$0xff]
      %v6828 = vld [vmem:[%s6765 + $0x1f0] sm:$0xff]
      %v6829 = vld [vmem:[%s6765 + $0x1f8] sm:$0xff]
      %v6830 = vld [vmem:[%s6765 + $0x200] sm:$0xff]
      %v6831 = vld [vmem:[%s6765 + $0x208] sm:$0xff]
      %v6832 = vld [vmem:[%s6765 + $0x210] sm:$0xff]
      %v6833 = vld [vmem:[%s6765 + $0x218] sm:$0xff]
      %v6834 = vld [vmem:[%s6765 + $0x220] sm:$0xff]
      %v6835 = vld [vmem:[%s6765 + $0x228] sm:$0xff]
      %v6836 = vld [vmem:[%s6765 + $0x230] sm:$0xff]
      %v6837 = vld [vmem:[%s6765 + $0x238] sm:$0xff]
      %v6838 = vld [vmem:[%s6765 + $0x240] sm:$0xff]
      %v6839 = vld [vmem:[%s6765 + $0x248] sm:$0xff]
      %v6840 = vld [vmem:[%s6765 + $0x250] sm:$0xff]
      %v6841 = vld [vmem:[%s6765 + $0x258] sm:$0xff]
      %v6842 = vld [vmem:[%s6765 + $0x260] sm:$0xff]
      %v6843 = vld [vmem:[%s6765 + $0x268] sm:$0xff]
      %v6844 = vld [vmem:[%s6765 + $0x270] sm:$0xff]
      %v6845 = vld [vmem:[%s6765 + $0x278] sm:$0xff]
      %v6846 = vld [vmem:[%s6765 + $0x280] sm:$0xff]
      %v6847 = vld [vmem:[%s6765 + $0x288] sm:$0xff]
      %v6848 = vld [vmem:[%s6765 + $0x290] sm:$0xff]
      %v6849 = vld [vmem:[%s6765 + $0x298] sm:$0xff]
      %v6850 = vld [vmem:[%s6765 + $0x2a0] sm:$0xff]
      %v6851 = vld [vmem:[%s6765 + $0x2a8] sm:$0xff]
      %v6852 = vld [vmem:[%s6765 + $0x2b0] sm:$0xff]
      %v6853 = vld [vmem:[%s6765 + $0x2b8] sm:$0xff]
      %v6854 = vld [vmem:[%s6765 + $0x2c0] sm:$0xff]
      %v6855 = vld [vmem:[%s6765 + $0x2c8] sm:$0xff]
      %v6856 = vld [vmem:[%s6765 + $0x2d0] sm:$0xff]
      %v6857 = vld [vmem:[%s6765 + $0x2d8] sm:$0xff]
      %v6858 = vld [vmem:[%s6765 + $0x2e0] sm:$0xff]
      %v6859 = vld [vmem:[%s6765 + $0x2e8] sm:$0xff]
      %v6860 = vld [vmem:[%s6765 + $0x2f0] sm:$0xff]
      %v6861 = vld [vmem:[%s6765 + $0x2f8] sm:$0xff]
      %v6862 = vld [vmem:[%s6765 + $0x300] sm:$0xff]
      %v6863 = vld [vmem:[%s6765 + $0x308] sm:$0xff]
      %v6864 = vld [vmem:[%s6765 + $0x310] sm:$0xff]
      %v6865 = vld [vmem:[%s6765 + $0x318] sm:$0xff]
      %v6866 = vld [vmem:[%s6765 + $0x320] sm:$0xff]
      %v6867 = vld [vmem:[%s6765 + $0x328] sm:$0xff]
      %v6868 = vld [vmem:[%s6765 + $0x330] sm:$0xff]
      %v6869 = vld [vmem:[%s6765 + $0x338] sm:$0xff]
      %v6870 = vld [vmem:[%s6765 + $0x340] sm:$0xff]
      %v6871 = vld [vmem:[%s6765 + $0x348] sm:$0xff]
      %v6872 = vld [vmem:[%s6765 + $0x350] sm:$0xff]
      %v6873 = vld [vmem:[%s6765 + $0x358] sm:$0xff]
      %v6874 = vld [vmem:[%s6765 + $0x360] sm:$0xff]
      %v6875 = vld [vmem:[%s6765 + $0x368] sm:$0xff]
      %v6876 = vld [vmem:[%s6765 + $0x370] sm:$0xff]
      %v6877 = vld [vmem:[%s6765 + $0x378] sm:$0xff]
      %v6878 = vld [vmem:[%s6765 + $0x380] sm:$0xff]
      %v6879 = vld [vmem:[%s6765 + $0x388] sm:$0xff]
      %v6880 = vld [vmem:[%s6765 + $0x390] sm:$0xff]
      %v6881 = vld [vmem:[%s6765 + $0x398] sm:$0xff]
      %v6882 = vld [vmem:[%s6765 + $0x3a0] sm:$0xff]
      %v6883 = vld [vmem:[%s6765 + $0x3a8] sm:$0xff]
      %v6884 = vld [vmem:[%s6765 + $0x3b0] sm:$0xff]
      %v6885 = vld [vmem:[%s6765 + $0x3b8] sm:$0xff]
      %v6886 = vld [vmem:[%s6765 + $0x3c0] sm:$0xff]
      %v6887 = vld [vmem:[%s6765 + $0x3c8] sm:$0xff]
      %v6888 = vld [vmem:[%s6765 + $0x3d0] sm:$0xff]
      %v6889 = vld [vmem:[%s6765 + $0x3d8] sm:$0xff]
      %v6890 = vld [vmem:[%s6765 + $0x3e0] sm:$0xff]
      %v6891 = vld [vmem:[%s6765 + $0x3e8] sm:$0xff]
      %v6892 = vld [vmem:[%s6765 + $0x3f0] sm:$0xff]
      %v6893 = vld [vmem:[%s6765 + $0x3f8] sm:$0xff]
      %v7022 = vunpack.c.l.b16 %v6766
      %v7023 = vunpack.c.h.b16 %v6766
      %v7024 = vunpack.c.l.b16 %v6767
      %v7025 = vunpack.c.h.b16 %v6767
      %v7026 = vunpack.c.l.b16 %v6768
      %v7027 = vunpack.c.h.b16 %v6768
      %v7028 = vunpack.c.l.b16 %v6769
      %v7029 = vunpack.c.h.b16 %v6769
      %v7030 = vunpack.c.l.b16 %v6770
      %v7031 = vunpack.c.h.b16 %v6770
      %v7032 = vunpack.c.l.b16 %v6771
      %v7033 = vunpack.c.h.b16 %v6771
      %v7034 = vunpack.c.l.b16 %v6772
      %v7035 = vunpack.c.h.b16 %v6772
      %v7036 = vunpack.c.l.b16 %v6773
      %v7037 = vunpack.c.h.b16 %v6773
      %v7038 = vunpack.c.l.b16 %v6774
      %v7039 = vunpack.c.h.b16 %v6774
      %v7040 = vunpack.c.l.b16 %v6775
      %v7041 = vunpack.c.h.b16 %v6775
      %v7042 = vunpack.c.l.b16 %v6776
      %v7043 = vunpack.c.h.b16 %v6776
      %v7044 = vunpack.c.l.b16 %v6777
      %v7045 = vunpack.c.h.b16 %v6777
      %v7046 = vunpack.c.l.b16 %v6778
      %v7047 = vunpack.c.h.b16 %v6778
      %v7048 = vunpack.c.l.b16 %v6779
      %v7049 = vunpack.c.h.b16 %v6779
      %v7050 = vunpack.c.l.b16 %v6780
      %v7051 = vunpack.c.h.b16 %v6780
      %v7052 = vunpack.c.l.b16 %v6781
      %v7053 = vunpack.c.h.b16 %v6781
      %v7054 = vunpack.c.l.b16 %v6782
      %v7055 = vunpack.c.h.b16 %v6782
      %v7056 = vunpack.c.l.b16 %v6783
      %v7057 = vunpack.c.h.b16 %v6783
      %v7058 = vunpack.c.l.b16 %v6784
      %v7059 = vunpack.c.h.b16 %v6784
      %v7060 = vunpack.c.l.b16 %v6785
      %v7061 = vunpack.c.h.b16 %v6785
      %v7062 = vunpack.c.l.b16 %v6786
      %v7063 = vunpack.c.h.b16 %v6786
      %v7064 = vunpack.c.l.b16 %v6787
      %v7065 = vunpack.c.h.b16 %v6787
      %v7066 = vunpack.c.l.b16 %v6788
      %v7067 = vunpack.c.h.b16 %v6788
      %v7068 = vunpack.c.l.b16 %v6789
      %v7069 = vunpack.c.h.b16 %v6789
      %v7070 = vunpack.c.l.b16 %v6790
      %v7071 = vunpack.c.h.b16 %v6790
      %v7072 = vunpack.c.l.b16 %v6791
      %v7073 = vunpack.c.h.b16 %v6791
      %v7074 = vunpack.c.l.b16 %v6792
      %v7075 = vunpack.c.h.b16 %v6792
      %v7076 = vunpack.c.l.b16 %v6793
      %v7077 = vunpack.c.h.b16 %v6793
      %v7078 = vunpack.c.l.b16 %v6794
      %v7079 = vunpack.c.h.b16 %v6794
      %v7080 = vunpack.c.l.b16 %v6795
      %v7081 = vunpack.c.h.b16 %v6795
      %v7082 = vunpack.c.l.b16 %v6796
      %v7083 = vunpack.c.h.b16 %v6796
      %v7084 = vunpack.c.l.b16 %v6797
      %v7085 = vunpack.c.h.b16 %v6797
      %v7086 = vunpack.c.l.b16 %v6798
      %v7087 = vunpack.c.h.b16 %v6798
      %v7088 = vunpack.c.l.b16 %v6799
      %v7089 = vunpack.c.h.b16 %v6799
      %v7090 = vunpack.c.l.b16 %v6800
      %v7091 = vunpack.c.h.b16 %v6800
      %v7092 = vunpack.c.l.b16 %v6801
      %v7093 = vunpack.c.h.b16 %v6801
      %v7094 = vunpack.c.l.b16 %v6802
      %v7095 = vunpack.c.h.b16 %v6802
      %v7096 = vunpack.c.l.b16 %v6803
      %v7097 = vunpack.c.h.b16 %v6803
      %v7098 = vunpack.c.l.b16 %v6804
      %v7099 = vunpack.c.h.b16 %v6804
      %v7100 = vunpack.c.l.b16 %v6805
      %v7101 = vunpack.c.h.b16 %v6805
      %v7102 = vunpack.c.l.b16 %v6806
      %v7103 = vunpack.c.h.b16 %v6806
      %v7104 = vunpack.c.l.b16 %v6807
      %v7105 = vunpack.c.h.b16 %v6807
      %v7106 = vunpack.c.l.b16 %v6808
      %v7107 = vunpack.c.h.b16 %v6808
      %v7108 = vunpack.c.l.b16 %v6809
      %v7109 = vunpack.c.h.b16 %v6809
      %v7110 = vunpack.c.l.b16 %v6810
      %v7111 = vunpack.c.h.b16 %v6810
      %v7112 = vunpack.c.l.b16 %v6811
      %v7113 = vunpack.c.h.b16 %v6811
      %v7114 = vunpack.c.l.b16 %v6812
      %v7115 = vunpack.c.h.b16 %v6812
      %v7116 = vunpack.c.l.b16 %v6813
      %v7117 = vunpack.c.h.b16 %v6813
      %v7118 = vunpack.c.l.b16 %v6814
      %v7119 = vunpack.c.h.b16 %v6814
      %v7120 = vunpack.c.l.b16 %v6815
      %v7121 = vunpack.c.h.b16 %v6815
      %v7122 = vunpack.c.l.b16 %v6816
      %v7123 = vunpack.c.h.b16 %v6816
      %v7124 = vunpack.c.l.b16 %v6817
      %v7125 = vunpack.c.h.b16 %v6817
      %v7126 = vunpack.c.l.b16 %v6818
      %v7127 = vunpack.c.h.b16 %v6818
      %v7128 = vunpack.c.l.b16 %v6819
      %v7129 = vunpack.c.h.b16 %v6819
      %v7130 = vunpack.c.l.b16 %v6820
      %v7131 = vunpack.c.h.b16 %v6820
      %v7132 = vunpack.c.l.b16 %v6821
      %v7133 = vunpack.c.h.b16 %v6821
      %v7134 = vunpack.c.l.b16 %v6822
      %v7135 = vunpack.c.h.b16 %v6822
      %v7136 = vunpack.c.l.b16 %v6823
      %v7137 = vunpack.c.h.b16 %v6823
      %v7138 = vunpack.c.l.b16 %v6824
      %v7139 = vunpack.c.h.b16 %v6824
      %v7140 = vunpack.c.l.b16 %v6825
      %v7141 = vunpack.c.h.b16 %v6825
      %v7142 = vunpack.c.l.b16 %v6826
      %v7143 = vunpack.c.h.b16 %v6826
      %v7144 = vunpack.c.l.b16 %v6827
      %v7145 = vunpack.c.h.b16 %v6827
      %v7146 = vunpack.c.l.b16 %v6828
      %v7147 = vunpack.c.h.b16 %v6828
      %v7148 = vunpack.c.l.b16 %v6829
      %v7149 = vunpack.c.h.b16 %v6829
      %v7150 = vunpack.c.l.b16 %v6830
      %v7151 = vunpack.c.h.b16 %v6830
      %v7152 = vunpack.c.l.b16 %v6831
      %v7153 = vunpack.c.h.b16 %v6831
      %v7154 = vunpack.c.l.b16 %v6832
      %v7155 = vunpack.c.h.b16 %v6832
      %v7156 = vunpack.c.l.b16 %v6833
      %v7157 = vunpack.c.h.b16 %v6833
      %v7158 = vunpack.c.l.b16 %v6834
      %v7159 = vunpack.c.h.b16 %v6834
      %v7160 = vunpack.c.l.b16 %v6835
      %v7161 = vunpack.c.h.b16 %v6835
      %v7162 = vunpack.c.l.b16 %v6836
      %v7163 = vunpack.c.h.b16 %v6836
      %v7164 = vunpack.c.l.b16 %v6837
      %v7165 = vunpack.c.h.b16 %v6837
      %v7166 = vunpack.c.l.b16 %v6838
      %v7167 = vunpack.c.h.b16 %v6838
      %v7168 = vunpack.c.l.b16 %v6839
      %v7169 = vunpack.c.h.b16 %v6839
      %v7170 = vunpack.c.l.b16 %v6840
      %v7171 = vunpack.c.h.b16 %v6840
      %v7172 = vunpack.c.l.b16 %v6841
      %v7173 = vunpack.c.h.b16 %v6841
      %v7174 = vunpack.c.l.b16 %v6842
      %v7175 = vunpack.c.h.b16 %v6842
      %v7176 = vunpack.c.l.b16 %v6843
      %v7177 = vunpack.c.h.b16 %v6843
      %v7178 = vunpack.c.l.b16 %v6844
      %v7179 = vunpack.c.h.b16 %v6844
      %v7180 = vunpack.c.l.b16 %v6845
      %v7181 = vunpack.c.h.b16 %v6845
      %v7182 = vunpack.c.l.b16 %v6846
      %v7183 = vunpack.c.h.b16 %v6846
      %v7184 = vunpack.c.l.b16 %v6847
      %v7185 = vunpack.c.h.b16 %v6847
      %v7186 = vunpack.c.l.b16 %v6848
      %v7187 = vunpack.c.h.b16 %v6848
      %v7188 = vunpack.c.l.b16 %v6849
      %v7189 = vunpack.c.h.b16 %v6849
      %v7190 = vunpack.c.l.b16 %v6850
      %v7191 = vunpack.c.h.b16 %v6850
      %v7192 = vunpack.c.l.b16 %v6851
      %v7193 = vunpack.c.h.b16 %v6851
      %v7194 = vunpack.c.l.b16 %v6852
      %v7195 = vunpack.c.h.b16 %v6852
      %v7196 = vunpack.c.l.b16 %v6853
      %v7197 = vunpack.c.h.b16 %v6853
      %v7198 = vunpack.c.l.b16 %v6854
      %v7199 = vunpack.c.h.b16 %v6854
      %v7200 = vunpack.c.l.b16 %v6855
      %v7201 = vunpack.c.h.b16 %v6855
      %v7202 = vunpack.c.l.b16 %v6856
      %v7203 = vunpack.c.h.b16 %v6856
      %v7204 = vunpack.c.l.b16 %v6857
      %v7205 = vunpack.c.h.b16 %v6857
      %v7206 = vunpack.c.l.b16 %v6858
      %v7207 = vunpack.c.h.b16 %v6858
      %v7208 = vunpack.c.l.b16 %v6859
      %v7209 = vunpack.c.h.b16 %v6859
      %v7210 = vunpack.c.l.b16 %v6860
      %v7211 = vunpack.c.h.b16 %v6860
      %v7212 = vunpack.c.l.b16 %v6861
      %v7213 = vunpack.c.h.b16 %v6861
      %v7214 = vunpack.c.l.b16 %v6862
      %v7215 = vunpack.c.h.b16 %v6862
      %v7216 = vunpack.c.l.b16 %v6863
      %v7217 = vunpack.c.h.b16 %v6863
      %v7218 = vunpack.c.l.b16 %v6864
      %v7219 = vunpack.c.h.b16 %v6864
      %v7220 = vunpack.c.l.b16 %v6865
      %v7221 = vunpack.c.h.b16 %v6865
      %v7222 = vunpack.c.l.b16 %v6866
      %v7223 = vunpack.c.h.b16 %v6866
      %v7224 = vunpack.c.l.b16 %v6867
      %v7225 = vunpack.c.h.b16 %v6867
      %v7226 = vunpack.c.l.b16 %v6868
      %v7227 = vunpack.c.h.b16 %v6868
      %v7228 = vunpack.c.l.b16 %v6869
      %v7229 = vunpack.c.h.b16 %v6869
      %v7230 = vunpack.c.l.b16 %v6870
      %v7231 = vunpack.c.h.b16 %v6870
      %v7232 = vunpack.c.l.b16 %v6871
      %v7233 = vunpack.c.h.b16 %v6871
      %v7234 = vunpack.c.l.b16 %v6872
      %v7235 = vunpack.c.h.b16 %v6872
      %v7236 = vunpack.c.l.b16 %v6873
      %v7237 = vunpack.c.h.b16 %v6873
      %v7238 = vunpack.c.l.b16 %v6874
      %v7239 = vunpack.c.h.b16 %v6874
      %v7240 = vunpack.c.l.b16 %v6875
      %v7241 = vunpack.c.h.b16 %v6875
      %v7242 = vunpack.c.l.b16 %v6876
      %v7243 = vunpack.c.h.b16 %v6876
      %v7244 = vunpack.c.l.b16 %v6877
      %v7245 = vunpack.c.h.b16 %v6877
      %v7246 = vunpack.c.l.b16 %v6878
      %v7247 = vunpack.c.h.b16 %v6878
      %v7248 = vunpack.c.l.b16 %v6879
      %v7249 = vunpack.c.h.b16 %v6879
      %v7250 = vunpack.c.l.b16 %v6880
      %v7251 = vunpack.c.h.b16 %v6880
      %v7252 = vunpack.c.l.b16 %v6881
      %v7253 = vunpack.c.h.b16 %v6881
      %v7254 = vunpack.c.l.b16 %v6882
      %v7255 = vunpack.c.h.b16 %v6882
      %v7256 = vunpack.c.l.b16 %v6883
      %v7257 = vunpack.c.h.b16 %v6883
      %v7258 = vunpack.c.l.b16 %v6884
      %v7259 = vunpack.c.h.b16 %v6884
      %v7260 = vunpack.c.l.b16 %v6885
      %v7261 = vunpack.c.h.b16 %v6885
      %v7262 = vunpack.c.l.b16 %v6886
      %v7263 = vunpack.c.h.b16 %v6886
      %v7264 = vunpack.c.l.b16 %v6887
      %v7265 = vunpack.c.h.b16 %v6887
      %v7266 = vunpack.c.l.b16 %v6888
      %v7267 = vunpack.c.h.b16 %v6888
      %v7268 = vunpack.c.l.b16 %v6889
      %v7269 = vunpack.c.h.b16 %v6889
      %v7270 = vunpack.c.l.b16 %v6890
      %v7271 = vunpack.c.h.b16 %v6890
      %v7272 = vunpack.c.l.b16 %v6891
      %v7273 = vunpack.c.h.b16 %v6891
      %v7274 = vunpack.c.l.b16 %v6892
      %v7275 = vunpack.c.h.b16 %v6892
      %v7276 = vunpack.c.l.b16 %v6893
      %v7277 = vunpack.c.h.b16 %v6893
      %v7278 = vpack.c.b16 %v7026, %v7022
      %v7279 = vpack.c.b16 %v7027, %v7023
      %v7280 = vpack.c.b16 %v7028, %v7024
      %v7281 = vpack.c.b16 %v7029, %v7025
      %v7282 = vpack.c.b16 %v7034, %v7030
      %v7283 = vpack.c.b16 %v7035, %v7031
      %v7284 = vpack.c.b16 %v7036, %v7032
      %v7285 = vpack.c.b16 %v7037, %v7033
      %v7286 = vpack.c.b16 %v7042, %v7038
      %v7287 = vpack.c.b16 %v7043, %v7039
      %v7288 = vpack.c.b16 %v7044, %v7040
      %v7289 = vpack.c.b16 %v7045, %v7041
      %v7290 = vpack.c.b16 %v7050, %v7046
      %v7291 = vpack.c.b16 %v7051, %v7047
      %v7292 = vpack.c.b16 %v7052, %v7048
      %v7293 = vpack.c.b16 %v7053, %v7049
      %v7294 = vpack.c.b16 %v7058, %v7054
      %v7295 = vpack.c.b16 %v7059, %v7055
      %v7296 = vpack.c.b16 %v7060, %v7056
      %v7297 = vpack.c.b16 %v7061, %v7057
      %v7298 = vpack.c.b16 %v7066, %v7062
      %v7299 = vpack.c.b16 %v7067, %v7063
      %v7300 = vpack.c.b16 %v7068, %v7064
      %v7301 = vpack.c.b16 %v7069, %v7065
      %v7302 = vpack.c.b16 %v7074, %v7070
      %v7303 = vpack.c.b16 %v7075, %v7071
      %v7304 = vpack.c.b16 %v7076, %v7072
      %v7305 = vpack.c.b16 %v7077, %v7073
      %v7306 = vpack.c.b16 %v7082, %v7078
      %v7307 = vpack.c.b16 %v7083, %v7079
      %v7308 = vpack.c.b16 %v7084, %v7080
      %v7309 = vpack.c.b16 %v7085, %v7081
      %v7310 = vpack.c.b16 %v7090, %v7086
      %v7311 = vpack.c.b16 %v7091, %v7087
      %v7312 = vpack.c.b16 %v7092, %v7088
      %v7313 = vpack.c.b16 %v7093, %v7089
      %v7314 = vpack.c.b16 %v7098, %v7094
      %v7315 = vpack.c.b16 %v7099, %v7095
      %v7316 = vpack.c.b16 %v7100, %v7096
      %v7317 = vpack.c.b16 %v7101, %v7097
      %v7318 = vpack.c.b16 %v7106, %v7102
      %v7319 = vpack.c.b16 %v7107, %v7103
      %v7320 = vpack.c.b16 %v7108, %v7104
      %v7321 = vpack.c.b16 %v7109, %v7105
      %v7322 = vpack.c.b16 %v7114, %v7110
      %v7323 = vpack.c.b16 %v7115, %v7111
      %v7324 = vpack.c.b16 %v7116, %v7112
      %v7325 = vpack.c.b16 %v7117, %v7113
      %v7326 = vpack.c.b16 %v7122, %v7118
      %v7327 = vpack.c.b16 %v7123, %v7119
      %v7328 = vpack.c.b16 %v7124, %v7120
      %v7329 = vpack.c.b16 %v7125, %v7121
      %v7330 = vpack.c.b16 %v7130, %v7126
      %v7331 = vpack.c.b16 %v7131, %v7127
      %v7332 = vpack.c.b16 %v7132, %v7128
      %v7333 = vpack.c.b16 %v7133, %v7129
      %v7334 = vpack.c.b16 %v7138, %v7134
      %v7335 = vpack.c.b16 %v7139, %v7135
      %v7336 = vpack.c.b16 %v7140, %v7136
      %v7337 = vpack.c.b16 %v7141, %v7137
      %v7338 = vpack.c.b16 %v7146, %v7142
      %v7339 = vpack.c.b16 %v7147, %v7143
      %v7340 = vpack.c.b16 %v7148, %v7144
      %v7341 = vpack.c.b16 %v7149, %v7145
      %v7342 = vpack.c.b16 %v7154, %v7150
      %v7343 = vpack.c.b16 %v7155, %v7151
      %v7344 = vpack.c.b16 %v7156, %v7152
      %v7345 = vpack.c.b16 %v7157, %v7153
      %v7346 = vpack.c.b16 %v7162, %v7158
      %v7347 = vpack.c.b16 %v7163, %v7159
      %v7348 = vpack.c.b16 %v7164, %v7160
      %v7349 = vpack.c.b16 %v7165, %v7161
      %v7350 = vpack.c.b16 %v7170, %v7166
      %v7351 = vpack.c.b16 %v7171, %v7167
      %v7352 = vpack.c.b16 %v7172, %v7168
      %v7353 = vpack.c.b16 %v7173, %v7169
      %v7354 = vpack.c.b16 %v7178, %v7174
      %v7355 = vpack.c.b16 %v7179, %v7175
      %v7356 = vpack.c.b16 %v7180, %v7176
      %v7357 = vpack.c.b16 %v7181, %v7177
      %v7358 = vpack.c.b16 %v7186, %v7182
      %v7359 = vpack.c.b16 %v7187, %v7183
      %v7360 = vpack.c.b16 %v7188, %v7184
      %v7361 = vpack.c.b16 %v7189, %v7185
      %v7362 = vpack.c.b16 %v7194, %v7190
      %v7363 = vpack.c.b16 %v7195, %v7191
      %v7364 = vpack.c.b16 %v7196, %v7192
      %v7365 = vpack.c.b16 %v7197, %v7193
      %v7366 = vpack.c.b16 %v7202, %v7198
      %v7367 = vpack.c.b16 %v7203, %v7199
      %v7368 = vpack.c.b16 %v7204, %v7200
      %v7369 = vpack.c.b16 %v7205, %v7201
      %v7370 = vpack.c.b16 %v7210, %v7206
      %v7371 = vpack.c.b16 %v7211, %v7207
      %v7372 = vpack.c.b16 %v7212, %v7208
      %v7373 = vpack.c.b16 %v7213, %v7209
      %v7374 = vpack.c.b16 %v7218, %v7214
      %v7375 = vpack.c.b16 %v7219, %v7215
      %v7376 = vpack.c.b16 %v7220, %v7216
      %v7377 = vpack.c.b16 %v7221, %v7217
      %v7378 = vpack.c.b16 %v7226, %v7222
      %v7379 = vpack.c.b16 %v7227, %v7223
      %v7380 = vpack.c.b16 %v7228, %v7224
      %v7381 = vpack.c.b16 %v7229, %v7225
      %v7382 = vpack.c.b16 %v7234, %v7230
      %v7383 = vpack.c.b16 %v7235, %v7231
      %v7384 = vpack.c.b16 %v7236, %v7232
      %v7385 = vpack.c.b16 %v7237, %v7233
      %v7386 = vpack.c.b16 %v7242, %v7238
      %v7387 = vpack.c.b16 %v7243, %v7239
      %v7388 = vpack.c.b16 %v7244, %v7240
      %v7389 = vpack.c.b16 %v7245, %v7241
      %v7390 = vpack.c.b16 %v7250, %v7246
      %v7391 = vpack.c.b16 %v7251, %v7247
      %v7392 = vpack.c.b16 %v7252, %v7248
      %v7393 = vpack.c.b16 %v7253, %v7249
      %v7394 = vpack.c.b16 %v7258, %v7254
      %v7395 = vpack.c.b16 %v7259, %v7255
      %v7396 = vpack.c.b16 %v7260, %v7256
      %v7397 = vpack.c.b16 %v7261, %v7257
      %v7398 = vpack.c.b16 %v7266, %v7262
      %v7399 = vpack.c.b16 %v7267, %v7263
      %v7400 = vpack.c.b16 %v7268, %v7264
      %v7401 = vpack.c.b16 %v7269, %v7265
      %v7402 = vpack.c.b16 %v7274, %v7270
      %v7403 = vpack.c.b16 %v7275, %v7271
      %v7404 = vpack.c.b16 %v7276, %v7272
      %v7405 = vpack.c.b16 %v7277, %v7273
      %7534 = vmatprep.subr.bf16.mxu0 %v7279
      %7535 = vmatpush1.bf16.msra.mxu0 %v7278
      %7536 = vmatprep.subr.bf16.mxu0 %v7283
      %7537 = vmatpush1.bf16.msra.mxu0 %v7282
      %7538 = vmatprep.subr.bf16.mxu0 %v7287
      %7539 = vmatpush1.bf16.msra.mxu0 %v7286
      %7540 = vmatprep.subr.bf16.mxu0 %v7291
      %7541 = vmatpush1.bf16.msra.mxu0 %v7290
      %7542 = vmatprep.subr.bf16.mxu0 %v7295
      %7543 = vmatpush1.bf16.msra.mxu0 %v7294
      %7544 = vmatprep.subr.bf16.mxu0 %v7299
      %7545 = vmatpush1.bf16.msra.mxu0 %v7298
      %7546 = vmatprep.subr.bf16.mxu0 %v7303
      %7547 = vmatpush1.bf16.msra.mxu0 %v7302
      %7548 = vmatprep.subr.bf16.mxu0 %v7307
      %7549 = vmatpush1.bf16.msra.mxu0 %v7306
      %7550 = vmatprep.subr.bf16.mxu0 %v7311
      %7551 = vmatpush1.bf16.msra.mxu0 %v7310
      %7552 = vmatprep.subr.bf16.mxu0 %v7315
      %7553 = vmatpush1.bf16.msra.mxu0 %v7314
      %7554 = vmatprep.subr.bf16.mxu0 %v7319
      %7555 = vmatpush1.bf16.msra.mxu0 %v7318
      %7556 = vmatprep.subr.bf16.mxu0 %v7323
      %7557 = vmatpush1.bf16.msra.mxu0 %v7322
      %7558 = vmatprep.subr.bf16.mxu0 %v7327
      %7559 = vmatpush1.bf16.msra.mxu0 %v7326
      %7560 = vmatprep.subr.bf16.mxu0 %v7331
      %7561 = vmatpush1.bf16.msra.mxu0 %v7330
      %7562 = vmatprep.subr.bf16.mxu0 %v7335
      %7563 = vmatpush1.bf16.msra.mxu0 %v7334
      %7564 = vmatprep.subr.bf16.mxu0 %v7339
      %7565 = vmatpush1.bf16.msra.mxu0 %v7338
      %7566 = vmatprep.mubr.bf16.mxu0 %v6734
      %7567 = vmatmul.mubr.bf16.gmra.mrb[0].mxu0 %v6733
      %v7568 = vpop.f32.mrb[0].mxu0
      %v7569 = vadd.f32 0.0, %v7568
      %v7570 = vpop.f32.mrb[0].mxu0
      %v7571 = vadd.f32 0.0, %v7570
      %v7572 = vpop.f32.mrb[0].mxu0
      %v7573 = vadd.f32 0.0, %v7572
      %v7574 = vpop.f32.mrb[0].mxu0
      %v7575 = vadd.f32 0.0, %v7574
      %7576 = vmatprep.mubr.bf16.mxu0 %v6738
      %7577 = vmatmul.mubr.bf16.gmra.mrb[0].mxu0 %v6737
      %v7578 = vpop.f32.mrb[0].mxu0
      %v7579 = vadd.f32 0.0, %v7578
      %v7580 = vpop.f32.mrb[0].mxu0
      %v7581 = vadd.f32 0.0, %v7580
      %v7582 = vpop.f32.mrb[0].mxu0
      %v7583 = vadd.f32 0.0, %v7582
      %v7584 = vpop.f32.mrb[0].mxu0
      %v7585 = vadd.f32 0.0, %v7584
      %7586 = vmatprep.mubr.bf16.mxu0 %v6742
      %7587 = vmatmul.mubr.bf16.gmra.mrb[0].mxu0 %v6741
      %v7588 = vpop.f32.mrb[0].mxu0
      %v7589 = vadd.f32 0.0, %v7588
      %v7590 = vpop.f32.mrb[0].mxu0
      %v7591 = vadd.f32 0.0, %v7590
      %v7592 = vpop.f32.mrb[0].mxu0
      %v7593 = vadd.f32 0.0, %v7592
      %v7594 = vpop.f32.mrb[0].mxu0
      %v7595 = vadd.f32 0.0, %v7594
      %7596 = vmatprep.mubr.bf16.mxu0 %v6746
      %7597 = vmatmul.mubr.bf16.gmra.mrb[0].mxu0 %v6745
      %v7598 = vpop.f32.mrb[0].mxu0
      %v7599 = vadd.f32 0.0, %v7598
      %v7600 = vpop.f32.mrb[0].mxu0
      %v7601 = vadd.f32 0.0, %v7600
      %v7602 = vpop.f32.mrb[0].mxu0
      %v7603 = vadd.f32 0.0, %v7602
      %v7604 = vpop.f32.mrb[0].mxu0
      %v7605 = vadd.f32 0.0, %v7604
      %7606 = vmatprep.mubr.bf16.mxu0 %v6750
      %7607 = vmatmul.mubr.bf16.gmra.mrb[0].mxu0 %v6749
      %v7608 = vpop.f32.mrb[0].mxu0
      %v7609 = vadd.f32 0.0, %v7608
      %v7610 = vpop.f32.mrb[0].mxu0
      %v7611 = vadd.f32 0.0, %v7610
      %v7612 = vpop.f32.mrb[0].mxu0
      %v7613 = vadd.f32 0.0, %v7612
      %v7614 = vpop.f32.mrb[0].mxu0
      %v7615 = vadd.f32 0.0, %v7614
      %7616 = vmatprep.mubr.bf16.mxu0 %v6754
      %7617 = vmatmul.mubr.bf16.gmra.mrb[0].mxu0 %v6753
      %v7618 = vpop.f32.mrb[0].mxu0
      %v7619 = vadd.f32 0.0, %v7618
      %v7620 = vpop.f32.mrb[0].mxu0
      %v7621 = vadd.f32 0.0, %v7620
      %v7622 = vpop.f32.mrb[0].mxu0
      %v7623 = vadd.f32 0.0, %v7622
      %v7624 = vpop.f32.mrb[0].mxu0
      %v7625 = vadd.f32 0.0, %v7624
      %7626 = vmatprep.mubr.bf16.mxu0 %v6758
      %7627 = vmatmul.mubr.bf16.gmra.mrb[0].mxu0 %v6757
      %v7628 = vpop.f32.mrb[0].mxu0
      %v7629 = vadd.f32 0.0, %v7628
      %v7630 = vpop.f32.mrb[0].mxu0
      %v7631 = vadd.f32 0.0, %v7630
      %v7632 = vpop.f32.mrb[0].mxu0
      %v7633 = vadd.f32 0.0, %v7632
      %v7634 = vpop.f32.mrb[0].mxu0
      %v7635 = vadd.f32 0.0, %v7634
      %7636 = vmatprep.mubr.bf16.mxu0 %v6762
      %7637 = vmatmul.mubr.bf16.gmra.mrb[0].mxu0 %v6761
      %v7638 = vpop.f32.mrb[0].mxu0
      %v7639 = vadd.f32 0.0, %v7638
      %v7640 = vpop.f32.mrb[0].mxu0
      %v7641 = vadd.f32 0.0, %v7640
      %v7642 = vpop.f32.mrb[0].mxu0
      %v7643 = vadd.f32 0.0, %v7642
      %v7644 = vpop.f32.mrb[0].mxu0
      %v7645 = vadd.f32 0.0, %v7644
      %7646 = vdwg.mxu0
      %7647 = vmatprep.subr.bf16.mxu0 %v7343
      %7648 = vmatpush1.bf16.msra.mxu0 %v7342
      %7649 = vmatprep.subr.bf16.mxu0 %v7347
      %7650 = vmatpush1.bf16.msra.mxu0 %v7346
      %7651 = vmatprep.subr.bf16.mxu0 %v7351
      %7652 = vmatpush1.bf16.msra.mxu0 %v7350
      %7653 = vmatprep.subr.bf16.mxu0 %v7355
      %7654 = vmatpush1.bf16.msra.mxu0 %v7354
      %7655 = vmatprep.subr.bf16.mxu0 %v7359
      %7656 = vmatpush1.bf16.msra.mxu0 %v7358
      %7657 = vmatprep.subr.bf16.mxu0 %v7363
      %7658 = vmatpush1.bf16.msra.mxu0 %v7362
      %7659 = vmatprep.subr.bf16.mxu0 %v7367
      %7660 = vmatpush1.bf16.msra.mxu0 %v7366
      %7661 = vmatprep.subr.bf16.mxu0 %v7371
      %7662 = vmatpush1.bf16.msra.mxu0 %v7370
      %7663 = vmatprep.subr.bf16.mxu0 %v7375
      %7664 = vmatpush1.bf16.msra.mxu0 %v7374
      %7665 = vmatprep.subr.bf16.mxu0 %v7379
      %7666 = vmatpush1.bf16.msra.mxu0 %v7378
      %7667 = vmatprep.subr.bf16.mxu0 %v7383
      %7668 = vmatpush1.bf16.msra.mxu0 %v7382
      %7669 = vmatprep.subr.bf16.mxu0 %v7387
      %7670 = vmatpush1.bf16.msra.mxu0 %v7386
      %7671 = vmatprep.subr.bf16.mxu0 %v7391
      %7672 = vmatpush1.bf16.msra.mxu0 %v7390
      %7673 = vmatprep.subr.bf16.mxu0 %v7395
      %7674 = vmatpush1.bf16.msra.mxu0 %v7394
      %7675 = vmatprep.subr.bf16.mxu0 %v7399
      %7676 = vmatpush1.bf16.msra.mxu0 %v7398
      %7677 = vmatprep.subr.bf16.mxu0 %v7403
      %7678 = vmatpush1.bf16.msra.mxu0 %v7402
      %7679 = vmatprep.mubr.bf16.mxu0 %v6736
      %7680 = vmatmul.mubr.bf16.gmra.mrb[0].mxu0 %v6735
      %v7681 = vpop.f32.mrb[0].mxu0
      %v7682 = vadd.f32 %v7569, %v7681
      %v7683 = vpop.f32.mrb[0].mxu0
      %v7684 = vadd.f32 %v7571, %v7683
      %v7685 = vpop.f32.mrb[0].mxu0
      %v7686 = vadd.f32 %v7573, %v7685
      %v7687 = vpop.f32.mrb[0].mxu0
      %v7688 = vadd.f32 %v7575, %v7687
      %7689 = vmatprep.mubr.bf16.mxu0 %v6740
      %7690 = vmatmul.mubr.bf16.gmra.mrb[0].mxu0 %v6739
      %v7691 = vpop.f32.mrb[0].mxu0
      %v7692 = vadd.f32 %v7579, %v7691
      %v7693 = vpop.f32.mrb[0].mxu0
      %v7694 = vadd.f32 %v7581, %v7693
      %v7695 = vpop.f32.mrb[0].mxu0
      %v7696 = vadd.f32 %v7583, %v7695
      %v7697 = vpop.f32.mrb[0].mxu0
      %v7698 = vadd.f32 %v7585, %v7697
      %7699 = vmatprep.mubr.bf16.mxu0 %v6744
      %7700 = vmatmul.mubr.bf16.gmra.mrb[0].mxu0 %v6743
      %v7701 = vpop.f32.mrb[0].mxu0
      %v7702 = vadd.f32 %v7589, %v7701
      %v7703 = vpop.f32.mrb[0].mxu0
      %v7704 = vadd.f32 %v7591, %v7703
      %v7705 = vpop.f32.mrb[0].mxu0
      %v7706 = vadd.f32 %v7593, %v7705
      %v7707 = vpop.f32.mrb[0].mxu0
      %v7708 = vadd.f32 %v7595, %v7707
      %7709 = vmatprep.mubr.bf16.mxu0 %v6748
      %7710 = vmatmul.mubr.bf16.gmra.mrb[0].mxu0 %v6747
      %v7711 = vpop.f32.mrb[0].mxu0
      %v7712 = vadd.f32 %v7599, %v7711
      %v7713 = vpop.f32.mrb[0].mxu0
      %v7714 = vadd.f32 %v7601, %v7713
      %v7715 = vpop.f32.mrb[0].mxu0
      %v7716 = vadd.f32 %v7603, %v7715
      %v7717 = vpop.f32.mrb[0].mxu0
      %v7718 = vadd.f32 %v7605, %v7717
      %7719 = vmatprep.mubr.bf16.mxu0 %v6752
      %7720 = vmatmul.mubr.bf16.gmra.mrb[0].mxu0 %v6751
      %v7721 = vpop.f32.mrb[0].mxu0
      %v7722 = vadd.f32 %v7609, %v7721
      %v7723 = vpop.f32.mrb[0].mxu0
      %v7724 = vadd.f32 %v7611, %v7723
      %v7725 = vpop.f32.mrb[0].mxu0
      %v7726 = vadd.f32 %v7613, %v7725
      %v7727 = vpop.f32.mrb[0].mxu0
      %v7728 = vadd.f32 %v7615, %v7727
      %7729 = vmatprep.mubr.bf16.mxu0 %v6756
      %7730 = vmatmul.mubr.bf16.gmra.mrb[0].mxu0 %v6755
      %v7731 = vpop.f32.mrb[0].mxu0
      %v7732 = vadd.f32 %v7619, %v7731
      %v7733 = vpop.f32.mrb[0].mxu0
      %v7734 = vadd.f32 %v7621, %v7733
      %v7735 = vpop.f32.mrb[0].mxu0
      %v7736 = vadd.f32 %v7623, %v7735
      %v7737 = vpop.f32.mrb[0].mxu0
      %v7738 = vadd.f32 %v7625, %v7737
      %7739 = vmatprep.mubr.bf16.mxu0 %v6760
      %7740 = vmatmul.mubr.bf16.gmra.mrb[0].mxu0 %v6759
      %v7741 = vpop.f32.mrb[0].mxu0
      %v7742 = vadd.f32 %v7629, %v7741
      %v7743 = vpop.f32.mrb[0].mxu0
      %v7744 = vadd.f32 %v7631, %v7743
      %v7745 = vpop.f32.mrb[0].mxu0
      %v7746 = vadd.f32 %v7633, %v7745
      %v7747 = vpop.f32.mrb[0].mxu0
      %v7748 = vadd.f32 %v7635, %v7747
      %7749 = vmatprep.mubr.bf16.mxu0 %v6764
      %7750 = vmatmul.mubr.bf16.gmra.mrb[0].mxu0 %v6763
      %v7751 = vpop.f32.mrb[0].mxu0
      %v7752 = vadd.f32 %v7639, %v7751
      %v7753 = vpop.f32.mrb[0].mxu0
      %v7754 = vadd.f32 %v7641, %v7753
      %v7755 = vpop.f32.mrb[0].mxu0
      %v7756 = vadd.f32 %v7643, %v7755
      %v7757 = vpop.f32.mrb[0].mxu0
      %v7758 = vadd.f32 %v7645, %v7757
      %7759 = vdwg.mxu0
      %7760 = vmatprep.subr.bf16.mxu0 %v7281
      %7761 = vmatpush1.bf16.msra.mxu0 %v7280
      %7762 = vmatprep.subr.bf16.mxu0 %v7285
      %7763 = vmatpush1.bf16.msra.mxu0 %v7284
      %7764 = vmatprep.subr.bf16.mxu0 %v7289
      %7765 = vmatpush1.bf16.msra.mxu0 %v7288
      %7766 = vmatprep.subr.bf16.mxu0 %v7293
      %7767 = vmatpush1.bf16.msra.mxu0 %v7292
      %7768 = vmatprep.subr.bf16.mxu0 %v7297
      %7769 = vmatpush1.bf16.msra.mxu0 %v7296
      %7770 = vmatprep.subr.bf16.mxu0 %v7301
      %7771 = vmatpush1.bf16.msra.mxu0 %v7300
      %7772 = vmatprep.subr.bf16.mxu0 %v7305
      %7773 = vmatpush1.bf16.msra.mxu0 %v7304
      %7774 = vmatprep.subr.bf16.mxu0 %v7309
      %7775 = vmatpush1.bf16.msra.mxu0 %v7308
      %7776 = vmatprep.subr.bf16.mxu0 %v7313
      %7777 = vmatpush1.bf16.msra.mxu0 %v7312
      %7778 = vmatprep.subr.bf16.mxu0 %v7317
      %7779 = vmatpush1.bf16.msra.mxu0 %v7316
      %7780 = vmatprep.subr.bf16.mxu0 %v7321
      %7781 = vmatpush1.bf16.msra.mxu0 %v7320
      %7782 = vmatprep.subr.bf16.mxu0 %v7325
      %7783 = vmatpush1.bf16.msra.mxu0 %v7324
      %7784 = vmatprep.subr.bf16.mxu0 %v7329
      %7785 = vmatpush1.bf16.msra.mxu0 %v7328
      %7786 = vmatprep.subr.bf16.mxu0 %v7333
      %7787 = vmatpush1.bf16.msra.mxu0 %v7332
      %7788 = vmatprep.subr.bf16.mxu0 %v7337
      %7789 = vmatpush1.bf16.msra.mxu0 %v7336
      %7790 = vmatprep.subr.bf16.mxu0 %v7341
      %7791 = vmatpush1.bf16.msra.mxu0 %v7340
      %7792 = vmatprep.mubr.bf16.mxu0 %v6734
      %7793 = vmatmul.mubr.bf16.gmra.mrb[0].mxu0 %v6733
      %v7794 = vpop.f32.mrb[0].mxu0
      %v7795 = vadd.f32 0.0, %v7794
      %v7796 = vpop.f32.mrb[0].mxu0
      %v7797 = vadd.f32 0.0, %v7796
      %v7798 = vpop.f32.mrb[0].mxu0
      %v7799 = vadd.f32 0.0, %v7798
      %v7800 = vpop.f32.mrb[0].mxu0
      %v7801 = vadd.f32 0.0, %v7800
      %7802 = vmatprep.mubr.bf16.mxu0 %v6738
      %7803 = vmatmul.mubr.bf16.gmra.mrb[0].mxu0 %v6737
      %v7804 = vpop.f32.mrb[0].mxu0
      %v7805 = vadd.f32 0.0, %v7804
      %v7806 = vpop.f32.mrb[0].mxu0
      %v7807 = vadd.f32 0.0, %v7806
      %v7808 = vpop.f32.mrb[0].mxu0
      %v7809 = vadd.f32 0.0, %v7808
      %v7810 = vpop.f32.mrb[0].mxu0
      %v7811 = vadd.f32 0.0, %v7810
      %7812 = vmatprep.mubr.bf16.mxu0 %v6742
      %7813 = vmatmul.mubr.bf16.gmra.mrb[0].mxu0 %v6741
      %v7814 = vpop.f32.mrb[0].mxu0
      %v7815 = vadd.f32 0.0, %v7814
      %v7816 = vpop.f32.mrb[0].mxu0
      %v7817 = vadd.f32 0.0, %v7816
      %v7818 = vpop.f32.mrb[0].mxu0
      %v7819 = vadd.f32 0.0, %v7818
      %v7820 = vpop.f32.mrb[0].mxu0
      %v7821 = vadd.f32 0.0, %v7820
      %7822 = vmatprep.mubr.bf16.mxu0 %v6746
      %7823 = vmatmul.mubr.bf16.gmra.mrb[0].mxu0 %v6745
      %v7824 = vpop.f32.mrb[0].mxu0
      %v7825 = vadd.f32 0.0, %v7824
      %v7826 = vpop.f32.mrb[0].mxu0
      %v7827 = vadd.f32 0.0, %v7826
      %v7828 = vpop.f32.mrb[0].mxu0
      %v7829 = vadd.f32 0.0, %v7828
      %v7830 = vpop.f32.mrb[0].mxu0
      %v7831 = vadd.f32 0.0, %v7830
      %7832 = vmatprep.mubr.bf16.mxu0 %v6750
      %7833 = vmatmul.mubr.bf16.gmra.mrb[0].mxu0 %v6749
      %v7834 = vpop.f32.mrb[0].mxu0
      %v7835 = vadd.f32 0.0, %v7834
      %v7836 = vpop.f32.mrb[0].mxu0
      %v7837 = vadd.f32 0.0, %v7836
      %v7838 = vpop.f32.mrb[0].mxu0
      %v7839 = vadd.f32 0.0, %v7838
      %v7840 = vpop.f32.mrb[0].mxu0
      %v7841 = vadd.f32 0.0, %v7840
      %7842 = vmatprep.mubr.bf16.mxu0 %v6754
      %7843 = vmatmul.mubr.bf16.gmra.mrb[0].mxu0 %v6753
      %v7844 = vpop.f32.mrb[0].mxu0
      %v7845 = vadd.f32 0.0, %v7844
      %v7846 = vpop.f32.mrb[0].mxu0
      %v7847 = vadd.f32 0.0, %v7846
      %v7848 = vpop.f32.mrb[0].mxu0
      %v7849 = vadd.f32 0.0, %v7848
      %v7850 = vpop.f32.mrb[0].mxu0
      %v7851 = vadd.f32 0.0, %v7850
      %7852 = vmatprep.mubr.bf16.mxu0 %v6758
      %7853 = vmatmul.mubr.bf16.gmra.mrb[0].mxu0 %v6757
      %v7854 = vpop.f32.mrb[0].mxu0
      %v7855 = vadd.f32 0.0, %v7854
      %v7856 = vpop.f32.mrb[0].mxu0
      %v7857 = vadd.f32 0.0, %v7856
      %v7858 = vpop.f32.mrb[0].mxu0
      %v7859 = vadd.f32 0.0, %v7858
      %v7860 = vpop.f32.mrb[0].mxu0
      %v7861 = vadd.f32 0.0, %v7860
      %7862 = vmatprep.mubr.bf16.mxu0 %v6762
      %7863 = vmatmul.mubr.bf16.gmra.mrb[0].mxu0 %v6761
      %v7864 = vpop.f32.mrb[0].mxu0
      %v7865 = vadd.f32 0.0, %v7864
      %v7866 = vpop.f32.mrb[0].mxu0
      %v7867 = vadd.f32 0.0, %v7866
      %v7868 = vpop.f32.mrb[0].mxu0
      %v7869 = vadd.f32 0.0, %v7868
      %v7870 = vpop.f32.mrb[0].mxu0
      %v7871 = vadd.f32 0.0, %v7870
      %7872 = vdwg.mxu0
      %7873 = vmatprep.subr.bf16.mxu0 %v7345
      %7874 = vmatpush1.bf16.msra.mxu0 %v7344
      %7875 = vmatprep.subr.bf16.mxu0 %v7349
      %7876 = vmatpush1.bf16.msra.mxu0 %v7348
      %7877 = vmatprep.subr.bf16.mxu0 %v7353
      %7878 = vmatpush1.bf16.msra.mxu0 %v7352
      %7879 = vmatprep.subr.bf16.mxu0 %v7357
      %7880 = vmatpush1.bf16.msra.mxu0 %v7356
      %7881 = vmatprep.subr.bf16.mxu0 %v7361
      %7882 = vmatpush1.bf16.msra.mxu0 %v7360
      %7883 = vmatprep.subr.bf16.mxu0 %v7365
      %7884 = vmatpush1.bf16.msra.mxu0 %v7364
      %7885 = vmatprep.subr.bf16.mxu0 %v7369
      %7886 = vmatpush1.bf16.msra.mxu0 %v7368
      %7887 = vmatprep.subr.bf16.mxu0 %v7373
      %7888 = vmatpush1.bf16.msra.mxu0 %v7372
      %7889 = vmatprep.subr.bf16.mxu0 %v7377
      %7890 = vmatpush1.bf16.msra.mxu0 %v7376
      %7891 = vmatprep.subr.bf16.mxu0 %v7381
      %7892 = vmatpush1.bf16.msra.mxu0 %v7380
      %7893 = vmatprep.subr.bf16.mxu0 %v7385
      %7894 = vmatpush1.bf16.msra.mxu0 %v7384
      %7895 = vmatprep.subr.bf16.mxu0 %v7389
      %7896 = vmatpush1.bf16.msra.mxu0 %v7388
      %7897 = vmatprep.subr.bf16.mxu0 %v7393
      %7898 = vmatpush1.bf16.msra.mxu0 %v7392
      %7899 = vmatprep.subr.bf16.mxu0 %v7397
      %7900 = vmatpush1.bf16.msra.mxu0 %v7396
      %7901 = vmatprep.subr.bf16.mxu0 %v7401
      %7902 = vmatpush1.bf16.msra.mxu0 %v7400
      %7903 = vmatprep.subr.bf16.mxu0 %v7405
      %7904 = vmatpush1.bf16.msra.mxu0 %v7404
      %7905 = vmatprep.mubr.bf16.mxu0 %v6736
      %7906 = vmatmul.mubr.bf16.gmra.mrb[0].mxu0 %v6735
      %v7907 = vpop.f32.mrb[0].mxu0
      %v7908 = vadd.f32 %v7795, %v7907
      %v7909 = vpop.f32.mrb[0].mxu0
      %v7910 = vadd.f32 %v7797, %v7909
      %v7911 = vpop.f32.mrb[0].mxu0
      %v7912 = vadd.f32 %v7799, %v7911
      %v7913 = vpop.f32.mrb[0].mxu0
      %v7914 = vadd.f32 %v7801, %v7913
      %7915 = vmatprep.mubr.bf16.mxu0 %v6740
      %7916 = vmatmul.mubr.bf16.gmra.mrb[0].mxu0 %v6739
      %v7917 = vpop.f32.mrb[0].mxu0
      %v7918 = vadd.f32 %v7805, %v7917
      %v7919 = vpop.f32.mrb[0].mxu0
      %v7920 = vadd.f32 %v7807, %v7919
      %v7921 = vpop.f32.mrb[0].mxu0
      %v7922 = vadd.f32 %v7809, %v7921
      %v7923 = vpop.f32.mrb[0].mxu0
      %v7924 = vadd.f32 %v7811, %v7923
      %7925 = vmatprep.mubr.bf16.mxu0 %v6744
      %7926 = vmatmul.mubr.bf16.gmra.mrb[0].mxu0 %v6743
      %v7927 = vpop.f32.mrb[0].mxu0
      %v7928 = vadd.f32 %v7815, %v7927
      %v7929 = vpop.f32.mrb[0].mxu0
      %v7930 = vadd.f32 %v7817, %v7929
      %v7931 = vpop.f32.mrb[0].mxu0
      %v7932 = vadd.f32 %v7819, %v7931
      %v7933 = vpop.f32.mrb[0].mxu0
      %v7934 = vadd.f32 %v7821, %v7933
      %7935 = vmatprep.mubr.bf16.mxu0 %v6748
      %7936 = vmatmul.mubr.bf16.gmra.mrb[0].mxu0 %v6747
      %v7937 = vpop.f32.mrb[0].mxu0
      %v7938 = vadd.f32 %v7825, %v7937
      %v7939 = vpop.f32.mrb[0].mxu0
      %v7940 = vadd.f32 %v7827, %v7939
      %v7941 = vpop.f32.mrb[0].mxu0
      %v7942 = vadd.f32 %v7829, %v7941
      %v7943 = vpop.f32.mrb[0].mxu0
      %v7944 = vadd.f32 %v7831, %v7943
      %7945 = vmatprep.mubr.bf16.mxu0 %v6752
      %7946 = vmatmul.mubr.bf16.gmra.mrb[0].mxu0 %v6751
      %v7947 = vpop.f32.mrb[0].mxu0
      %v7948 = vadd.f32 %v7835, %v7947
      %v7949 = vpop.f32.mrb[0].mxu0
      %v7950 = vadd.f32 %v7837, %v7949
      %v7951 = vpop.f32.mrb[0].mxu0
      %v7952 = vadd.f32 %v7839, %v7951
      %v7953 = vpop.f32.mrb[0].mxu0
      %v7954 = vadd.f32 %v7841, %v7953
      %7955 = vmatprep.mubr.bf16.mxu0 %v6756
      %7956 = vmatmul.mubr.bf16.gmra.mrb[0].mxu0 %v6755
      %v7957 = vpop.f32.mrb[0].mxu0
      %v7958 = vadd.f32 %v7845, %v7957
      %v7959 = vpop.f32.mrb[0].mxu0
      %v7960 = vadd.f32 %v7847, %v7959
      %v7961 = vpop.f32.mrb[0].mxu0
      %v7962 = vadd.f32 %v7849, %v7961
      %v7963 = vpop.f32.mrb[0].mxu0
      %v7964 = vadd.f32 %v7851, %v7963
      %7965 = vmatprep.mubr.bf16.mxu0 %v6760
      %7966 = vmatmul.mubr.bf16.gmra.mrb[0].mxu0 %v6759
      %v7967 = vpop.f32.mrb[0].mxu0
      %v7968 = vadd.f32 %v7855, %v7967
      %v7969 = vpop.f32.mrb[0].mxu0
      %v7970 = vadd.f32 %v7857, %v7969
      %v7971 = vpop.f32.mrb[0].mxu0
      %v7972 = vadd.f32 %v7859, %v7971
      %v7973 = vpop.f32.mrb[0].mxu0
      %v7974 = vadd.f32 %v7861, %v7973
      %7975 = vmatprep.mubr.bf16.mxu0 %v6764
      %7976 = vmatmul.mubr.bf16.gmra.mrb[0].mxu0 %v6763
      %v7977 = vpop.f32.mrb[0].mxu0
      %v7978 = vadd.f32 %v7865, %v7977
      %v7979 = vpop.f32.mrb[0].mxu0
      %v7980 = vadd.f32 %v7867, %v7979
      %v7981 = vpop.f32.mrb[0].mxu0
      %v7982 = vadd.f32 %v7869, %v7981
      %v7983 = vpop.f32.mrb[0].mxu0
      %v7984 = vadd.f32 %v7871, %v7983
      %7985 = vdwg.mxu0
      %v8114 = vunpack.c.l.b16 %v6221
      %v8115 = vunpack.c.h.b16 %v6221
      %v8116 = vunpack.c.l.b16 %v6222
      %v8117 = vunpack.c.h.b16 %v6222
      %v8118 = vunpack.c.l.b16 %v6223
      %v8119 = vunpack.c.h.b16 %v6223
      %v8120 = vunpack.c.l.b16 %v6224
      %v8121 = vunpack.c.h.b16 %v6224
      %v8122 = vunpack.c.l.b16 %v6225
      %v8123 = vunpack.c.h.b16 %v6225
      %v8124 = vunpack.c.l.b16 %v6226
      %v8125 = vunpack.c.h.b16 %v6226
      %v8126 = vunpack.c.l.b16 %v6227
      %v8127 = vunpack.c.h.b16 %v6227
      %v8128 = vunpack.c.l.b16 %v6228
      %v8129 = vunpack.c.h.b16 %v6228
      %v8130 = vunpack.c.l.b16 %v6229
      %v8131 = vunpack.c.h.b16 %v6229
      %v8132 = vunpack.c.l.b16 %v6230
      %v8133 = vunpack.c.h.b16 %v6230
      %v8134 = vunpack.c.l.b16 %v6231
      %v8135 = vunpack.c.h.b16 %v6231
      %v8136 = vunpack.c.l.b16 %v6232
      %v8137 = vunpack.c.h.b16 %v6232
      %v8138 = vunpack.c.l.b16 %v6233
      %v8139 = vunpack.c.h.b16 %v6233
      %v8140 = vunpack.c.l.b16 %v6234
      %v8141 = vunpack.c.h.b16 %v6234
      %v8142 = vunpack.c.l.b16 %v6235
      %v8143 = vunpack.c.h.b16 %v6235
      %v8144 = vunpack.c.l.b16 %v6236
      %v8145 = vunpack.c.h.b16 %v6236
      %v8146 = vunpack.c.l.b16 %v6237
      %v8147 = vunpack.c.h.b16 %v6237
      %v8148 = vunpack.c.l.b16 %v6238
      %v8149 = vunpack.c.h.b16 %v6238
      %v8150 = vunpack.c.l.b16 %v6239
      %v8151 = vunpack.c.h.b16 %v6239
      %v8152 = vunpack.c.l.b16 %v6240
      %v8153 = vunpack.c.h.b16 %v6240
      %v8154 = vunpack.c.l.b16 %v6241
      %v8155 = vunpack.c.h.b16 %v6241
      %v8156 = vunpack.c.l.b16 %v6242
      %v8157 = vunpack.c.h.b16 %v6242
      %v8158 = vunpack.c.l.b16 %v6243
      %v8159 = vunpack.c.h.b16 %v6243
      %v8160 = vunpack.c.l.b16 %v6244
      %v8161 = vunpack.c.h.b16 %v6244
      %v8162 = vunpack.c.l.b16 %v6245
      %v8163 = vunpack.c.h.b16 %v6245
      %v8164 = vunpack.c.l.b16 %v6246
      %v8165 = vunpack.c.h.b16 %v6246
      %v8166 = vunpack.c.l.b16 %v6247
      %v8167 = vunpack.c.h.b16 %v6247
      %v8168 = vunpack.c.l.b16 %v6248
      %v8169 = vunpack.c.h.b16 %v6248
      %v8170 = vunpack.c.l.b16 %v6249
      %v8171 = vunpack.c.h.b16 %v6249
      %v8172 = vunpack.c.l.b16 %v6250
      %v8173 = vunpack.c.h.b16 %v6250
      %v8174 = vunpack.c.l.b16 %v6251
      %v8175 = vunpack.c.h.b16 %v6251
      %v8176 = vunpack.c.l.b16 %v6252
      %v8177 = vunpack.c.h.b16 %v6252
      %v8178 = vunpack.c.l.b16 %v6253
      %v8179 = vunpack.c.h.b16 %v6253
      %v8180 = vunpack.c.l.b16 %v6254
      %v8181 = vunpack.c.h.b16 %v6254
      %v8182 = vunpack.c.l.b16 %v6255
      %v8183 = vunpack.c.h.b16 %v6255
      %v8184 = vunpack.c.l.b16 %v6256
      %v8185 = vunpack.c.h.b16 %v6256
      %v8186 = vunpack.c.l.b16 %v6257
      %v8187 = vunpack.c.h.b16 %v6257
      %v8188 = vunpack.c.l.b16 %v6258
      %v8189 = vunpack.c.h.b16 %v6258
      %v8190 = vunpack.c.l.b16 %v6259
      %v8191 = vunpack.c.h.b16 %v6259
      %v8192 = vunpack.c.l.b16 %v6260
      %v8193 = vunpack.c.h.b16 %v6260
      %v8194 = vunpack.c.l.b16 %v6261
      %v8195 = vunpack.c.h.b16 %v6261
      %v8196 = vunpack.c.l.b16 %v6262
      %v8197 = vunpack.c.h.b16 %v6262
      %v8198 = vunpack.c.l.b16 %v6263
      %v8199 = vunpack.c.h.b16 %v6263
      %v8200 = vunpack.c.l.b16 %v6264
      %v8201 = vunpack.c.h.b16 %v6264
      %v8202 = vunpack.c.l.b16 %v6265
      %v8203 = vunpack.c.h.b16 %v6265
      %v8204 = vunpack.c.l.b16 %v6266
      %v8205 = vunpack.c.h.b16 %v6266
      %v8206 = vunpack.c.l.b16 %v6267
      %v8207 = vunpack.c.h.b16 %v6267
      %v8208 = vunpack.c.l.b16 %v6268
      %v8209 = vunpack.c.h.b16 %v6268
      %v8210 = vunpack.c.l.b16 %v6269
      %v8211 = vunpack.c.h.b16 %v6269
      %v8212 = vunpack.c.l.b16 %v6270
      %v8213 = vunpack.c.h.b16 %v6270
      %v8214 = vunpack.c.l.b16 %v6271
      %v8215 = vunpack.c.h.b16 %v6271
      %v8216 = vunpack.c.l.b16 %v6272
      %v8217 = vunpack.c.h.b16 %v6272
      %v8218 = vunpack.c.l.b16 %v6273
      %v8219 = vunpack.c.h.b16 %v6273
      %v8220 = vunpack.c.l.b16 %v6274
      %v8221 = vunpack.c.h.b16 %v6274
      %v8222 = vunpack.c.l.b16 %v6275
      %v8223 = vunpack.c.h.b16 %v6275
      %v8224 = vunpack.c.l.b16 %v6276
      %v8225 = vunpack.c.h.b16 %v6276
      %v8226 = vunpack.c.l.b16 %v6277
      %v8227 = vunpack.c.h.b16 %v6277
      %v8228 = vunpack.c.l.b16 %v6278
      %v8229 = vunpack.c.h.b16 %v6278
      %v8230 = vunpack.c.l.b16 %v6279
      %v8231 = vunpack.c.h.b16 %v6279
      %v8232 = vunpack.c.l.b16 %v6280
      %v8233 = vunpack.c.h.b16 %v6280
      %v8234 = vunpack.c.l.b16 %v6281
      %v8235 = vunpack.c.h.b16 %v6281
      %v8236 = vunpack.c.l.b16 %v6282
      %v8237 = vunpack.c.h.b16 %v6282
      %v8238 = vunpack.c.l.b16 %v6283
      %v8239 = vunpack.c.h.b16 %v6283
      %v8240 = vunpack.c.l.b16 %v6284
      %v8241 = vunpack.c.h.b16 %v6284
      %v8242 = vunpack.c.l.b16 %v6285
      %v8243 = vunpack.c.h.b16 %v6285
      %v8244 = vunpack.c.l.b16 %v6286
      %v8245 = vunpack.c.h.b16 %v6286
      %v8246 = vunpack.c.l.b16 %v6287
      %v8247 = vunpack.c.h.b16 %v6287
      %v8248 = vunpack.c.l.b16 %v6288
      %v8249 = vunpack.c.h.b16 %v6288
      %v8250 = vunpack.c.l.b16 %v6289
      %v8251 = vunpack.c.h.b16 %v6289
      %v8252 = vunpack.c.l.b16 %v6290
      %v8253 = vunpack.c.h.b16 %v6290
      %v8254 = vunpack.c.l.b16 %v6291
      %v8255 = vunpack.c.h.b16 %v6291
      %v8256 = vunpack.c.l.b16 %v6292
      %v8257 = vunpack.c.h.b16 %v6292
      %v8258 = vunpack.c.l.b16 %v6293
      %v8259 = vunpack.c.h.b16 %v6293
      %v8260 = vunpack.c.l.b16 %v6294
      %v8261 = vunpack.c.h.b16 %v6294
      %v8262 = vunpack.c.l.b16 %v6295
      %v8263 = vunpack.c.h.b16 %v6295
      %v8264 = vunpack.c.l.b16 %v6296
      %v8265 = vunpack.c.h.b16 %v6296
      %v8266 = vunpack.c.l.b16 %v6297
      %v8267 = vunpack.c.h.b16 %v6297
      %v8268 = vunpack.c.l.b16 %v6298
      %v8269 = vunpack.c.h.b16 %v6298
      %v8270 = vunpack.c.l.b16 %v6299
      %v8271 = vunpack.c.h.b16 %v6299
      %v8272 = vunpack.c.l.b16 %v6300
      %v8273 = vunpack.c.h.b16 %v6300
      %v8274 = vunpack.c.l.b16 %v6301
      %v8275 = vunpack.c.h.b16 %v6301
      %v8276 = vunpack.c.l.b16 %v6302
      %v8277 = vunpack.c.h.b16 %v6302
      %v8278 = vunpack.c.l.b16 %v6303
      %v8279 = vunpack.c.h.b16 %v6303
      %v8280 = vunpack.c.l.b16 %v6304
      %v8281 = vunpack.c.h.b16 %v6304
      %v8282 = vunpack.c.l.b16 %v6305
      %v8283 = vunpack.c.h.b16 %v6305
      %v8284 = vunpack.c.l.b16 %v6306
      %v8285 = vunpack.c.h.b16 %v6306
      %v8286 = vunpack.c.l.b16 %v6307
      %v8287 = vunpack.c.h.b16 %v6307
      %v8288 = vunpack.c.l.b16 %v6308
      %v8289 = vunpack.c.h.b16 %v6308
      %v8290 = vunpack.c.l.b16 %v6309
      %v8291 = vunpack.c.h.b16 %v6309
      %v8292 = vunpack.c.l.b16 %v6310
      %v8293 = vunpack.c.h.b16 %v6310
      %v8294 = vunpack.c.l.b16 %v6311
      %v8295 = vunpack.c.h.b16 %v6311
      %v8296 = vunpack.c.l.b16 %v6312
      %v8297 = vunpack.c.h.b16 %v6312
      %v8298 = vunpack.c.l.b16 %v6313
      %v8299 = vunpack.c.h.b16 %v6313
      %v8300 = vunpack.c.l.b16 %v6314
      %v8301 = vunpack.c.h.b16 %v6314
      %v8302 = vunpack.c.l.b16 %v6315
      %v8303 = vunpack.c.h.b16 %v6315
      %v8304 = vunpack.c.l.b16 %v6316
      %v8305 = vunpack.c.h.b16 %v6316
      %v8306 = vunpack.c.l.b16 %v6317
      %v8307 = vunpack.c.h.b16 %v6317
      %v8308 = vunpack.c.l.b16 %v6318
      %v8309 = vunpack.c.h.b16 %v6318
      %v8310 = vunpack.c.l.b16 %v6319
      %v8311 = vunpack.c.h.b16 %v6319
      %v8312 = vunpack.c.l.b16 %v6320
      %v8313 = vunpack.c.h.b16 %v6320
      %v8314 = vunpack.c.l.b16 %v6321
      %v8315 = vunpack.c.h.b16 %v6321
      %v8316 = vunpack.c.l.b16 %v6322
      %v8317 = vunpack.c.h.b16 %v6322
      %v8318 = vunpack.c.l.b16 %v6323
      %v8319 = vunpack.c.h.b16 %v6323
      %v8320 = vunpack.c.l.b16 %v6324
      %v8321 = vunpack.c.h.b16 %v6324
      %v8322 = vunpack.c.l.b16 %v6325
      %v8323 = vunpack.c.h.b16 %v6325
      %v8324 = vunpack.c.l.b16 %v6326
      %v8325 = vunpack.c.h.b16 %v6326
      %v8326 = vunpack.c.l.b16 %v6327
      %v8327 = vunpack.c.h.b16 %v6327
      %v8328 = vunpack.c.l.b16 %v6328
      %v8329 = vunpack.c.h.b16 %v6328
      %v8330 = vunpack.c.l.b16 %v6329
      %v8331 = vunpack.c.h.b16 %v6329
      %v8332 = vunpack.c.l.b16 %v6330
      %v8333 = vunpack.c.h.b16 %v6330
      %v8334 = vunpack.c.l.b16 %v6331
      %v8335 = vunpack.c.h.b16 %v6331
      %v8336 = vunpack.c.l.b16 %v6332
      %v8337 = vunpack.c.h.b16 %v6332
      %v8338 = vunpack.c.l.b16 %v6333
      %v8339 = vunpack.c.h.b16 %v6333
      %v8340 = vunpack.c.l.b16 %v6334
      %v8341 = vunpack.c.h.b16 %v6334
      %v8342 = vunpack.c.l.b16 %v6335
      %v8343 = vunpack.c.h.b16 %v6335
      %v8344 = vunpack.c.l.b16 %v6336
      %v8345 = vunpack.c.h.b16 %v6336
      %v8346 = vunpack.c.l.b16 %v6337
      %v8347 = vunpack.c.h.b16 %v6337
      %v8348 = vunpack.c.l.b16 %v6338
      %v8349 = vunpack.c.h.b16 %v6338
      %v8350 = vunpack.c.l.b16 %v6339
      %v8351 = vunpack.c.h.b16 %v6339
      %v8352 = vunpack.c.l.b16 %v6340
      %v8353 = vunpack.c.h.b16 %v6340
      %v8354 = vunpack.c.l.b16 %v6341
      %v8355 = vunpack.c.h.b16 %v6341
      %v8356 = vunpack.c.l.b16 %v6342
      %v8357 = vunpack.c.h.b16 %v6342
      %v8358 = vunpack.c.l.b16 %v6343
      %v8359 = vunpack.c.h.b16 %v6343
      %v8360 = vunpack.c.l.b16 %v6344
      %v8361 = vunpack.c.h.b16 %v6344
      %v8362 = vunpack.c.l.b16 %v6345
      %v8363 = vunpack.c.h.b16 %v6345
      %v8364 = vunpack.c.l.b16 %v6346
      %v8365 = vunpack.c.h.b16 %v6346
      %v8366 = vunpack.c.l.b16 %v6347
      %v8367 = vunpack.c.h.b16 %v6347
      %v8368 = vunpack.c.l.b16 %v6348
      %v8369 = vunpack.c.h.b16 %v6348
      %v8370 = vpack.c.b16 %v8118, %v8114
      %v8371 = vpack.c.b16 %v8119, %v8115
      %v8372 = vpack.c.b16 %v8120, %v8116
      %v8373 = vpack.c.b16 %v8121, %v8117
      %v8374 = vpack.c.b16 %v8126, %v8122
      %v8375 = vpack.c.b16 %v8127, %v8123
      %v8376 = vpack.c.b16 %v8128, %v8124
      %v8377 = vpack.c.b16 %v8129, %v8125
      %v8378 = vpack.c.b16 %v8134, %v8130
      %v8379 = vpack.c.b16 %v8135, %v8131
      %v8380 = vpack.c.b16 %v8136, %v8132
      %v8381 = vpack.c.b16 %v8137, %v8133
      %v8382 = vpack.c.b16 %v8142, %v8138
      %v8383 = vpack.c.b16 %v8143, %v8139
      %v8384 = vpack.c.b16 %v8144, %v8140
      %v8385 = vpack.c.b16 %v8145, %v8141
      %v8386 = vpack.c.b16 %v8150, %v8146
      %v8387 = vpack.c.b16 %v8151, %v8147
      %v8388 = vpack.c.b16 %v8152, %v8148
      %v8389 = vpack.c.b16 %v8153, %v8149
      %v8390 = vpack.c.b16 %v8158, %v8154
      %v8391 = vpack.c.b16 %v8159, %v8155
      %v8392 = vpack.c.b16 %v8160, %v8156
      %v8393 = vpack.c.b16 %v8161, %v8157
      %v8394 = vpack.c.b16 %v8166, %v8162
      %v8395 = vpack.c.b16 %v8167, %v8163
      %v8396 = vpack.c.b16 %v8168, %v8164
      %v8397 = vpack.c.b16 %v8169, %v8165
      %v8398 = vpack.c.b16 %v8174, %v8170
      %v8399 = vpack.c.b16 %v8175, %v8171
      %v8400 = vpack.c.b16 %v8176, %v8172
      %v8401 = vpack.c.b16 %v8177, %v8173
      %v8402 = vpack.c.b16 %v8182, %v8178
      %v8403 = vpack.c.b16 %v8183, %v8179
      %v8404 = vpack.c.b16 %v8184, %v8180
      %v8405 = vpack.c.b16 %v8185, %v8181
      %v8406 = vpack.c.b16 %v8190, %v8186
      %v8407 = vpack.c.b16 %v8191, %v8187
      %v8408 = vpack.c.b16 %v8192, %v8188
      %v8409 = vpack.c.b16 %v8193, %v8189
      %v8410 = vpack.c.b16 %v8198, %v8194
      %v8411 = vpack.c.b16 %v8199, %v8195
      %v8412 = vpack.c.b16 %v8200, %v8196
      %v8413 = vpack.c.b16 %v8201, %v8197
      %v8414 = vpack.c.b16 %v8206, %v8202
      %v8415 = vpack.c.b16 %v8207, %v8203
      %v8416 = vpack.c.b16 %v8208, %v8204
      %v8417 = vpack.c.b16 %v8209, %v8205
      %v8418 = vpack.c.b16 %v8214, %v8210
      %v8419 = vpack.c.b16 %v8215, %v8211
      %v8420 = vpack.c.b16 %v8216, %v8212
      %v8421 = vpack.c.b16 %v8217, %v8213
      %v8422 = vpack.c.b16 %v8222, %v8218
      %v8423 = vpack.c.b16 %v8223, %v8219
      %v8424 = vpack.c.b16 %v8224, %v8220
      %v8425 = vpack.c.b16 %v8225, %v8221
      %v8426 = vpack.c.b16 %v8230, %v8226
      %v8427 = vpack.c.b16 %v8231, %v8227
      %v8428 = vpack.c.b16 %v8232, %v8228
      %v8429 = vpack.c.b16 %v8233, %v8229
      %v8430 = vpack.c.b16 %v8238, %v8234
      %v8431 = vpack.c.b16 %v8239, %v8235
      %v8432 = vpack.c.b16 %v8240, %v8236
      %v8433 = vpack.c.b16 %v8241, %v8237
      %v8434 = vpack.c.b16 %v8246, %v8242
      %v8435 = vpack.c.b16 %v8247, %v8243
      %v8436 = vpack.c.b16 %v8248, %v8244
      %v8437 = vpack.c.b16 %v8249, %v8245
      %v8438 = vpack.c.b16 %v8254, %v8250
      %v8439 = vpack.c.b16 %v8255, %v8251
      %v8440 = vpack.c.b16 %v8256, %v8252
      %v8441 = vpack.c.b16 %v8257, %v8253
      %v8442 = vpack.c.b16 %v8262, %v8258
      %v8443 = vpack.c.b16 %v8263, %v8259
      %v8444 = vpack.c.b16 %v8264, %v8260
      %v8445 = vpack.c.b16 %v8265, %v8261
      %v8446 = vpack.c.b16 %v8270, %v8266
      %v8447 = vpack.c.b16 %v8271, %v8267
      %v8448 = vpack.c.b16 %v8272, %v8268
      %v8449 = vpack.c.b16 %v8273, %v8269
      %v8450 = vpack.c.b16 %v8278, %v8274
      %v8451 = vpack.c.b16 %v8279, %v8275
      %v8452 = vpack.c.b16 %v8280, %v8276
      %v8453 = vpack.c.b16 %v8281, %v8277
      %v8454 = vpack.c.b16 %v8286, %v8282
      %v8455 = vpack.c.b16 %v8287, %v8283
      %v8456 = vpack.c.b16 %v8288, %v8284
      %v8457 = vpack.c.b16 %v8289, %v8285
      %v8458 = vpack.c.b16 %v8294, %v8290
      %v8459 = vpack.c.b16 %v8295, %v8291
      %v8460 = vpack.c.b16 %v8296, %v8292
      %v8461 = vpack.c.b16 %v8297, %v8293
      %v8462 = vpack.c.b16 %v8302, %v8298
      %v8463 = vpack.c.b16 %v8303, %v8299
      %v8464 = vpack.c.b16 %v8304, %v8300
      %v8465 = vpack.c.b16 %v8305, %v8301
      %v8466 = vpack.c.b16 %v8310, %v8306
      %v8467 = vpack.c.b16 %v8311, %v8307
      %v8468 = vpack.c.b16 %v8312, %v8308
      %v8469 = vpack.c.b16 %v8313, %v8309
      %v8470 = vpack.c.b16 %v8318, %v8314
      %v8471 = vpack.c.b16 %v8319, %v8315
      %v8472 = vpack.c.b16 %v8320, %v8316
      %v8473 = vpack.c.b16 %v8321, %v8317
      %v8474 = vpack.c.b16 %v8326, %v8322
      %v8475 = vpack.c.b16 %v8327, %v8323
      %v8476 = vpack.c.b16 %v8328, %v8324
      %v8477 = vpack.c.b16 %v8329, %v8325
      %v8478 = vpack.c.b16 %v8334, %v8330
      %v8479 = vpack.c.b16 %v8335, %v8331
      %v8480 = vpack.c.b16 %v8336, %v8332
      %v8481 = vpack.c.b16 %v8337, %v8333
      %v8482 = vpack.c.b16 %v8342, %v8338
      %v8483 = vpack.c.b16 %v8343, %v8339
      %v8484 = vpack.c.b16 %v8344, %v8340
      %v8485 = vpack.c.b16 %v8345, %v8341
      %v8486 = vpack.c.b16 %v8350, %v8346
      %v8487 = vpack.c.b16 %v8351, %v8347
      %v8488 = vpack.c.b16 %v8352, %v8348
      %v8489 = vpack.c.b16 %v8353, %v8349
      %v8490 = vpack.c.b16 %v8358, %v8354
      %v8491 = vpack.c.b16 %v8359, %v8355
      %v8492 = vpack.c.b16 %v8360, %v8356
      %v8493 = vpack.c.b16 %v8361, %v8357
      %v8494 = vpack.c.b16 %v8366, %v8362
      %v8495 = vpack.c.b16 %v8367, %v8363
      %v8496 = vpack.c.b16 %v8368, %v8364
      %v8497 = vpack.c.b16 %v8369, %v8365
      %8626 = vmatprep.subr.bf16.mxu0 %v8371
      %8627 = vmatpush1.bf16.msra.mxu0 %v8370
      %8628 = vmatprep.subr.bf16.mxu0 %v8375
      %8629 = vmatpush1.bf16.msra.mxu0 %v8374
      %8630 = vmatprep.subr.bf16.mxu0 %v8379
      %8631 = vmatpush1.bf16.msra.mxu0 %v8378
      %8632 = vmatprep.subr.bf16.mxu0 %v8383
      %8633 = vmatpush1.bf16.msra.mxu0 %v8382
      %8634 = vmatprep.subr.bf16.mxu0 %v8387
      %8635 = vmatpush1.bf16.msra.mxu0 %v8386
      %8636 = vmatprep.subr.bf16.mxu0 %v8391
      %8637 = vmatpush1.bf16.msra.mxu0 %v8390
      %8638 = vmatprep.subr.bf16.mxu0 %v8395
      %8639 = vmatpush1.bf16.msra.mxu0 %v8394
      %8640 = vmatprep.subr.bf16.mxu0 %v8399
      %8641 = vmatpush1.bf16.msra.mxu0 %v8398
      %8642 = vmatprep.subr.bf16.mxu0 %v8403
      %8643 = vmatpush1.bf16.msra.mxu0 %v8402
      %8644 = vmatprep.subr.bf16.mxu0 %v8407
      %8645 = vmatpush1.bf16.msra.mxu0 %v8406
      %8646 = vmatprep.subr.bf16.mxu0 %v8411
      %8647 = vmatpush1.bf16.msra.mxu0 %v8410
      %8648 = vmatprep.subr.bf16.mxu0 %v8415
      %8649 = vmatpush1.bf16.msra.mxu0 %v8414
      %8650 = vmatprep.subr.bf16.mxu0 %v8419
      %8651 = vmatpush1.bf16.msra.mxu0 %v8418
      %8652 = vmatprep.subr.bf16.mxu0 %v8423
      %8653 = vmatpush1.bf16.msra.mxu0 %v8422
      %8654 = vmatprep.subr.bf16.mxu0 %v8427
      %8655 = vmatpush1.bf16.msra.mxu0 %v8426
      %8656 = vmatprep.subr.bf16.mxu0 %v8431
      %8657 = vmatpush1.bf16.msra.mxu0 %v8430
      %8658 = vmatprep.mubr.bf16.mxu0 %v6190
      %8659 = vmatmul.mubr.bf16.gmra.mrb[0].mxu0 %v6189
      %v8660 = vpop.f32.mrb[0].mxu0
      %v8661 = vadd.f32 %v7682, %v8660
      %v8662 = vpop.f32.mrb[0].mxu0
      %v8663 = vadd.f32 %v7684, %v8662
      %v8664 = vpop.f32.mrb[0].mxu0
      %v8665 = vadd.f32 %v7686, %v8664
      %v8666 = vpop.f32.mrb[0].mxu0
      %v8667 = vadd.f32 %v7688, %v8666
      %8668 = vmatprep.mubr.bf16.mxu0 %v6194
      %8669 = vmatmul.mubr.bf16.gmra.mrb[0].mxu0 %v6193
      %v8670 = vpop.f32.mrb[0].mxu0
      %v8671 = vadd.f32 %v7692, %v8670
      %v8672 = vpop.f32.mrb[0].mxu0
      %v8673 = vadd.f32 %v7694, %v8672
      %v8674 = vpop.f32.mrb[0].mxu0
      %v8675 = vadd.f32 %v7696, %v8674
      %v8676 = vpop.f32.mrb[0].mxu0
      %v8677 = vadd.f32 %v7698, %v8676
      %8678 = vmatprep.mubr.bf16.mxu0 %v6198
      %8679 = vmatmul.mubr.bf16.gmra.mrb[0].mxu0 %v6197
      %v8680 = vpop.f32.mrb[0].mxu0
      %v8681 = vadd.f32 %v7702, %v8680
      %v8682 = vpop.f32.mrb[0].mxu0
      %v8683 = vadd.f32 %v7704, %v8682
      %v8684 = vpop.f32.mrb[0].mxu0
      %v8685 = vadd.f32 %v7706, %v8684
      %v8686 = vpop.f32.mrb[0].mxu0
      %v8687 = vadd.f32 %v7708, %v8686
      %8688 = vmatprep.mubr.bf16.mxu0 %v6202
      %8689 = vmatmul.mubr.bf16.gmra.mrb[0].mxu0 %v6201
      %v8690 = vpop.f32.mrb[0].mxu0
      %v8691 = vadd.f32 %v7712, %v8690
      %v8692 = vpop.f32.mrb[0].mxu0
      %v8693 = vadd.f32 %v7714, %v8692
      %v8694 = vpop.f32.mrb[0].mxu0
      %v8695 = vadd.f32 %v7716, %v8694
      %v8696 = vpop.f32.mrb[0].mxu0
      %v8697 = vadd.f32 %v7718, %v8696
      %8698 = vmatprep.mubr.bf16.mxu0 %v6206
      %8699 = vmatmul.mubr.bf16.gmra.mrb[0].mxu0 %v6205
      %v8700 = vpop.f32.mrb[0].mxu0
      %v8701 = vadd.f32 %v7722, %v8700
      %v8702 = vpop.f32.mrb[0].mxu0
      %v8703 = vadd.f32 %v7724, %v8702
      %v8704 = vpop.f32.mrb[0].mxu0
      %v8705 = vadd.f32 %v7726, %v8704
      %v8706 = vpop.f32.mrb[0].mxu0
      %v8707 = vadd.f32 %v7728, %v8706
      %8708 = vmatprep.mubr.bf16.mxu0 %v6210
      %8709 = vmatmul.mubr.bf16.gmra.mrb[0].mxu0 %v6209
      %v8710 = vpop.f32.mrb[0].mxu0
      %v8711 = vadd.f32 %v7732, %v8710
      %v8712 = vpop.f32.mrb[0].mxu0
      %v8713 = vadd.f32 %v7734, %v8712
      %v8714 = vpop.f32.mrb[0].mxu0
      %v8715 = vadd.f32 %v7736, %v8714
      %v8716 = vpop.f32.mrb[0].mxu0
      %v8717 = vadd.f32 %v7738, %v8716
      %8718 = vmatprep.mubr.bf16.mxu0 %v6214
      %8719 = vmatmul.mubr.bf16.gmra.mrb[0].mxu0 %v6213
      %v8720 = vpop.f32.mrb[0].mxu0
      %v8721 = vadd.f32 %v7742, %v8720
      %v8722 = vpop.f32.mrb[0].mxu0
      %v8723 = vadd.f32 %v7744, %v8722
      %v8724 = vpop.f32.mrb[0].mxu0
      %v8725 = vadd.f32 %v7746, %v8724
      %v8726 = vpop.f32.mrb[0].mxu0
      %v8727 = vadd.f32 %v7748, %v8726
      %8728 = vmatprep.mubr.bf16.mxu0 %v6218
      %8729 = vmatmul.mubr.bf16.gmra.mrb[0].mxu0 %v6217
      %v8730 = vpop.f32.mrb[0].mxu0
      %v8731 = vadd.f32 %v7752, %v8730
      %v8732 = vpop.f32.mrb[0].mxu0
      %v8733 = vadd.f32 %v7754, %v8732
      %v8734 = vpop.f32.mrb[0].mxu0
      %v8735 = vadd.f32 %v7756, %v8734
      %v8736 = vpop.f32.mrb[0].mxu0
      %v8737 = vadd.f32 %v7758, %v8736
      %8738 = vdwg.mxu0
      %8739 = vmatprep.subr.bf16.mxu0 %v8435
      %8740 = vmatpush1.bf16.msra.mxu0 %v8434
      %8741 = vmatprep.subr.bf16.mxu0 %v8439
      %8742 = vmatpush1.bf16.msra.mxu0 %v8438
      %8743 = vmatprep.subr.bf16.mxu0 %v8443
      %8744 = vmatpush1.bf16.msra.mxu0 %v8442
      %8745 = vmatprep.subr.bf16.mxu0 %v8447
      %8746 = vmatpush1.bf16.msra.mxu0 %v8446
      %8747 = vmatprep.subr.bf16.mxu0 %v8451
      %8748 = vmatpush1.bf16.msra.mxu0 %v8450
      %8749 = vmatprep.subr.bf16.mxu0 %v8455
      %8750 = vmatpush1.bf16.msra.mxu0 %v8454
      %8751 = vmatprep.subr.bf16.mxu0 %v8459
      %8752 = vmatpush1.bf16.msra.mxu0 %v8458
      %8753 = vmatprep.subr.bf16.mxu0 %v8463
      %8754 = vmatpush1.bf16.msra.mxu0 %v8462
      %8755 = vmatprep.subr.bf16.mxu0 %v8467
      %8756 = vmatpush1.bf16.msra.mxu0 %v8466
      %8757 = vmatprep.subr.bf16.mxu0 %v8471
      %8758 = vmatpush1.bf16.msra.mxu0 %v8470
      %8759 = vmatprep.subr.bf16.mxu0 %v8475
      %8760 = vmatpush1.bf16.msra.mxu0 %v8474
      %8761 = vmatprep.subr.bf16.mxu0 %v8479
      %8762 = vmatpush1.bf16.msra.mxu0 %v8478
      %8763 = vmatprep.subr.bf16.mxu0 %v8483
      %8764 = vmatpush1.bf16.msra.mxu0 %v8482
      %8765 = vmatprep.subr.bf16.mxu0 %v8487
      %8766 = vmatpush1.bf16.msra.mxu0 %v8486
      %8767 = vmatprep.subr.bf16.mxu0 %v8491
      %8768 = vmatpush1.bf16.msra.mxu0 %v8490
      %8769 = vmatprep.subr.bf16.mxu0 %v8495
      %8770 = vmatpush1.bf16.msra.mxu0 %v8494
      %8771 = vmatprep.mubr.bf16.mxu0 %v6192
      %8772 = vmatmul.mubr.bf16.gmra.mrb[0].mxu0 %v6191
      %v8773 = vpop.f32.mrb[0].mxu0
      %v8774 = vadd.f32 %v8661, %v8773
      %v8775 = vpop.f32.mrb[0].mxu0
      %v8776 = vadd.f32 %v8663, %v8775
      %v8777 = vpop.f32.mrb[0].mxu0
      %v8778 = vadd.f32 %v8665, %v8777
      %v8779 = vpop.f32.mrb[0].mxu0
      %v8780 = vadd.f32 %v8667, %v8779
      %8781 = vmatprep.mubr.bf16.mxu0 %v6196
      %8782 = vmatmul.mubr.bf16.gmra.mrb[0].mxu0 %v6195
      %v8783 = vpop.f32.mrb[0].mxu0
      %v8784 = vadd.f32 %v8671, %v8783
      %v8785 = vpop.f32.mrb[0].mxu0
      %v8786 = vadd.f32 %v8673, %v8785
      %v8787 = vpop.f32.mrb[0].mxu0
      %v8788 = vadd.f32 %v8675, %v8787
      %v8789 = vpop.f32.mrb[0].mxu0
      %v8790 = vadd.f32 %v8677, %v8789
      %8791 = vmatprep.mubr.bf16.mxu0 %v6200
      %8792 = vmatmul.mubr.bf16.gmra.mrb[0].mxu0 %v6199
      %v8793 = vpop.f32.mrb[0].mxu0
      %v8794 = vadd.f32 %v8681, %v8793
      %v8795 = vpop.f32.mrb[0].mxu0
      %v8796 = vadd.f32 %v8683, %v8795
      %v8797 = vpop.f32.mrb[0].mxu0
      %v8798 = vadd.f32 %v8685, %v8797
      %v8799 = vpop.f32.mrb[0].mxu0
      %v8800 = vadd.f32 %v8687, %v8799
      %8801 = vmatprep.mubr.bf16.mxu0 %v6204
      %8802 = vmatmul.mubr.bf16.gmra.mrb[0].mxu0 %v6203
      %v8803 = vpop.f32.mrb[0].mxu0
      %v8804 = vadd.f32 %v8691, %v8803
      %v8805 = vpop.f32.mrb[0].mxu0
      %v8806 = vadd.f32 %v8693, %v8805
      %v8807 = vpop.f32.mrb[0].mxu0
      %v8808 = vadd.f32 %v8695, %v8807
      %v8809 = vpop.f32.mrb[0].mxu0
      %v8810 = vadd.f32 %v8697, %v8809
      %8811 = vmatprep.mubr.bf16.mxu0 %v6208
      %8812 = vmatmul.mubr.bf16.gmra.mrb[0].mxu0 %v6207
      %v8813 = vpop.f32.mrb[0].mxu0
      %v8814 = vadd.f32 %v8701, %v8813
      %v8815 = vpop.f32.mrb[0].mxu0
      %v8816 = vadd.f32 %v8703, %v8815
      %v8817 = vpop.f32.mrb[0].mxu0
      %v8818 = vadd.f32 %v8705, %v8817
      %v8819 = vpop.f32.mrb[0].mxu0
      %v8820 = vadd.f32 %v8707, %v8819
      %8821 = vmatprep.mubr.bf16.mxu0 %v6212
      %8822 = vmatmul.mubr.bf16.gmra.mrb[0].mxu0 %v6211
      %v8823 = vpop.f32.mrb[0].mxu0
      %v8824 = vadd.f32 %v8711, %v8823
      %v8825 = vpop.f32.mrb[0].mxu0
      %v8826 = vadd.f32 %v8713, %v8825
      %v8827 = vpop.f32.mrb[0].mxu0
      %v8828 = vadd.f32 %v8715, %v8827
      %v8829 = vpop.f32.mrb[0].mxu0
      %v8830 = vadd.f32 %v8717, %v8829
      %8831 = vmatprep.mubr.bf16.mxu0 %v6216
      %8832 = vmatmul.mubr.bf16.gmra.mrb[0].mxu0 %v6215
      %v8833 = vpop.f32.mrb[0].mxu0
      %v8834 = vadd.f32 %v8721, %v8833
      %v8835 = vpop.f32.mrb[0].mxu0
      %v8836 = vadd.f32 %v8723, %v8835
      %v8837 = vpop.f32.mrb[0].mxu0
      %v8838 = vadd.f32 %v8725, %v8837
      %v8839 = vpop.f32.mrb[0].mxu0
      %v8840 = vadd.f32 %v8727, %v8839
      %8841 = vmatprep.mubr.bf16.mxu0 %v6220
      %8842 = vmatmul.mubr.bf16.gmra.mrb[0].mxu0 %v6219
      %v8843 = vpop.f32.mrb[0].mxu0
      %v8844 = vadd.f32 %v8731, %v8843
      %v8845 = vpop.f32.mrb[0].mxu0
      %v8846 = vadd.f32 %v8733, %v8845
      %v8847 = vpop.f32.mrb[0].mxu0
      %v8848 = vadd.f32 %v8735, %v8847
      %v8849 = vpop.f32.mrb[0].mxu0
      %v8850 = vadd.f32 %v8737, %v8849
      %8851 = vdwg.mxu0
      %8852 = vmatprep.subr.bf16.mxu0 %v8373
      %8853 = vmatpush1.bf16.msra.mxu0 %v8372
      %8854 = vmatprep.subr.bf16.mxu0 %v8377
      %8855 = vmatpush1.bf16.msra.mxu0 %v8376
      %8856 = vmatprep.subr.bf16.mxu0 %v8381
      %8857 = vmatpush1.bf16.msra.mxu0 %v8380
      %8858 = vmatprep.subr.bf16.mxu0 %v8385
      %8859 = vmatpush1.bf16.msra.mxu0 %v8384
      %8860 = vmatprep.subr.bf16.mxu0 %v8389
      %8861 = vmatpush1.bf16.msra.mxu0 %v8388
      %8862 = vmatprep.subr.bf16.mxu0 %v8393
      %8863 = vmatpush1.bf16.msra.mxu0 %v8392
      %8864 = vmatprep.subr.bf16.mxu0 %v8397
      %8865 = vmatpush1.bf16.msra.mxu0 %v8396
      %8866 = vmatprep.subr.bf16.mxu0 %v8401
      %8867 = vmatpush1.bf16.msra.mxu0 %v8400
      %8868 = vmatprep.subr.bf16.mxu0 %v8405
      %8869 = vmatpush1.bf16.msra.mxu0 %v8404
      %8870 = vmatprep.subr.bf16.mxu0 %v8409
      %8871 = vmatpush1.bf16.msra.mxu0 %v8408
      %8872 = vmatprep.subr.bf16.mxu0 %v8413
      %8873 = vmatpush1.bf16.msra.mxu0 %v8412
      %8874 = vmatprep.subr.bf16.mxu0 %v8417
      %8875 = vmatpush1.bf16.msra.mxu0 %v8416
      %8876 = vmatprep.subr.bf16.mxu0 %v8421
      %8877 = vmatpush1.bf16.msra.mxu0 %v8420
      %8878 = vmatprep.subr.bf16.mxu0 %v8425
      %8879 = vmatpush1.bf16.msra.mxu0 %v8424
      %8880 = vmatprep.subr.bf16.mxu0 %v8429
      %8881 = vmatpush1.bf16.msra.mxu0 %v8428
      %8882 = vmatprep.subr.bf16.mxu0 %v8433
      %8883 = vmatpush1.bf16.msra.mxu0 %v8432
      %8884 = vmatprep.mubr.bf16.mxu0 %v6190
      %8885 = vmatmul.mubr.bf16.gmra.mrb[0].mxu0 %v6189
      %v8886 = vpop.f32.mrb[0].mxu0
      %v8887 = vadd.f32 %v7908, %v8886
      %v8888 = vpop.f32.mrb[0].mxu0
      %v8889 = vadd.f32 %v7910, %v8888
      %v8890 = vpop.f32.mrb[0].mxu0
      %v8891 = vadd.f32 %v7912, %v8890
      %v8892 = vpop.f32.mrb[0].mxu0
      %v8893 = vadd.f32 %v7914, %v8892
      %8894 = vmatprep.mubr.bf16.mxu0 %v6194
      %8895 = vmatmul.mubr.bf16.gmra.mrb[0].mxu0 %v6193
      %v8896 = vpop.f32.mrb[0].mxu0
      %v8897 = vadd.f32 %v7918, %v8896
      %v8898 = vpop.f32.mrb[0].mxu0
      %v8899 = vadd.f32 %v7920, %v8898
      %v8900 = vpop.f32.mrb[0].mxu0
      %v8901 = vadd.f32 %v7922, %v8900
      %v8902 = vpop.f32.mrb[0].mxu0
      %v8903 = vadd.f32 %v7924, %v8902
      %8904 = vmatprep.mubr.bf16.mxu0 %v6198
      %8905 = vmatmul.mubr.bf16.gmra.mrb[0].mxu0 %v6197
      %v8906 = vpop.f32.mrb[0].mxu0
      %v8907 = vadd.f32 %v7928, %v8906
      %v8908 = vpop.f32.mrb[0].mxu0
      %v8909 = vadd.f32 %v7930, %v8908
      %v8910 = vpop.f32.mrb[0].mxu0
      %v8911 = vadd.f32 %v7932, %v8910
      %v8912 = vpop.f32.mrb[0].mxu0
      %v8913 = vadd.f32 %v7934, %v8912
      %8914 = vmatprep.mubr.bf16.mxu0 %v6202
      %8915 = vmatmul.mubr.bf16.gmra.mrb[0].mxu0 %v6201
      %v8916 = vpop.f32.mrb[0].mxu0
      %v8917 = vadd.f32 %v7938, %v8916
      %v8918 = vpop.f32.mrb[0].mxu0
      %v8919 = vadd.f32 %v7940, %v8918
      %v8920 = vpop.f32.mrb[0].mxu0
      %v8921 = vadd.f32 %v7942, %v8920
      %v8922 = vpop.f32.mrb[0].mxu0
      %v8923 = vadd.f32 %v7944, %v8922
      %8924 = vmatprep.mubr.bf16.mxu0 %v6206
      %8925 = vmatmul.mubr.bf16.gmra.mrb[0].mxu0 %v6205
      %v8926 = vpop.f32.mrb[0].mxu0
      %v8927 = vadd.f32 %v7948, %v8926
      %v8928 = vpop.f32.mrb[0].mxu0
      %v8929 = vadd.f32 %v7950, %v8928
      %v8930 = vpop.f32.mrb[0].mxu0
      %v8931 = vadd.f32 %v7952, %v8930
      %v8932 = vpop.f32.mrb[0].mxu0
      %v8933 = vadd.f32 %v7954, %v8932
      %8934 = vmatprep.mubr.bf16.mxu0 %v6210
      %8935 = vmatmul.mubr.bf16.gmra.mrb[0].mxu0 %v6209
      %v8936 = vpop.f32.mrb[0].mxu0
      %v8937 = vadd.f32 %v7958, %v8936
      %v8938 = vpop.f32.mrb[0].mxu0
      %v8939 = vadd.f32 %v7960, %v8938
      %v8940 = vpop.f32.mrb[0].mxu0
      %v8941 = vadd.f32 %v7962, %v8940
      %v8942 = vpop.f32.mrb[0].mxu0
      %v8943 = vadd.f32 %v7964, %v8942
      %8944 = vmatprep.mubr.bf16.mxu0 %v6214
      %8945 = vmatmul.mubr.bf16.gmra.mrb[0].mxu0 %v6213
      %v8946 = vpop.f32.mrb[0].mxu0
      %v8947 = vadd.f32 %v7968, %v8946
      %v8948 = vpop.f32.mrb[0].mxu0
      %v8949 = vadd.f32 %v7970, %v8948
      %v8950 = vpop.f32.mrb[0].mxu0
      %v8951 = vadd.f32 %v7972, %v8950
      %v8952 = vpop.f32.mrb[0].mxu0
      %v8953 = vadd.f32 %v7974, %v8952
      %8954 = vmatprep.mubr.bf16.mxu0 %v6218
      %8955 = vmatmul.mubr.bf16.gmra.mrb[0].mxu0 %v6217
      %v8956 = vpop.f32.mrb[0].mxu0
      %v8957 = vadd.f32 %v7978, %v8956
      %v8958 = vpop.f32.mrb[0].mxu0
      %v8959 = vadd.f32 %v7980, %v8958
      %v8960 = vpop.f32.mrb[0].mxu0
      %v8961 = vadd.f32 %v7982, %v8960
      %v8962 = vpop.f32.mrb[0].mxu0
      %v8963 = vadd.f32 %v7984, %v8962
      %8964 = vdwg.mxu0
      %8965 = vmatprep.subr.bf16.mxu0 %v8437
      %8966 = vmatpush1.bf16.msra.mxu0 %v8436
      %8967 = vmatprep.subr.bf16.mxu0 %v8441
      %8968 = vmatpush1.bf16.msra.mxu0 %v8440
      %8969 = vmatprep.subr.bf16.mxu0 %v8445
      %8970 = vmatpush1.bf16.msra.mxu0 %v8444
      %8971 = vmatprep.subr.bf16.mxu0 %v8449
      %8972 = vmatpush1.bf16.msra.mxu0 %v8448
      %8973 = vmatprep.subr.bf16.mxu0 %v8453
      %8974 = vmatpush1.bf16.msra.mxu0 %v8452
      %8975 = vmatprep.subr.bf16.mxu0 %v8457
      %8976 = vmatpush1.bf16.msra.mxu0 %v8456
      %8977 = vmatprep.subr.bf16.mxu0 %v8461
      %8978 = vmatpush1.bf16.msra.mxu0 %v8460
      %8979 = vmatprep.subr.bf16.mxu0 %v8465
      %8980 = vmatpush1.bf16.msra.mxu0 %v8464
      %8981 = vmatprep.subr.bf16.mxu0 %v8469
      %8982 = vmatpush1.bf16.msra.mxu0 %v8468
      %8983 = vmatprep.subr.bf16.mxu0 %v8473
      %8984 = vmatpush1.bf16.msra.mxu0 %v8472
      %8985 = vmatprep.subr.bf16.mxu0 %v8477
      %8986 = vmatpush1.bf16.msra.mxu0 %v8476
      %8987 = vmatprep.subr.bf16.mxu0 %v8481
      %8988 = vmatpush1.bf16.msra.mxu0 %v8480
      %8989 = vmatprep.subr.bf16.mxu0 %v8485
      %8990 = vmatpush1.bf16.msra.mxu0 %v8484
      %8991 = vmatprep.subr.bf16.mxu0 %v8489
      %8992 = vmatpush1.bf16.msra.mxu0 %v8488
      %8993 = vmatprep.subr.bf16.mxu0 %v8493
      %8994 = vmatpush1.bf16.msra.mxu0 %v8492
      %8995 = vmatprep.subr.bf16.mxu0 %v8497
      %8996 = vmatpush1.bf16.msra.mxu0 %v8496
      %8997 = vmatprep.mubr.bf16.mxu0 %v6192
      %8998 = vmatmul.mubr.bf16.gmra.mrb[0].mxu0 %v6191
      %v8999 = vpop.f32.mrb[0].mxu0
      %v9000 = vadd.f32 %v8887, %v8999
      %v9001 = vpop.f32.mrb[0].mxu0
      %v9002 = vadd.f32 %v8889, %v9001
      %v9003 = vpop.f32.mrb[0].mxu0
      %v9004 = vadd.f32 %v8891, %v9003
      %v9005 = vpop.f32.mrb[0].mxu0
      %v9006 = vadd.f32 %v8893, %v9005
      %9007 = vmatprep.mubr.bf16.mxu0 %v6196
      %9008 = vmatmul.mubr.bf16.gmra.mrb[0].mxu0 %v6195
      %v9009 = vpop.f32.mrb[0].mxu0
      %v9010 = vadd.f32 %v8897, %v9009
      %v9011 = vpop.f32.mrb[0].mxu0
      %v9012 = vadd.f32 %v8899, %v9011
      %v9013 = vpop.f32.mrb[0].mxu0
      %v9014 = vadd.f32 %v8901, %v9013
      %v9015 = vpop.f32.mrb[0].mxu0
      %v9016 = vadd.f32 %v8903, %v9015
      %9017 = vmatprep.mubr.bf16.mxu0 %v6200
      %9018 = vmatmul.mubr.bf16.gmra.mrb[0].mxu0 %v6199
      %v9019 = vpop.f32.mrb[0].mxu0
      %v9020 = vadd.f32 %v8907, %v9019
      %v9021 = vpop.f32.mrb[0].mxu0
      %v9022 = vadd.f32 %v8909, %v9021
      %v9023 = vpop.f32.mrb[0].mxu0
      %v9024 = vadd.f32 %v8911, %v9023
      %v9025 = vpop.f32.mrb[0].mxu0
      %v9026 = vadd.f32 %v8913, %v9025
      %9027 = vmatprep.mubr.bf16.mxu0 %v6204
      %9028 = vmatmul.mubr.bf16.gmra.mrb[0].mxu0 %v6203
      %v9029 = vpop.f32.mrb[0].mxu0
      %v9030 = vadd.f32 %v8917, %v9029
      %v9031 = vpop.f32.mrb[0].mxu0
      %v9032 = vadd.f32 %v8919, %v9031
      %v9033 = vpop.f32.mrb[0].mxu0
      %v9034 = vadd.f32 %v8921, %v9033
      %v9035 = vpop.f32.mrb[0].mxu0
      %v9036 = vadd.f32 %v8923, %v9035
      %9037 = vmatprep.mubr.bf16.mxu0 %v6208
      %9038 = vmatmul.mubr.bf16.gmra.mrb[0].mxu0 %v6207
      %v9039 = vpop.f32.mrb[0].mxu0
      %v9040 = vadd.f32 %v8927, %v9039
      %v9041 = vpop.f32.mrb[0].mxu0
      %v9042 = vadd.f32 %v8929, %v9041
      %v9043 = vpop.f32.mrb[0].mxu0
      %v9044 = vadd.f32 %v8931, %v9043
      %v9045 = vpop.f32.mrb[0].mxu0
      %v9046 = vadd.f32 %v8933, %v9045
      %9047 = vmatprep.mubr.bf16.mxu0 %v6212
      %9048 = vmatmul.mubr.bf16.gmra.mrb[0].mxu0 %v6211
      %v9049 = vpop.f32.mrb[0].mxu0
      %v9050 = vadd.f32 %v8937, %v9049
      %v9051 = vpop.f32.mrb[0].mxu0
      %v9052 = vadd.f32 %v8939, %v9051
      %v9053 = vpop.f32.mrb[0].mxu0
      %v9054 = vadd.f32 %v8941, %v9053
      %v9055 = vpop.f32.mrb[0].mxu0
      %v9056 = vadd.f32 %v8943, %v9055
      %9057 = vmatprep.mubr.bf16.mxu0 %v6216
      %9058 = vmatmul.mubr.bf16.gmra.mrb[0].mxu0 %v6215
      %v9059 = vpop.f32.mrb[0].mxu0
      %v9060 = vadd.f32 %v8947, %v9059
      %v9061 = vpop.f32.mrb[0].mxu0
      %v9062 = vadd.f32 %v8949, %v9061
      %v9063 = vpop.f32.mrb[0].mxu0
      %v9064 = vadd.f32 %v8951, %v9063
      %v9065 = vpop.f32.mrb[0].mxu0
      %v9066 = vadd.f32 %v8953, %v9065
      %9067 = vmatprep.mubr.bf16.mxu0 %v6220
      %9068 = vmatmul.mubr.bf16.gmra.mrb[0].mxu0 %v6219
      %v9069 = vpop.f32.mrb[0].mxu0
      %v9070 = vadd.f32 %v8957, %v9069
      %v9071 = vpop.f32.mrb[0].mxu0
      %v9072 = vadd.f32 %v8959, %v9071
      %v9073 = vpop.f32.mrb[0].mxu0
      %v9074 = vadd.f32 %v8961, %v9073
      %v9075 = vpop.f32.mrb[0].mxu0
      %v9076 = vadd.f32 %v8963, %v9075
      %9077 = vdwg.mxu0
      %v9078 = vld [vmem:[#allocation2] sm:$0xfc]
      %v9079 = vld [vmem:[#allocation2 + $0x8] sm:$0xfc]
      %v9080 = vld [vmem:[#allocation2 + $0x10] sm:$0xfc]
      %v9081 = vld [vmem:[#allocation2 + $0x18] sm:$0xfc]
      %v9082 = vld [vmem:[#allocation2 + $0x40] sm:$0x3]
      %v9083 = vld [vmem:[#allocation2 + $0x48] sm:$0x3]
      %v9084 = vld [vmem:[#allocation2 + $0x50] sm:$0x3]
      %v9085 = vld [vmem:[#allocation2 + $0x58] sm:$0x3]
      %v9086 = vld [vmem:[#allocation2 + $0x60] sm:$0xfc]
      %v9087 = vld [vmem:[#allocation2 + $0x68] sm:$0xfc]
      %v9088 = vld [vmem:[#allocation2 + $0x70] sm:$0xfc]
      %v9089 = vld [vmem:[#allocation2 + $0x78] sm:$0xfc]
      %v9090 = vld [vmem:[#allocation2 + $0xa0] sm:$0x3]
      %v9091 = vld [vmem:[#allocation2 + $0xa8] sm:$0x3]
      %v9092 = vld [vmem:[#allocation2 + $0xb0] sm:$0x3]
      %v9093 = vld [vmem:[#allocation2 + $0xb8] sm:$0x3]
      %v9094 = vld [vmem:[#allocation2 + $0xc0] sm:$0xfc]
      %v9095 = vld [vmem:[#allocation2 + $0xc8] sm:$0xfc]
      %v9096 = vld [vmem:[#allocation2 + $0xd0] sm:$0xfc]
      %v9097 = vld [vmem:[#allocation2 + $0xd8] sm:$0xfc]
      %v9098 = vld [vmem:[#allocation2 + $0x100] sm:$0x3]
      %v9099 = vld [vmem:[#allocation2 + $0x108] sm:$0x3]
      %v9100 = vld [vmem:[#allocation2 + $0x110] sm:$0x3]
      %v9101 = vld [vmem:[#allocation2 + $0x118] sm:$0x3]
      %v9102 = vld [vmem:[#allocation2 + $0x120] sm:$0xfc]
      %v9103 = vld [vmem:[#allocation2 + $0x128] sm:$0xfc]
      %v9104 = vld [vmem:[#allocation2 + $0x130] sm:$0xfc]
      %v9105 = vld [vmem:[#allocation2 + $0x138] sm:$0xfc]
      %v9106 = vld [vmem:[#allocation2 + $0x160] sm:$0x3]
      %v9107 = vld [vmem:[#allocation2 + $0x168] sm:$0x3]
      %v9108 = vld [vmem:[#allocation2 + $0x170] sm:$0x3]
      %v9109 = vld [vmem:[#allocation2 + $0x178] sm:$0x3]
      %v9110 = vld [vmem:[#allocation2 + $0x180] sm:$0xfc]
      %v9111 = vld [vmem:[#allocation2 + $0x188] sm:$0xfc]
      %v9112 = vld [vmem:[#allocation2 + $0x190] sm:$0xfc]
      %v9113 = vld [vmem:[#allocation2 + $0x198] sm:$0xfc]
      %v9114 = vld [vmem:[#allocation2 + $0x1c0] sm:$0x3]
      %v9115 = vld [vmem:[#allocation2 + $0x1c8] sm:$0x3]
      %v9116 = vld [vmem:[#allocation2 + $0x1d0] sm:$0x3]
      %v9117 = vld [vmem:[#allocation2 + $0x1d8] sm:$0x3]
      %v9118 = vld [vmem:[#allocation2 + $0x1e0] sm:$0xfc]
      %v9119 = vld [vmem:[#allocation2 + $0x1e8] sm:$0xfc]
      %v9120 = vld [vmem:[#allocation2 + $0x1f0] sm:$0xfc]
      %v9121 = vld [vmem:[#allocation2 + $0x1f8] sm:$0xfc]
      %v9122 = vld [vmem:[#allocation2 + $0x220] sm:$0x3]
      %v9123 = vld [vmem:[#allocation2 + $0x228] sm:$0x3]
      %v9124 = vld [vmem:[#allocation2 + $0x230] sm:$0x3]
      %v9125 = vld [vmem:[#allocation2 + $0x238] sm:$0x3]
      %v9126 = vld [vmem:[#allocation2 + $0x240] sm:$0xfc]
      %v9127 = vld [vmem:[#allocation2 + $0x248] sm:$0xfc]
      %v9128 = vld [vmem:[#allocation2 + $0x250] sm:$0xfc]
      %v9129 = vld [vmem:[#allocation2 + $0x258] sm:$0xfc]
      %v9130 = vld [vmem:[#allocation2 + $0x280] sm:$0x3]
      %v9131 = vld [vmem:[#allocation2 + $0x288] sm:$0x3]
      %v9132 = vld [vmem:[#allocation2 + $0x290] sm:$0x3]
      %v9133 = vld [vmem:[#allocation2 + $0x298] sm:$0x3]
      %v9134 = vld [vmem:[#allocation2 + $0x2a0] sm:$0xfc]
      %v9135 = vld [vmem:[#allocation2 + $0x2a8] sm:$0xfc]
      %v9136 = vld [vmem:[#allocation2 + $0x2b0] sm:$0xfc]
      %v9137 = vld [vmem:[#allocation2 + $0x2b8] sm:$0xfc]
      %v9138 = vld [vmem:[#allocation2 + $0x2e0] sm:$0x3]
      %v9139 = vld [vmem:[#allocation2 + $0x2e8] sm:$0x3]
      %v9140 = vld [vmem:[#allocation2 + $0x2f0] sm:$0x3]
      %v9141 = vld [vmem:[#allocation2 + $0x2f8] sm:$0x3]
      %v9206 = vrot.slane %v9078, 2
      %v9207 = vrot.slane %v6129, 2
      %v9208 = vsel %vm3865, %v9206, %v9207
      %v9209 = vrot.slane %v9079, 2
      %v9210 = vrot.slane %v6130, 2
      %v9211 = vsel %vm3865, %v9209, %v9210
      %v9212 = vrot.slane %v9080, 2
      %v9213 = vrot.slane %v6131, 2
      %v9214 = vsel %vm3865, %v9212, %v9213
      %v9215 = vrot.slane %v9081, 2
      %v9216 = vrot.slane %v6132, 2
      %v9217 = vsel %vm3865, %v9215, %v9216
      %v9218 = vrot.slane %v9082, 2
      %v9219 = vsel %vm3865, %v9207, %v9218
      %v9220 = vrot.slane %v9083, 2
      %v9221 = vsel %vm3865, %v9210, %v9220
      %v9222 = vrot.slane %v9084, 2
      %v9223 = vsel %vm3865, %v9213, %v9222
      %v9224 = vrot.slane %v9085, 2
      %v9225 = vsel %vm3865, %v9216, %v9224
      %v9226 = vrot.slane %v9086, 2
      %v9227 = vrot.slane %v6137, 2
      %v9228 = vsel %vm3865, %v9226, %v9227
      %v9229 = vrot.slane %v9087, 2
      %v9230 = vrot.slane %v6138, 2
      %v9231 = vsel %vm3865, %v9229, %v9230
      %v9232 = vrot.slane %v9088, 2
      %v9233 = vrot.slane %v6139, 2
      %v9234 = vsel %vm3865, %v9232, %v9233
      %v9235 = vrot.slane %v9089, 2
      %v9236 = vrot.slane %v6140, 2
      %v9237 = vsel %vm3865, %v9235, %v9236
      %v9238 = vrot.slane %v9090, 2
      %v9239 = vsel %vm3865, %v9227, %v9238
      %v9240 = vrot.slane %v9091, 2
      %v9241 = vsel %vm3865, %v9230, %v9240
      %v9242 = vrot.slane %v9092, 2
      %v9243 = vsel %vm3865, %v9233, %v9242
      %v9244 = vrot.slane %v9093, 2
      %v9245 = vsel %vm3865, %v9236, %v9244
      %v9246 = vrot.slane %v9094, 2
      %v9247 = vrot.slane %v6145, 2
      %v9248 = vsel %vm3865, %v9246, %v9247
      %v9249 = vrot.slane %v9095, 2
      %v9250 = vrot.slane %v6146, 2
      %v9251 = vsel %vm3865, %v9249, %v9250
      %v9252 = vrot.slane %v9096, 2
      %v9253 = vrot.slane %v6147, 2
      %v9254 = vsel %vm3865, %v9252, %v9253
      %v9255 = vrot.slane %v9097, 2
      %v9256 = vrot.slane %v6148, 2
      %v9257 = vsel %vm3865, %v9255, %v9256
      %v9258 = vrot.slane %v9098, 2
      %v9259 = vsel %vm3865, %v9247, %v9258
      %v9260 = vrot.slane %v9099, 2
      %v9261 = vsel %vm3865, %v9250, %v9260
      %v9262 = vrot.slane %v9100, 2
      %v9263 = vsel %vm3865, %v9253, %v9262
      %v9264 = vrot.slane %v9101, 2
      %v9265 = vsel %vm3865, %v9256, %v9264
      %v9266 = vrot.slane %v9102, 2
      %v9267 = vrot.slane %v6153, 2
      %v9268 = vsel %vm3865, %v9266, %v9267
      %v9269 = vrot.slane %v9103, 2
      %v9270 = vrot.slane %v6154, 2
      %v9271 = vsel %vm3865, %v9269, %v9270
      %v9272 = vrot.slane %v9104, 2
      %v9273 = vrot.slane %v6155, 2
      %v9274 = vsel %vm3865, %v9272, %v9273
      %v9275 = vrot.slane %v9105, 2
      %v9276 = vrot.slane %v6156, 2
      %v9277 = vsel %vm3865, %v9275, %v9276
      %v9278 = vrot.slane %v9106, 2
      %v9279 = vsel %vm3865, %v9267, %v9278
      %v9280 = vrot.slane %v9107, 2
      %v9281 = vsel %vm3865, %v9270, %v9280
      %v9282 = vrot.slane %v9108, 2
      %v9283 = vsel %vm3865, %v9273, %v9282
      %v9284 = vrot.slane %v9109, 2
      %v9285 = vsel %vm3865, %v9276, %v9284
      %v9286 = vrot.slane %v9110, 2
      %v9287 = vrot.slane %v6161, 2
      %v9288 = vsel %vm3865, %v9286, %v9287
      %v9289 = vrot.slane %v9111, 2
      %v9290 = vrot.slane %v6162, 2
      %v9291 = vsel %vm3865, %v9289, %v9290
      %v9292 = vrot.slane %v9112, 2
      %v9293 = vrot.slane %v6163, 2
      %v9294 = vsel %vm3865, %v9292, %v9293
      %v9295 = vrot.slane %v9113, 2
      %v9296 = vrot.slane %v6164, 2
      %v9297 = vsel %vm3865, %v9295, %v9296
      %v9298 = vrot.slane %v9114, 2
      %v9299 = vsel %vm3865, %v9287, %v9298
      %v9300 = vrot.slane %v9115, 2
      %v9301 = vsel %vm3865, %v9290, %v9300
      %v9302 = vrot.slane %v9116, 2
      %v9303 = vsel %vm3865, %v9293, %v9302
      %v9304 = vrot.slane %v9117, 2
      %v9305 = vsel %vm3865, %v9296, %v9304
      %v9306 = vrot.slane %v9118, 2
      %v9307 = vrot.slane %v6169, 2
      %v9308 = vsel %vm3865, %v9306, %v9307
      %v9309 = vrot.slane %v9119, 2
      %v9310 = vrot.slane %v6170, 2
      %v9311 = vsel %vm3865, %v9309, %v9310
      %v9312 = vrot.slane %v9120, 2
      %v9313 = vrot.slane %v6171, 2
      %v9314 = vsel %vm3865, %v9312, %v9313
      %v9315 = vrot.slane %v9121, 2
      %v9316 = vrot.slane %v6172, 2
      %v9317 = vsel %vm3865, %v9315, %v9316
      %v9318 = vrot.slane %v9122, 2
      %v9319 = vsel %vm3865, %v9307, %v9318
      %v9320 = vrot.slane %v9123, 2
      %v9321 = vsel %vm3865, %v9310, %v9320
      %v9322 = vrot.slane %v9124, 2
      %v9323 = vsel %vm3865, %v9313, %v9322
      %v9324 = vrot.slane %v9125, 2
      %v9325 = vsel %vm3865, %v9316, %v9324
      %v9326 = vrot.slane %v9126, 2
      %v9327 = vrot.slane %v6177, 2
      %v9328 = vsel %vm3865, %v9326, %v9327
      %v9329 = vrot.slane %v9127, 2
      %v9330 = vrot.slane %v6178, 2
      %v9331 = vsel %vm3865, %v9329, %v9330
      %v9332 = vrot.slane %v9128, 2
      %v9333 = vrot.slane %v6179, 2
      %v9334 = vsel %vm3865, %v9332, %v9333
      %v9335 = vrot.slane %v9129, 2
      %v9336 = vrot.slane %v6180, 2
      %v9337 = vsel %vm3865, %v9335, %v9336
      %v9338 = vrot.slane %v9130, 2
      %v9339 = vsel %vm3865, %v9327, %v9338
      %v9340 = vrot.slane %v9131, 2
      %v9341 = vsel %vm3865, %v9330, %v9340
      %v9342 = vrot.slane %v9132, 2
      %v9343 = vsel %vm3865, %v9333, %v9342
      %v9344 = vrot.slane %v9133, 2
      %v9345 = vsel %vm3865, %v9336, %v9344
      %v9346 = vrot.slane %v9134, 2
      %v9347 = vrot.slane %v6185, 2
      %v9348 = vsel %vm3865, %v9346, %v9347
      %v9349 = vrot.slane %v9135, 2
      %v9350 = vrot.slane %v6186, 2
      %v9351 = vsel %vm3865, %v9349, %v9350
      %v9352 = vrot.slane %v9136, 2
      %v9353 = vrot.slane %v6187, 2
      %v9354 = vsel %vm3865, %v9352, %v9353
      %v9355 = vrot.slane %v9137, 2
      %v9356 = vrot.slane %v6188, 2
      %v9357 = vsel %vm3865, %v9355, %v9356
      %v9358 = vrot.slane %v9138, 2
      %v9359 = vsel %vm3865, %v9347, %v9358
      %v9360 = vrot.slane %v9139, 2
      %v9361 = vsel %vm3865, %v9350, %v9360
      %v9362 = vrot.slane %v9140, 2
      %v9363 = vsel %vm3865, %v9353, %v9362
      %v9364 = vrot.slane %v9141, 2
      %v9365 = vsel %vm3865, %v9356, %v9364
      %v9430 = vpack.c.bf16 %v9219, %v9208
      %v9431 = vpack.c.bf16 %v9221, %v9211
      %v9432 = vpack.c.bf16 %v9223, %v9214
      %v9433 = vpack.c.bf16 %v9225, %v9217
      %v9434 = vpack.c.bf16 %v9239, %v9228
      %v9435 = vpack.c.bf16 %v9241, %v9231
      %v9436 = vpack.c.bf16 %v9243, %v9234
      %v9437 = vpack.c.bf16 %v9245, %v9237
      %v9438 = vpack.c.bf16 %v9259, %v9248
      %v9439 = vpack.c.bf16 %v9261, %v9251
      %v9440 = vpack.c.bf16 %v9263, %v9254
      %v9441 = vpack.c.bf16 %v9265, %v9257
      %v9442 = vpack.c.bf16 %v9279, %v9268
      %v9443 = vpack.c.bf16 %v9281, %v9271
      %v9444 = vpack.c.bf16 %v9283, %v9274
      %v9445 = vpack.c.bf16 %v9285, %v9277
      %v9446 = vpack.c.bf16 %v9299, %v9288
      %v9447 = vpack.c.bf16 %v9301, %v9291
      %v9448 = vpack.c.bf16 %v9303, %v9294
      %v9449 = vpack.c.bf16 %v9305, %v9297
      %v9450 = vpack.c.bf16 %v9319, %v9308
      %v9451 = vpack.c.bf16 %v9321, %v9311
      %v9452 = vpack.c.bf16 %v9323, %v9314
      %v9453 = vpack.c.bf16 %v9325, %v9317
      %v9454 = vpack.c.bf16 %v9339, %v9328
      %v9455 = vpack.c.bf16 %v9341, %v9331
      %v9456 = vpack.c.bf16 %v9343, %v9334
      %v9457 = vpack.c.bf16 %v9345, %v9337
      %v9458 = vpack.c.bf16 %v9359, %v9348
      %v9459 = vpack.c.bf16 %v9361, %v9351
      %v9460 = vpack.c.bf16 %v9363, %v9354
      %v9461 = vpack.c.bf16 %v9365, %v9357
      %s9462 = scalar_lea.vmem %s2, 2048
      %v9463 = vld [vmem:[%s9462] sm:$0xff]
      %v9464 = vld [vmem:[%s9462 + $0x8] sm:$0xff]
      %v9465 = vld [vmem:[%s9462 + $0x10] sm:$0xff]
      %v9466 = vld [vmem:[%s9462 + $0x18] sm:$0xff]
      %v9467 = vld [vmem:[%s9462 + $0x20] sm:$0xff]
      %v9468 = vld [vmem:[%s9462 + $0x28] sm:$0xff]
      %v9469 = vld [vmem:[%s9462 + $0x30] sm:$0xff]
      %v9470 = vld [vmem:[%s9462 + $0x38] sm:$0xff]
      %v9471 = vld [vmem:[%s9462 + $0x40] sm:$0xff]
      %v9472 = vld [vmem:[%s9462 + $0x48] sm:$0xff]
      %v9473 = vld [vmem:[%s9462 + $0x50] sm:$0xff]
      %v9474 = vld [vmem:[%s9462 + $0x58] sm:$0xff]
      %v9475 = vld [vmem:[%s9462 + $0x60] sm:$0xff]
      %v9476 = vld [vmem:[%s9462 + $0x68] sm:$0xff]
      %v9477 = vld [vmem:[%s9462 + $0x70] sm:$0xff]
      %v9478 = vld [vmem:[%s9462 + $0x78] sm:$0xff]
      %v9479 = vld [vmem:[%s9462 + $0x80] sm:$0xff]
      %v9480 = vld [vmem:[%s9462 + $0x88] sm:$0xff]
      %v9481 = vld [vmem:[%s9462 + $0x90] sm:$0xff]
      %v9482 = vld [vmem:[%s9462 + $0x98] sm:$0xff]
      %v9483 = vld [vmem:[%s9462 + $0xa0] sm:$0xff]
      %v9484 = vld [vmem:[%s9462 + $0xa8] sm:$0xff]
      %v9485 = vld [vmem:[%s9462 + $0xb0] sm:$0xff]
      %v9486 = vld [vmem:[%s9462 + $0xb8] sm:$0xff]
      %v9487 = vld [vmem:[%s9462 + $0xc0] sm:$0xff]
      %v9488 = vld [vmem:[%s9462 + $0xc8] sm:$0xff]
      %v9489 = vld [vmem:[%s9462 + $0xd0] sm:$0xff]
      %v9490 = vld [vmem:[%s9462 + $0xd8] sm:$0xff]
      %v9491 = vld [vmem:[%s9462 + $0xe0] sm:$0xff]
      %v9492 = vld [vmem:[%s9462 + $0xe8] sm:$0xff]
      %v9493 = vld [vmem:[%s9462 + $0xf0] sm:$0xff]
      %v9494 = vld [vmem:[%s9462 + $0xf8] sm:$0xff]
      %v9495 = vld [vmem:[%s9462 + $0x100] sm:$0xff]
      %v9496 = vld [vmem:[%s9462 + $0x108] sm:$0xff]
      %v9497 = vld [vmem:[%s9462 + $0x110] sm:$0xff]
      %v9498 = vld [vmem:[%s9462 + $0x118] sm:$0xff]
      %v9499 = vld [vmem:[%s9462 + $0x120] sm:$0xff]
      %v9500 = vld [vmem:[%s9462 + $0x128] sm:$0xff]
      %v9501 = vld [vmem:[%s9462 + $0x130] sm:$0xff]
      %v9502 = vld [vmem:[%s9462 + $0x138] sm:$0xff]
      %v9503 = vld [vmem:[%s9462 + $0x140] sm:$0xff]
      %v9504 = vld [vmem:[%s9462 + $0x148] sm:$0xff]
      %v9505 = vld [vmem:[%s9462 + $0x150] sm:$0xff]
      %v9506 = vld [vmem:[%s9462 + $0x158] sm:$0xff]
      %v9507 = vld [vmem:[%s9462 + $0x160] sm:$0xff]
      %v9508 = vld [vmem:[%s9462 + $0x168] sm:$0xff]
      %v9509 = vld [vmem:[%s9462 + $0x170] sm:$0xff]
      %v9510 = vld [vmem:[%s9462 + $0x178] sm:$0xff]
      %v9511 = vld [vmem:[%s9462 + $0x180] sm:$0xff]
      %v9512 = vld [vmem:[%s9462 + $0x188] sm:$0xff]
      %v9513 = vld [vmem:[%s9462 + $0x190] sm:$0xff]
      %v9514 = vld [vmem:[%s9462 + $0x198] sm:$0xff]
      %v9515 = vld [vmem:[%s9462 + $0x1a0] sm:$0xff]
      %v9516 = vld [vmem:[%s9462 + $0x1a8] sm:$0xff]
      %v9517 = vld [vmem:[%s9462 + $0x1b0] sm:$0xff]
      %v9518 = vld [vmem:[%s9462 + $0x1b8] sm:$0xff]
      %v9519 = vld [vmem:[%s9462 + $0x1c0] sm:$0xff]
      %v9520 = vld [vmem:[%s9462 + $0x1c8] sm:$0xff]
      %v9521 = vld [vmem:[%s9462 + $0x1d0] sm:$0xff]
      %v9522 = vld [vmem:[%s9462 + $0x1d8] sm:$0xff]
      %v9523 = vld [vmem:[%s9462 + $0x1e0] sm:$0xff]
      %v9524 = vld [vmem:[%s9462 + $0x1e8] sm:$0xff]
      %v9525 = vld [vmem:[%s9462 + $0x1f0] sm:$0xff]
      %v9526 = vld [vmem:[%s9462 + $0x1f8] sm:$0xff]
      %v9527 = vld [vmem:[%s9462 + $0x200] sm:$0xff]
      %v9528 = vld [vmem:[%s9462 + $0x208] sm:$0xff]
      %v9529 = vld [vmem:[%s9462 + $0x210] sm:$0xff]
      %v9530 = vld [vmem:[%s9462 + $0x218] sm:$0xff]
      %v9531 = vld [vmem:[%s9462 + $0x220] sm:$0xff]
      %v9532 = vld [vmem:[%s9462 + $0x228] sm:$0xff]
      %v9533 = vld [vmem:[%s9462 + $0x230] sm:$0xff]
      %v9534 = vld [vmem:[%s9462 + $0x238] sm:$0xff]
      %v9535 = vld [vmem:[%s9462 + $0x240] sm:$0xff]
      %v9536 = vld [vmem:[%s9462 + $0x248] sm:$0xff]
      %v9537 = vld [vmem:[%s9462 + $0x250] sm:$0xff]
      %v9538 = vld [vmem:[%s9462 + $0x258] sm:$0xff]
      %v9539 = vld [vmem:[%s9462 + $0x260] sm:$0xff]
      %v9540 = vld [vmem:[%s9462 + $0x268] sm:$0xff]
      %v9541 = vld [vmem:[%s9462 + $0x270] sm:$0xff]
      %v9542 = vld [vmem:[%s9462 + $0x278] sm:$0xff]
      %v9543 = vld [vmem:[%s9462 + $0x280] sm:$0xff]
      %v9544 = vld [vmem:[%s9462 + $0x288] sm:$0xff]
      %v9545 = vld [vmem:[%s9462 + $0x290] sm:$0xff]
      %v9546 = vld [vmem:[%s9462 + $0x298] sm:$0xff]
      %v9547 = vld [vmem:[%s9462 + $0x2a0] sm:$0xff]
      %v9548 = vld [vmem:[%s9462 + $0x2a8] sm:$0xff]
      %v9549 = vld [vmem:[%s9462 + $0x2b0] sm:$0xff]
      %v9550 = vld [vmem:[%s9462 + $0x2b8] sm:$0xff]
      %v9551 = vld [vmem:[%s9462 + $0x2c0] sm:$0xff]
      %v9552 = vld [vmem:[%s9462 + $0x2c8] sm:$0xff]
      %v9553 = vld [vmem:[%s9462 + $0x2d0] sm:$0xff]
      %v9554 = vld [vmem:[%s9462 + $0x2d8] sm:$0xff]
      %v9555 = vld [vmem:[%s9462 + $0x2e0] sm:$0xff]
      %v9556 = vld [vmem:[%s9462 + $0x2e8] sm:$0xff]
      %v9557 = vld [vmem:[%s9462 + $0x2f0] sm:$0xff]
      %v9558 = vld [vmem:[%s9462 + $0x2f8] sm:$0xff]
      %v9559 = vld [vmem:[%s9462 + $0x300] sm:$0xff]
      %v9560 = vld [vmem:[%s9462 + $0x308] sm:$0xff]
      %v9561 = vld [vmem:[%s9462 + $0x310] sm:$0xff]
      %v9562 = vld [vmem:[%s9462 + $0x318] sm:$0xff]
      %v9563 = vld [vmem:[%s9462 + $0x320] sm:$0xff]
      %v9564 = vld [vmem:[%s9462 + $0x328] sm:$0xff]
      %v9565 = vld [vmem:[%s9462 + $0x330] sm:$0xff]
      %v9566 = vld [vmem:[%s9462 + $0x338] sm:$0xff]
      %v9567 = vld [vmem:[%s9462 + $0x340] sm:$0xff]
      %v9568 = vld [vmem:[%s9462 + $0x348] sm:$0xff]
      %v9569 = vld [vmem:[%s9462 + $0x350] sm:$0xff]
      %v9570 = vld [vmem:[%s9462 + $0x358] sm:$0xff]
      %v9571 = vld [vmem:[%s9462 + $0x360] sm:$0xff]
      %v9572 = vld [vmem:[%s9462 + $0x368] sm:$0xff]
      %v9573 = vld [vmem:[%s9462 + $0x370] sm:$0xff]
      %v9574 = vld [vmem:[%s9462 + $0x378] sm:$0xff]
      %v9575 = vld [vmem:[%s9462 + $0x380] sm:$0xff]
      %v9576 = vld [vmem:[%s9462 + $0x388] sm:$0xff]
      %v9577 = vld [vmem:[%s9462 + $0x390] sm:$0xff]
      %v9578 = vld [vmem:[%s9462 + $0x398] sm:$0xff]
      %v9579 = vld [vmem:[%s9462 + $0x3a0] sm:$0xff]
      %v9580 = vld [vmem:[%s9462 + $0x3a8] sm:$0xff]
      %v9581 = vld [vmem:[%s9462 + $0x3b0] sm:$0xff]
      %v9582 = vld [vmem:[%s9462 + $0x3b8] sm:$0xff]
      %v9583 = vld [vmem:[%s9462 + $0x3c0] sm:$0xff]
      %v9584 = vld [vmem:[%s9462 + $0x3c8] sm:$0xff]
      %v9585 = vld [vmem:[%s9462 + $0x3d0] sm:$0xff]
      %v9586 = vld [vmem:[%s9462 + $0x3d8] sm:$0xff]
      %v9587 = vld [vmem:[%s9462 + $0x3e0] sm:$0xff]
      %v9588 = vld [vmem:[%s9462 + $0x3e8] sm:$0xff]
      %v9589 = vld [vmem:[%s9462 + $0x3f0] sm:$0xff]
      %v9590 = vld [vmem:[%s9462 + $0x3f8] sm:$0xff]
      %v9719 = vunpack.c.l.b16 %v9463
      %v9720 = vunpack.c.h.b16 %v9463
      %v9721 = vunpack.c.l.b16 %v9464
      %v9722 = vunpack.c.h.b16 %v9464
      %v9723 = vunpack.c.l.b16 %v9465
      %v9724 = vunpack.c.h.b16 %v9465
      %v9725 = vunpack.c.l.b16 %v9466
      %v9726 = vunpack.c.h.b16 %v9466
      %v9727 = vunpack.c.l.b16 %v9467
      %v9728 = vunpack.c.h.b16 %v9467
      %v9729 = vunpack.c.l.b16 %v9468
      %v9730 = vunpack.c.h.b16 %v9468
      %v9731 = vunpack.c.l.b16 %v9469
      %v9732 = vunpack.c.h.b16 %v9469
      %v9733 = vunpack.c.l.b16 %v9470
      %v9734 = vunpack.c.h.b16 %v9470
      %v9735 = vunpack.c.l.b16 %v9471
      %v9736 = vunpack.c.h.b16 %v9471
      %v9737 = vunpack.c.l.b16 %v9472
      %v9738 = vunpack.c.h.b16 %v9472
      %v9739 = vunpack.c.l.b16 %v9473
      %v9740 = vunpack.c.h.b16 %v9473
      %v9741 = vunpack.c.l.b16 %v9474
      %v9742 = vunpack.c.h.b16 %v9474
      %v9743 = vunpack.c.l.b16 %v9475
      %v9744 = vunpack.c.h.b16 %v9475
      %v9745 = vunpack.c.l.b16 %v9476
      %v9746 = vunpack.c.h.b16 %v9476
      %v9747 = vunpack.c.l.b16 %v9477
      %v9748 = vunpack.c.h.b16 %v9477
      %v9749 = vunpack.c.l.b16 %v9478
      %v9750 = vunpack.c.h.b16 %v9478
      %v9751 = vunpack.c.l.b16 %v9479
      %v9752 = vunpack.c.h.b16 %v9479
      %v9753 = vunpack.c.l.b16 %v9480
      %v9754 = vunpack.c.h.b16 %v9480
      %v9755 = vunpack.c.l.b16 %v9481
      %v9756 = vunpack.c.h.b16 %v9481
      %v9757 = vunpack.c.l.b16 %v9482
      %v9758 = vunpack.c.h.b16 %v9482
      %v9759 = vunpack.c.l.b16 %v9483
      %v9760 = vunpack.c.h.b16 %v9483
      %v9761 = vunpack.c.l.b16 %v9484
      %v9762 = vunpack.c.h.b16 %v9484
      %v9763 = vunpack.c.l.b16 %v9485
      %v9764 = vunpack.c.h.b16 %v9485
      %v9765 = vunpack.c.l.b16 %v9486
      %v9766 = vunpack.c.h.b16 %v9486
      %v9767 = vunpack.c.l.b16 %v9487
      %v9768 = vunpack.c.h.b16 %v9487
      %v9769 = vunpack.c.l.b16 %v9488
      %v9770 = vunpack.c.h.b16 %v9488
      %v9771 = vunpack.c.l.b16 %v9489
      %v9772 = vunpack.c.h.b16 %v9489
      %v9773 = vunpack.c.l.b16 %v9490
      %v9774 = vunpack.c.h.b16 %v9490
      %v9775 = vunpack.c.l.b16 %v9491
      %v9776 = vunpack.c.h.b16 %v9491
      %v9777 = vunpack.c.l.b16 %v9492
      %v9778 = vunpack.c.h.b16 %v9492
      %v9779 = vunpack.c.l.b16 %v9493
      %v9780 = vunpack.c.h.b16 %v9493
      %v9781 = vunpack.c.l.b16 %v9494
      %v9782 = vunpack.c.h.b16 %v9494
      %v9783 = vunpack.c.l.b16 %v9495
      %v9784 = vunpack.c.h.b16 %v9495
      %v9785 = vunpack.c.l.b16 %v9496
      %v9786 = vunpack.c.h.b16 %v9496
      %v9787 = vunpack.c.l.b16 %v9497
      %v9788 = vunpack.c.h.b16 %v9497
      %v9789 = vunpack.c.l.b16 %v9498
      %v9790 = vunpack.c.h.b16 %v9498
      %v9791 = vunpack.c.l.b16 %v9499
      %v9792 = vunpack.c.h.b16 %v9499
      %v9793 = vunpack.c.l.b16 %v9500
      %v9794 = vunpack.c.h.b16 %v9500
      %v9795 = vunpack.c.l.b16 %v9501
      %v9796 = vunpack.c.h.b16 %v9501
      %v9797 = vunpack.c.l.b16 %v9502
      %v9798 = vunpack.c.h.b16 %v9502
      %v9799 = vunpack.c.l.b16 %v9503
      %v9800 = vunpack.c.h.b16 %v9503
      %v9801 = vunpack.c.l.b16 %v9504
      %v9802 = vunpack.c.h.b16 %v9504
      %v9803 = vunpack.c.l.b16 %v9505
      %v9804 = vunpack.c.h.b16 %v9505
      %v9805 = vunpack.c.l.b16 %v9506
      %v9806 = vunpack.c.h.b16 %v9506
      %v9807 = vunpack.c.l.b16 %v9507
      %v9808 = vunpack.c.h.b16 %v9507
      %v9809 = vunpack.c.l.b16 %v9508
      %v9810 = vunpack.c.h.b16 %v9508
      %v9811 = vunpack.c.l.b16 %v9509
      %v9812 = vunpack.c.h.b16 %v9509
      %v9813 = vunpack.c.l.b16 %v9510
      %v9814 = vunpack.c.h.b16 %v9510
      %v9815 = vunpack.c.l.b16 %v9511
      %v9816 = vunpack.c.h.b16 %v9511
      %v9817 = vunpack.c.l.b16 %v9512
      %v9818 = vunpack.c.h.b16 %v9512
      %v9819 = vunpack.c.l.b16 %v9513
      %v9820 = vunpack.c.h.b16 %v9513
      %v9821 = vunpack.c.l.b16 %v9514
      %v9822 = vunpack.c.h.b16 %v9514
      %v9823 = vunpack.c.l.b16 %v9515
      %v9824 = vunpack.c.h.b16 %v9515
      %v9825 = vunpack.c.l.b16 %v9516
      %v9826 = vunpack.c.h.b16 %v9516
      %v9827 = vunpack.c.l.b16 %v9517
      %v9828 = vunpack.c.h.b16 %v9517
      %v9829 = vunpack.c.l.b16 %v9518
      %v9830 = vunpack.c.h.b16 %v9518
      %v9831 = vunpack.c.l.b16 %v9519
      %v9832 = vunpack.c.h.b16 %v9519
      %v9833 = vunpack.c.l.b16 %v9520
      %v9834 = vunpack.c.h.b16 %v9520
      %v9835 = vunpack.c.l.b16 %v9521
      %v9836 = vunpack.c.h.b16 %v9521
      %v9837 = vunpack.c.l.b16 %v9522
      %v9838 = vunpack.c.h.b16 %v9522
      %v9839 = vunpack.c.l.b16 %v9523
      %v9840 = vunpack.c.h.b16 %v9523
      %v9841 = vunpack.c.l.b16 %v9524
      %v9842 = vunpack.c.h.b16 %v9524
      %v9843 = vunpack.c.l.b16 %v9525
      %v9844 = vunpack.c.h.b16 %v9525
      %v9845 = vunpack.c.l.b16 %v9526
      %v9846 = vunpack.c.h.b16 %v9526
      %v9847 = vunpack.c.l.b16 %v9527
      %v9848 = vunpack.c.h.b16 %v9527
      %v9849 = vunpack.c.l.b16 %v9528
      %v9850 = vunpack.c.h.b16 %v9528
      %v9851 = vunpack.c.l.b16 %v9529
      %v9852 = vunpack.c.h.b16 %v9529
      %v9853 = vunpack.c.l.b16 %v9530
      %v9854 = vunpack.c.h.b16 %v9530
      %v9855 = vunpack.c.l.b16 %v9531
      %v9856 = vunpack.c.h.b16 %v9531
      %v9857 = vunpack.c.l.b16 %v9532
      %v9858 = vunpack.c.h.b16 %v9532
      %v9859 = vunpack.c.l.b16 %v9533
      %v9860 = vunpack.c.h.b16 %v9533
      %v9861 = vunpack.c.l.b16 %v9534
      %v9862 = vunpack.c.h.b16 %v9534
      %v9863 = vunpack.c.l.b16 %v9535
      %v9864 = vunpack.c.h.b16 %v9535
      %v9865 = vunpack.c.l.b16 %v9536
      %v9866 = vunpack.c.h.b16 %v9536
      %v9867 = vunpack.c.l.b16 %v9537
      %v9868 = vunpack.c.h.b16 %v9537
      %v9869 = vunpack.c.l.b16 %v9538
      %v9870 = vunpack.c.h.b16 %v9538
      %v9871 = vunpack.c.l.b16 %v9539
      %v9872 = vunpack.c.h.b16 %v9539
      %v9873 = vunpack.c.l.b16 %v9540
      %v9874 = vunpack.c.h.b16 %v9540
      %v9875 = vunpack.c.l.b16 %v9541
      %v9876 = vunpack.c.h.b16 %v9541
      %v9877 = vunpack.c.l.b16 %v9542
      %v9878 = vunpack.c.h.b16 %v9542
      %v9879 = vunpack.c.l.b16 %v9543
      %v9880 = vunpack.c.h.b16 %v9543
      %v9881 = vunpack.c.l.b16 %v9544
      %v9882 = vunpack.c.h.b16 %v9544
      %v9883 = vunpack.c.l.b16 %v9545
      %v9884 = vunpack.c.h.b16 %v9545
      %v9885 = vunpack.c.l.b16 %v9546
      %v9886 = vunpack.c.h.b16 %v9546
      %v9887 = vunpack.c.l.b16 %v9547
      %v9888 = vunpack.c.h.b16 %v9547
      %v9889 = vunpack.c.l.b16 %v9548
      %v9890 = vunpack.c.h.b16 %v9548
      %v9891 = vunpack.c.l.b16 %v9549
      %v9892 = vunpack.c.h.b16 %v9549
      %v9893 = vunpack.c.l.b16 %v9550
      %v9894 = vunpack.c.h.b16 %v9550
      %v9895 = vunpack.c.l.b16 %v9551
      %v9896 = vunpack.c.h.b16 %v9551
      %v9897 = vunpack.c.l.b16 %v9552
      %v9898 = vunpack.c.h.b16 %v9552
      %v9899 = vunpack.c.l.b16 %v9553
      %v9900 = vunpack.c.h.b16 %v9553
      %v9901 = vunpack.c.l.b16 %v9554
      %v9902 = vunpack.c.h.b16 %v9554
      %v9903 = vunpack.c.l.b16 %v9555
      %v9904 = vunpack.c.h.b16 %v9555
      %v9905 = vunpack.c.l.b16 %v9556
      %v9906 = vunpack.c.h.b16 %v9556
      %v9907 = vunpack.c.l.b16 %v9557
      %v9908 = vunpack.c.h.b16 %v9557
      %v9909 = vunpack.c.l.b16 %v9558
      %v9910 = vunpack.c.h.b16 %v9558
      %v9911 = vunpack.c.l.b16 %v9559
      %v9912 = vunpack.c.h.b16 %v9559
      %v9913 = vunpack.c.l.b16 %v9560
      %v9914 = vunpack.c.h.b16 %v9560
      %v9915 = vunpack.c.l.b16 %v9561
      %v9916 = vunpack.c.h.b16 %v9561
      %v9917 = vunpack.c.l.b16 %v9562
      %v9918 = vunpack.c.h.b16 %v9562
      %v9919 = vunpack.c.l.b16 %v9563
      %v9920 = vunpack.c.h.b16 %v9563
      %v9921 = vunpack.c.l.b16 %v9564
      %v9922 = vunpack.c.h.b16 %v9564
      %v9923 = vunpack.c.l.b16 %v9565
      %v9924 = vunpack.c.h.b16 %v9565
      %v9925 = vunpack.c.l.b16 %v9566
      %v9926 = vunpack.c.h.b16 %v9566
      %v9927 = vunpack.c.l.b16 %v9567
      %v9928 = vunpack.c.h.b16 %v9567
      %v9929 = vunpack.c.l.b16 %v9568
      %v9930 = vunpack.c.h.b16 %v9568
      %v9931 = vunpack.c.l.b16 %v9569
      %v9932 = vunpack.c.h.b16 %v9569
      %v9933 = vunpack.c.l.b16 %v9570
      %v9934 = vunpack.c.h.b16 %v9570
      %v9935 = vunpack.c.l.b16 %v9571
      %v9936 = vunpack.c.h.b16 %v9571
      %v9937 = vunpack.c.l.b16 %v9572
      %v9938 = vunpack.c.h.b16 %v9572
      %v9939 = vunpack.c.l.b16 %v9573
      %v9940 = vunpack.c.h.b16 %v9573
      %v9941 = vunpack.c.l.b16 %v9574
      %v9942 = vunpack.c.h.b16 %v9574
      %v9943 = vunpack.c.l.b16 %v9575
      %v9944 = vunpack.c.h.b16 %v9575
      %v9945 = vunpack.c.l.b16 %v9576
      %v9946 = vunpack.c.h.b16 %v9576
      %v9947 = vunpack.c.l.b16 %v9577
      %v9948 = vunpack.c.h.b16 %v9577
      %v9949 = vunpack.c.l.b16 %v9578
      %v9950 = vunpack.c.h.b16 %v9578
      %v9951 = vunpack.c.l.b16 %v9579
      %v9952 = vunpack.c.h.b16 %v9579
      %v9953 = vunpack.c.l.b16 %v9580
      %v9954 = vunpack.c.h.b16 %v9580
      %v9955 = vunpack.c.l.b16 %v9581
      %v9956 = vunpack.c.h.b16 %v9581
      %v9957 = vunpack.c.l.b16 %v9582
      %v9958 = vunpack.c.h.b16 %v9582
      %v9959 = vunpack.c.l.b16 %v9583
      %v9960 = vunpack.c.h.b16 %v9583
      %v9961 = vunpack.c.l.b16 %v9584
      %v9962 = vunpack.c.h.b16 %v9584
      %v9963 = vunpack.c.l.b16 %v9585
      %v9964 = vunpack.c.h.b16 %v9585
      %v9965 = vunpack.c.l.b16 %v9586
      %v9966 = vunpack.c.h.b16 %v9586
      %v9967 = vunpack.c.l.b16 %v9587
      %v9968 = vunpack.c.h.b16 %v9587
      %v9969 = vunpack.c.l.b16 %v9588
      %v9970 = vunpack.c.h.b16 %v9588
      %v9971 = vunpack.c.l.b16 %v9589
      %v9972 = vunpack.c.h.b16 %v9589
      %v9973 = vunpack.c.l.b16 %v9590
      %v9974 = vunpack.c.h.b16 %v9590
      %v9975 = vpack.c.b16 %v9723, %v9719
      %v9976 = vpack.c.b16 %v9724, %v9720
      %v9977 = vpack.c.b16 %v9725, %v9721
      %v9978 = vpack.c.b16 %v9726, %v9722
      %v9979 = vpack.c.b16 %v9731, %v9727
      %v9980 = vpack.c.b16 %v9732, %v9728
      %v9981 = vpack.c.b16 %v9733, %v9729
      %v9982 = vpack.c.b16 %v9734, %v9730
      %v9983 = vpack.c.b16 %v9739, %v9735
      %v9984 = vpack.c.b16 %v9740, %v9736
      %v9985 = vpack.c.b16 %v9741, %v9737
      %v9986 = vpack.c.b16 %v9742, %v9738
      %v9987 = vpack.c.b16 %v9747, %v9743
      %v9988 = vpack.c.b16 %v9748, %v9744
      %v9989 = vpack.c.b16 %v9749, %v9745
      %v9990 = vpack.c.b16 %v9750, %v9746
      %v9991 = vpack.c.b16 %v9755, %v9751
      %v9992 = vpack.c.b16 %v9756, %v9752
      %v9993 = vpack.c.b16 %v9757, %v9753
      %v9994 = vpack.c.b16 %v9758, %v9754
      %v9995 = vpack.c.b16 %v9763, %v9759
      %v9996 = vpack.c.b16 %v9764, %v9760
      %v9997 = vpack.c.b16 %v9765, %v9761
      %v9998 = vpack.c.b16 %v9766, %v9762
      %v9999 = vpack.c.b16 %v9771, %v9767
      %v10000 = vpack.c.b16 %v9772, %v9768
      %v10001 = vpack.c.b16 %v9773, %v9769
      %v10002 = vpack.c.b16 %v9774, %v9770
      %v10003 = vpack.c.b16 %v9779, %v9775
      %v10004 = vpack.c.b16 %v9780, %v9776
      %v10005 = vpack.c.b16 %v9781, %v9777
      %v10006 = vpack.c.b16 %v9782, %v9778
      %v10007 = vpack.c.b16 %v9787, %v9783
      %v10008 = vpack.c.b16 %v9788, %v9784
      %v10009 = vpack.c.b16 %v9789, %v9785
      %v10010 = vpack.c.b16 %v9790, %v9786
      %v10011 = vpack.c.b16 %v9795, %v9791
      %v10012 = vpack.c.b16 %v9796, %v9792
      %v10013 = vpack.c.b16 %v9797, %v9793
      %v10014 = vpack.c.b16 %v9798, %v9794
      %v10015 = vpack.c.b16 %v9803, %v9799
      %v10016 = vpack.c.b16 %v9804, %v9800
      %v10017 = vpack.c.b16 %v9805, %v9801
      %v10018 = vpack.c.b16 %v9806, %v9802
      %v10019 = vpack.c.b16 %v9811, %v9807
      %v10020 = vpack.c.b16 %v9812, %v9808
      %v10021 = vpack.c.b16 %v9813, %v9809
      %v10022 = vpack.c.b16 %v9814, %v9810
      %v10023 = vpack.c.b16 %v9819, %v9815
      %v10024 = vpack.c.b16 %v9820, %v9816
      %v10025 = vpack.c.b16 %v9821, %v9817
      %v10026 = vpack.c.b16 %v9822, %v9818
      %v10027 = vpack.c.b16 %v9827, %v9823
      %v10028 = vpack.c.b16 %v9828, %v9824
      %v10029 = vpack.c.b16 %v9829, %v9825
      %v10030 = vpack.c.b16 %v9830, %v9826
      %v10031 = vpack.c.b16 %v9835, %v9831
      %v10032 = vpack.c.b16 %v9836, %v9832
      %v10033 = vpack.c.b16 %v9837, %v9833
      %v10034 = vpack.c.b16 %v9838, %v9834
      %v10035 = vpack.c.b16 %v9843, %v9839
      %v10036 = vpack.c.b16 %v9844, %v9840
      %v10037 = vpack.c.b16 %v9845, %v9841
      %v10038 = vpack.c.b16 %v9846, %v9842
      %v10039 = vpack.c.b16 %v9851, %v9847
      %v10040 = vpack.c.b16 %v9852, %v9848
      %v10041 = vpack.c.b16 %v9853, %v9849
      %v10042 = vpack.c.b16 %v9854, %v9850
      %v10043 = vpack.c.b16 %v9859, %v9855
      %v10044 = vpack.c.b16 %v9860, %v9856
      %v10045 = vpack.c.b16 %v9861, %v9857
      %v10046 = vpack.c.b16 %v9862, %v9858
      %v10047 = vpack.c.b16 %v9867, %v9863
      %v10048 = vpack.c.b16 %v9868, %v9864
      %v10049 = vpack.c.b16 %v9869, %v9865
      %v10050 = vpack.c.b16 %v9870, %v9866
      %v10051 = vpack.c.b16 %v9875, %v9871
      %v10052 = vpack.c.b16 %v9876, %v9872
      %v10053 = vpack.c.b16 %v9877, %v9873
      %v10054 = vpack.c.b16 %v9878, %v9874
      %v10055 = vpack.c.b16 %v9883, %v9879
      %v10056 = vpack.c.b16 %v9884, %v9880
      %v10057 = vpack.c.b16 %v9885, %v9881
      %v10058 = vpack.c.b16 %v9886, %v9882
      %v10059 = vpack.c.b16 %v9891, %v9887
      %v10060 = vpack.c.b16 %v9892, %v9888
      %v10061 = vpack.c.b16 %v9893, %v9889
      %v10062 = vpack.c.b16 %v9894, %v9890
      %v10063 = vpack.c.b16 %v9899, %v9895
      %v10064 = vpack.c.b16 %v9900, %v9896
      %v10065 = vpack.c.b16 %v9901, %v9897
      %v10066 = vpack.c.b16 %v9902, %v9898
      %v10067 = vpack.c.b16 %v9907, %v9903
      %v10068 = vpack.c.b16 %v9908, %v9904
      %v10069 = vpack.c.b16 %v9909, %v9905
      %v10070 = vpack.c.b16 %v9910, %v9906
      %v10071 = vpack.c.b16 %v9915, %v9911
      %v10072 = vpack.c.b16 %v9916, %v9912
      %v10073 = vpack.c.b16 %v9917, %v9913
      %v10074 = vpack.c.b16 %v9918, %v9914
      %v10075 = vpack.c.b16 %v9923, %v9919
      %v10076 = vpack.c.b16 %v9924, %v9920
      %v10077 = vpack.c.b16 %v9925, %v9921
      %v10078 = vpack.c.b16 %v9926, %v9922
      %v10079 = vpack.c.b16 %v9931, %v9927
      %v10080 = vpack.c.b16 %v9932, %v9928
      %v10081 = vpack.c.b16 %v9933, %v9929
      %v10082 = vpack.c.b16 %v9934, %v9930
      %v10083 = vpack.c.b16 %v9939, %v9935
      %v10084 = vpack.c.b16 %v9940, %v9936
      %v10085 = vpack.c.b16 %v9941, %v9937
      %v10086 = vpack.c.b16 %v9942, %v9938
      %v10087 = vpack.c.b16 %v9947, %v9943
      %v10088 = vpack.c.b16 %v9948, %v9944
      %v10089 = vpack.c.b16 %v9949, %v9945
      %v10090 = vpack.c.b16 %v9950, %v9946
      %v10091 = vpack.c.b16 %v9955, %v9951
      %v10092 = vpack.c.b16 %v9956, %v9952
      %v10093 = vpack.c.b16 %v9957, %v9953
      %v10094 = vpack.c.b16 %v9958, %v9954
      %v10095 = vpack.c.b16 %v9963, %v9959
      %v10096 = vpack.c.b16 %v9964, %v9960
      %v10097 = vpack.c.b16 %v9965, %v9961
      %v10098 = vpack.c.b16 %v9966, %v9962
      %v10099 = vpack.c.b16 %v9971, %v9967
      %v10100 = vpack.c.b16 %v9972, %v9968
      %v10101 = vpack.c.b16 %v9973, %v9969
      %v10102 = vpack.c.b16 %v9974, %v9970
      %10231 = vmatprep.subr.bf16.mxu0 %v9976
      %10232 = vmatpush1.bf16.msra.mxu0 %v9975
      %10233 = vmatprep.subr.bf16.mxu0 %v9980
      %10234 = vmatpush1.bf16.msra.mxu0 %v9979
      %10235 = vmatprep.subr.bf16.mxu0 %v9984
      %10236 = vmatpush1.bf16.msra.mxu0 %v9983
      %10237 = vmatprep.subr.bf16.mxu0 %v9988
      %10238 = vmatpush1.bf16.msra.mxu0 %v9987
      %10239 = vmatprep.subr.bf16.mxu0 %v9992
      %10240 = vmatpush1.bf16.msra.mxu0 %v9991
      %10241 = vmatprep.subr.bf16.mxu0 %v9996
      %10242 = vmatpush1.bf16.msra.mxu0 %v9995
      %10243 = vmatprep.subr.bf16.mxu0 %v10000
      %10244 = vmatpush1.bf16.msra.mxu0 %v9999
      %10245 = vmatprep.subr.bf16.mxu0 %v10004
      %10246 = vmatpush1.bf16.msra.mxu0 %v10003
      %10247 = vmatprep.subr.bf16.mxu0 %v10008
      %10248 = vmatpush1.bf16.msra.mxu0 %v10007
      %10249 = vmatprep.subr.bf16.mxu0 %v10012
      %10250 = vmatpush1.bf16.msra.mxu0 %v10011
      %10251 = vmatprep.subr.bf16.mxu0 %v10016
      %10252 = vmatpush1.bf16.msra.mxu0 %v10015
      %10253 = vmatprep.subr.bf16.mxu0 %v10020
      %10254 = vmatpush1.bf16.msra.mxu0 %v10019
      %10255 = vmatprep.subr.bf16.mxu0 %v10024
      %10256 = vmatpush1.bf16.msra.mxu0 %v10023
      %10257 = vmatprep.subr.bf16.mxu0 %v10028
      %10258 = vmatpush1.bf16.msra.mxu0 %v10027
      %10259 = vmatprep.subr.bf16.mxu0 %v10032
      %10260 = vmatpush1.bf16.msra.mxu0 %v10031
      %10261 = vmatprep.subr.bf16.mxu0 %v10036
      %10262 = vmatpush1.bf16.msra.mxu0 %v10035
      %10263 = vmatprep.mubr.bf16.mxu0 %v9431
      %10264 = vmatmul.mubr.bf16.gmra.mrb[0].mxu0 %v9430
      %v10265 = vpop.f32.mrb[0].mxu0
      %v10266 = vadd.f32 0.0, %v10265
      %v10267 = vpop.f32.mrb[0].mxu0
      %v10268 = vadd.f32 0.0, %v10267
      %v10269 = vpop.f32.mrb[0].mxu0
      %v10270 = vadd.f32 0.0, %v10269
      %v10271 = vpop.f32.mrb[0].mxu0
      %v10272 = vadd.f32 0.0, %v10271
      %10273 = vmatprep.mubr.bf16.mxu0 %v9435
      %10274 = vmatmul.mubr.bf16.gmra.mrb[0].mxu0 %v9434
      %v10275 = vpop.f32.mrb[0].mxu0
      %v10276 = vadd.f32 0.0, %v10275
      %v10277 = vpop.f32.mrb[0].mxu0
      %v10278 = vadd.f32 0.0, %v10277
      %v10279 = vpop.f32.mrb[0].mxu0
      %v10280 = vadd.f32 0.0, %v10279
      %v10281 = vpop.f32.mrb[0].mxu0
      %v10282 = vadd.f32 0.0, %v10281
      %10283 = vmatprep.mubr.bf16.mxu0 %v9439
      %10284 = vmatmul.mubr.bf16.gmra.mrb[0].mxu0 %v9438
      %v10285 = vpop.f32.mrb[0].mxu0
      %v10286 = vadd.f32 0.0, %v10285
      %v10287 = vpop.f32.mrb[0].mxu0
      %v10288 = vadd.f32 0.0, %v10287
      %v10289 = vpop.f32.mrb[0].mxu0
      %v10290 = vadd.f32 0.0, %v10289
      %v10291 = vpop.f32.mrb[0].mxu0
      %v10292 = vadd.f32 0.0, %v10291
      %10293 = vmatprep.mubr.bf16.mxu0 %v9443
      %10294 = vmatmul.mubr.bf16.gmra.mrb[0].mxu0 %v9442
      %v10295 = vpop.f32.mrb[0].mxu0
      %v10296 = vadd.f32 0.0, %v10295
      %v10297 = vpop.f32.mrb[0].mxu0
      %v10298 = vadd.f32 0.0, %v10297
      %v10299 = vpop.f32.mrb[0].mxu0
      %v10300 = vadd.f32 0.0, %v10299
      %v10301 = vpop.f32.mrb[0].mxu0
      %v10302 = vadd.f32 0.0, %v10301
      %10303 = vmatprep.mubr.bf16.mxu0 %v9447
      %10304 = vmatmul.mubr.bf16.gmra.mrb[0].mxu0 %v9446
      %v10305 = vpop.f32.mrb[0].mxu0
      %v10306 = vadd.f32 0.0, %v10305
      %v10307 = vpop.f32.mrb[0].mxu0
      %v10308 = vadd.f32 0.0, %v10307
      %v10309 = vpop.f32.mrb[0].mxu0
      %v10310 = vadd.f32 0.0, %v10309
      %v10311 = vpop.f32.mrb[0].mxu0
      %v10312 = vadd.f32 0.0, %v10311
      %10313 = vmatprep.mubr.bf16.mxu0 %v9451
      %10314 = vmatmul.mubr.bf16.gmra.mrb[0].mxu0 %v9450
      %v10315 = vpop.f32.mrb[0].mxu0
      %v10316 = vadd.f32 0.0, %v10315
      %v10317 = vpop.f32.mrb[0].mxu0
      %v10318 = vadd.f32 0.0, %v10317
      %v10319 = vpop.f32.mrb[0].mxu0
      %v10320 = vadd.f32 0.0, %v10319
      %v10321 = vpop.f32.mrb[0].mxu0
      %v10322 = vadd.f32 0.0, %v10321
      %10323 = vmatprep.mubr.bf16.mxu0 %v9455
      %10324 = vmatmul.mubr.bf16.gmra.mrb[0].mxu0 %v9454
      %v10325 = vpop.f32.mrb[0].mxu0
      %v10326 = vadd.f32 0.0, %v10325
      %v10327 = vpop.f32.mrb[0].mxu0
      %v10328 = vadd.f32 0.0, %v10327
      %v10329 = vpop.f32.mrb[0].mxu0
      %v10330 = vadd.f32 0.0, %v10329
      %v10331 = vpop.f32.mrb[0].mxu0
      %v10332 = vadd.f32 0.0, %v10331
      %10333 = vmatprep.mubr.bf16.mxu0 %v9459
      %10334 = vmatmul.mubr.bf16.gmra.mrb[0].mxu0 %v9458
      %v10335 = vpop.f32.mrb[0].mxu0
      %v10336 = vadd.f32 0.0, %v10335
      %v10337 = vpop.f32.mrb[0].mxu0
      %v10338 = vadd.f32 0.0, %v10337
      %v10339 = vpop.f32.mrb[0].mxu0
      %v10340 = vadd.f32 0.0, %v10339
      %v10341 = vpop.f32.mrb[0].mxu0
      %v10342 = vadd.f32 0.0, %v10341
      %10343 = vdwg.mxu0
      %10344 = vmatprep.subr.bf16.mxu0 %v10040
      %10345 = vmatpush1.bf16.msra.mxu0 %v10039
      %10346 = vmatprep.subr.bf16.mxu0 %v10044
      %10347 = vmatpush1.bf16.msra.mxu0 %v10043
      %10348 = vmatprep.subr.bf16.mxu0 %v10048
      %10349 = vmatpush1.bf16.msra.mxu0 %v10047
      %10350 = vmatprep.subr.bf16.mxu0 %v10052
      %10351 = vmatpush1.bf16.msra.mxu0 %v10051
      %10352 = vmatprep.subr.bf16.mxu0 %v10056
      %10353 = vmatpush1.bf16.msra.mxu0 %v10055
      %10354 = vmatprep.subr.bf16.mxu0 %v10060
      %10355 = vmatpush1.bf16.msra.mxu0 %v10059
      %10356 = vmatprep.subr.bf16.mxu0 %v10064
      %10357 = vmatpush1.bf16.msra.mxu0 %v10063
      %10358 = vmatprep.subr.bf16.mxu0 %v10068
      %10359 = vmatpush1.bf16.msra.mxu0 %v10067
      %10360 = vmatprep.subr.bf16.mxu0 %v10072
      %10361 = vmatpush1.bf16.msra.mxu0 %v10071
      %10362 = vmatprep.subr.bf16.mxu0 %v10076
      %10363 = vmatpush1.bf16.msra.mxu0 %v10075
      %10364 = vmatprep.subr.bf16.mxu0 %v10080
      %10365 = vmatpush1.bf16.msra.mxu0 %v10079
      %10366 = vmatprep.subr.bf16.mxu0 %v10084
      %10367 = vmatpush1.bf16.msra.mxu0 %v10083
      %10368 = vmatprep.subr.bf16.mxu0 %v10088
      %10369 = vmatpush1.bf16.msra.mxu0 %v10087
      %10370 = vmatprep.subr.bf16.mxu0 %v10092
      %10371 = vmatpush1.bf16.msra.mxu0 %v10091
      %10372 = vmatprep.subr.bf16.mxu0 %v10096
      %10373 = vmatpush1.bf16.msra.mxu0 %v10095
      %10374 = vmatprep.subr.bf16.mxu0 %v10100
      %10375 = vmatpush1.bf16.msra.mxu0 %v10099
      %10376 = vmatprep.mubr.bf16.mxu0 %v9433
      %10377 = vmatmul.mubr.bf16.gmra.mrb[0].mxu0 %v9432
      %v10378 = vpop.f32.mrb[0].mxu0
      %v10379 = vadd.f32 %v10266, %v10378
      %v10380 = vpop.f32.mrb[0].mxu0
      %v10381 = vadd.f32 %v10268, %v10380
      %v10382 = vpop.f32.mrb[0].mxu0
      %v10383 = vadd.f32 %v10270, %v10382
      %v10384 = vpop.f32.mrb[0].mxu0
      %v10385 = vadd.f32 %v10272, %v10384
      %10386 = vmatprep.mubr.bf16.mxu0 %v9437
      %10387 = vmatmul.mubr.bf16.gmra.mrb[0].mxu0 %v9436
      %v10388 = vpop.f32.mrb[0].mxu0
      %v10389 = vadd.f32 %v10276, %v10388
      %v10390 = vpop.f32.mrb[0].mxu0
      %v10391 = vadd.f32 %v10278, %v10390
      %v10392 = vpop.f32.mrb[0].mxu0
      %v10393 = vadd.f32 %v10280, %v10392
      %v10394 = vpop.f32.mrb[0].mxu0
      %v10395 = vadd.f32 %v10282, %v10394
      %10396 = vmatprep.mubr.bf16.mxu0 %v9441
      %10397 = vmatmul.mubr.bf16.gmra.mrb[0].mxu0 %v9440
      %v10398 = vpop.f32.mrb[0].mxu0
      %v10399 = vadd.f32 %v10286, %v10398
      %v10400 = vpop.f32.mrb[0].mxu0
      %v10401 = vadd.f32 %v10288, %v10400
      %v10402 = vpop.f32.mrb[0].mxu0
      %v10403 = vadd.f32 %v10290, %v10402
      %v10404 = vpop.f32.mrb[0].mxu0
      %v10405 = vadd.f32 %v10292, %v10404
      %10406 = vmatprep.mubr.bf16.mxu0 %v9445
      %10407 = vmatmul.mubr.bf16.gmra.mrb[0].mxu0 %v9444
      %v10408 = vpop.f32.mrb[0].mxu0
      %v10409 = vadd.f32 %v10296, %v10408
      %v10410 = vpop.f32.mrb[0].mxu0
      %v10411 = vadd.f32 %v10298, %v10410
      %v10412 = vpop.f32.mrb[0].mxu0
      %v10413 = vadd.f32 %v10300, %v10412
      %v10414 = vpop.f32.mrb[0].mxu0
      %v10415 = vadd.f32 %v10302, %v10414
      %10416 = vmatprep.mubr.bf16.mxu0 %v9449
      %10417 = vmatmul.mubr.bf16.gmra.mrb[0].mxu0 %v9448
      %v10418 = vpop.f32.mrb[0].mxu0
      %v10419 = vadd.f32 %v10306, %v10418
      %v10420 = vpop.f32.mrb[0].mxu0
      %v10421 = vadd.f32 %v10308, %v10420
      %v10422 = vpop.f32.mrb[0].mxu0
      %v10423 = vadd.f32 %v10310, %v10422
      %v10424 = vpop.f32.mrb[0].mxu0
      %v10425 = vadd.f32 %v10312, %v10424
      %10426 = vmatprep.mubr.bf16.mxu0 %v9453
      %10427 = vmatmul.mubr.bf16.gmra.mrb[0].mxu0 %v9452
      %v10428 = vpop.f32.mrb[0].mxu0
      %v10429 = vadd.f32 %v10316, %v10428
      %v10430 = vpop.f32.mrb[0].mxu0
      %v10431 = vadd.f32 %v10318, %v10430
      %v10432 = vpop.f32.mrb[0].mxu0
      %v10433 = vadd.f32 %v10320, %v10432
      %v10434 = vpop.f32.mrb[0].mxu0
      %v10435 = vadd.f32 %v10322, %v10434
      %10436 = vmatprep.mubr.bf16.mxu0 %v9457
      %10437 = vmatmul.mubr.bf16.gmra.mrb[0].mxu0 %v9456
      %v10438 = vpop.f32.mrb[0].mxu0
      %v10439 = vadd.f32 %v10326, %v10438
      %v10440 = vpop.f32.mrb[0].mxu0
      %v10441 = vadd.f32 %v10328, %v10440
      %v10442 = vpop.f32.mrb[0].mxu0
      %v10443 = vadd.f32 %v10330, %v10442
      %v10444 = vpop.f32.mrb[0].mxu0
      %v10445 = vadd.f32 %v10332, %v10444
      %10446 = vmatprep.mubr.bf16.mxu0 %v9461
      %10447 = vmatmul.mubr.bf16.gmra.mrb[0].mxu0 %v9460
      %v10448 = vpop.f32.mrb[0].mxu0
      %v10449 = vadd.f32 %v10336, %v10448
      %v10450 = vpop.f32.mrb[0].mxu0
      %v10451 = vadd.f32 %v10338, %v10450
      %v10452 = vpop.f32.mrb[0].mxu0
      %v10453 = vadd.f32 %v10340, %v10452
      %v10454 = vpop.f32.mrb[0].mxu0
      %v10455 = vadd.f32 %v10342, %v10454
      %10456 = vdwg.mxu0
      %10457 = vmatprep.subr.bf16.mxu0 %v9978
      %10458 = vmatpush1.bf16.msra.mxu0 %v9977
      %10459 = vmatprep.subr.bf16.mxu0 %v9982
      %10460 = vmatpush1.bf16.msra.mxu0 %v9981
      %10461 = vmatprep.subr.bf16.mxu0 %v9986
      %10462 = vmatpush1.bf16.msra.mxu0 %v9985
      %10463 = vmatprep.subr.bf16.mxu0 %v9990
      %10464 = vmatpush1.bf16.msra.mxu0 %v9989
      %10465 = vmatprep.subr.bf16.mxu0 %v9994
      %10466 = vmatpush1.bf16.msra.mxu0 %v9993
      %10467 = vmatprep.subr.bf16.mxu0 %v9998
      %10468 = vmatpush1.bf16.msra.mxu0 %v9997
      %10469 = vmatprep.subr.bf16.mxu0 %v10002
      %10470 = vmatpush1.bf16.msra.mxu0 %v10001
      %10471 = vmatprep.subr.bf16.mxu0 %v10006
      %10472 = vmatpush1.bf16.msra.mxu0 %v10005
      %10473 = vmatprep.subr.bf16.mxu0 %v10010
      %10474 = vmatpush1.bf16.msra.mxu0 %v10009
      %10475 = vmatprep.subr.bf16.mxu0 %v10014
      %10476 = vmatpush1.bf16.msra.mxu0 %v10013
      %10477 = vmatprep.subr.bf16.mxu0 %v10018
      %10478 = vmatpush1.bf16.msra.mxu0 %v10017
      %10479 = vmatprep.subr.bf16.mxu0 %v10022
      %10480 = vmatpush1.bf16.msra.mxu0 %v10021
      %10481 = vmatprep.subr.bf16.mxu0 %v10026
      %10482 = vmatpush1.bf16.msra.mxu0 %v10025
      %10483 = vmatprep.subr.bf16.mxu0 %v10030
      %10484 = vmatpush1.bf16.msra.mxu0 %v10029
      %10485 = vmatprep.subr.bf16.mxu0 %v10034
      %10486 = vmatpush1.bf16.msra.mxu0 %v10033
      %10487 = vmatprep.subr.bf16.mxu0 %v10038
      %10488 = vmatpush1.bf16.msra.mxu0 %v10037
      %10489 = vmatprep.mubr.bf16.mxu0 %v9431
      %10490 = vmatmul.mubr.bf16.gmra.mrb[0].mxu0 %v9430
      %v10491 = vpop.f32.mrb[0].mxu0
      %v10492 = vadd.f32 0.0, %v10491
      %v10493 = vpop.f32.mrb[0].mxu0
      %v10494 = vadd.f32 0.0, %v10493
      %v10495 = vpop.f32.mrb[0].mxu0
      %v10496 = vadd.f32 0.0, %v10495
      %v10497 = vpop.f32.mrb[0].mxu0
      %v10498 = vadd.f32 0.0, %v10497
      %10499 = vmatprep.mubr.bf16.mxu0 %v9435
      %10500 = vmatmul.mubr.bf16.gmra.mrb[0].mxu0 %v9434
      %v10501 = vpop.f32.mrb[0].mxu0
      %v10502 = vadd.f32 0.0, %v10501
      %v10503 = vpop.f32.mrb[0].mxu0
      %v10504 = vadd.f32 0.0, %v10503
      %v10505 = vpop.f32.mrb[0].mxu0
      %v10506 = vadd.f32 0.0, %v10505
      %v10507 = vpop.f32.mrb[0].mxu0
      %v10508 = vadd.f32 0.0, %v10507
      %10509 = vmatprep.mubr.bf16.mxu0 %v9439
      %10510 = vmatmul.mubr.bf16.gmra.mrb[0].mxu0 %v9438
      %v10511 = vpop.f32.mrb[0].mxu0
      %v10512 = vadd.f32 0.0, %v10511
      %v10513 = vpop.f32.mrb[0].mxu0
      %v10514 = vadd.f32 0.0, %v10513
      %v10515 = vpop.f32.mrb[0].mxu0
      %v10516 = vadd.f32 0.0, %v10515
      %v10517 = vpop.f32.mrb[0].mxu0
      %v10518 = vadd.f32 0.0, %v10517
      %10519 = vmatprep.mubr.bf16.mxu0 %v9443
      %10520 = vmatmul.mubr.bf16.gmra.mrb[0].mxu0 %v9442
      %v10521 = vpop.f32.mrb[0].mxu0
      %v10522 = vadd.f32 0.0, %v10521
      %v10523 = vpop.f32.mrb[0].mxu0
      %v10524 = vadd.f32 0.0, %v10523
      %v10525 = vpop.f32.mrb[0].mxu0
      %v10526 = vadd.f32 0.0, %v10525
      %v10527 = vpop.f32.mrb[0].mxu0
      %v10528 = vadd.f32 0.0, %v10527
      %10529 = vmatprep.mubr.bf16.mxu0 %v9447
      %10530 = vmatmul.mubr.bf16.gmra.mrb[0].mxu0 %v9446
      %v10531 = vpop.f32.mrb[0].mxu0
      %v10532 = vadd.f32 0.0, %v10531
      %v10533 = vpop.f32.mrb[0].mxu0
      %v10534 = vadd.f32 0.0, %v10533
      %v10535 = vpop.f32.mrb[0].mxu0
      %v10536 = vadd.f32 0.0, %v10535
      %v10537 = vpop.f32.mrb[0].mxu0
      %v10538 = vadd.f32 0.0, %v10537
      %10539 = vmatprep.mubr.bf16.mxu0 %v9451
      %10540 = vmatmul.mubr.bf16.gmra.mrb[0].mxu0 %v9450
      %v10541 = vpop.f32.mrb[0].mxu0
      %v10542 = vadd.f32 0.0, %v10541
      %v10543 = vpop.f32.mrb[0].mxu0
      %v10544 = vadd.f32 0.0, %v10543
      %v10545 = vpop.f32.mrb[0].mxu0
      %v10546 = vadd.f32 0.0, %v10545
      %v10547 = vpop.f32.mrb[0].mxu0
      %v10548 = vadd.f32 0.0, %v10547
      %10549 = vmatprep.mubr.bf16.mxu0 %v9455
      %10550 = vmatmul.mubr.bf16.gmra.mrb[0].mxu0 %v9454
      %v10551 = vpop.f32.mrb[0].mxu0
      %v10552 = vadd.f32 0.0, %v10551
      %v10553 = vpop.f32.mrb[0].mxu0
      %v10554 = vadd.f32 0.0, %v10553
      %v10555 = vpop.f32.mrb[0].mxu0
      %v10556 = vadd.f32 0.0, %v10555
      %v10557 = vpop.f32.mrb[0].mxu0
      %v10558 = vadd.f32 0.0, %v10557
      %10559 = vmatprep.mubr.bf16.mxu0 %v9459
      %10560 = vmatmul.mubr.bf16.gmra.mrb[0].mxu0 %v9458
      %v10561 = vpop.f32.mrb[0].mxu0
      %v10562 = vadd.f32 0.0, %v10561
      %v10563 = vpop.f32.mrb[0].mxu0
      %v10564 = vadd.f32 0.0, %v10563
      %v10565 = vpop.f32.mrb[0].mxu0
      %v10566 = vadd.f32 0.0, %v10565
      %v10567 = vpop.f32.mrb[0].mxu0
      %v10568 = vadd.f32 0.0, %v10567
      %10569 = vdwg.mxu0
      %10570 = vmatprep.subr.bf16.mxu0 %v10042
      %10571 = vmatpush1.bf16.msra.mxu0 %v10041
      %10572 = vmatprep.subr.bf16.mxu0 %v10046
      %10573 = vmatpush1.bf16.msra.mxu0 %v10045
      %10574 = vmatprep.subr.bf16.mxu0 %v10050
      %10575 = vmatpush1.bf16.msra.mxu0 %v10049
      %10576 = vmatprep.subr.bf16.mxu0 %v10054
      %10577 = vmatpush1.bf16.msra.mxu0 %v10053
      %10578 = vmatprep.subr.bf16.mxu0 %v10058
      %10579 = vmatpush1.bf16.msra.mxu0 %v10057
      %10580 = vmatprep.subr.bf16.mxu0 %v10062
      %10581 = vmatpush1.bf16.msra.mxu0 %v10061
      %10582 = vmatprep.subr.bf16.mxu0 %v10066
      %10583 = vmatpush1.bf16.msra.mxu0 %v10065
      %10584 = vmatprep.subr.bf16.mxu0 %v10070
      %10585 = vmatpush1.bf16.msra.mxu0 %v10069
      %10586 = vmatprep.subr.bf16.mxu0 %v10074
      %10587 = vmatpush1.bf16.msra.mxu0 %v10073
      %10588 = vmatprep.subr.bf16.mxu0 %v10078
      %10589 = vmatpush1.bf16.msra.mxu0 %v10077
      %10590 = vmatprep.subr.bf16.mxu0 %v10082
      %10591 = vmatpush1.bf16.msra.mxu0 %v10081
      %10592 = vmatprep.subr.bf16.mxu0 %v10086
      %10593 = vmatpush1.bf16.msra.mxu0 %v10085
      %10594 = vmatprep.subr.bf16.mxu0 %v10090
      %10595 = vmatpush1.bf16.msra.mxu0 %v10089
      %10596 = vmatprep.subr.bf16.mxu0 %v10094
      %10597 = vmatpush1.bf16.msra.mxu0 %v10093
      %10598 = vmatprep.subr.bf16.mxu0 %v10098
      %10599 = vmatpush1.bf16.msra.mxu0 %v10097
      %10600 = vmatprep.subr.bf16.mxu0 %v10102
      %10601 = vmatpush1.bf16.msra.mxu0 %v10101
      %10602 = vmatprep.mubr.bf16.mxu0 %v9433
      %10603 = vmatmul.mubr.bf16.gmra.mrb[0].mxu0 %v9432
      %v10604 = vpop.f32.mrb[0].mxu0
      %v10605 = vadd.f32 %v10492, %v10604
      %v10606 = vpop.f32.mrb[0].mxu0
      %v10607 = vadd.f32 %v10494, %v10606
      %v10608 = vpop.f32.mrb[0].mxu0
      %v10609 = vadd.f32 %v10496, %v10608
      %v10610 = vpop.f32.mrb[0].mxu0
      %v10611 = vadd.f32 %v10498, %v10610
      %10612 = vmatprep.mubr.bf16.mxu0 %v9437
      %10613 = vmatmul.mubr.bf16.gmra.mrb[0].mxu0 %v9436
      %v10614 = vpop.f32.mrb[0].mxu0
      %v10615 = vadd.f32 %v10502, %v10614
      %v10616 = vpop.f32.mrb[0].mxu0
      %v10617 = vadd.f32 %v10504, %v10616
      %v10618 = vpop.f32.mrb[0].mxu0
      %v10619 = vadd.f32 %v10506, %v10618
      %v10620 = vpop.f32.mrb[0].mxu0
      %v10621 = vadd.f32 %v10508, %v10620
      %10622 = vmatprep.mubr.bf16.mxu0 %v9441
      %10623 = vmatmul.mubr.bf16.gmra.mrb[0].mxu0 %v9440
      %v10624 = vpop.f32.mrb[0].mxu0
      %v10625 = vadd.f32 %v10512, %v10624
      %v10626 = vpop.f32.mrb[0].mxu0
      %v10627 = vadd.f32 %v10514, %v10626
      %v10628 = vpop.f32.mrb[0].mxu0
      %v10629 = vadd.f32 %v10516, %v10628
      %v10630 = vpop.f32.mrb[0].mxu0
      %v10631 = vadd.f32 %v10518, %v10630
      %10632 = vmatprep.mubr.bf16.mxu0 %v9445
      %10633 = vmatmul.mubr.bf16.gmra.mrb[0].mxu0 %v9444
      %v10634 = vpop.f32.mrb[0].mxu0
      %v10635 = vadd.f32 %v10522, %v10634
      %v10636 = vpop.f32.mrb[0].mxu0
      %v10637 = vadd.f32 %v10524, %v10636
      %v10638 = vpop.f32.mrb[0].mxu0
      %v10639 = vadd.f32 %v10526, %v10638
      %v10640 = vpop.f32.mrb[0].mxu0
      %v10641 = vadd.f32 %v10528, %v10640
      %10642 = vmatprep.mubr.bf16.mxu0 %v9449
      %10643 = vmatmul.mubr.bf16.gmra.mrb[0].mxu0 %v9448
      %v10644 = vpop.f32.mrb[0].mxu0
      %v10645 = vadd.f32 %v10532, %v10644
      %v10646 = vpop.f32.mrb[0].mxu0
      %v10647 = vadd.f32 %v10534, %v10646
      %v10648 = vpop.f32.mrb[0].mxu0
      %v10649 = vadd.f32 %v10536, %v10648
      %v10650 = vpop.f32.mrb[0].mxu0
      %v10651 = vadd.f32 %v10538, %v10650
      %10652 = vmatprep.mubr.bf16.mxu0 %v9453
      %10653 = vmatmul.mubr.bf16.gmra.mrb[0].mxu0 %v9452
      %v10654 = vpop.f32.mrb[0].mxu0
      %v10655 = vadd.f32 %v10542, %v10654
      %v10656 = vpop.f32.mrb[0].mxu0
      %v10657 = vadd.f32 %v10544, %v10656
      %v10658 = vpop.f32.mrb[0].mxu0
      %v10659 = vadd.f32 %v10546, %v10658
      %v10660 = vpop.f32.mrb[0].mxu0
      %v10661 = vadd.f32 %v10548, %v10660
      %10662 = vmatprep.mubr.bf16.mxu0 %v9457
      %10663 = vmatmul.mubr.bf16.gmra.mrb[0].mxu0 %v9456
      %v10664 = vpop.f32.mrb[0].mxu0
      %v10665 = vadd.f32 %v10552, %v10664
      %v10666 = vpop.f32.mrb[0].mxu0
      %v10667 = vadd.f32 %v10554, %v10666
      %v10668 = vpop.f32.mrb[0].mxu0
      %v10669 = vadd.f32 %v10556, %v10668
      %v10670 = vpop.f32.mrb[0].mxu0
      %v10671 = vadd.f32 %v10558, %v10670
      %10672 = vmatprep.mubr.bf16.mxu0 %v9461
      %10673 = vmatmul.mubr.bf16.gmra.mrb[0].mxu0 %v9460
      %v10674 = vpop.f32.mrb[0].mxu0
      %v10675 = vadd.f32 %v10562, %v10674
      %v10676 = vpop.f32.mrb[0].mxu0
      %v10677 = vadd.f32 %v10564, %v10676
      %v10678 = vpop.f32.mrb[0].mxu0
      %v10679 = vadd.f32 %v10566, %v10678
      %v10680 = vpop.f32.mrb[0].mxu0
      %v10681 = vadd.f32 %v10568, %v10680
      %10682 = vdwg.mxu0
      %v10683 = vadd.f32 %v8774, %v10379
      %v10684 = vadd.f32 %v8776, %v10381
      %v10685 = vadd.f32 %v9000, %v10605
      %v10686 = vadd.f32 %v9002, %v10607
      %v10687 = vadd.f32 %v8778, %v10383
      %v10688 = vadd.f32 %v8780, %v10385
      %v10689 = vadd.f32 %v9004, %v10609
      %v10690 = vadd.f32 %v9006, %v10611
      %v10691 = vadd.f32 %v8784, %v10389
      %v10692 = vadd.f32 %v8786, %v10391
      %v10693 = vadd.f32 %v9010, %v10615
      %v10694 = vadd.f32 %v9012, %v10617
      %v10695 = vadd.f32 %v8788, %v10393
      %v10696 = vadd.f32 %v8790, %v10395
      %v10697 = vadd.f32 %v9014, %v10619
      %v10698 = vadd.f32 %v9016, %v10621
      %v10699 = vadd.f32 %v8794, %v10399
      %v10700 = vadd.f32 %v8796, %v10401
      %v10701 = vadd.f32 %v9020, %v10625
      %v10702 = vadd.f32 %v9022, %v10627
      %v10703 = vadd.f32 %v8798, %v10403
      %v10704 = vadd.f32 %v8800, %v10405
      %v10705 = vadd.f32 %v9024, %v10629
      %v10706 = vadd.f32 %v9026, %v10631
      %v10707 = vadd.f32 %v8804, %v10409
      %v10708 = vadd.f32 %v8806, %v10411
      %v10709 = vadd.f32 %v9030, %v10635
      %v10710 = vadd.f32 %v9032, %v10637
      %v10711 = vadd.f32 %v8808, %v10413
      %v10712 = vadd.f32 %v8810, %v10415
      %v10713 = vadd.f32 %v9034, %v10639
      %v10714 = vadd.f32 %v9036, %v10641
      %v10715 = vadd.f32 %v8814, %v10419
      %v10716 = vadd.f32 %v8816, %v10421
      %v10717 = vadd.f32 %v9040, %v10645
      %v10718 = vadd.f32 %v9042, %v10647
      %v10719 = vadd.f32 %v8818, %v10423
      %v10720 = vadd.f32 %v8820, %v10425
      %v10721 = vadd.f32 %v9044, %v10649
      %v10722 = vadd.f32 %v9046, %v10651
      %v10723 = vadd.f32 %v8824, %v10429
      %v10724 = vadd.f32 %v8826, %v10431
      %v10725 = vadd.f32 %v9050, %v10655
      %v10726 = vadd.f32 %v9052, %v10657
      %v10727 = vadd.f32 %v8828, %v10433
      %v10728 = vadd.f32 %v8830, %v10435
      %v10729 = vadd.f32 %v9054, %v10659
      %v10730 = vadd.f32 %v9056, %v10661
      %v10731 = vadd.f32 %v8834, %v10439
      %v10732 = vadd.f32 %v8836, %v10441
      %v10733 = vadd.f32 %v9060, %v10665
      %v10734 = vadd.f32 %v9062, %v10667
      %v10735 = vadd.f32 %v8838, %v10443
      %v10736 = vadd.f32 %v8840, %v10445
      %v10737 = vadd.f32 %v9064, %v10669
      %v10738 = vadd.f32 %v9066, %v10671
      %v10739 = vadd.f32 %v8844, %v10449
      %v10740 = vadd.f32 %v8846, %v10451
      %v10741 = vadd.f32 %v9070, %v10675
      %v10742 = vadd.f32 %v9072, %v10677
      %v10743 = vadd.f32 %v8848, %v10453
      %v10744 = vadd.f32 %v8850, %v10455
      %v10745 = vadd.f32 %v9074, %v10679
      %v10746 = vadd.f32 %v9076, %v10681
      %v10747 = vld [vmem:[%s5] sm:$0xf]
      %v10749 = vlaneseq
      %v10750 = vshrl.u32 %v10749, 7
      %v10751 = vsub.s32 0, %v10750
      %v10752 = vrot.slane %v10747, %v10751
      %v10753 = vlaneseq
      %v10754 = vshrl.u32 %v10753, 7
      %v10755 = vsub.s32 1, %v10754
      %v10756 = vrot.slane %v10747, %v10755
      %v10757 = vlaneseq
      %v10758 = vshrl.u32 %v10757, 7
      %v10759 = vsub.s32 2, %v10758
      %v10760 = vrot.slane %v10747, %v10759
      %v10761 = vlaneseq
      %v10762 = vshrl.u32 %v10761, 7
      %v10763 = vsub.s32 3, %v10762
      %v10764 = vrot.slane %v10747, %v10763
      %v10769 = vmul.f32 %v10683, %v10752
      %v10770 = vmul.f32 %v10684, %v10756
      %v10771 = vmul.f32 %v10685, %v10760
      %v10772 = vmul.f32 %v10686, %v10764
      %v10773 = vmul.f32 %v10687, %v10752
      %v10774 = vmul.f32 %v10688, %v10756
      %v10775 = vmul.f32 %v10689, %v10760
      %v10776 = vmul.f32 %v10690, %v10764
      %v10777 = vmul.f32 %v10691, %v10752
      %v10778 = vmul.f32 %v10692, %v10756
      %v10779 = vmul.f32 %v10693, %v10760
      %v10780 = vmul.f32 %v10694, %v10764
      %v10781 = vmul.f32 %v10695, %v10752
      %v10782 = vmul.f32 %v10696, %v10756
      %v10783 = vmul.f32 %v10697, %v10760
      %v10784 = vmul.f32 %v10698, %v10764
      %v10785 = vmul.f32 %v10699, %v10752
      %v10786 = vmul.f32 %v10700, %v10756
      %v10787 = vmul.f32 %v10701, %v10760
      %v10788 = vmul.f32 %v10702, %v10764
      %v10789 = vmul.f32 %v10703, %v10752
      %v10790 = vmul.f32 %v10704, %v10756
      %v10791 = vmul.f32 %v10705, %v10760
      %v10792 = vmul.f32 %v10706, %v10764
      %v10793 = vmul.f32 %v10707, %v10752
      %v10794 = vmul.f32 %v10708, %v10756
      %v10795 = vmul.f32 %v10709, %v10760
      %v10796 = vmul.f32 %v10710, %v10764
      %v10797 = vmul.f32 %v10711, %v10752
      %v10798 = vmul.f32 %v10712, %v10756
      %v10799 = vmul.f32 %v10713, %v10760
      %v10800 = vmul.f32 %v10714, %v10764
      %v10801 = vmul.f32 %v10715, %v10752
      %v10802 = vmul.f32 %v10716, %v10756
      %v10803 = vmul.f32 %v10717, %v10760
      %v10804 = vmul.f32 %v10718, %v10764
      %v10805 = vmul.f32 %v10719, %v10752
      %v10806 = vmul.f32 %v10720, %v10756
      %v10807 = vmul.f32 %v10721, %v10760
      %v10808 = vmul.f32 %v10722, %v10764
      %v10809 = vmul.f32 %v10723, %v10752
      %v10810 = vmul.f32 %v10724, %v10756
      %v10811 = vmul.f32 %v10725, %v10760
      %v10812 = vmul.f32 %v10726, %v10764
      %v10813 = vmul.f32 %v10727, %v10752
      %v10814 = vmul.f32 %v10728, %v10756
      %v10815 = vmul.f32 %v10729, %v10760
      %v10816 = vmul.f32 %v10730, %v10764
      %v10817 = vmul.f32 %v10731, %v10752
      %v10818 = vmul.f32 %v10732, %v10756
      %v10819 = vmul.f32 %v10733, %v10760
      %v10820 = vmul.f32 %v10734, %v10764
      %v10821 = vmul.f32 %v10735, %v10752
      %v10822 = vmul.f32 %v10736, %v10756
      %v10823 = vmul.f32 %v10737, %v10760
      %v10824 = vmul.f32 %v10738, %v10764
      %v10825 = vmul.f32 %v10739, %v10752
      %v10826 = vmul.f32 %v10740, %v10756
      %v10827 = vmul.f32 %v10741, %v10760
      %v10828 = vmul.f32 %v10742, %v10764
      %v10829 = vmul.f32 %v10743, %v10752
      %v10830 = vmul.f32 %v10744, %v10756
      %v10831 = vmul.f32 %v10745, %v10760
      %v10832 = vmul.f32 %v10746, %v10764
      %v10833 = vld [vmem:[%s6] sm:$0xf]
      %v10835 = vlaneseq
      %v10836 = vshrl.u32 %v10835, 7
      %v10837 = vsub.s32 0, %v10836
      %v10838 = vrot.slane %v10833, %v10837
      %v10839 = vlaneseq
      %v10840 = vshrl.u32 %v10839, 7
      %v10841 = vsub.s32 1, %v10840
      %v10842 = vrot.slane %v10833, %v10841
      %v10843 = vlaneseq
      %v10844 = vshrl.u32 %v10843, 7
      %v10845 = vsub.s32 2, %v10844
      %v10846 = vrot.slane %v10833, %v10845
      %v10847 = vlaneseq
      %v10848 = vshrl.u32 %v10847, 7
      %v10849 = vsub.s32 3, %v10848
      %v10850 = vrot.slane %v10833, %v10849
      %v10855 = vadd.f32 %v10769, %v10838
      %v10856 = vadd.f32 %v10770, %v10842
      %v10857 = vadd.f32 %v10771, %v10846
      %v10858 = vadd.f32 %v10772, %v10850
      %v10859 = vadd.f32 %v10773, %v10838
      %v10860 = vadd.f32 %v10774, %v10842
      %v10861 = vadd.f32 %v10775, %v10846
      %v10862 = vadd.f32 %v10776, %v10850
      %v10863 = vadd.f32 %v10777, %v10838
      %v10864 = vadd.f32 %v10778, %v10842
      %v10865 = vadd.f32 %v10779, %v10846
      %v10866 = vadd.f32 %v10780, %v10850
      %v10867 = vadd.f32 %v10781, %v10838
      %v10868 = vadd.f32 %v10782, %v10842
      %v10869 = vadd.f32 %v10783, %v10846
      %v10870 = vadd.f32 %v10784, %v10850
      %v10871 = vadd.f32 %v10785, %v10838
      %v10872 = vadd.f32 %v10786, %v10842
      %v10873 = vadd.f32 %v10787, %v10846
      %v10874 = vadd.f32 %v10788, %v10850
      %v10875 = vadd.f32 %v10789, %v10838
      %v10876 = vadd.f32 %v10790, %v10842
      %v10877 = vadd.f32 %v10791, %v10846
      %v10878 = vadd.f32 %v10792, %v10850
      %v10879 = vadd.f32 %v10793, %v10838
      %v10880 = vadd.f32 %v10794, %v10842
      %v10881 = vadd.f32 %v10795, %v10846
      %v10882 = vadd.f32 %v10796, %v10850
      %v10883 = vadd.f32 %v10797, %v10838
      %v10884 = vadd.f32 %v10798, %v10842
      %v10885 = vadd.f32 %v10799, %v10846
      %v10886 = vadd.f32 %v10800, %v10850
      %v10887 = vadd.f32 %v10801, %v10838
      %v10888 = vadd.f32 %v10802, %v10842
      %v10889 = vadd.f32 %v10803, %v10846
      %v10890 = vadd.f32 %v10804, %v10850
      %v10891 = vadd.f32 %v10805, %v10838
      %v10892 = vadd.f32 %v10806, %v10842
      %v10893 = vadd.f32 %v10807, %v10846
      %v10894 = vadd.f32 %v10808, %v10850
      %v10895 = vadd.f32 %v10809, %v10838
      %v10896 = vadd.f32 %v10810, %v10842
      %v10897 = vadd.f32 %v10811, %v10846
      %v10898 = vadd.f32 %v10812, %v10850
      %v10899 = vadd.f32 %v10813, %v10838
      %v10900 = vadd.f32 %v10814, %v10842
      %v10901 = vadd.f32 %v10815, %v10846
      %v10902 = vadd.f32 %v10816, %v10850
      %v10903 = vadd.f32 %v10817, %v10838
      %v10904 = vadd.f32 %v10818, %v10842
      %v10905 = vadd.f32 %v10819, %v10846
      %v10906 = vadd.f32 %v10820, %v10850
      %v10907 = vadd.f32 %v10821, %v10838
      %v10908 = vadd.f32 %v10822, %v10842
      %v10909 = vadd.f32 %v10823, %v10846
      %v10910 = vadd.f32 %v10824, %v10850
      %v10911 = vadd.f32 %v10825, %v10838
      %v10912 = vadd.f32 %v10826, %v10842
      %v10913 = vadd.f32 %v10827, %v10846
      %v10914 = vadd.f32 %v10828, %v10850
      %v10915 = vadd.f32 %v10829, %v10838
      %v10916 = vadd.f32 %v10830, %v10842
      %v10917 = vadd.f32 %v10831, %v10846
      %v10918 = vadd.f32 %v10832, %v10850
      %v10919 = vld [vmem:[%s306] sm:$0xff]
      %v10920 = vld [vmem:[%s306 + $0x8] sm:$0xff]
      %v10921 = vld [vmem:[%s306 + $0x10] sm:$0xff]
      %v10922 = vld [vmem:[%s306 + $0x18] sm:$0xff]
      %v10923 = vld [vmem:[%s306 + $0x20] sm:$0xff]
      %v10924 = vld [vmem:[%s306 + $0x28] sm:$0xff]
      %v10925 = vld [vmem:[%s306 + $0x30] sm:$0xff]
      %v10926 = vld [vmem:[%s306 + $0x38] sm:$0xff]
      %v10927 = vld [vmem:[%s306 + $0x40] sm:$0xff]
      %v10928 = vld [vmem:[%s306 + $0x48] sm:$0xff]
      %v10929 = vld [vmem:[%s306 + $0x50] sm:$0xff]
      %v10930 = vld [vmem:[%s306 + $0x58] sm:$0xff]
      %v10931 = vld [vmem:[%s306 + $0x60] sm:$0xff]
      %v10932 = vld [vmem:[%s306 + $0x68] sm:$0xff]
      %v10933 = vld [vmem:[%s306 + $0x70] sm:$0xff]
      %v10934 = vld [vmem:[%s306 + $0x78] sm:$0xff]
      %v10935 = vld [vmem:[%s306 + $0x80] sm:$0xff]
      %v10936 = vld [vmem:[%s306 + $0x88] sm:$0xff]
      %v10937 = vld [vmem:[%s306 + $0x90] sm:$0xff]
      %v10938 = vld [vmem:[%s306 + $0x98] sm:$0xff]
      %v10939 = vld [vmem:[%s306 + $0xa0] sm:$0xff]
      %v10940 = vld [vmem:[%s306 + $0xa8] sm:$0xff]
      %v10941 = vld [vmem:[%s306 + $0xb0] sm:$0xff]
      %v10942 = vld [vmem:[%s306 + $0xb8] sm:$0xff]
      %v10943 = vld [vmem:[%s306 + $0xc0] sm:$0xff]
      %v10944 = vld [vmem:[%s306 + $0xc8] sm:$0xff]
      %v10945 = vld [vmem:[%s306 + $0xd0] sm:$0xff]
      %v10946 = vld [vmem:[%s306 + $0xd8] sm:$0xff]
      %v10947 = vld [vmem:[%s306 + $0xe0] sm:$0xff]
      %v10948 = vld [vmem:[%s306 + $0xe8] sm:$0xff]
      %v10949 = vld [vmem:[%s306 + $0xf0] sm:$0xff]
      %v10950 = vld [vmem:[%s306 + $0xf8] sm:$0xff]
      %v10951 = vld [vmem:[%s306 + $0x100] sm:$0xff]
      %v10952 = vld [vmem:[%s306 + $0x108] sm:$0xff]
      %v10953 = vld [vmem:[%s306 + $0x110] sm:$0xff]
      %v10954 = vld [vmem:[%s306 + $0x118] sm:$0xff]
      %v10955 = vld [vmem:[%s306 + $0x120] sm:$0xff]
      %v10956 = vld [vmem:[%s306 + $0x128] sm:$0xff]
      %v10957 = vld [vmem:[%s306 + $0x130] sm:$0xff]
      %v10958 = vld [vmem:[%s306 + $0x138] sm:$0xff]
      %v10959 = vld [vmem:[%s306 + $0x140] sm:$0xff]
      %v10960 = vld [vmem:[%s306 + $0x148] sm:$0xff]
      %v10961 = vld [vmem:[%s306 + $0x150] sm:$0xff]
      %v10962 = vld [vmem:[%s306 + $0x158] sm:$0xff]
      %v10963 = vld [vmem:[%s306 + $0x160] sm:$0xff]
      %v10964 = vld [vmem:[%s306 + $0x168] sm:$0xff]
      %v10965 = vld [vmem:[%s306 + $0x170] sm:$0xff]
      %v10966 = vld [vmem:[%s306 + $0x178] sm:$0xff]
      %v10967 = vld [vmem:[%s306 + $0x180] sm:$0xff]
      %v10968 = vld [vmem:[%s306 + $0x188] sm:$0xff]
      %v10969 = vld [vmem:[%s306 + $0x190] sm:$0xff]
      %v10970 = vld [vmem:[%s306 + $0x198] sm:$0xff]
      %v10971 = vld [vmem:[%s306 + $0x1a0] sm:$0xff]
      %v10972 = vld [vmem:[%s306 + $0x1a8] sm:$0xff]
      %v10973 = vld [vmem:[%s306 + $0x1b0] sm:$0xff]
      %v10974 = vld [vmem:[%s306 + $0x1b8] sm:$0xff]
      %v10975 = vld [vmem:[%s306 + $0x1c0] sm:$0xff]
      %v10976 = vld [vmem:[%s306 + $0x1c8] sm:$0xff]
      %v10977 = vld [vmem:[%s306 + $0x1d0] sm:$0xff]
      %v10978 = vld [vmem:[%s306 + $0x1d8] sm:$0xff]
      %v10979 = vld [vmem:[%s306 + $0x1e0] sm:$0xff]
      %v10980 = vld [vmem:[%s306 + $0x1e8] sm:$0xff]
      %v10981 = vld [vmem:[%s306 + $0x1f0] sm:$0xff]
      %v10982 = vld [vmem:[%s306 + $0x1f8] sm:$0xff]
      %v10983 = vadd.f32 %v10855, %v10919
      %v10984 = vadd.f32 %v10856, %v10920
      %v10985 = vadd.f32 %v10857, %v10921
      %v10986 = vadd.f32 %v10858, %v10922
      %v10987 = vadd.f32 %v10859, %v10923
      %v10988 = vadd.f32 %v10860, %v10924
      %v10989 = vadd.f32 %v10861, %v10925
      %v10990 = vadd.f32 %v10862, %v10926
      %v10991 = vadd.f32 %v10863, %v10927
      %v10992 = vadd.f32 %v10864, %v10928
      %v10993 = vadd.f32 %v10865, %v10929
      %v10994 = vadd.f32 %v10866, %v10930
      %v10995 = vadd.f32 %v10867, %v10931
      %v10996 = vadd.f32 %v10868, %v10932
      %v10997 = vadd.f32 %v10869, %v10933
      %v10998 = vadd.f32 %v10870, %v10934
      %v10999 = vadd.f32 %v10871, %v10935
      %v11000 = vadd.f32 %v10872, %v10936
      %v11001 = vadd.f32 %v10873, %v10937
      %v11002 = vadd.f32 %v10874, %v10938
      %v11003 = vadd.f32 %v10875, %v10939
      %v11004 = vadd.f32 %v10876, %v10940
      %v11005 = vadd.f32 %v10877, %v10941
      %v11006 = vadd.f32 %v10878, %v10942
      %v11007 = vadd.f32 %v10879, %v10943
      %v11008 = vadd.f32 %v10880, %v10944
      %v11009 = vadd.f32 %v10881, %v10945
      %v11010 = vadd.f32 %v10882, %v10946
      %v11011 = vadd.f32 %v10883, %v10947
      %v11012 = vadd.f32 %v10884, %v10948
      %v11013 = vadd.f32 %v10885, %v10949
      %v11014 = vadd.f32 %v10886, %v10950
      %v11015 = vadd.f32 %v10887, %v10951
      %v11016 = vadd.f32 %v10888, %v10952
      %v11017 = vadd.f32 %v10889, %v10953
      %v11018 = vadd.f32 %v10890, %v10954
      %v11019 = vadd.f32 %v10891, %v10955
      %v11020 = vadd.f32 %v10892, %v10956
      %v11021 = vadd.f32 %v10893, %v10957
      %v11022 = vadd.f32 %v10894, %v10958
      %v11023 = vadd.f32 %v10895, %v10959
      %v11024 = vadd.f32 %v10896, %v10960
      %v11025 = vadd.f32 %v10897, %v10961
      %v11026 = vadd.f32 %v10898, %v10962
      %v11027 = vadd.f32 %v10899, %v10963
      %v11028 = vadd.f32 %v10900, %v10964
      %v11029 = vadd.f32 %v10901, %v10965
      %v11030 = vadd.f32 %v10902, %v10966
      %v11031 = vadd.f32 %v10903, %v10967
      %v11032 = vadd.f32 %v10904, %v10968
      %v11033 = vadd.f32 %v10905, %v10969
      %v11034 = vadd.f32 %v10906, %v10970
      %v11035 = vadd.f32 %v10907, %v10971
      %v11036 = vadd.f32 %v10908, %v10972
      %v11037 = vadd.f32 %v10909, %v10973
      %v11038 = vadd.f32 %v10910, %v10974
      %v11039 = vadd.f32 %v10911, %v10975
      %v11040 = vadd.f32 %v10912, %v10976
      %v11041 = vadd.f32 %v10913, %v10977
      %v11042 = vadd.f32 %v10914, %v10978
      %v11043 = vadd.f32 %v10915, %v10979
      %v11044 = vadd.f32 %v10916, %v10980
      %v11045 = vadd.f32 %v10917, %v10981
      %v11046 = vadd.f32 %v10918, %v10982
      %11047 = vst [vmem:[%s313] sm:$0xff] %v10983
      %11048 = vst [vmem:[%s313 + $0x8] sm:$0xff] %v10984
      %11049 = vst [vmem:[%s313 + $0x10] sm:$0xff] %v10985
      %11050 = vst [vmem:[%s313 + $0x18] sm:$0xff] %v10986
      %11051 = vst [vmem:[%s313 + $0x20] sm:$0xff] %v10987
      %11052 = vst [vmem:[%s313 + $0x28] sm:$0xff] %v10988
      %11053 = vst [vmem:[%s313 + $0x30] sm:$0xff] %v10989
      %11054 = vst [vmem:[%s313 + $0x38] sm:$0xff] %v10990
      %11055 = vst [vmem:[%s313 + $0x40] sm:$0xff] %v10991
      %11056 = vst [vmem:[%s313 + $0x48] sm:$0xff] %v10992
      %11057 = vst [vmem:[%s313 + $0x50] sm:$0xff] %v10993
      %11058 = vst [vmem:[%s313 + $0x58] sm:$0xff] %v10994
      %11059 = vst [vmem:[%s313 + $0x60] sm:$0xff] %v10995
      %11060 = vst [vmem:[%s313 + $0x68] sm:$0xff] %v10996
      %11061 = vst [vmem:[%s313 + $0x70] sm:$0xff] %v10997
      %11062 = vst [vmem:[%s313 + $0x78] sm:$0xff] %v10998
      %11063 = vst [vmem:[%s313 + $0x80] sm:$0xff] %v10999
      %11064 = vst [vmem:[%s313 + $0x88] sm:$0xff] %v11000
      %11065 = vst [vmem:[%s313 + $0x90] sm:$0xff] %v11001
      %11066 = vst [vmem:[%s313 + $0x98] sm:$0xff] %v11002
      %11067 = vst [vmem:[%s313 + $0xa0] sm:$0xff] %v11003
      %11068 = vst [vmem:[%s313 + $0xa8] sm:$0xff] %v11004
      %11069 = vst [vmem:[%s313 + $0xb0] sm:$0xff] %v11005
      %11070 = vst [vmem:[%s313 + $0xb8] sm:$0xff] %v11006
      %11071 = vst [vmem:[%s313 + $0xc0] sm:$0xff] %v11007
      %11072 = vst [vmem:[%s313 + $0xc8] sm:$0xff] %v11008
      %11073 = vst [vmem:[%s313 + $0xd0] sm:$0xff] %v11009
      %11074 = vst [vmem:[%s313 + $0xd8] sm:$0xff] %v11010
      %11075 = vst [vmem:[%s313 + $0xe0] sm:$0xff] %v11011
      %11076 = vst [vmem:[%s313 + $0xe8] sm:$0xff] %v11012
      %11077 = vst [vmem:[%s313 + $0xf0] sm:$0xff] %v11013
      %11078 = vst [vmem:[%s313 + $0xf8] sm:$0xff] %v11014
      %11079 = vst [vmem:[%s313 + $0x100] sm:$0xff] %v11015
      %11080 = vst [vmem:[%s313 + $0x108] sm:$0xff] %v11016
      %11081 = vst [vmem:[%s313 + $0x110] sm:$0xff] %v11017
      %11082 = vst [vmem:[%s313 + $0x118] sm:$0xff] %v11018
      %11083 = vst [vmem:[%s313 + $0x120] sm:$0xff] %v11019
      %11084 = vst [vmem:[%s313 + $0x128] sm:$0xff] %v11020
      %11085 = vst [vmem:[%s313 + $0x130] sm:$0xff] %v11021
      %11086 = vst [vmem:[%s313 + $0x138] sm:$0xff] %v11022
      %11087 = vst [vmem:[%s313 + $0x140] sm:$0xff] %v11023
      %11088 = vst [vmem:[%s313 + $0x148] sm:$0xff] %v11024
      %11089 = vst [vmem:[%s313 + $0x150] sm:$0xff] %v11025
      %11090 = vst [vmem:[%s313 + $0x158] sm:$0xff] %v11026
      %11091 = vst [vmem:[%s313 + $0x160] sm:$0xff] %v11027
      %11092 = vst [vmem:[%s313 + $0x168] sm:$0xff] %v11028
      %11093 = vst [vmem:[%s313 + $0x170] sm:$0xff] %v11029
      %11094 = vst [vmem:[%s313 + $0x178] sm:$0xff] %v11030
      %11095 = vst [vmem:[%s313 + $0x180] sm:$0xff] %v11031
      %11096 = vst [vmem:[%s313 + $0x188] sm:$0xff] %v11032
      %11097 = vst [vmem:[%s313 + $0x190] sm:$0xff] %v11033
      %11098 = vst [vmem:[%s313 + $0x198] sm:$0xff] %v11034
      %11099 = vst [vmem:[%s313 + $0x1a0] sm:$0xff] %v11035
      %11100 = vst [vmem:[%s313 + $0x1a8] sm:$0xff] %v11036
      %11101 = vst [vmem:[%s313 + $0x1b0] sm:$0xff] %v11037
      %11102 = vst [vmem:[%s313 + $0x1b8] sm:$0xff] %v11038
      %11103 = vst [vmem:[%s313 + $0x1c0] sm:$0xff] %v11039
      %11104 = vst [vmem:[%s313 + $0x1c8] sm:$0xff] %v11040
      %11105 = vst [vmem:[%s313 + $0x1d0] sm:$0xff] %v11041
      %11106 = vst [vmem:[%s313 + $0x1d8] sm:$0xff] %v11042
      %11107 = vst [vmem:[%s313 + $0x1e0] sm:$0xff] %v11043
      %11108 = vst [vmem:[%s313 + $0x1e8] sm:$0xff] %v11044
      %11109 = vst [vmem:[%s313 + $0x1f0] sm:$0xff] %v11045
      %11110 = vst [vmem:[%s313 + $0x1f8] sm:$0xff] %v11046
      %s11111 = smul.u32 8, %s20
      %p11112 = scmp.lt.s32.totalorder %s11111, 15
      %s11113 = scalar_select %p11112, %s11111, 15
      %s11114 = smul.addr %s11113, 8
      %s11115 = smul.addr %s11114, 8
      %s11116 = scalar_lea.vmem %s8, %s11115
      // Predicated region
      $region53: #{resblock_forward.1} parent=51 // pred_check
        %p11117 = pneg %p211
      $region54: #{resblock_forward.1} parent=51 // pred_check_branch
        %11119 = sbr.rel (%p11117) target = $region56
      $region55: #{resblock_forward.1} parent=51 // pred_region
        %s11120 = smul.u32 8, %s20
      $region56: #{resblock_forward.1} parent=51 // pred_fallthru
        _
    $region52: #{resblock_forward.1} parent=5 // pred_fallthru
      _
    %p11121 = scmp.le.s32.totalorder 2, %s15
    // Predicated region
    $region57: #{resblock_forward.1} parent=5 // pred_check
      %p11122 = pneg %p11121
    $region58: #{resblock_forward.1} parent=5 // pred_check_branch
      %11124 = sbr.rel (%p11122) target = $region60
    $region59: #{resblock_forward.1} parent=5 // pred_region
      %s11125 = ssub.s32 %s15, 2
      // Predicated region
      $region61: #{resblock_forward.1} parent=59 // pred_check
        %p11126 = pneg %p217
      $region62: #{resblock_forward.1} parent=59 // pred_check_branch
        %11128 = sbr.rel (%p11126) target = $region64
      $region63: #{resblock_forward.1} parent=59 // pred_region
        %s11129 = smul.u32 8, %s21
        %p11130 = scmp.lt.s32.totalorder %s11129, 15
        %s11131 = scalar_select %p11130, %s11129, 15
        %s11132 = smul.addr %s11131, 8
        %s11133 = smul.addr %s11132, 8
        %s11134 = scalar_lea.vmem %s8, %s11133
      $region64: #{resblock_forward.1} parent=59 // pred_fallthru
        _
    $region60: #{resblock_forward.1} parent=5 // pred_fallthru
      _
  $region6: #{resblock_forward.1} parent=0 // loop_footer
    %s19 = sadd.s32 1, %s15
  $region7: #{resblock_forward.1} parent=0 // loop_footer_branch
    %14 = sbr.rel target = $region3
  $region8: #{resblock_forward.1} parent=0 // loop_exit
    _

</llo_original>
